<compile_context>
chip_gen: v7x
topology: tpu7x:2x2x1
jax: 0.10.0
libtpu: 0.0.40
codegen_flags: <defaults>
</compile_context>

<pallas_src>
import math
import jax
import jax.numpy as jnp
from jax.experimental import pallas as pl
from jax.experimental.pallas import tpu as pltpu

# ----------------------------- model dims -----------------------------------
INPUT_DIM = 1
HIDDEN_DIM = 32
OUTPUT_DIM = 3
NUM_LAYERS = 2
BATCH = 2      # NOTE: kernel is launch/latency-bound at this size; larger B is
SEQ = 8        # essentially free compute if the application ever allows it.


# ----------------------------- fused kernel ----------------------------------
def _sigmoid(v):
    # sigma(x) = 0.5 * (1 + tanh(x / 2)): one EUP op on the dependent chain.
    return 0.5 * jnp.tanh(0.5 * v) + 0.5


def fused_gru_fc_kernel(x_ref, wih0_ref, whh0_ref, bgi0_ref, bhn0_ref,
                        wih1_ref, whh1_ref, bgi1_ref, bhn1_ref,
                        wfc_ref, bfc_ref, out_ref):
    """Fused 2-layer GRU + Linear forward (single invocation, no grid).

    x_ref    : (B, S)      raw input (INPUT_DIM == 1, trailing unit dim dropped)
    wih0_ref : (3, 1, H)   layer-0 input weights, gates [r|z|n] on leading axis
    whh0_ref : (3, H, H)   layer-0 recurrent weights, per-gate, pre-transposed
    bgi0_ref : (3, 1, H)   per-gate hoisted bias: [b_ir+b_hr, b_iz+b_hz, b_in]
    bhn0_ref : (1, H)      b_hn (stays inside the r*(.) term)
    wih1/whh1/bgi1/bhn1    same for layer 1 (wih1 is (3, H, H))
    wfc_ref  : (H, O), bfc_ref : (1, O)
    out_ref  : (B, O)      only the final time step's output leaves the kernel
    """
    B, S = x_ref.shape
    H = whh0_ref.shape[1]

    xv = x_ref[...]                                          # (B, S)

    # Per-gate weights/biases: leading-axis indexing of the refs is free.
    wih0 = [wih0_ref[g] for g in range(3)]                   # (1, H) each
    whh0 = [whh0_ref[g] for g in range(3)]                   # (H, H) each
    bgi0 = [bgi0_ref[g] for g in range(3)]                   # (1, H) each
    bhn0 = bhn0_ref[...]
    wih1 = [wih1_ref[g] for g in range(3)]                   # (H, H) each
    whh1 = [whh1_ref[g] for g in range(3)]
    bgi1 = [bgi1_ref[g] for g in range(3)]
    bhn1 = bhn1_ref[...]

    def cell(gi_r, gi_z, gi_n, h, whh, bhn):
        # One GRU cell step. Gates are separate (B, H) tiles, so no lane-offset
        # extraction sits on the serial chain; the z branch is off the
        # h -> gh_r -> r -> n critical path until the final blend.
        gh_r = jnp.dot(h, whh[0], preferred_element_type=jnp.float32)
        gh_z = jnp.dot(h, whh[1], preferred_element_type=jnp.float32)
        gh_n = jnp.dot(h, whh[2], preferred_element_type=jnp.float32)
        r = _sigmoid(gi_r + gh_r)
        z = _sigmoid(gi_z + gh_z)
        n = jnp.tanh(gi_n + r * (gh_n + bhn))
        return n + z * (h - n)                               # == (1-z)*n + z*h

    h0 = jnp.zeros((B, H), jnp.float32)
    h1 = jnp.zeros((B, H), jnp.float32)

    # Fully unrolled and interleaved: layer-1 step t only depends on layer-0
    # step t and h1[t-1], so the scheduler overlaps layer-0 step t+1 with
    # layer-1 step t.  Do NOT convert this to a grid axis or a rolled loop —
    # the recurrence is strictly serial.
    for t in range(S):                                        # static unroll
        x_t = xv[:, t:t + 1]                                  # (B, 1), static slice
        # layer-0 input projection: F == 1 -> pure VPU broadcast multiply
        gi0_r = x_t * wih0[0] + bgi0[0]
        gi0_z = x_t * wih0[1] + bgi0[1]
        gi0_n = x_t * wih0[2] + bgi0[2]
        h0 = cell(gi0_r, gi0_z, gi0_n, h0, whh0, bhn0)

        # layer-1 input projection from the fresh layer-0 hidden state
        gi1_r = jnp.dot(h0, wih1[0], preferred_element_type=jnp.float32) + bgi1[0]
        gi1_z = jnp.dot(h0, wih1[1], preferred_element_type=jnp.float32) + bgi1[1]
        gi1_n = jnp.dot(h0, wih1[2], preferred_element_type=jnp.float32) + bgi1[2]
        h1 = cell(gi1_r, gi1_z, gi1_n, h1, whh1, bhn1)

    # FC on the final hidden state only.
    out_ref[...] = (jnp.dot(h1, wfc_ref[...], preferred_element_type=jnp.float32)
                    + bfc_ref[...])


def gru_model_forward(kparams, x):
    """x: (B, S, INPUT_DIM), batch_first like the PyTorch module."""
    B, S, F = x.shape
    # Guard: the broadcast input projection in the kernel is only valid for F==1.
    assert F == INPUT_DIM == 1, "fused kernel requires INPUT_DIM == 1"
    x2d = x.reshape(B, S).astype(jnp.float32)     # drop trailing unit dim (bitcast)
    n_in = 1 + len(kparams)
    return pl.pallas_call(
        fused_gru_fc_kernel,
        out_shape=jax.ShapeDtypeStruct((B, OUTPUT_DIM), jnp.float32),
        in_specs=[pl.BlockSpec(memory_space=pltpu.MemorySpace.VMEM)] * n_in,
        out_specs=pl.BlockSpec(memory_space=pltpu.MemorySpace.VMEM),
    )(x2d, *kparams)


# ----------------------------- parameter init --------------------------------
def init_params(key):
    """Deterministic init mimicking PyTorch's U(-1/sqrt(H), 1/sqrt(H)), stored
    in PyTorch orientation (w_ih: (3H, in), w_hh: (3H, H), fc.w: (O, H))."""
    params = {"gru": [], "fc": {}}
    bound = 1.0 / math.sqrt(HIDDEN_DIM)
    for layer in range(NUM_LAYERS):
        in_dim = INPUT_DIM if layer == 0 else HIDDEN_DIM
        key, k1, k2, k3, k4 = jax.random.split(key, 5)
        w_ih = jax.random.uniform(k1, (3 * HIDDEN_DIM, in_dim),
                                  minval=-bound, maxval=bound, dtype=jnp.float32)
        w_hh = jax.random.uniform(k2, (3 * HIDDEN_DIM, HIDDEN_DIM),
                                  minval=-bound, maxval=bound, dtype=jnp.float32)
        b_ih = jax.random.uniform(k3, (3 * HIDDEN_DIM,),
                                  minval=-bound, maxval=bound, dtype=jnp.float32)
        b_hh = jax.random.uniform(k4, (3 * HIDDEN_DIM,),
                                  minval=-bound, maxval=bound, dtype=jnp.float32)
        params["gru"].append(dict(w_ih=w_ih, w_hh=w_hh, b_ih=b_ih, b_hh=b_hh))
    key, k5, k6 = jax.random.split(key, 3)
    params["fc"]["w"] = jax.random.uniform(k5, (OUTPUT_DIM, HIDDEN_DIM),
                                           minval=-bound, maxval=bound, dtype=jnp.float32)
    params["fc"]["b"] = jax.random.uniform(k6, (OUTPUT_DIM,),
                                           minval=-bound, maxval=bound, dtype=jnp.float32)
    return params


def prepare_kernel_params(params):
    """One-time conversion to kernel layout: per-gate (r|z|n) weight stacks on a
    leading axis, transposed weights, and pre-summed biases."""
    H = HIDDEN_DIM
    kp = []
    for layer in range(NUM_LAYERS):
        p = params["gru"][layer]
        w_ih, w_hh = p["w_ih"], p["w_hh"]
        b_ih, b_hh = p["b_ih"], p["b_hh"]
        wih = jnp.stack([w_ih[:H].T, w_ih[H:2 * H].T, w_ih[2 * H:].T])     # (3, in, H)
        whh = jnp.stack([w_hh[:H].T, w_hh[H:2 * H].T, w_hh[2 * H:].T])     # (3, H, H)
        # r/z biases fully folded into the input projection; n keeps b_hn inside r*(.)
        bgi = jnp.stack([(b_ih[:H] + b_hh[:H]).reshape(1, H),
                         (b_ih[H:2 * H] + b_hh[H:2 * H]).reshape(1, H),
                         b_ih[2 * H:].reshape(1, H)])                      # (3, 1, H)
        bhn = b_hh[2 * H:].reshape(1, H)                                   # (1, H)
        kp += [wih, whh, bgi, bhn]
    kp += [params["fc"]["w"].T, params["fc"]["b"].reshape(1, OUTPUT_DIM)]
    return tuple(kp)


# ----------------------------- pure-JAX reference ----------------------------
def gru_model_reference(params, x):
    B = x.shape[0]
    h_seq = jnp.transpose(x, (1, 0, 2)).astype(jnp.float32)
    for layer in range(NUM_LAYERS):
        p = params["gru"][layer]
        H = HIDDEN_DIM

        def step(h_prev, x_t):
            gi = x_t @ p["w_ih"].T + p["b_ih"]
            gh = h_prev @ p["w_hh"].T + p["b_hh"]
            i_r, i_z, i_n = gi[:, :H], gi[:, H:2 * H], gi[:, 2 * H:]
            h_r, h_z, h_n = gh[:, :H], gh[:, H:2 * H], gh[:, 2 * H:]
            r = jax.nn.sigmoid(i_r + h_r)
            z = jax.nn.sigmoid(i_z + h_z)
            n = jnp.tanh(i_n + r * h_n)
            h_new = (1.0 - z) * n + z * h_prev
            return h_new, h_new

        h0 = jnp.zeros((B, H), jnp.float32)
        _, h_seq = jax.lax.scan(step, h0, h_seq)
    return h_seq[-1] @ params["fc"]["w"].T + params["fc"]["b"]


if __name__ == "__main__":
    key = jax.random.PRNGKey(0)
    pkey, xkey = jax.random.split(key)
    params = init_params(pkey)
    kparams = prepare_kernel_params(params)
    x = jax.random.normal(xkey, (BATCH, SEQ, INPUT_DIM), dtype=jnp.float32)

    fwd = jax.jit(gru_model_forward)
    out = jax.block_until_ready(fwd(kparams, x))

    ref = jax.block_until_ready(gru_model_reference(params, x))
    assert out.shape == (BATCH, OUTPUT_DIM)
    assert jnp.allclose(out, ref, atol=1e-5, rtol=1e-5), (out, ref)

    print("KERNEL_OK")
</pallas_src>

<mosaic_0001>
module attributes {stable_mosaic.version = 11 : i64} {
  func.func @fused_gru_fc_kernel(%arg0: memref<2x8xf32, #tpu.memory_space<vmem>>, %arg1: memref<3x1x32xf32, #tpu.memory_space<vmem>>, %arg2: memref<3x32x32xf32, #tpu.memory_space<vmem>>, %arg3: memref<3x1x32xf32, #tpu.memory_space<vmem>>, %arg4: memref<1x32xf32, #tpu.memory_space<vmem>>, %arg5: memref<3x32x32xf32, #tpu.memory_space<vmem>>, %arg6: memref<3x32x32xf32, #tpu.memory_space<vmem>>, %arg7: memref<3x1x32xf32, #tpu.memory_space<vmem>>, %arg8: memref<1x32xf32, #tpu.memory_space<vmem>>, %arg9: memref<32x3xf32, #tpu.memory_space<vmem>>, %arg10: memref<1x3xf32, #tpu.memory_space<vmem>>, %arg11: memref<2x3xf32, #tpu.memory_space<vmem>>) attributes {dimension_semantics = [], scalar_prefetch = 0 : i64, scratch_operands = 0 : i64, tpu.core_type = #tpu.core_type<tc>} {
    %c0 = arith.constant 0 : index
    %c0_0 = arith.constant 0 : index
    %0 = vector.load %arg0[%c0, %c0_0] : memref<2x8xf32, #tpu.memory_space<vmem>>, vector<2x8xf32>
    %c0_1 = arith.constant 0 : index
    %c0_2 = arith.constant 0 : index
    %c0_3 = arith.constant 0 : index
    %1 = vector.load %arg1[%c0_1, %c0_2, %c0_3] : memref<3x1x32xf32, #tpu.memory_space<vmem>>, vector<1x1x32xf32>
    %2 = vector.shape_cast %1 : vector<1x1x32xf32> to vector<1x32xf32>
    %c1 = arith.constant 1 : index
    %c0_4 = arith.constant 0 : index
    %c0_5 = arith.constant 0 : index
    %3 = vector.load %arg1[%c1, %c0_4, %c0_5] : memref<3x1x32xf32, #tpu.memory_space<vmem>>, vector<1x1x32xf32>
    %4 = vector.shape_cast %3 : vector<1x1x32xf32> to vector<1x32xf32>
    %c2 = arith.constant 2 : index
    %c0_6 = arith.constant 0 : index
    %c0_7 = arith.constant 0 : index
    %5 = vector.load %arg1[%c2, %c0_6, %c0_7] : memref<3x1x32xf32, #tpu.memory_space<vmem>>, vector<1x1x32xf32>
    %6 = vector.shape_cast %5 : vector<1x1x32xf32> to vector<1x32xf32>
    %c0_8 = arith.constant 0 : index
    %c0_9 = arith.constant 0 : index
    %c0_10 = arith.constant 0 : index
    %7 = vector.load %arg2[%c0_8, %c0_9, %c0_10] : memref<3x32x32xf32, #tpu.memory_space<vmem>>, vector<1x32x32xf32>
    %8 = vector.shape_cast %7 : vector<1x32x32xf32> to vector<32x32xf32>
    %c1_11 = arith.constant 1 : index
    %c0_12 = arith.constant 0 : index
    %c0_13 = arith.constant 0 : index
    %9 = vector.load %arg2[%c1_11, %c0_12, %c0_13] : memref<3x32x32xf32, #tpu.memory_space<vmem>>, vector<1x32x32xf32>
    %10 = vector.shape_cast %9 : vector<1x32x32xf32> to vector<32x32xf32>
    %c2_14 = arith.constant 2 : index
    %c0_15 = arith.constant 0 : index
    %c0_16 = arith.constant 0 : index
    %11 = vector.load %arg2[%c2_14, %c0_15, %c0_16] : memref<3x32x32xf32, #tpu.memory_space<vmem>>, vector<1x32x32xf32>
    %12 = vector.shape_cast %11 : vector<1x32x32xf32> to vector<32x32xf32>
    %c0_17 = arith.constant 0 : index
    %c0_18 = arith.constant 0 : index
    %c0_19 = arith.constant 0 : index
    %13 = vector.load %arg3[%c0_17, %c0_18, %c0_19] : memref<3x1x32xf32, #tpu.memory_space<vmem>>, vector<1x1x32xf32>
    %14 = vector.shape_cast %13 : vector<1x1x32xf32> to vector<1x32xf32>
    %c1_20 = arith.constant 1 : index
    %c0_21 = arith.constant 0 : index
    %c0_22 = arith.constant 0 : index
    %15 = vector.load %arg3[%c1_20, %c0_21, %c0_22] : memref<3x1x32xf32, #tpu.memory_space<vmem>>, vector<1x1x32xf32>
    %16 = vector.shape_cast %15 : vector<1x1x32xf32> to vector<1x32xf32>
    %c2_23 = arith.constant 2 : index
    %c0_24 = arith.constant 0 : index
    %c0_25 = arith.constant 0 : index
    %17 = vector.load %arg3[%c2_23, %c0_24, %c0_25] : memref<3x1x32xf32, #tpu.memory_space<vmem>>, vector<1x1x32xf32>
    %18 = vector.shape_cast %17 : vector<1x1x32xf32> to vector<1x32xf32>
    %c0_26 = arith.constant 0 : index
    %c0_27 = arith.constant 0 : index
    %19 = vector.load %arg4[%c0_26, %c0_27] : memref<1x32xf32, #tpu.memory_space<vmem>>, vector<1x32xf32>
    %c0_28 = arith.constant 0 : index
    %c0_29 = arith.constant 0 : index
    %c0_30 = arith.constant 0 : index
    %20 = vector.load %arg5[%c0_28, %c0_29, %c0_30] : memref<3x32x32xf32, #tpu.memory_space<vmem>>, vector<1x32x32xf32>
    %21 = vector.shape_cast %20 : vector<1x32x32xf32> to vector<32x32xf32>
    %c1_31 = arith.constant 1 : index
    %c0_32 = arith.constant 0 : index
    %c0_33 = arith.constant 0 : index
    %22 = vector.load %arg5[%c1_31, %c0_32, %c0_33] : memref<3x32x32xf32, #tpu.memory_space<vmem>>, vector<1x32x32xf32>
    %23 = vector.shape_cast %22 : vector<1x32x32xf32> to vector<32x32xf32>
    %c2_34 = arith.constant 2 : index
    %c0_35 = arith.constant 0 : index
    %c0_36 = arith.constant 0 : index
    %24 = vector.load %arg5[%c2_34, %c0_35, %c0_36] : memref<3x32x32xf32, #tpu.memory_space<vmem>>, vector<1x32x32xf32>
    %25 = vector.shape_cast %24 : vector<1x32x32xf32> to vector<32x32xf32>
    %c0_37 = arith.constant 0 : index
    %c0_38 = arith.constant 0 : index
    %c0_39 = arith.constant 0 : index
    %26 = vector.load %arg6[%c0_37, %c0_38, %c0_39] : memref<3x32x32xf32, #tpu.memory_space<vmem>>, vector<1x32x32xf32>
    %27 = vector.shape_cast %26 : vector<1x32x32xf32> to vector<32x32xf32>
    %c1_40 = arith.constant 1 : index
    %c0_41 = arith.constant 0 : index
    %c0_42 = arith.constant 0 : index
    %28 = vector.load %arg6[%c1_40, %c0_41, %c0_42] : memref<3x32x32xf32, #tpu.memory_space<vmem>>, vector<1x32x32xf32>
    %29 = vector.shape_cast %28 : vector<1x32x32xf32> to vector<32x32xf32>
    %c2_43 = arith.constant 2 : index
    %c0_44 = arith.constant 0 : index
    %c0_45 = arith.constant 0 : index
    %30 = vector.load %arg6[%c2_43, %c0_44, %c0_45] : memref<3x32x32xf32, #tpu.memory_space<vmem>>, vector<1x32x32xf32>
    %31 = vector.shape_cast %30 : vector<1x32x32xf32> to vector<32x32xf32>
    %c0_46 = arith.constant 0 : index
    %c0_47 = arith.constant 0 : index
    %c0_48 = arith.constant 0 : index
    %32 = vector.load %arg7[%c0_46, %c0_47, %c0_48] : memref<3x1x32xf32, #tpu.memory_space<vmem>>, vector<1x1x32xf32>
    %33 = vector.shape_cast %32 : vector<1x1x32xf32> to vector<1x32xf32>
    %c1_49 = arith.constant 1 : index
    %c0_50 = arith.constant 0 : index
    %c0_51 = arith.constant 0 : index
    %34 = vector.load %arg7[%c1_49, %c0_50, %c0_51] : memref<3x1x32xf32, #tpu.memory_space<vmem>>, vector<1x1x32xf32>
    %35 = vector.shape_cast %34 : vector<1x1x32xf32> to vector<1x32xf32>
    %c2_52 = arith.constant 2 : index
    %c0_53 = arith.constant 0 : index
    %c0_54 = arith.constant 0 : index
    %36 = vector.load %arg7[%c2_52, %c0_53, %c0_54] : memref<3x1x32xf32, #tpu.memory_space<vmem>>, vector<1x1x32xf32>
    %37 = vector.shape_cast %36 : vector<1x1x32xf32> to vector<1x32xf32>
    %c0_55 = arith.constant 0 : index
    %c0_56 = arith.constant 0 : index
    %38 = vector.load %arg8[%c0_55, %c0_56] : memref<1x32xf32, #tpu.memory_space<vmem>>, vector<1x32xf32>
    %cst = arith.constant 0.000000e+00 : f32
    %39 = vector.broadcast %cst : f32 to vector<2x32xf32>
    %cst_57 = arith.constant 0.000000e+00 : f32
    %40 = vector.broadcast %cst_57 : f32 to vector<2x32xf32>
    %41 = vector.extract_strided_slice %0 {offsets = [0, 0], sizes = [2, 1], strides = [1, 1]} : vector<2x8xf32> to vector<2x1xf32>
    %42 = vector.broadcast %41 : vector<2x1xf32> to vector<2x32xf32>
    %43 = vector.broadcast %2 : vector<1x32xf32> to vector<2x32xf32>
    %44 = arith.mulf %42, %43 : vector<2x32xf32>
    %45 = vector.broadcast %14 : vector<1x32xf32> to vector<2x32xf32>
    %46 = arith.addf %44, %45 : vector<2x32xf32>
    %47 = vector.broadcast %41 : vector<2x1xf32> to vector<2x32xf32>
    %48 = vector.broadcast %4 : vector<1x32xf32> to vector<2x32xf32>
    %49 = arith.mulf %47, %48 : vector<2x32xf32>
    %50 = vector.broadcast %16 : vector<1x32xf32> to vector<2x32xf32>
    %51 = arith.addf %49, %50 : vector<2x32xf32>
    %52 = vector.broadcast %41 : vector<2x1xf32> to vector<2x32xf32>
    %53 = vector.broadcast %6 : vector<1x32xf32> to vector<2x32xf32>
    %54 = arith.mulf %52, %53 : vector<2x32xf32>
    %55 = vector.broadcast %18 : vector<1x32xf32> to vector<2x32xf32>
    %56 = arith.addf %54, %55 : vector<2x32xf32>
    %cst_58 = arith.constant dense<0.000000e+00> : vector<2x32xf32>
    %57 = tpu.matmul %39, %8, %cst_58 {dimension_numbers = #tpu.dot_dimension_numbers<[1], [0], [0], [1], [0, 0, 1, 1], [], []>} : vector<2x32xf32>, vector<32x32xf32>, vector<2x32xf32> -> vector<2x32xf32>
    %cst_59 = arith.constant dense<0.000000e+00> : vector<2x32xf32>
    %58 = tpu.matmul %39, %10, %cst_59 {dimension_numbers = #tpu.dot_dimension_numbers<[1], [0], [0], [1], [0, 0, 1, 1], [], []>} : vector<2x32xf32>, vector<32x32xf32>, vector<2x32xf32> -> vector<2x32xf32>
    %cst_60 = arith.constant dense<0.000000e+00> : vector<2x32xf32>
    %59 = tpu.matmul %39, %12, %cst_60 {dimension_numbers = #tpu.dot_dimension_numbers<[1], [0], [0], [1], [0, 0, 1, 1], [], []>} : vector<2x32xf32>, vector<32x32xf32>, vector<2x32xf32> -> vector<2x32xf32>
    %60 = arith.addf %46, %57 : vector<2x32xf32>
    %cst_61 = arith.constant 5.000000e-01 : f32
    %61 = vector.broadcast %cst_61 : f32 to vector<2x32xf32>
    %62 = arith.mulf %61, %60 : vector<2x32xf32>
    %63 = math.tanh %62 : vector<2x32xf32>
    %cst_62 = arith.constant 5.000000e-01 : f32
    %64 = vector.broadcast %cst_62 : f32 to vector<2x32xf32>
    %65 = arith.mulf %64, %63 : vector<2x32xf32>
    %cst_63 = arith.constant 5.000000e-01 : f32
    %66 = vector.broadcast %cst_63 : f32 to vector<2x32xf32>
    %67 = arith.addf %65, %66 : vector<2x32xf32>
    %68 = arith.addf %51, %58 : vector<2x32xf32>
    %cst_64 = arith.constant 5.000000e-01 : f32
    %69 = vector.broadcast %cst_64 : f32 to vector<2x32xf32>
    %70 = arith.mulf %69, %68 : vector<2x32xf32>
    %71 = math.tanh %70 : vector<2x32xf32>
    %cst_65 = arith.constant 5.000000e-01 : f32
    %72 = vector.broadcast %cst_65 : f32 to vector<2x32xf32>
    %73 = arith.mulf %72, %71 : vector<2x32xf32>
    %cst_66 = arith.constant 5.000000e-01 : f32
    %74 = vector.broadcast %cst_66 : f32 to vector<2x32xf32>
    %75 = arith.addf %73, %74 : vector<2x32xf32>
    %76 = vector.broadcast %19 : vector<1x32xf32> to vector<2x32xf32>
    %77 = arith.addf %59, %76 : vector<2x32xf32>
    %78 = arith.mulf %67, %77 : vector<2x32xf32>
    %79 = arith.addf %56, %78 : vector<2x32xf32>
    %80 = math.tanh %79 : vector<2x32xf32>
    %81 = arith.subf %39, %80 : vector<2x32xf32>
    %82 = arith.mulf %75, %81 : vector<2x32xf32>
    %83 = arith.addf %80, %82 : vector<2x32xf32>
    %cst_67 = arith.constant dense<0.000000e+00> : vector<2x32xf32>
    %84 = tpu.matmul %83, %21, %cst_67 {dimension_numbers = #tpu.dot_dimension_numbers<[1], [0], [0], [1], [0, 0, 1, 1], [], []>} : vector<2x32xf32>, vector<32x32xf32>, vector<2x32xf32> -> vector<2x32xf32>
    %85 = vector.broadcast %33 : vector<1x32xf32> to vector<2x32xf32>
    %86 = arith.addf %84, %85 : vector<2x32xf32>
    %cst_68 = arith.constant dense<0.000000e+00> : vector<2x32xf32>
    %87 = tpu.matmul %83, %23, %cst_68 {dimension_numbers = #tpu.dot_dimension_numbers<[1], [0], [0], [1], [0, 0, 1, 1], [], []>} : vector<2x32xf32>, vector<32x32xf32>, vector<2x32xf32> -> vector<2x32xf32>
    %88 = vector.broadcast %35 : vector<1x32xf32> to vector<2x32xf32>
    %89 = arith.addf %87, %88 : vector<2x32xf32>
    %cst_69 = arith.constant dense<0.000000e+00> : vector<2x32xf32>
    %90 = tpu.matmul %83, %25, %cst_69 {dimension_numbers = #tpu.dot_dimension_numbers<[1], [0], [0], [1], [0, 0, 1, 1], [], []>} : vector<2x32xf32>, vector<32x32xf32>, vector<2x32xf32> -> vector<2x32xf32>
    %91 = vector.broadcast %37 : vector<1x32xf32> to vector<2x32xf32>
    %92 = arith.addf %90, %91 : vector<2x32xf32>
    %cst_70 = arith.constant dense<0.000000e+00> : vector<2x32xf32>
    %93 = tpu.matmul %40, %27, %cst_70 {dimension_numbers = #tpu.dot_dimension_numbers<[1], [0], [0], [1], [0, 0, 1, 1], [], []>} : vector<2x32xf32>, vector<32x32xf32>, vector<2x32xf32> -> vector<2x32xf32>
    %cst_71 = arith.constant dense<0.000000e+00> : vector<2x32xf32>
    %94 = tpu.matmul %40, %29, %cst_71 {dimension_numbers = #tpu.dot_dimension_numbers<[1], [0], [0], [1], [0, 0, 1, 1], [], []>} : vector<2x32xf32>, vector<32x32xf32>, vector<2x32xf32> -> vector<2x32xf32>
    %cst_72 = arith.constant dense<0.000000e+00> : vector<2x32xf32>
    %95 = tpu.matmul %40, %31, %cst_72 {dimension_numbers = #tpu.dot_dimension_numbers<[1], [0], [0], [1], [0, 0, 1, 1], [], []>} : vector<2x32xf32>, vector<32x32xf32>, vector<2x32xf32> -> vector<2x32xf32>
    %96 = arith.addf %86, %93 : vector<2x32xf32>
    %cst_73 = arith.constant 5.000000e-01 : f32
    %97 = vector.broadcast %cst_73 : f32 to vector<2x32xf32>
    %98 = arith.mulf %97, %96 : vector<2x32xf32>
    %99 = math.tanh %98 : vector<2x32xf32>
    %cst_74 = arith.constant 5.000000e-01 : f32
    %100 = vector.broadcast %cst_74 : f32 to vector<2x32xf32>
    %101 = arith.mulf %100, %99 : vector<2x32xf32>
    %cst_75 = arith.constant 5.000000e-01 : f32
    %102 = vector.broadcast %cst_75 : f32 to vector<2x32xf32>
    %103 = arith.addf %101, %102 : vector<2x32xf32>
    %104 = arith.addf %89, %94 : vector<2x32xf32>
    %cst_76 = arith.constant 5.000000e-01 : f32
    %105 = vector.broadcast %cst_76 : f32 to vector<2x32xf32>
    %106 = arith.mulf %105, %104 : vector<2x32xf32>
    %107 = math.tanh %106 : vector<2x32xf32>
    %cst_77 = arith.constant 5.000000e-01 : f32
    %108 = vector.broadcast %cst_77 : f32 to vector<2x32xf32>
    %109 = arith.mulf %108, %107 : vector<2x32xf32>
    %cst_78 = arith.constant 5.000000e-01 : f32
    %110 = vector.broadcast %cst_78 : f32 to vector<2x32xf32>
    %111 = arith.addf %109, %110 : vector<2x32xf32>
    %112 = vector.broadcast %38 : vector<1x32xf32> to vector<2x32xf32>
    %113 = arith.addf %95, %112 : vector<2x32xf32>
    %114 = arith.mulf %103, %113 : vector<2x32xf32>
    %115 = arith.addf %92, %114 : vector<2x32xf32>
    %116 = math.tanh %115 : vector<2x32xf32>
    %117 = arith.subf %40, %116 : vector<2x32xf32>
    %118 = arith.mulf %111, %117 : vector<2x32xf32>
    %119 = arith.addf %116, %118 : vector<2x32xf32>
    %120 = vector.extract_strided_slice %0 {offsets = [0, 1], sizes = [2, 1], strides = [1, 1]} : vector<2x8xf32> to vector<2x1xf32>
    %121 = vector.broadcast %120 : vector<2x1xf32> to vector<2x32xf32>
    %122 = vector.broadcast %2 : vector<1x32xf32> to vector<2x32xf32>
    %123 = arith.mulf %121, %122 : vector<2x32xf32>
    %124 = vector.broadcast %14 : vector<1x32xf32> to vector<2x32xf32>
    %125 = arith.addf %123, %124 : vector<2x32xf32>
    %126 = vector.broadcast %120 : vector<2x1xf32> to vector<2x32xf32>
    %127 = vector.broadcast %4 : vector<1x32xf32> to vector<2x32xf32>
    %128 = arith.mulf %126, %127 : vector<2x32xf32>
    %129 = vector.broadcast %16 : vector<1x32xf32> to vector<2x32xf32>
    %130 = arith.addf %128, %129 : vector<2x32xf32>
    %131 = vector.broadcast %120 : vector<2x1xf32> to vector<2x32xf32>
    %132 = vector.broadcast %6 : vector<1x32xf32> to vector<2x32xf32>
    %133 = arith.mulf %131, %132 : vector<2x32xf32>
    %134 = vector.broadcast %18 : vector<1x32xf32> to vector<2x32xf32>
    %135 = arith.addf %133, %134 : vector<2x32xf32>
    %cst_79 = arith.constant dense<0.000000e+00> : vector<2x32xf32>
    %136 = tpu.matmul %83, %8, %cst_79 {dimension_numbers = #tpu.dot_dimension_numbers<[1], [0], [0], [1], [0, 0, 1, 1], [], []>} : vector<2x32xf32>, vector<32x32xf32>, vector<2x32xf32> -> vector<2x32xf32>
    %cst_80 = arith.constant dense<0.000000e+00> : vector<2x32xf32>
    %137 = tpu.matmul %83, %10, %cst_80 {dimension_numbers = #tpu.dot_dimension_numbers<[1], [0], [0], [1], [0, 0, 1, 1], [], []>} : vector<2x32xf32>, vector<32x32xf32>, vector<2x32xf32> -> vector<2x32xf32>
    %cst_81 = arith.constant dense<0.000000e+00> : vector<2x32xf32>
    %138 = tpu.matmul %83, %12, %cst_81 {dimension_numbers = #tpu.dot_dimension_numbers<[1], [0], [0], [1], [0, 0, 1, 1], [], []>} : vector<2x32xf32>, vector<32x32xf32>, vector<2x32xf32> -> vector<2x32xf32>
    %139 = arith.addf %125, %136 : vector<2x32xf32>
    %cst_82 = arith.constant 5.000000e-01 : f32
    %140 = vector.broadcast %cst_82 : f32 to vector<2x32xf32>
    %141 = arith.mulf %140, %139 : vector<2x32xf32>
    %142 = math.tanh %141 : vector<2x32xf32>
    %cst_83 = arith.constant 5.000000e-01 : f32
    %143 = vector.broadcast %cst_83 : f32 to vector<2x32xf32>
    %144 = arith.mulf %143, %142 : vector<2x32xf32>
    %cst_84 = arith.constant 5.000000e-01 : f32
    %145 = vector.broadcast %cst_84 : f32 to vector<2x32xf32>
    %146 = arith.addf %144, %145 : vector<2x32xf32>
    %147 = arith.addf %130, %137 : vector<2x32xf32>
    %cst_85 = arith.constant 5.000000e-01 : f32
    %148 = vector.broadcast %cst_85 : f32 to vector<2x32xf32>
    %149 = arith.mulf %148, %147 : vector<2x32xf32>
    %150 = math.tanh %149 : vector<2x32xf32>
    %cst_86 = arith.constant 5.000000e-01 : f32
    %151 = vector.broadcast %cst_86 : f32 to vector<2x32xf32>
    %152 = arith.mulf %151, %150 : vector<2x32xf32>
    %cst_87 = arith.constant 5.000000e-01 : f32
    %153 = vector.broadcast %cst_87 : f32 to vector<2x32xf32>
    %154 = arith.addf %152, %153 : vector<2x32xf32>
    %155 = vector.broadcast %19 : vector<1x32xf32> to vector<2x32xf32>
    %156 = arith.addf %138, %155 : vector<2x32xf32>
    %157 = arith.mulf %146, %156 : vector<2x32xf32>
    %158 = arith.addf %135, %157 : vector<2x32xf32>
    %159 = math.tanh %158 : vector<2x32xf32>
    %160 = arith.subf %83, %159 : vector<2x32xf32>
    %161 = arith.mulf %154, %160 : vector<2x32xf32>
    %162 = arith.addf %159, %161 : vector<2x32xf32>
    %cst_88 = arith.constant dense<0.000000e+00> : vector<2x32xf32>
    %163 = tpu.matmul %162, %21, %cst_88 {dimension_numbers = #tpu.dot_dimension_numbers<[1], [0], [0], [1], [0, 0, 1, 1], [], []>} : vector<2x32xf32>, vector<32x32xf32>, vector<2x32xf32> -> vector<2x32xf32>
    %164 = vector.broadcast %33 : vector<1x32xf32> to vector<2x32xf32>
    %165 = arith.addf %163, %164 : vector<2x32xf32>
    %cst_89 = arith.constant dense<0.000000e+00> : vector<2x32xf32>
    %166 = tpu.matmul %162, %23, %cst_89 {dimension_numbers = #tpu.dot_dimension_numbers<[1], [0], [0], [1], [0, 0, 1, 1], [], []>} : vector<2x32xf32>, vector<32x32xf32>, vector<2x32xf32> -> vector<2x32xf32>
    %167 = vector.broadcast %35 : vector<1x32xf32> to vector<2x32xf32>
    %168 = arith.addf %166, %167 : vector<2x32xf32>
    %cst_90 = arith.constant dense<0.000000e+00> : vector<2x32xf32>
    %169 = tpu.matmul %162, %25, %cst_90 {dimension_numbers = #tpu.dot_dimension_numbers<[1], [0], [0], [1], [0, 0, 1, 1], [], []>} : vector<2x32xf32>, vector<32x32xf32>, vector<2x32xf32> -> vector<2x32xf32>
    %170 = vector.broadcast %37 : vector<1x32xf32> to vector<2x32xf32>
    %171 = arith.addf %169, %170 : vector<2x32xf32>
    %cst_91 = arith.constant dense<0.000000e+00> : vector<2x32xf32>
    %172 = tpu.matmul %119, %27, %cst_91 {dimension_numbers = #tpu.dot_dimension_numbers<[1], [0], [0], [1], [0, 0, 1, 1], [], []>} : vector<2x32xf32>, vector<32x32xf32>, vector<2x32xf32> -> vector<2x32xf32>
    %cst_92 = arith.constant dense<0.000000e+00> : vector<2x32xf32>
    %173 = tpu.matmul %119, %29, %cst_92 {dimension_numbers = #tpu.dot_dimension_numbers<[1], [0], [0], [1], [0, 0, 1, 1], [], []>} : vector<2x32xf32>, vector<32x32xf32>, vector<2x32xf32> -> vector<2x32xf32>
    %cst_93 = arith.constant dense<0.000000e+00> : vector<2x32xf32>
    %174 = tpu.matmul %119, %31, %cst_93 {dimension_numbers = #tpu.dot_dimension_numbers<[1], [0], [0], [1], [0, 0, 1, 1], [], []>} : vector<2x32xf32>, vector<32x32xf32>, vector<2x32xf32> -> vector<2x32xf32>
    %175 = arith.addf %165, %172 : vector<2x32xf32>
    %cst_94 = arith.constant 5.000000e-01 : f32
    %176 = vector.broadcast %cst_94 : f32 to vector<2x32xf32>
    %177 = arith.mulf %176, %175 : vector<2x32xf32>
    %178 = math.tanh %177 : vector<2x32xf32>
    %cst_95 = arith.constant 5.000000e-01 : f32
    %179 = vector.broadcast %cst_95 : f32 to vector<2x32xf32>
    %180 = arith.mulf %179, %178 : vector<2x32xf32>
    %cst_96 = arith.constant 5.000000e-01 : f32
    %181 = vector.broadcast %cst_96 : f32 to vector<2x32xf32>
    %182 = arith.addf %180, %181 : vector<2x32xf32>
    %183 = arith.addf %168, %173 : vector<2x32xf32>
    %cst_97 = arith.constant 5.000000e-01 : f32
    %184 = vector.broadcast %cst_97 : f32 to vector<2x32xf32>
    %185 = arith.mulf %184, %183 : vector<2x32xf32>
    %186 = math.tanh %185 : vector<2x32xf32>
    %cst_98 = arith.constant 5.000000e-01 : f32
    %187 = vector.broadcast %cst_98 : f32 to vector<2x32xf32>
    %188 = arith.mulf %187, %186 : vector<2x32xf32>
    %cst_99 = arith.constant 5.000000e-01 : f32
    %189 = vector.broadcast %cst_99 : f32 to vector<2x32xf32>
    %190 = arith.addf %188, %189 : vector<2x32xf32>
    %191 = vector.broadcast %38 : vector<1x32xf32> to vector<2x32xf32>
    %192 = arith.addf %174, %191 : vector<2x32xf32>
    %193 = arith.mulf %182, %192 : vector<2x32xf32>
    %194 = arith.addf %171, %193 : vector<2x32xf32>
    %195 = math.tanh %194 : vector<2x32xf32>
    %196 = arith.subf %119, %195 : vector<2x32xf32>
    %197 = arith.mulf %190, %196 : vector<2x32xf32>
    %198 = arith.addf %195, %197 : vector<2x32xf32>
    %199 = vector.extract_strided_slice %0 {offsets = [0, 2], sizes = [2, 1], strides = [1, 1]} : vector<2x8xf32> to vector<2x1xf32>
    %200 = vector.broadcast %199 : vector<2x1xf32> to vector<2x32xf32>
    %201 = vector.broadcast %2 : vector<1x32xf32> to vector<2x32xf32>
    %202 = arith.mulf %200, %201 : vector<2x32xf32>
    %203 = vector.broadcast %14 : vector<1x32xf32> to vector<2x32xf32>
    %204 = arith.addf %202, %203 : vector<2x32xf32>
    %205 = vector.broadcast %199 : vector<2x1xf32> to vector<2x32xf32>
    %206 = vector.broadcast %4 : vector<1x32xf32> to vector<2x32xf32>
    %207 = arith.mulf %205, %206 : vector<2x32xf32>
    %208 = vector.broadcast %16 : vector<1x32xf32> to vector<2x32xf32>
    %209 = arith.addf %207, %208 : vector<2x32xf32>
    %210 = vector.broadcast %199 : vector<2x1xf32> to vector<2x32xf32>
    %211 = vector.broadcast %6 : vector<1x32xf32> to vector<2x32xf32>
    %212 = arith.mulf %210, %211 : vector<2x32xf32>
    %213 = vector.broadcast %18 : vector<1x32xf32> to vector<2x32xf32>
    %214 = arith.addf %212, %213 : vector<2x32xf32>
    %cst_100 = arith.constant dense<0.000000e+00> : vector<2x32xf32>
    %215 = tpu.matmul %162, %8, %cst_100 {dimension_numbers = #tpu.dot_dimension_numbers<[1], [0], [0], [1], [0, 0, 1, 1], [], []>} : vector<2x32xf32>, vector<32x32xf32>, vector<2x32xf32> -> vector<2x32xf32>
    %cst_101 = arith.constant dense<0.000000e+00> : vector<2x32xf32>
    %216 = tpu.matmul %162, %10, %cst_101 {dimension_numbers = #tpu.dot_dimension_numbers<[1], [0], [0], [1], [0, 0, 1, 1], [], []>} : vector<2x32xf32>, vector<32x32xf32>, vector<2x32xf32> -> vector<2x32xf32>
    %cst_102 = arith.constant dense<0.000000e+00> : vector<2x32xf32>
    %217 = tpu.matmul %162, %12, %cst_102 {dimension_numbers = #tpu.dot_dimension_numbers<[1], [0], [0], [1], [0, 0, 1, 1], [], []>} : vector<2x32xf32>, vector<32x32xf32>, vector<2x32xf32> -> vector<2x32xf32>
    %218 = arith.addf %204, %215 : vector<2x32xf32>
    %cst_103 = arith.constant 5.000000e-01 : f32
    %219 = vector.broadcast %cst_103 : f32 to vector<2x32xf32>
    %220 = arith.mulf %219, %218 : vector<2x32xf32>
    %221 = math.tanh %220 : vector<2x32xf32>
    %cst_104 = arith.constant 5.000000e-01 : f32
    %222 = vector.broadcast %cst_104 : f32 to vector<2x32xf32>
    %223 = arith.mulf %222, %221 : vector<2x32xf32>
    %cst_105 = arith.constant 5.000000e-01 : f32
    %224 = vector.broadcast %cst_105 : f32 to vector<2x32xf32>
    %225 = arith.addf %223, %224 : vector<2x32xf32>
    %226 = arith.addf %209, %216 : vector<2x32xf32>
    %cst_106 = arith.constant 5.000000e-01 : f32
    %227 = vector.broadcast %cst_106 : f32 to vector<2x32xf32>
    %228 = arith.mulf %227, %226 : vector<2x32xf32>
    %229 = math.tanh %228 : vector<2x32xf32>
    %cst_107 = arith.constant 5.000000e-01 : f32
    %230 = vector.broadcast %cst_107 : f32 to vector<2x32xf32>
    %231 = arith.mulf %230, %229 : vector<2x32xf32>
    %cst_108 = arith.constant 5.000000e-01 : f32
    %232 = vector.broadcast %cst_108 : f32 to vector<2x32xf32>
    %233 = arith.addf %231, %232 : vector<2x32xf32>
    %234 = vector.broadcast %19 : vector<1x32xf32> to vector<2x32xf32>
    %235 = arith.addf %217, %234 : vector<2x32xf32>
    %236 = arith.mulf %225, %235 : vector<2x32xf32>
    %237 = arith.addf %214, %236 : vector<2x32xf32>
    %238 = math.tanh %237 : vector<2x32xf32>
    %239 = arith.subf %162, %238 : vector<2x32xf32>
    %240 = arith.mulf %233, %239 : vector<2x32xf32>
    %241 = arith.addf %238, %240 : vector<2x32xf32>
    %cst_109 = arith.constant dense<0.000000e+00> : vector<2x32xf32>
    %242 = tpu.matmul %241, %21, %cst_109 {dimension_numbers = #tpu.dot_dimension_numbers<[1], [0], [0], [1], [0, 0, 1, 1], [], []>} : vector<2x32xf32>, vector<32x32xf32>, vector<2x32xf32> -> vector<2x32xf32>
    %243 = vector.broadcast %33 : vector<1x32xf32> to vector<2x32xf32>
    %244 = arith.addf %242, %243 : vector<2x32xf32>
    %cst_110 = arith.constant dense<0.000000e+00> : vector<2x32xf32>
    %245 = tpu.matmul %241, %23, %cst_110 {dimension_numbers = #tpu.dot_dimension_numbers<[1], [0], [0], [1], [0, 0, 1, 1], [], []>} : vector<2x32xf32>, vector<32x32xf32>, vector<2x32xf32> -> vector<2x32xf32>
    %246 = vector.broadcast %35 : vector<1x32xf32> to vector<2x32xf32>
    %247 = arith.addf %245, %246 : vector<2x32xf32>
    %cst_111 = arith.constant dense<0.000000e+00> : vector<2x32xf32>
    %248 = tpu.matmul %241, %25, %cst_111 {dimension_numbers = #tpu.dot_dimension_numbers<[1], [0], [0], [1], [0, 0, 1, 1], [], []>} : vector<2x32xf32>, vector<32x32xf32>, vector<2x32xf32> -> vector<2x32xf32>
    %249 = vector.broadcast %37 : vector<1x32xf32> to vector<2x32xf32>
    %250 = arith.addf %248, %249 : vector<2x32xf32>
    %cst_112 = arith.constant dense<0.000000e+00> : vector<2x32xf32>
    %251 = tpu.matmul %198, %27, %cst_112 {dimension_numbers = #tpu.dot_dimension_numbers<[1], [0], [0], [1], [0, 0, 1, 1], [], []>} : vector<2x32xf32>, vector<32x32xf32>, vector<2x32xf32> -> vector<2x32xf32>
    %cst_113 = arith.constant dense<0.000000e+00> : vector<2x32xf32>
    %252 = tpu.matmul %198, %29, %cst_113 {dimension_numbers = #tpu.dot_dimension_numbers<[1], [0], [0], [1], [0, 0, 1, 1], [], []>} : vector<2x32xf32>, vector<32x32xf32>, vector<2x32xf32> -> vector<2x32xf32>
    %cst_114 = arith.constant dense<0.000000e+00> : vector<2x32xf32>
    %253 = tpu.matmul %198, %31, %cst_114 {dimension_numbers = #tpu.dot_dimension_numbers<[1], [0], [0], [1], [0, 0, 1, 1], [], []>} : vector<2x32xf32>, vector<32x32xf32>, vector<2x32xf32> -> vector<2x32xf32>
    %254 = arith.addf %244, %251 : vector<2x32xf32>
    %cst_115 = arith.constant 5.000000e-01 : f32
    %255 = vector.broadcast %cst_115 : f32 to vector<2x32xf32>
    %256 = arith.mulf %255, %254 : vector<2x32xf32>
    %257 = math.tanh %256 : vector<2x32xf32>
    %cst_116 = arith.constant 5.000000e-01 : f32
    %258 = vector.broadcast %cst_116 : f32 to vector<2x32xf32>
    %259 = arith.mulf %258, %257 : vector<2x32xf32>
    %cst_117 = arith.constant 5.000000e-01 : f32
    %260 = vector.broadcast %cst_117 : f32 to vector<2x32xf32>
    %261 = arith.addf %259, %260 : vector<2x32xf32>
    %262 = arith.addf %247, %252 : vector<2x32xf32>
    %cst_118 = arith.constant 5.000000e-01 : f32
    %263 = vector.broadcast %cst_118 : f32 to vector<2x32xf32>
    %264 = arith.mulf %263, %262 : vector<2x32xf32>
    %265 = math.tanh %264 : vector<2x32xf32>
    %cst_119 = arith.constant 5.000000e-01 : f32
    %266 = vector.broadcast %cst_119 : f32 to vector<2x32xf32>
    %267 = arith.mulf %266, %265 : vector<2x32xf32>
    %cst_120 = arith.constant 5.000000e-01 : f32
    %268 = vector.broadcast %cst_120 : f32 to vector<2x32xf32>
    %269 = arith.addf %267, %268 : vector<2x32xf32>
    %270 = vector.broadcast %38 : vector<1x32xf32> to vector<2x32xf32>
    %271 = arith.addf %253, %270 : vector<2x32xf32>
    %272 = arith.mulf %261, %271 : vector<2x32xf32>
    %273 = arith.addf %250, %272 : vector<2x32xf32>
    %274 = math.tanh %273 : vector<2x32xf32>
    %275 = arith.subf %198, %274 : vector<2x32xf32>
    %276 = arith.mulf %269, %275 : vector<2x32xf32>
    %277 = arith.addf %274, %276 : vector<2x32xf32>
    %278 = vector.extract_strided_slice %0 {offsets = [0, 3], sizes = [2, 1], strides = [1, 1]} : vector<2x8xf32> to vector<2x1xf32>
    %279 = vector.broadcast %278 : vector<2x1xf32> to vector<2x32xf32>
    %280 = vector.broadcast %2 : vector<1x32xf32> to vector<2x32xf32>
    %281 = arith.mulf %279, %280 : vector<2x32xf32>
    %282 = vector.broadcast %14 : vector<1x32xf32> to vector<2x32xf32>
    %283 = arith.addf %281, %282 : vector<2x32xf32>
    %284 = vector.broadcast %278 : vector<2x1xf32> to vector<2x32xf32>
    %285 = vector.broadcast %4 : vector<1x32xf32> to vector<2x32xf32>
    %286 = arith.mulf %284, %285 : vector<2x32xf32>
    %287 = vector.broadcast %16 : vector<1x32xf32> to vector<2x32xf32>
    %288 = arith.addf %286, %287 : vector<2x32xf32>
    %289 = vector.broadcast %278 : vector<2x1xf32> to vector<2x32xf32>
    %290 = vector.broadcast %6 : vector<1x32xf32> to vector<2x32xf32>
    %291 = arith.mulf %289, %290 : vector<2x32xf32>
    %292 = vector.broadcast %18 : vector<1x32xf32> to vector<2x32xf32>
    %293 = arith.addf %291, %292 : vector<2x32xf32>
    %cst_121 = arith.constant dense<0.000000e+00> : vector<2x32xf32>
    %294 = tpu.matmul %241, %8, %cst_121 {dimension_numbers = #tpu.dot_dimension_numbers<[1], [0], [0], [1], [0, 0, 1, 1], [], []>} : vector<2x32xf32>, vector<32x32xf32>, vector<2x32xf32> -> vector<2x32xf32>
    %cst_122 = arith.constant dense<0.000000e+00> : vector<2x32xf32>
    %295 = tpu.matmul %241, %10, %cst_122 {dimension_numbers = #tpu.dot_dimension_numbers<[1], [0], [0], [1], [0, 0, 1, 1], [], []>} : vector<2x32xf32>, vector<32x32xf32>, vector<2x32xf32> -> vector<2x32xf32>
    %cst_123 = arith.constant dense<0.000000e+00> : vector<2x32xf32>
    %296 = tpu.matmul %241, %12, %cst_123 {dimension_numbers = #tpu.dot_dimension_numbers<[1], [0], [0], [1], [0, 0, 1, 1], [], []>} : vector<2x32xf32>, vector<32x32xf32>, vector<2x32xf32> -> vector<2x32xf32>
    %297 = arith.addf %283, %294 : vector<2x32xf32>
    %cst_124 = arith.constant 5.000000e-01 : f32
    %298 = vector.broadcast %cst_124 : f32 to vector<2x32xf32>
    %299 = arith.mulf %298, %297 : vector<2x32xf32>
    %300 = math.tanh %299 : vector<2x32xf32>
    %cst_125 = arith.constant 5.000000e-01 : f32
    %301 = vector.broadcast %cst_125 : f32 to vector<2x32xf32>
    %302 = arith.mulf %301, %300 : vector<2x32xf32>
    %cst_126 = arith.constant 5.000000e-01 : f32
    %303 = vector.broadcast %cst_126 : f32 to vector<2x32xf32>
    %304 = arith.addf %302, %303 : vector<2x32xf32>
    %305 = arith.addf %288, %295 : vector<2x32xf32>
    %cst_127 = arith.constant 5.000000e-01 : f32
    %306 = vector.broadcast %cst_127 : f32 to vector<2x32xf32>
    %307 = arith.mulf %306, %305 : vector<2x32xf32>
    %308 = math.tanh %307 : vector<2x32xf32>
    %cst_128 = arith.constant 5.000000e-01 : f32
    %309 = vector.broadcast %cst_128 : f32 to vector<2x32xf32>
    %310 = arith.mulf %309, %308 : vector<2x32xf32>
    %cst_129 = arith.constant 5.000000e-01 : f32
    %311 = vector.broadcast %cst_129 : f32 to vector<2x32xf32>
    %312 = arith.addf %310, %311 : vector<2x32xf32>
    %313 = vector.broadcast %19 : vector<1x32xf32> to vector<2x32xf32>
    %314 = arith.addf %296, %313 : vector<2x32xf32>
    %315 = arith.mulf %304, %314 : vector<2x32xf32>
    %316 = arith.addf %293, %315 : vector<2x32xf32>
    %317 = math.tanh %316 : vector<2x32xf32>
    %318 = arith.subf %241, %317 : vector<2x32xf32>
    %319 = arith.mulf %312, %318 : vector<2x32xf32>
    %320 = arith.addf %317, %319 : vector<2x32xf32>
    %cst_130 = arith.constant dense<0.000000e+00> : vector<2x32xf32>
    %321 = tpu.matmul %320, %21, %cst_130 {dimension_numbers = #tpu.dot_dimension_numbers<[1], [0], [0], [1], [0, 0, 1, 1], [], []>} : vector<2x32xf32>, vector<32x32xf32>, vector<2x32xf32> -> vector<2x32xf32>
    %322 = vector.broadcast %33 : vector<1x32xf32> to vector<2x32xf32>
    %323 = arith.addf %321, %322 : vector<2x32xf32>
    %cst_131 = arith.constant dense<0.000000e+00> : vector<2x32xf32>
    %324 = tpu.matmul %320, %23, %cst_131 {dimension_numbers = #tpu.dot_dimension_numbers<[1], [0], [0], [1], [0, 0, 1, 1], [], []>} : vector<2x32xf32>, vector<32x32xf32>, vector<2x32xf32> -> vector<2x32xf32>
    %325 = vector.broadcast %35 : vector<1x32xf32> to vector<2x32xf32>
    %326 = arith.addf %324, %325 : vector<2x32xf32>
    %cst_132 = arith.constant dense<0.000000e+00> : vector<2x32xf32>
    %327 = tpu.matmul %320, %25, %cst_132 {dimension_numbers = #tpu.dot_dimension_numbers<[1], [0], [0], [1], [0, 0, 1, 1], [], []>} : vector<2x32xf32>, vector<32x32xf32>, vector<2x32xf32> -> vector<2x32xf32>
    %328 = vector.broadcast %37 : vector<1x32xf32> to vector<2x32xf32>
    %329 = arith.addf %327, %328 : vector<2x32xf32>
    %cst_133 = arith.constant dense<0.000000e+00> : vector<2x32xf32>
    %330 = tpu.matmul %277, %27, %cst_133 {dimension_numbers = #tpu.dot_dimension_numbers<[1], [0], [0], [1], [0, 0, 1, 1], [], []>} : vector<2x32xf32>, vector<32x32xf32>, vector<2x32xf32> -> vector<2x32xf32>
    %cst_134 = arith.constant dense<0.000000e+00> : vector<2x32xf32>
    %331 = tpu.matmul %277, %29, %cst_134 {dimension_numbers = #tpu.dot_dimension_numbers<[1], [0], [0], [1], [0, 0, 1, 1], [], []>} : vector<2x32xf32>, vector<32x32xf32>, vector<2x32xf32> -> vector<2x32xf32>
    %cst_135 = arith.constant dense<0.000000e+00> : vector<2x32xf32>
    %332 = tpu.matmul %277, %31, %cst_135 {dimension_numbers = #tpu.dot_dimension_numbers<[1], [0], [0], [1], [0, 0, 1, 1], [], []>} : vector<2x32xf32>, vector<32x32xf32>, vector<2x32xf32> -> vector<2x32xf32>
    %333 = arith.addf %323, %330 : vector<2x32xf32>
    %cst_136 = arith.constant 5.000000e-01 : f32
    %334 = vector.broadcast %cst_136 : f32 to vector<2x32xf32>
    %335 = arith.mulf %334, %333 : vector<2x32xf32>
    %336 = math.tanh %335 : vector<2x32xf32>
    %cst_137 = arith.constant 5.000000e-01 : f32
    %337 = vector.broadcast %cst_137 : f32 to vector<2x32xf32>
    %338 = arith.mulf %337, %336 : vector<2x32xf32>
    %cst_138 = arith.constant 5.000000e-01 : f32
    %339 = vector.broadcast %cst_138 : f32 to vector<2x32xf32>
    %340 = arith.addf %338, %339 : vector<2x32xf32>
    %341 = arith.addf %326, %331 : vector<2x32xf32>
    %cst_139 = arith.constant 5.000000e-01 : f32
    %342 = vector.broadcast %cst_139 : f32 to vector<2x32xf32>
    %343 = arith.mulf %342, %341 : vector<2x32xf32>
    %344 = math.tanh %343 : vector<2x32xf32>
    %cst_140 = arith.constant 5.000000e-01 : f32
    %345 = vector.broadcast %cst_140 : f32 to vector<2x32xf32>
    %346 = arith.mulf %345, %344 : vector<2x32xf32>
    %cst_141 = arith.constant 5.000000e-01 : f32
    %347 = vector.broadcast %cst_141 : f32 to vector<2x32xf32>
    %348 = arith.addf %346, %347 : vector<2x32xf32>
    %349 = vector.broadcast %38 : vector<1x32xf32> to vector<2x32xf32>
    %350 = arith.addf %332, %349 : vector<2x32xf32>
    %351 = arith.mulf %340, %350 : vector<2x32xf32>
    %352 = arith.addf %329, %351 : vector<2x32xf32>
    %353 = math.tanh %352 : vector<2x32xf32>
    %354 = arith.subf %277, %353 : vector<2x32xf32>
    %355 = arith.mulf %348, %354 : vector<2x32xf32>
    %356 = arith.addf %353, %355 : vector<2x32xf32>
    %357 = vector.extract_strided_slice %0 {offsets = [0, 4], sizes = [2, 1], strides = [1, 1]} : vector<2x8xf32> to vector<2x1xf32>
    %358 = vector.broadcast %357 : vector<2x1xf32> to vector<2x32xf32>
    %359 = vector.broadcast %2 : vector<1x32xf32> to vector<2x32xf32>
    %360 = arith.mulf %358, %359 : vector<2x32xf32>
    %361 = vector.broadcast %14 : vector<1x32xf32> to vector<2x32xf32>
    %362 = arith.addf %360, %361 : vector<2x32xf32>
    %363 = vector.broadcast %357 : vector<2x1xf32> to vector<2x32xf32>
    %364 = vector.broadcast %4 : vector<1x32xf32> to vector<2x32xf32>
    %365 = arith.mulf %363, %364 : vector<2x32xf32>
    %366 = vector.broadcast %16 : vector<1x32xf32> to vector<2x32xf32>
    %367 = arith.addf %365, %366 : vector<2x32xf32>
    %368 = vector.broadcast %357 : vector<2x1xf32> to vector<2x32xf32>
    %369 = vector.broadcast %6 : vector<1x32xf32> to vector<2x32xf32>
    %370 = arith.mulf %368, %369 : vector<2x32xf32>
    %371 = vector.broadcast %18 : vector<1x32xf32> to vector<2x32xf32>
    %372 = arith.addf %370, %371 : vector<2x32xf32>
    %cst_142 = arith.constant dense<0.000000e+00> : vector<2x32xf32>
    %373 = tpu.matmul %320, %8, %cst_142 {dimension_numbers = #tpu.dot_dimension_numbers<[1], [0], [0], [1], [0, 0, 1, 1], [], []>} : vector<2x32xf32>, vector<32x32xf32>, vector<2x32xf32> -> vector<2x32xf32>
    %cst_143 = arith.constant dense<0.000000e+00> : vector<2x32xf32>
    %374 = tpu.matmul %320, %10, %cst_143 {dimension_numbers = #tpu.dot_dimension_numbers<[1], [0], [0], [1], [0, 0, 1, 1], [], []>} : vector<2x32xf32>, vector<32x32xf32>, vector<2x32xf32> -> vector<2x32xf32>
    %cst_144 = arith.constant dense<0.000000e+00> : vector<2x32xf32>
    %375 = tpu.matmul %320, %12, %cst_144 {dimension_numbers = #tpu.dot_dimension_numbers<[1], [0], [0], [1], [0, 0, 1, 1], [], []>} : vector<2x32xf32>, vector<32x32xf32>, vector<2x32xf32> -> vector<2x32xf32>
    %376 = arith.addf %362, %373 : vector<2x32xf32>
    %cst_145 = arith.constant 5.000000e-01 : f32
    %377 = vector.broadcast %cst_145 : f32 to vector<2x32xf32>
    %378 = arith.mulf %377, %376 : vector<2x32xf32>
    %379 = math.tanh %378 : vector<2x32xf32>
    %cst_146 = arith.constant 5.000000e-01 : f32
    %380 = vector.broadcast %cst_146 : f32 to vector<2x32xf32>
    %381 = arith.mulf %380, %379 : vector<2x32xf32>
    %cst_147 = arith.constant 5.000000e-01 : f32
    %382 = vector.broadcast %cst_147 : f32 to vector<2x32xf32>
    %383 = arith.addf %381, %382 : vector<2x32xf32>
    %384 = arith.addf %367, %374 : vector<2x32xf32>
    %cst_148 = arith.constant 5.000000e-01 : f32
    %385 = vector.broadcast %cst_148 : f32 to vector<2x32xf32>
    %386 = arith.mulf %385, %384 : vector<2x32xf32>
    %387 = math.tanh %386 : vector<2x32xf32>
    %cst_149 = arith.constant 5.000000e-01 : f32
    %388 = vector.broadcast %cst_149 : f32 to vector<2x32xf32>
    %389 = arith.mulf %388, %387 : vector<2x32xf32>
    %cst_150 = arith.constant 5.000000e-01 : f32
    %390 = vector.broadcast %cst_150 : f32 to vector<2x32xf32>
    %391 = arith.addf %389, %390 : vector<2x32xf32>
    %392 = vector.broadcast %19 : vector<1x32xf32> to vector<2x32xf32>
    %393 = arith.addf %375, %392 : vector<2x32xf32>
    %394 = arith.mulf %383, %393 : vector<2x32xf32>
    %395 = arith.addf %372, %394 : vector<2x32xf32>
    %396 = math.tanh %395 : vector<2x32xf32>
    %397 = arith.subf %320, %396 : vector<2x32xf32>
    %398 = arith.mulf %391, %397 : vector<2x32xf32>
    %399 = arith.addf %396, %398 : vector<2x32xf32>
    %cst_151 = arith.constant dense<0.000000e+00> : vector<2x32xf32>
    %400 = tpu.matmul %399, %21, %cst_151 {dimension_numbers = #tpu.dot_dimension_numbers<[1], [0], [0], [1], [0, 0, 1, 1], [], []>} : vector<2x32xf32>, vector<32x32xf32>, vector<2x32xf32> -> vector<2x32xf32>
    %401 = vector.broadcast %33 : vector<1x32xf32> to vector<2x32xf32>
    %402 = arith.addf %400, %401 : vector<2x32xf32>
    %cst_152 = arith.constant dense<0.000000e+00> : vector<2x32xf32>
    %403 = tpu.matmul %399, %23, %cst_152 {dimension_numbers = #tpu.dot_dimension_numbers<[1], [0], [0], [1], [0, 0, 1, 1], [], []>} : vector<2x32xf32>, vector<32x32xf32>, vector<2x32xf32> -> vector<2x32xf32>
    %404 = vector.broadcast %35 : vector<1x32xf32> to vector<2x32xf32>
    %405 = arith.addf %403, %404 : vector<2x32xf32>
    %cst_153 = arith.constant dense<0.000000e+00> : vector<2x32xf32>
    %406 = tpu.matmul %399, %25, %cst_153 {dimension_numbers = #tpu.dot_dimension_numbers<[1], [0], [0], [1], [0, 0, 1, 1], [], []>} : vector<2x32xf32>, vector<32x32xf32>, vector<2x32xf32> -> vector<2x32xf32>
    %407 = vector.broadcast %37 : vector<1x32xf32> to vector<2x32xf32>
    %408 = arith.addf %406, %407 : vector<2x32xf32>
    %cst_154 = arith.constant dense<0.000000e+00> : vector<2x32xf32>
    %409 = tpu.matmul %356, %27, %cst_154 {dimension_numbers = #tpu.dot_dimension_numbers<[1], [0], [0], [1], [0, 0, 1, 1], [], []>} : vector<2x32xf32>, vector<32x32xf32>, vector<2x32xf32> -> vector<2x32xf32>
    %cst_155 = arith.constant dense<0.000000e+00> : vector<2x32xf32>
    %410 = tpu.matmul %356, %29, %cst_155 {dimension_numbers = #tpu.dot_dimension_numbers<[1], [0], [0], [1], [0, 0, 1, 1], [], []>} : vector<2x32xf32>, vector<32x32xf32>, vector<2x32xf32> -> vector<2x32xf32>
    %cst_156 = arith.constant dense<0.000000e+00> : vector<2x32xf32>
    %411 = tpu.matmul %356, %31, %cst_156 {dimension_numbers = #tpu.dot_dimension_numbers<[1], [0], [0], [1], [0, 0, 1, 1], [], []>} : vector<2x32xf32>, vector<32x32xf32>, vector<2x32xf32> -> vector<2x32xf32>
    %412 = arith.addf %402, %409 : vector<2x32xf32>
    %cst_157 = arith.constant 5.000000e-01 : f32
    %413 = vector.broadcast %cst_157 : f32 to vector<2x32xf32>
    %414 = arith.mulf %413, %412 : vector<2x32xf32>
    %415 = math.tanh %414 : vector<2x32xf32>
    %cst_158 = arith.constant 5.000000e-01 : f32
    %416 = vector.broadcast %cst_158 : f32 to vector<2x32xf32>
    %417 = arith.mulf %416, %415 : vector<2x32xf32>
    %cst_159 = arith.constant 5.000000e-01 : f32
    %418 = vector.broadcast %cst_159 : f32 to vector<2x32xf32>
    %419 = arith.addf %417, %418 : vector<2x32xf32>
    %420 = arith.addf %405, %410 : vector<2x32xf32>
    %cst_160 = arith.constant 5.000000e-01 : f32
    %421 = vector.broadcast %cst_160 : f32 to vector<2x32xf32>
    %422 = arith.mulf %421, %420 : vector<2x32xf32>
    %423 = math.tanh %422 : vector<2x32xf32>
    %cst_161 = arith.constant 5.000000e-01 : f32
    %424 = vector.broadcast %cst_161 : f32 to vector<2x32xf32>
    %425 = arith.mulf %424, %423 : vector<2x32xf32>
    %cst_162 = arith.constant 5.000000e-01 : f32
    %426 = vector.broadcast %cst_162 : f32 to vector<2x32xf32>
    %427 = arith.addf %425, %426 : vector<2x32xf32>
    %428 = vector.broadcast %38 : vector<1x32xf32> to vector<2x32xf32>
    %429 = arith.addf %411, %428 : vector<2x32xf32>
    %430 = arith.mulf %419, %429 : vector<2x32xf32>
    %431 = arith.addf %408, %430 : vector<2x32xf32>
    %432 = math.tanh %431 : vector<2x32xf32>
    %433 = arith.subf %356, %432 : vector<2x32xf32>
    %434 = arith.mulf %427, %433 : vector<2x32xf32>
    %435 = arith.addf %432, %434 : vector<2x32xf32>
    %436 = vector.extract_strided_slice %0 {offsets = [0, 5], sizes = [2, 1], strides = [1, 1]} : vector<2x8xf32> to vector<2x1xf32>
    %437 = vector.broadcast %436 : vector<2x1xf32> to vector<2x32xf32>
    %438 = vector.broadcast %2 : vector<1x32xf32> to vector<2x32xf32>
    %439 = arith.mulf %437, %438 : vector<2x32xf32>
    %440 = vector.broadcast %14 : vector<1x32xf32> to vector<2x32xf32>
    %441 = arith.addf %439, %440 : vector<2x32xf32>
    %442 = vector.broadcast %436 : vector<2x1xf32> to vector<2x32xf32>
    %443 = vector.broadcast %4 : vector<1x32xf32> to vector<2x32xf32>
    %444 = arith.mulf %442, %443 : vector<2x32xf32>
    %445 = vector.broadcast %16 : vector<1x32xf32> to vector<2x32xf32>
    %446 = arith.addf %444, %445 : vector<2x32xf32>
    %447 = vector.broadcast %436 : vector<2x1xf32> to vector<2x32xf32>
    %448 = vector.broadcast %6 : vector<1x32xf32> to vector<2x32xf32>
    %449 = arith.mulf %447, %448 : vector<2x32xf32>
    %450 = vector.broadcast %18 : vector<1x32xf32> to vector<2x32xf32>
    %451 = arith.addf %449, %450 : vector<2x32xf32>
    %cst_163 = arith.constant dense<0.000000e+00> : vector<2x32xf32>
    %452 = tpu.matmul %399, %8, %cst_163 {dimension_numbers = #tpu.dot_dimension_numbers<[1], [0], [0], [1], [0, 0, 1, 1], [], []>} : vector<2x32xf32>, vector<32x32xf32>, vector<2x32xf32> -> vector<2x32xf32>
    %cst_164 = arith.constant dense<0.000000e+00> : vector<2x32xf32>
    %453 = tpu.matmul %399, %10, %cst_164 {dimension_numbers = #tpu.dot_dimension_numbers<[1], [0], [0], [1], [0, 0, 1, 1], [], []>} : vector<2x32xf32>, vector<32x32xf32>, vector<2x32xf32> -> vector<2x32xf32>
    %cst_165 = arith.constant dense<0.000000e+00> : vector<2x32xf32>
    %454 = tpu.matmul %399, %12, %cst_165 {dimension_numbers = #tpu.dot_dimension_numbers<[1], [0], [0], [1], [0, 0, 1, 1], [], []>} : vector<2x32xf32>, vector<32x32xf32>, vector<2x32xf32> -> vector<2x32xf32>
    %455 = arith.addf %441, %452 : vector<2x32xf32>
    %cst_166 = arith.constant 5.000000e-01 : f32
    %456 = vector.broadcast %cst_166 : f32 to vector<2x32xf32>
    %457 = arith.mulf %456, %455 : vector<2x32xf32>
    %458 = math.tanh %457 : vector<2x32xf32>
    %cst_167 = arith.constant 5.000000e-01 : f32
    %459 = vector.broadcast %cst_167 : f32 to vector<2x32xf32>
    %460 = arith.mulf %459, %458 : vector<2x32xf32>
    %cst_168 = arith.constant 5.000000e-01 : f32
    %461 = vector.broadcast %cst_168 : f32 to vector<2x32xf32>
    %462 = arith.addf %460, %461 : vector<2x32xf32>
    %463 = arith.addf %446, %453 : vector<2x32xf32>
    %cst_169 = arith.constant 5.000000e-01 : f32
    %464 = vector.broadcast %cst_169 : f32 to vector<2x32xf32>
    %465 = arith.mulf %464, %463 : vector<2x32xf32>
    %466 = math.tanh %465 : vector<2x32xf32>
    %cst_170 = arith.constant 5.000000e-01 : f32
    %467 = vector.broadcast %cst_170 : f32 to vector<2x32xf32>
    %468 = arith.mulf %467, %466 : vector<2x32xf32>
    %cst_171 = arith.constant 5.000000e-01 : f32
    %469 = vector.broadcast %cst_171 : f32 to vector<2x32xf32>
    %470 = arith.addf %468, %469 : vector<2x32xf32>
    %471 = vector.broadcast %19 : vector<1x32xf32> to vector<2x32xf32>
    %472 = arith.addf %454, %471 : vector<2x32xf32>
    %473 = arith.mulf %462, %472 : vector<2x32xf32>
    %474 = arith.addf %451, %473 : vector<2x32xf32>
    %475 = math.tanh %474 : vector<2x32xf32>
    %476 = arith.subf %399, %475 : vector<2x32xf32>
    %477 = arith.mulf %470, %476 : vector<2x32xf32>
    %478 = arith.addf %475, %477 : vector<2x32xf32>
    %cst_172 = arith.constant dense<0.000000e+00> : vector<2x32xf32>
    %479 = tpu.matmul %478, %21, %cst_172 {dimension_numbers = #tpu.dot_dimension_numbers<[1], [0], [0], [1], [0, 0, 1, 1], [], []>} : vector<2x32xf32>, vector<32x32xf32>, vector<2x32xf32> -> vector<2x32xf32>
    %480 = vector.broadcast %33 : vector<1x32xf32> to vector<2x32xf32>
    %481 = arith.addf %479, %480 : vector<2x32xf32>
    %cst_173 = arith.constant dense<0.000000e+00> : vector<2x32xf32>
    %482 = tpu.matmul %478, %23, %cst_173 {dimension_numbers = #tpu.dot_dimension_numbers<[1], [0], [0], [1], [0, 0, 1, 1], [], []>} : vector<2x32xf32>, vector<32x32xf32>, vector<2x32xf32> -> vector<2x32xf32>
    %483 = vector.broadcast %35 : vector<1x32xf32> to vector<2x32xf32>
    %484 = arith.addf %482, %483 : vector<2x32xf32>
    %cst_174 = arith.constant dense<0.000000e+00> : vector<2x32xf32>
    %485 = tpu.matmul %478, %25, %cst_174 {dimension_numbers = #tpu.dot_dimension_numbers<[1], [0], [0], [1], [0, 0, 1, 1], [], []>} : vector<2x32xf32>, vector<32x32xf32>, vector<2x32xf32> -> vector<2x32xf32>
    %486 = vector.broadcast %37 : vector<1x32xf32> to vector<2x32xf32>
    %487 = arith.addf %485, %486 : vector<2x32xf32>
    %cst_175 = arith.constant dense<0.000000e+00> : vector<2x32xf32>
    %488 = tpu.matmul %435, %27, %cst_175 {dimension_numbers = #tpu.dot_dimension_numbers<[1], [0], [0], [1], [0, 0, 1, 1], [], []>} : vector<2x32xf32>, vector<32x32xf32>, vector<2x32xf32> -> vector<2x32xf32>
    %cst_176 = arith.constant dense<0.000000e+00> : vector<2x32xf32>
    %489 = tpu.matmul %435, %29, %cst_176 {dimension_numbers = #tpu.dot_dimension_numbers<[1], [0], [0], [1], [0, 0, 1, 1], [], []>} : vector<2x32xf32>, vector<32x32xf32>, vector<2x32xf32> -> vector<2x32xf32>
    %cst_177 = arith.constant dense<0.000000e+00> : vector<2x32xf32>
    %490 = tpu.matmul %435, %31, %cst_177 {dimension_numbers = #tpu.dot_dimension_numbers<[1], [0], [0], [1], [0, 0, 1, 1], [], []>} : vector<2x32xf32>, vector<32x32xf32>, vector<2x32xf32> -> vector<2x32xf32>
    %491 = arith.addf %481, %488 : vector<2x32xf32>
    %cst_178 = arith.constant 5.000000e-01 : f32
    %492 = vector.broadcast %cst_178 : f32 to vector<2x32xf32>
    %493 = arith.mulf %492, %491 : vector<2x32xf32>
    %494 = math.tanh %493 : vector<2x32xf32>
    %cst_179 = arith.constant 5.000000e-01 : f32
    %495 = vector.broadcast %cst_179 : f32 to vector<2x32xf32>
    %496 = arith.mulf %495, %494 : vector<2x32xf32>
    %cst_180 = arith.constant 5.000000e-01 : f32
    %497 = vector.broadcast %cst_180 : f32 to vector<2x32xf32>
    %498 = arith.addf %496, %497 : vector<2x32xf32>
    %499 = arith.addf %484, %489 : vector<2x32xf32>
    %cst_181 = arith.constant 5.000000e-01 : f32
    %500 = vector.broadcast %cst_181 : f32 to vector<2x32xf32>
    %501 = arith.mulf %500, %499 : vector<2x32xf32>
    %502 = math.tanh %501 : vector<2x32xf32>
    %cst_182 = arith.constant 5.000000e-01 : f32
    %503 = vector.broadcast %cst_182 : f32 to vector<2x32xf32>
    %504 = arith.mulf %503, %502 : vector<2x32xf32>
    %cst_183 = arith.constant 5.000000e-01 : f32
    %505 = vector.broadcast %cst_183 : f32 to vector<2x32xf32>
    %506 = arith.addf %504, %505 : vector<2x32xf32>
    %507 = vector.broadcast %38 : vector<1x32xf32> to vector<2x32xf32>
    %508 = arith.addf %490, %507 : vector<2x32xf32>
    %509 = arith.mulf %498, %508 : vector<2x32xf32>
    %510 = arith.addf %487, %509 : vector<2x32xf32>
    %511 = math.tanh %510 : vector<2x32xf32>
    %512 = arith.subf %435, %511 : vector<2x32xf32>
    %513 = arith.mulf %506, %512 : vector<2x32xf32>
    %514 = arith.addf %511, %513 : vector<2x32xf32>
    %515 = vector.extract_strided_slice %0 {offsets = [0, 6], sizes = [2, 1], strides = [1, 1]} : vector<2x8xf32> to vector<2x1xf32>
    %516 = vector.broadcast %515 : vector<2x1xf32> to vector<2x32xf32>
    %517 = vector.broadcast %2 : vector<1x32xf32> to vector<2x32xf32>
    %518 = arith.mulf %516, %517 : vector<2x32xf32>
    %519 = vector.broadcast %14 : vector<1x32xf32> to vector<2x32xf32>
    %520 = arith.addf %518, %519 : vector<2x32xf32>
    %521 = vector.broadcast %515 : vector<2x1xf32> to vector<2x32xf32>
    %522 = vector.broadcast %4 : vector<1x32xf32> to vector<2x32xf32>
    %523 = arith.mulf %521, %522 : vector<2x32xf32>
    %524 = vector.broadcast %16 : vector<1x32xf32> to vector<2x32xf32>
    %525 = arith.addf %523, %524 : vector<2x32xf32>
    %526 = vector.broadcast %515 : vector<2x1xf32> to vector<2x32xf32>
    %527 = vector.broadcast %6 : vector<1x32xf32> to vector<2x32xf32>
    %528 = arith.mulf %526, %527 : vector<2x32xf32>
    %529 = vector.broadcast %18 : vector<1x32xf32> to vector<2x32xf32>
    %530 = arith.addf %528, %529 : vector<2x32xf32>
    %cst_184 = arith.constant dense<0.000000e+00> : vector<2x32xf32>
    %531 = tpu.matmul %478, %8, %cst_184 {dimension_numbers = #tpu.dot_dimension_numbers<[1], [0], [0], [1], [0, 0, 1, 1], [], []>} : vector<2x32xf32>, vector<32x32xf32>, vector<2x32xf32> -> vector<2x32xf32>
    %cst_185 = arith.constant dense<0.000000e+00> : vector<2x32xf32>
    %532 = tpu.matmul %478, %10, %cst_185 {dimension_numbers = #tpu.dot_dimension_numbers<[1], [0], [0], [1], [0, 0, 1, 1], [], []>} : vector<2x32xf32>, vector<32x32xf32>, vector<2x32xf32> -> vector<2x32xf32>
    %cst_186 = arith.constant dense<0.000000e+00> : vector<2x32xf32>
    %533 = tpu.matmul %478, %12, %cst_186 {dimension_numbers = #tpu.dot_dimension_numbers<[1], [0], [0], [1], [0, 0, 1, 1], [], []>} : vector<2x32xf32>, vector<32x32xf32>, vector<2x32xf32> -> vector<2x32xf32>
    %534 = arith.addf %520, %531 : vector<2x32xf32>
    %cst_187 = arith.constant 5.000000e-01 : f32
    %535 = vector.broadcast %cst_187 : f32 to vector<2x32xf32>
    %536 = arith.mulf %535, %534 : vector<2x32xf32>
    %537 = math.tanh %536 : vector<2x32xf32>
    %cst_188 = arith.constant 5.000000e-01 : f32
    %538 = vector.broadcast %cst_188 : f32 to vector<2x32xf32>
    %539 = arith.mulf %538, %537 : vector<2x32xf32>
    %cst_189 = arith.constant 5.000000e-01 : f32
    %540 = vector.broadcast %cst_189 : f32 to vector<2x32xf32>
    %541 = arith.addf %539, %540 : vector<2x32xf32>
    %542 = arith.addf %525, %532 : vector<2x32xf32>
    %cst_190 = arith.constant 5.000000e-01 : f32
    %543 = vector.broadcast %cst_190 : f32 to vector<2x32xf32>
    %544 = arith.mulf %543, %542 : vector<2x32xf32>
    %545 = math.tanh %544 : vector<2x32xf32>
    %cst_191 = arith.constant 5.000000e-01 : f32
    %546 = vector.broadcast %cst_191 : f32 to vector<2x32xf32>
    %547 = arith.mulf %546, %545 : vector<2x32xf32>
    %cst_192 = arith.constant 5.000000e-01 : f32
    %548 = vector.broadcast %cst_192 : f32 to vector<2x32xf32>
    %549 = arith.addf %547, %548 : vector<2x32xf32>
    %550 = vector.broadcast %19 : vector<1x32xf32> to vector<2x32xf32>
    %551 = arith.addf %533, %550 : vector<2x32xf32>
    %552 = arith.mulf %541, %551 : vector<2x32xf32>
    %553 = arith.addf %530, %552 : vector<2x32xf32>
    %554 = math.tanh %553 : vector<2x32xf32>
    %555 = arith.subf %478, %554 : vector<2x32xf32>
    %556 = arith.mulf %549, %555 : vector<2x32xf32>
    %557 = arith.addf %554, %556 : vector<2x32xf32>
    %cst_193 = arith.constant dense<0.000000e+00> : vector<2x32xf32>
    %558 = tpu.matmul %557, %21, %cst_193 {dimension_numbers = #tpu.dot_dimension_numbers<[1], [0], [0], [1], [0, 0, 1, 1], [], []>} : vector<2x32xf32>, vector<32x32xf32>, vector<2x32xf32> -> vector<2x32xf32>
    %559 = vector.broadcast %33 : vector<1x32xf32> to vector<2x32xf32>
    %560 = arith.addf %558, %559 : vector<2x32xf32>
    %cst_194 = arith.constant dense<0.000000e+00> : vector<2x32xf32>
    %561 = tpu.matmul %557, %23, %cst_194 {dimension_numbers = #tpu.dot_dimension_numbers<[1], [0], [0], [1], [0, 0, 1, 1], [], []>} : vector<2x32xf32>, vector<32x32xf32>, vector<2x32xf32> -> vector<2x32xf32>
    %562 = vector.broadcast %35 : vector<1x32xf32> to vector<2x32xf32>
    %563 = arith.addf %561, %562 : vector<2x32xf32>
    %cst_195 = arith.constant dense<0.000000e+00> : vector<2x32xf32>
    %564 = tpu.matmul %557, %25, %cst_195 {dimension_numbers = #tpu.dot_dimension_numbers<[1], [0], [0], [1], [0, 0, 1, 1], [], []>} : vector<2x32xf32>, vector<32x32xf32>, vector<2x32xf32> -> vector<2x32xf32>
    %565 = vector.broadcast %37 : vector<1x32xf32> to vector<2x32xf32>
    %566 = arith.addf %564, %565 : vector<2x32xf32>
    %cst_196 = arith.constant dense<0.000000e+00> : vector<2x32xf32>
    %567 = tpu.matmul %514, %27, %cst_196 {dimension_numbers = #tpu.dot_dimension_numbers<[1], [0], [0], [1], [0, 0, 1, 1], [], []>} : vector<2x32xf32>, vector<32x32xf32>, vector<2x32xf32> -> vector<2x32xf32>
    %cst_197 = arith.constant dense<0.000000e+00> : vector<2x32xf32>
    %568 = tpu.matmul %514, %29, %cst_197 {dimension_numbers = #tpu.dot_dimension_numbers<[1], [0], [0], [1], [0, 0, 1, 1], [], []>} : vector<2x32xf32>, vector<32x32xf32>, vector<2x32xf32> -> vector<2x32xf32>
    %cst_198 = arith.constant dense<0.000000e+00> : vector<2x32xf32>
    %569 = tpu.matmul %514, %31, %cst_198 {dimension_numbers = #tpu.dot_dimension_numbers<[1], [0], [0], [1], [0, 0, 1, 1], [], []>} : vector<2x32xf32>, vector<32x32xf32>, vector<2x32xf32> -> vector<2x32xf32>
    %570 = arith.addf %560, %567 : vector<2x32xf32>
    %cst_199 = arith.constant 5.000000e-01 : f32
    %571 = vector.broadcast %cst_199 : f32 to vector<2x32xf32>
    %572 = arith.mulf %571, %570 : vector<2x32xf32>
    %573 = math.tanh %572 : vector<2x32xf32>
    %cst_200 = arith.constant 5.000000e-01 : f32
    %574 = vector.broadcast %cst_200 : f32 to vector<2x32xf32>
    %575 = arith.mulf %574, %573 : vector<2x32xf32>
    %cst_201 = arith.constant 5.000000e-01 : f32
    %576 = vector.broadcast %cst_201 : f32 to vector<2x32xf32>
    %577 = arith.addf %575, %576 : vector<2x32xf32>
    %578 = arith.addf %563, %568 : vector<2x32xf32>
    %cst_202 = arith.constant 5.000000e-01 : f32
    %579 = vector.broadcast %cst_202 : f32 to vector<2x32xf32>
    %580 = arith.mulf %579, %578 : vector<2x32xf32>
    %581 = math.tanh %580 : vector<2x32xf32>
    %cst_203 = arith.constant 5.000000e-01 : f32
    %582 = vector.broadcast %cst_203 : f32 to vector<2x32xf32>
    %583 = arith.mulf %582, %581 : vector<2x32xf32>
    %cst_204 = arith.constant 5.000000e-01 : f32
    %584 = vector.broadcast %cst_204 : f32 to vector<2x32xf32>
    %585 = arith.addf %583, %584 : vector<2x32xf32>
    %586 = vector.broadcast %38 : vector<1x32xf32> to vector<2x32xf32>
    %587 = arith.addf %569, %586 : vector<2x32xf32>
    %588 = arith.mulf %577, %587 : vector<2x32xf32>
    %589 = arith.addf %566, %588 : vector<2x32xf32>
    %590 = math.tanh %589 : vector<2x32xf32>
    %591 = arith.subf %514, %590 : vector<2x32xf32>
    %592 = arith.mulf %585, %591 : vector<2x32xf32>
    %593 = arith.addf %590, %592 : vector<2x32xf32>
    %594 = vector.extract_strided_slice %0 {offsets = [0, 7], sizes = [2, 1], strides = [1, 1]} : vector<2x8xf32> to vector<2x1xf32>
    %595 = vector.broadcast %594 : vector<2x1xf32> to vector<2x32xf32>
    %596 = vector.broadcast %2 : vector<1x32xf32> to vector<2x32xf32>
    %597 = arith.mulf %595, %596 : vector<2x32xf32>
    %598 = vector.broadcast %14 : vector<1x32xf32> to vector<2x32xf32>
    %599 = arith.addf %597, %598 : vector<2x32xf32>
    %600 = vector.broadcast %594 : vector<2x1xf32> to vector<2x32xf32>
    %601 = vector.broadcast %4 : vector<1x32xf32> to vector<2x32xf32>
    %602 = arith.mulf %600, %601 : vector<2x32xf32>
    %603 = vector.broadcast %16 : vector<1x32xf32> to vector<2x32xf32>
    %604 = arith.addf %602, %603 : vector<2x32xf32>
    %605 = vector.broadcast %594 : vector<2x1xf32> to vector<2x32xf32>
    %606 = vector.broadcast %6 : vector<1x32xf32> to vector<2x32xf32>
    %607 = arith.mulf %605, %606 : vector<2x32xf32>
    %608 = vector.broadcast %18 : vector<1x32xf32> to vector<2x32xf32>
    %609 = arith.addf %607, %608 : vector<2x32xf32>
    %cst_205 = arith.constant dense<0.000000e+00> : vector<2x32xf32>
    %610 = tpu.matmul %557, %8, %cst_205 {dimension_numbers = #tpu.dot_dimension_numbers<[1], [0], [0], [1], [0, 0, 1, 1], [], []>} : vector<2x32xf32>, vector<32x32xf32>, vector<2x32xf32> -> vector<2x32xf32>
    %cst_206 = arith.constant dense<0.000000e+00> : vector<2x32xf32>
    %611 = tpu.matmul %557, %10, %cst_206 {dimension_numbers = #tpu.dot_dimension_numbers<[1], [0], [0], [1], [0, 0, 1, 1], [], []>} : vector<2x32xf32>, vector<32x32xf32>, vector<2x32xf32> -> vector<2x32xf32>
    %cst_207 = arith.constant dense<0.000000e+00> : vector<2x32xf32>
    %612 = tpu.matmul %557, %12, %cst_207 {dimension_numbers = #tpu.dot_dimension_numbers<[1], [0], [0], [1], [0, 0, 1, 1], [], []>} : vector<2x32xf32>, vector<32x32xf32>, vector<2x32xf32> -> vector<2x32xf32>
    %613 = arith.addf %599, %610 : vector<2x32xf32>
    %cst_208 = arith.constant 5.000000e-01 : f32
    %614 = vector.broadcast %cst_208 : f32 to vector<2x32xf32>
    %615 = arith.mulf %614, %613 : vector<2x32xf32>
    %616 = math.tanh %615 : vector<2x32xf32>
    %cst_209 = arith.constant 5.000000e-01 : f32
    %617 = vector.broadcast %cst_209 : f32 to vector<2x32xf32>
    %618 = arith.mulf %617, %616 : vector<2x32xf32>
    %cst_210 = arith.constant 5.000000e-01 : f32
    %619 = vector.broadcast %cst_210 : f32 to vector<2x32xf32>
    %620 = arith.addf %618, %619 : vector<2x32xf32>
    %621 = arith.addf %604, %611 : vector<2x32xf32>
    %cst_211 = arith.constant 5.000000e-01 : f32
    %622 = vector.broadcast %cst_211 : f32 to vector<2x32xf32>
    %623 = arith.mulf %622, %621 : vector<2x32xf32>
    %624 = math.tanh %623 : vector<2x32xf32>
    %cst_212 = arith.constant 5.000000e-01 : f32
    %625 = vector.broadcast %cst_212 : f32 to vector<2x32xf32>
    %626 = arith.mulf %625, %624 : vector<2x32xf32>
    %cst_213 = arith.constant 5.000000e-01 : f32
    %627 = vector.broadcast %cst_213 : f32 to vector<2x32xf32>
    %628 = arith.addf %626, %627 : vector<2x32xf32>
    %629 = vector.broadcast %19 : vector<1x32xf32> to vector<2x32xf32>
    %630 = arith.addf %612, %629 : vector<2x32xf32>
    %631 = arith.mulf %620, %630 : vector<2x32xf32>
    %632 = arith.addf %609, %631 : vector<2x32xf32>
    %633 = math.tanh %632 : vector<2x32xf32>
    %634 = arith.subf %557, %633 : vector<2x32xf32>
    %635 = arith.mulf %628, %634 : vector<2x32xf32>
    %636 = arith.addf %633, %635 : vector<2x32xf32>
    %cst_214 = arith.constant dense<0.000000e+00> : vector<2x32xf32>
    %637 = tpu.matmul %636, %21, %cst_214 {dimension_numbers = #tpu.dot_dimension_numbers<[1], [0], [0], [1], [0, 0, 1, 1], [], []>} : vector<2x32xf32>, vector<32x32xf32>, vector<2x32xf32> -> vector<2x32xf32>
    %638 = vector.broadcast %33 : vector<1x32xf32> to vector<2x32xf32>
    %639 = arith.addf %637, %638 : vector<2x32xf32>
    %cst_215 = arith.constant dense<0.000000e+00> : vector<2x32xf32>
    %640 = tpu.matmul %636, %23, %cst_215 {dimension_numbers = #tpu.dot_dimension_numbers<[1], [0], [0], [1], [0, 0, 1, 1], [], []>} : vector<2x32xf32>, vector<32x32xf32>, vector<2x32xf32> -> vector<2x32xf32>
    %641 = vector.broadcast %35 : vector<1x32xf32> to vector<2x32xf32>
    %642 = arith.addf %640, %641 : vector<2x32xf32>
    %cst_216 = arith.constant dense<0.000000e+00> : vector<2x32xf32>
    %643 = tpu.matmul %636, %25, %cst_216 {dimension_numbers = #tpu.dot_dimension_numbers<[1], [0], [0], [1], [0, 0, 1, 1], [], []>} : vector<2x32xf32>, vector<32x32xf32>, vector<2x32xf32> -> vector<2x32xf32>
    %644 = vector.broadcast %37 : vector<1x32xf32> to vector<2x32xf32>
    %645 = arith.addf %643, %644 : vector<2x32xf32>
    %cst_217 = arith.constant dense<0.000000e+00> : vector<2x32xf32>
    %646 = tpu.matmul %593, %27, %cst_217 {dimension_numbers = #tpu.dot_dimension_numbers<[1], [0], [0], [1], [0, 0, 1, 1], [], []>} : vector<2x32xf32>, vector<32x32xf32>, vector<2x32xf32> -> vector<2x32xf32>
    %cst_218 = arith.constant dense<0.000000e+00> : vector<2x32xf32>
    %647 = tpu.matmul %593, %29, %cst_218 {dimension_numbers = #tpu.dot_dimension_numbers<[1], [0], [0], [1], [0, 0, 1, 1], [], []>} : vector<2x32xf32>, vector<32x32xf32>, vector<2x32xf32> -> vector<2x32xf32>
    %cst_219 = arith.constant dense<0.000000e+00> : vector<2x32xf32>
    %648 = tpu.matmul %593, %31, %cst_219 {dimension_numbers = #tpu.dot_dimension_numbers<[1], [0], [0], [1], [0, 0, 1, 1], [], []>} : vector<2x32xf32>, vector<32x32xf32>, vector<2x32xf32> -> vector<2x32xf32>
    %649 = arith.addf %639, %646 : vector<2x32xf32>
    %cst_220 = arith.constant 5.000000e-01 : f32
    %650 = vector.broadcast %cst_220 : f32 to vector<2x32xf32>
    %651 = arith.mulf %650, %649 : vector<2x32xf32>
    %652 = math.tanh %651 : vector<2x32xf32>
    %cst_221 = arith.constant 5.000000e-01 : f32
    %653 = vector.broadcast %cst_221 : f32 to vector<2x32xf32>
    %654 = arith.mulf %653, %652 : vector<2x32xf32>
    %cst_222 = arith.constant 5.000000e-01 : f32
    %655 = vector.broadcast %cst_222 : f32 to vector<2x32xf32>
    %656 = arith.addf %654, %655 : vector<2x32xf32>
    %657 = arith.addf %642, %647 : vector<2x32xf32>
    %cst_223 = arith.constant 5.000000e-01 : f32
    %658 = vector.broadcast %cst_223 : f32 to vector<2x32xf32>
    %659 = arith.mulf %658, %657 : vector<2x32xf32>
    %660 = math.tanh %659 : vector<2x32xf32>
    %cst_224 = arith.constant 5.000000e-01 : f32
    %661 = vector.broadcast %cst_224 : f32 to vector<2x32xf32>
    %662 = arith.mulf %661, %660 : vector<2x32xf32>
    %cst_225 = arith.constant 5.000000e-01 : f32
    %663 = vector.broadcast %cst_225 : f32 to vector<2x32xf32>
    %664 = arith.addf %662, %663 : vector<2x32xf32>
    %665 = vector.broadcast %38 : vector<1x32xf32> to vector<2x32xf32>
    %666 = arith.addf %648, %665 : vector<2x32xf32>
    %667 = arith.mulf %656, %666 : vector<2x32xf32>
    %668 = arith.addf %645, %667 : vector<2x32xf32>
    %669 = math.tanh %668 : vector<2x32xf32>
    %670 = arith.subf %593, %669 : vector<2x32xf32>
    %671 = arith.mulf %664, %670 : vector<2x32xf32>
    %672 = arith.addf %669, %671 : vector<2x32xf32>
    %c0_226 = arith.constant 0 : index
    %c0_227 = arith.constant 0 : index
    %673 = vector.load %arg9[%c0_226, %c0_227] : memref<32x3xf32, #tpu.memory_space<vmem>>, vector<32x3xf32>
    %cst_228 = arith.constant dense<0.000000e+00> : vector<2x3xf32>
    %674 = tpu.matmul %672, %673, %cst_228 {dimension_numbers = #tpu.dot_dimension_numbers<[1], [0], [0], [1], [0, 0, 1, 1], [], []>} : vector<2x32xf32>, vector<32x3xf32>, vector<2x3xf32> -> vector<2x3xf32>
    %c0_229 = arith.constant 0 : index
    %c0_230 = arith.constant 0 : index
    %675 = vector.load %arg10[%c0_229, %c0_230] : memref<1x3xf32, #tpu.memory_space<vmem>>, vector<1x3xf32>
    %676 = vector.broadcast %675 : vector<1x3xf32> to vector<2x3xf32>
    %677 = arith.addf %674, %676 : vector<2x3xf32>
    %c0_231 = arith.constant 0 : index
    %c0_232 = arith.constant 0 : index
    %678 = vector.load %arg11[%c0_231, %c0_232] : memref<2x3xf32, #tpu.memory_space<vmem>>, vector<2x3xf32>
    tpu.vector_store %arg11[%c0_231, %c0_232], %677 {strides = array<i32>} : memref<2x3xf32, #tpu.memory_space<vmem>>, vector<2x3xf32>,
    return
  }
}

</mosaic_0001>

<llo_original>
// kernel: gru_model_forward.1
$region0: #{gru_model_forward.1}
  #allocation0 [shape = 'u32[]', space=smem, size = 0x4, offset = 0x4, fixed_abs, tag = 'smem constant byte address 0x4 - core index']
  #allocation1 [shape = 'u32[144,128]{1,0:T(1,128)}', space=vmem, size = 0x12000, scoped, tag = 'internal scratch']
  %s0 = inlined_call_operand.vmem [shape: f32[2,8], index: 0, kind: input, shape index: {}]
  %s1 = inlined_call_operand.vmem [shape: f32[3,1,32], index: 1, kind: input, shape index: {}]
  %s2 = inlined_call_operand.hbm [shape: f32[3,32,32], index: 2, kind: input, shape index: {}]
  %s3 = inlined_call_operand.vmem [shape: f32[3,1,32], index: 3, kind: input, shape index: {}]
  %s4 = inlined_call_operand.vmem [shape: f32[1,32], index: 4, kind: input, shape index: {}]
  %s5 = inlined_call_operand.hbm [shape: f32[3,32,32], index: 5, kind: input, shape index: {}]
  %s6 = inlined_call_operand.hbm [shape: f32[3,32,32], index: 6, kind: input, shape index: {}]
  %s7 = inlined_call_operand.vmem [shape: f32[3,1,32], index: 7, kind: input, shape index: {}]
  %s8 = inlined_call_operand.vmem [shape: f32[1,32], index: 8, kind: input, shape index: {}]
  %s9 = inlined_call_operand.vmem [shape: f32[32,3], index: 9, kind: input, shape index: {}]
  %s10 = inlined_call_operand.vmem [shape: f32[1,3], index: 10, kind: input, shape index: {}]
  %s11 = inlined_call_operand.hbm [shape: f32[2,3], index: 11, kind: output, shape index: {}]
  %s12 = sld [smem:[#allocation0]]
  $region66: #{gru_model_forward.1} parent=0
    _
  %s14 = ssub.s32 1, %s12
  %s15 = scalar_select 0, %s14, %s12
  $region1: #{gru_model_forward.1} parent=0
    #allocation2 [shape = 'u8[49152]{0}', space=vmem, size = 0xc000, scoped, tag = 'input window, operand 2, single buffered']
    #allocation3 [shape = 's32[1]{0}', space=sflag, size = 0x4, scoped, tag = 'scoped memory for gru_model_forward.1']
    #allocation4 [shape = 's32[1]{0}', space=sflag, size = 0x4, scoped, tag = 'scoped memory for gru_model_forward.1']
    #allocation5 [shape = 'u8[49152]{0}', space=vmem, size = 0xc000, scoped, tag = 'input window, operand 5, single buffered']
    #allocation6 [shape = 's32[1]{0}', space=sflag, size = 0x4, scoped, tag = 'scoped memory for gru_model_forward.1']
    #allocation7 [shape = 'u8[49152]{0}', space=vmem, size = 0xc000, scoped, tag = 'input window, operand 6, single buffered']
    #allocation8 [shape = 'u8[1024]{0}', space=vmem, size = 0x400, scoped, tag = 'output window, operand 0, single buffered']
    %16 = vsyncpa [#allocation3], 0
    %17 = vsyncpa [#allocation6], 0
    %18 = vsyncpa [#allocation4], 0
    // Predicated region
    $region2: #{gru_model_forward.1} parent=1 // pred_check
      _
    $region3: #{gru_model_forward.1} parent=1 // pred_check_branch
      %20 = sbr.rel (0) target = $region5
    $region4: #{gru_model_forward.1} parent=1 // pred_region
      _
    $region5: #{gru_model_forward.1} parent=1 // pred_fallthru
      _
    // Predicated region
    $region6: #{gru_model_forward.1} parent=1 // pred_check
      _
    $region7: #{gru_model_forward.1} parent=1 // pred_check_branch
      %22 = sbr.rel (0) target = $region9
    $region8: #{gru_model_forward.1} parent=1 // pred_region
      _
    $region9: #{gru_model_forward.1} parent=1 // pred_fallthru
      _
    // Predicated region
    $region10: #{gru_model_forward.1} parent=1 // pred_check
      _
    $region11: #{gru_model_forward.1} parent=1 // pred_check_branch
      %24 = sbr.rel (0) target = $region13
    $region12: #{gru_model_forward.1} parent=1 // pred_region
      %s26 = ssub.s32 1536, 1536
      %27 = vsyncadd [#allocation3], %s26
      %s28 = sshll.u32 [#allocation2], 4
      %s29 = int_to_ptr.vmem [resolvable:$true] %s28
      %34 = dma.hbm_to_vmem [thread:$0]  %s2, 1536, %s29, [#allocation3], 128, 128, 8
    $region13: #{gru_model_forward.1} parent=1 // pred_fallthru
      _
    // Predicated region
    $region14: #{gru_model_forward.1} parent=1 // pred_check
      _
    $region15: #{gru_model_forward.1} parent=1 // pred_check_branch
      %36 = sbr.rel (0) target = $region17
    $region16: #{gru_model_forward.1} parent=1 // pred_region
      _
    $region17: #{gru_model_forward.1} parent=1 // pred_fallthru
      _
    // Predicated region
    $region18: #{gru_model_forward.1} parent=1 // pred_check
      _
    $region19: #{gru_model_forward.1} parent=1 // pred_check_branch
      %38 = sbr.rel (0) target = $region21
    $region20: #{gru_model_forward.1} parent=1 // pred_region
      _
    $region21: #{gru_model_forward.1} parent=1 // pred_fallthru
      _
    // Predicated region
    $region22: #{gru_model_forward.1} parent=1 // pred_check
      _
    $region23: #{gru_model_forward.1} parent=1 // pred_check_branch
      %40 = sbr.rel (0) target = $region25
    $region24: #{gru_model_forward.1} parent=1 // pred_region
      %s42 = ssub.s32 1536, 1536
      %43 = vsyncadd [#allocation6], %s42
      %s44 = sshll.u32 [#allocation5], 4
      %s45 = int_to_ptr.vmem [resolvable:$true] %s44
      %50 = dma.hbm_to_vmem [thread:$0]  %s5, 1536, %s45, [#allocation6], 128, 128, 8
    $region25: #{gru_model_forward.1} parent=1 // pred_fallthru
      _
    // Predicated region
    $region26: #{gru_model_forward.1} parent=1 // pred_check
      _
    $region27: #{gru_model_forward.1} parent=1 // pred_check_branch
      %52 = sbr.rel (0) target = $region29
    $region28: #{gru_model_forward.1} parent=1 // pred_region
      %s54 = ssub.s32 1536, 1536
      %55 = vsyncadd [#allocation6], %s54
      %s56 = sshll.u32 [#allocation7], 4
      %s57 = int_to_ptr.vmem [resolvable:$true] %s56
      %62 = dma.hbm_to_vmem [thread:$0]  %s6, 1536, %s57, [#allocation6], 128, 128, 8
    $region29: #{gru_model_forward.1} parent=1 // pred_fallthru
      _
    // Predicated region
    $region30: #{gru_model_forward.1} parent=1 // pred_check
      _
    $region31: #{gru_model_forward.1} parent=1 // pred_check_branch
      %64 = sbr.rel (0) target = $region33
    $region32: #{gru_model_forward.1} parent=1 // pred_region
      _
    $region33: #{gru_model_forward.1} parent=1 // pred_fallthru
      _
    // Predicated region
    $region34: #{gru_model_forward.1} parent=1 // pred_check
      _
    $region35: #{gru_model_forward.1} parent=1 // pred_check_branch
      %66 = sbr.rel (0) target = $region37
    $region36: #{gru_model_forward.1} parent=1 // pred_region
      _
    $region37: #{gru_model_forward.1} parent=1 // pred_fallthru
      _
    // Predicated region
    $region38: #{gru_model_forward.1} parent=1 // pred_check
      _
    $region39: #{gru_model_forward.1} parent=1 // pred_check_branch
      %68 = sbr.rel (0) target = $region41
    $region40: #{gru_model_forward.1} parent=1 // pred_region
      _
    $region41: #{gru_model_forward.1} parent=1 // pred_fallthru
      _
    // Predicated region
    $region42: #{gru_model_forward.1} parent=1 // pred_check
      _
    $region43: #{gru_model_forward.1} parent=1 // pred_check_branch
      %70 = sbr.rel (0) target = $region45
    $region44: #{gru_model_forward.1} parent=1 // pred_region
      _
    $region45: #{gru_model_forward.1} parent=1 // pred_fallthru
      _
    // Predicated region
    $region46: #{gru_model_forward.1} parent=1 // pred_check
      _
    $region47: #{gru_model_forward.1} parent=1 // pred_check_branch
      %72 = sbr.rel (0) target = $region49
    $region48: #{gru_model_forward.1} parent=1 // pred_region
      %73 = dma.done [#allocation3], 1536
    $region49: #{gru_model_forward.1} parent=1 // pred_fallthru
      _
    // Predicated region
    $region50: #{gru_model_forward.1} parent=1 // pred_check
      _
    $region51: #{gru_model_forward.1} parent=1 // pred_check_branch
      %75 = sbr.rel (0) target = $region53
    $region52: #{gru_model_forward.1} parent=1 // pred_region
      %76 = dma.done [#allocation6], 1536
    $region53: #{gru_model_forward.1} parent=1 // pred_fallthru
      _
    // Predicated region
    $region54: #{gru_model_forward.1} parent=1 // pred_check
      _
    $region55: #{gru_model_forward.1} parent=1 // pred_check_branch
      %78 = sbr.rel (0) target = $region57
    $region56: #{gru_model_forward.1} parent=1 // pred_region
      %79 = dma.done [#allocation6], 1536
    $region57: #{gru_model_forward.1} parent=1 // pred_fallthru
      _
    %v80 = vld [vmem:[%s0] sm:$0x3]
    %v81 = vld [vmem:[%s1] sm:$0x1]
    %s82 = scalar_lea.vmem %s1, 1
    %v83 = vld [vmem:[%s82] sm:$0x1]
    %s84 = scalar_lea.vmem %s1, 2
    %v85 = vld [vmem:[%s84] sm:$0x1]
    %v86 = vld [vmem:[#allocation2] sm:$0xff]
    %v87 = vld [vmem:[#allocation2 + $0x8] sm:$0xff]
    %v88 = vld [vmem:[#allocation2 + $0x10] sm:$0xff]
    %v89 = vld [vmem:[#allocation2 + $0x18] sm:$0xff]
    %s90 = scalar_lea.vmem [#allocation2], 32
    %v91 = vld [vmem:[%s90] sm:$0xff]
    %v92 = vld [vmem:[%s90 + $0x8] sm:$0xff]
    %v93 = vld [vmem:[%s90 + $0x10] sm:$0xff]
    %v94 = vld [vmem:[%s90 + $0x18] sm:$0xff]
    %s95 = scalar_lea.vmem [#allocation2], 64
    %v96 = vld [vmem:[%s95] sm:$0xff]
    %v97 = vld [vmem:[%s95 + $0x8] sm:$0xff]
    %v98 = vld [vmem:[%s95 + $0x10] sm:$0xff]
    %v99 = vld [vmem:[%s95 + $0x18] sm:$0xff]
    %v100 = vld [vmem:[%s3] sm:$0x1]
    %s101 = scalar_lea.vmem %s3, 1
    %v102 = vld [vmem:[%s101] sm:$0x1]
    %s103 = scalar_lea.vmem %s3, 2
    %v104 = vld [vmem:[%s103] sm:$0x1]
    %v105 = vld [vmem:[%s4] sm:$0x1]
    %v106 = vld [vmem:[#allocation5] sm:$0xff]
    %v107 = vld [vmem:[#allocation5 + $0x8] sm:$0xff]
    %v108 = vld [vmem:[#allocation5 + $0x10] sm:$0xff]
    %v109 = vld [vmem:[#allocation5 + $0x18] sm:$0xff]
    %s110 = scalar_lea.vmem [#allocation5], 32
    %v111 = vld [vmem:[%s110] sm:$0xff]
    %v112 = vld [vmem:[%s110 + $0x8] sm:$0xff]
    %v113 = vld [vmem:[%s110 + $0x10] sm:$0xff]
    %v114 = vld [vmem:[%s110 + $0x18] sm:$0xff]
    %s115 = scalar_lea.vmem [#allocation5], 64
    %v116 = vld [vmem:[%s115] sm:$0xff]
    %v117 = vld [vmem:[%s115 + $0x8] sm:$0xff]
    %v118 = vld [vmem:[%s115 + $0x10] sm:$0xff]
    %v119 = vld [vmem:[%s115 + $0x18] sm:$0xff]
    %v120 = vld [vmem:[#allocation7] sm:$0xff]
    %v121 = vld [vmem:[#allocation7 + $0x8] sm:$0xff]
    %v122 = vld [vmem:[#allocation7 + $0x10] sm:$0xff]
    %v123 = vld [vmem:[#allocation7 + $0x18] sm:$0xff]
    %s124 = scalar_lea.vmem [#allocation7], 32
    %v125 = vld [vmem:[%s124] sm:$0xff]
    %v126 = vld [vmem:[%s124 + $0x8] sm:$0xff]
    %v127 = vld [vmem:[%s124 + $0x10] sm:$0xff]
    %v128 = vld [vmem:[%s124 + $0x18] sm:$0xff]
    %s129 = scalar_lea.vmem [#allocation7], 64
    %v130 = vld [vmem:[%s129] sm:$0xff]
    %v131 = vld [vmem:[%s129 + $0x8] sm:$0xff]
    %v132 = vld [vmem:[%s129 + $0x10] sm:$0xff]
    %v133 = vld [vmem:[%s129 + $0x18] sm:$0xff]
    %v134 = vld [vmem:[%s7] sm:$0x1]
    %s135 = scalar_lea.vmem %s7, 1
    %v136 = vld [vmem:[%s135] sm:$0x1]
    %s137 = scalar_lea.vmem %s7, 2
    %v138 = vld [vmem:[%s137] sm:$0x1]
    %v139 = vld [vmem:[%s8] sm:$0x1]
    %141 = vset.pattern.permute.xlu0 0
    %142 = vperm.xlu0 %141, %v80
    %v143 = vpop.permute.xlu0 %142
    %v146 = vlaneseq
    %v147 = vshrl.u32 %v146, 7
    %v148 = vsub.s32 0, %v147
    %v149 = vrot.slane %v81, %v148
    %v151 = vmul.f32 %v143, %v149
    %v153 = vlaneseq
    %v154 = vshrl.u32 %v153, 7
    %v155 = vsub.s32 0, %v154
    %v156 = vrot.slane %v100, %v155
    %v158 = vadd.f32 %v151, %v156
    %v160 = vlaneseq
    %v161 = vshrl.u32 %v160, 7
    %v162 = vsub.s32 0, %v161
    %v163 = vrot.slane %v83, %v162
    %v165 = vmul.f32 %v143, %v163
    %v167 = vlaneseq
    %v168 = vshrl.u32 %v167, 7
    %v169 = vsub.s32 0, %v168
    %v170 = vrot.slane %v102, %v169
    %v172 = vadd.f32 %v165, %v170
    %v174 = vlaneseq
    %v175 = vshrl.u32 %v174, 7
    %v176 = vsub.s32 0, %v175
    %v177 = vrot.slane %v85, %v176
    %v179 = vmul.f32 %v143, %v177
    %v181 = vlaneseq
    %v182 = vshrl.u32 %v181, 7
    %v183 = vsub.s32 0, %v182
    %v184 = vrot.slane %v104, %v183
    %v186 = vadd.f32 %v179, %v184
    %vm187 = vcmask 261120
    %v189 = vsel %vm187, 0.0, 0
    %191 = vmatprep.subr.mxu0 0.0
    %192 = vmatpush1.msra.mxu0 %v86
    %193 = vmatprep.subr.mxu0 0.0
    %194 = vmatpush1.msra.mxu0 %v87
    %195 = vmatprep.subr.mxu0 0.0
    %196 = vmatpush1.msra.mxu0 %v88
    %197 = vmatprep.subr.mxu0 0.0
    %198 = vmatpush1.msra.mxu0 %v89
    %199 = vmatprep.subr.mxu0 0.0
    %200 = vmatpush1.msra.mxu0 0.0
    %201 = vmatprep.subr.mxu0 0.0
    %202 = vmatpush1.msra.mxu0 0.0
    %203 = vmatprep.subr.mxu0 0.0
    %204 = vmatpush1.msra.mxu0 0.0
    %205 = vmatprep.subr.mxu0 0.0
    %206 = vmatpush1.msra.mxu0 0.0
    %207 = vmatprep.subr.mxu0 0.0
    %208 = vmatpush1.msra.mxu0 0.0
    %209 = vmatprep.subr.mxu0 0.0
    %210 = vmatpush1.msra.mxu0 0.0
    %211 = vmatprep.subr.mxu0 0.0
    %212 = vmatpush1.msra.mxu0 0.0
    %213 = vmatprep.subr.mxu0 0.0
    %214 = vmatpush1.msra.mxu0 0.0
    %215 = vmatprep.subr.mxu0 0.0
    %216 = vmatpush1.msra.mxu0 0.0
    %217 = vmatprep.subr.mxu0 0.0
    %218 = vmatpush1.msra.mxu0 0.0
    %219 = vmatprep.subr.mxu0 0.0
    %220 = vmatpush1.msra.mxu0 0.0
    %221 = vmatprep.subr.mxu0 0.0
    %222 = vmatpush1.msra.mxu0 0.0
    %223 = vmatprep.subr.mxu0 0.0
    %224 = vmatpush1.msra.mxu0 0.0
    %225 = vmatprep.subr.mxu0 0.0
    %226 = vmatpush1.msra.mxu0 0.0
    %227 = vmatprep.subr.mxu0 0.0
    %228 = vmatpush1.msra.mxu0 0.0
    %229 = vmatprep.subr.mxu0 0.0
    %230 = vmatpush1.msra.mxu0 0.0
    %231 = vmatprep.subr.mxu0 0.0
    %232 = vmatpush1.msra.mxu0 0.0
    %233 = vmatprep.subr.mxu0 0.0
    %234 = vmatpush1.msra.mxu0 0.0
    %235 = vmatprep.subr.mxu0 0.0
    %236 = vmatpush1.msra.mxu0 0.0
    %237 = vmatprep.subr.mxu0 0.0
    %238 = vmatpush1.msra.mxu0 0.0
    %239 = vmatprep.subr.mxu0 0.0
    %240 = vmatpush1.msra.mxu0 0.0
    %241 = vmatprep.subr.mxu0 0.0
    %242 = vmatpush1.msra.mxu0 0.0
    %243 = vmatprep.subr.mxu0 0.0
    %244 = vmatpush1.msra.mxu0 0.0
    %245 = vmatprep.subr.mxu0 0.0
    %246 = vmatpush1.msra.mxu0 0.0
    %247 = vmatprep.subr.mxu0 0.0
    %248 = vmatpush1.msra.mxu0 0.0
    %249 = vmatprep.subr.mxu0 0.0
    %250 = vmatpush1.msra.mxu0 0.0
    %251 = vmatprep.subr.mxu0 0.0
    %252 = vmatpush1.msra.mxu0 0.0
    %253 = vmatprep.subr.mxu0 0.0
    %254 = vmatpush1.msra.mxu0 0.0
    %255 = vmatprep.mubr.f32.mxu0 0.0
    %256 = vmatmul.mubr.f32.gmra.mrb[0].mxu0 %v189
    %v257 = vpop.f32.mrb[0].mxu0
    %v258 = vadd.f32 0.0, %v257
    %v259 = vpop.f32.mrb[0].mxu0
    %260 = vdwg.mxu0
    %261 = vmatprep.subr.mxu0 0.0
    %262 = vmatpush1.msra.mxu0 %v91
    %263 = vmatprep.subr.mxu0 0.0
    %264 = vmatpush1.msra.mxu0 %v92
    %265 = vmatprep.subr.mxu0 0.0
    %266 = vmatpush1.msra.mxu0 %v93
    %267 = vmatprep.subr.mxu0 0.0
    %268 = vmatpush1.msra.mxu0 %v94
    %269 = vmatprep.subr.mxu0 0.0
    %270 = vmatpush1.msra.mxu0 0.0
    %271 = vmatprep.subr.mxu0 0.0
    %272 = vmatpush1.msra.mxu0 0.0
    %273 = vmatprep.subr.mxu0 0.0
    %274 = vmatpush1.msra.mxu0 0.0
    %275 = vmatprep.subr.mxu0 0.0
    %276 = vmatpush1.msra.mxu0 0.0
    %277 = vmatprep.subr.mxu0 0.0
    %278 = vmatpush1.msra.mxu0 0.0
    %279 = vmatprep.subr.mxu0 0.0
    %280 = vmatpush1.msra.mxu0 0.0
    %281 = vmatprep.subr.mxu0 0.0
    %282 = vmatpush1.msra.mxu0 0.0
    %283 = vmatprep.subr.mxu0 0.0
    %284 = vmatpush1.msra.mxu0 0.0
    %285 = vmatprep.subr.mxu0 0.0
    %286 = vmatpush1.msra.mxu0 0.0
    %287 = vmatprep.subr.mxu0 0.0
    %288 = vmatpush1.msra.mxu0 0.0
    %289 = vmatprep.subr.mxu0 0.0
    %290 = vmatpush1.msra.mxu0 0.0
    %291 = vmatprep.subr.mxu0 0.0
    %292 = vmatpush1.msra.mxu0 0.0
    %293 = vmatprep.subr.mxu0 0.0
    %294 = vmatpush1.msra.mxu0 0.0
    %295 = vmatprep.subr.mxu0 0.0
    %296 = vmatpush1.msra.mxu0 0.0
    %297 = vmatprep.subr.mxu0 0.0
    %298 = vmatpush1.msra.mxu0 0.0
    %299 = vmatprep.subr.mxu0 0.0
    %300 = vmatpush1.msra.mxu0 0.0
    %301 = vmatprep.subr.mxu0 0.0
    %302 = vmatpush1.msra.mxu0 0.0
    %303 = vmatprep.subr.mxu0 0.0
    %304 = vmatpush1.msra.mxu0 0.0
    %305 = vmatprep.subr.mxu0 0.0
    %306 = vmatpush1.msra.mxu0 0.0
    %307 = vmatprep.subr.mxu0 0.0
    %308 = vmatpush1.msra.mxu0 0.0
    %309 = vmatprep.subr.mxu0 0.0
    %310 = vmatpush1.msra.mxu0 0.0
    %311 = vmatprep.subr.mxu0 0.0
    %312 = vmatpush1.msra.mxu0 0.0
    %313 = vmatprep.subr.mxu0 0.0
    %314 = vmatpush1.msra.mxu0 0.0
    %315 = vmatprep.subr.mxu0 0.0
    %316 = vmatpush1.msra.mxu0 0.0
    %317 = vmatprep.subr.mxu0 0.0
    %318 = vmatpush1.msra.mxu0 0.0
    %319 = vmatprep.subr.mxu0 0.0
    %320 = vmatpush1.msra.mxu0 0.0
    %321 = vmatprep.subr.mxu0 0.0
    %322 = vmatpush1.msra.mxu0 0.0
    %323 = vmatprep.subr.mxu0 0.0
    %324 = vmatpush1.msra.mxu0 0.0
    %325 = vmatprep.mubr.f32.mxu0 0.0
    %326 = vmatmul.mubr.f32.gmra.mrb[0].mxu0 %v189
    %v327 = vpop.f32.mrb[0].mxu0
    %v328 = vadd.f32 0.0, %v327
    %v329 = vpop.f32.mrb[0].mxu0
    %330 = vdwg.mxu0
    %v331 = vadd.f32 %v158, %v258
    %v332 = vmul.f32 %v331, 0.5
    %v333 = vtanh.pop %v332
    %v334 = vmul.f32 %v333, 0.5
    %v335 = vadd.f32 %v334, 0.5
    %v336 = vadd.f32 %v172, %v328
    %v337 = vmul.f32 %v336, 0.5
    %v338 = vtanh.pop %v337
    %v339 = vmul.f32 %v338, 0.5
    %v340 = vadd.f32 %v339, 0.5
    %v342 = vlaneseq
    %v343 = vshrl.u32 %v342, 7
    %v344 = vsub.s32 0, %v343
    %v345 = vrot.slane %v105, %v344
    %347 = vmatprep.subr.mxu0 0.0
    %348 = vmatpush1.msra.mxu0 %v96
    %349 = vmatprep.subr.mxu0 0.0
    %350 = vmatpush1.msra.mxu0 %v97
    %351 = vmatprep.subr.mxu0 0.0
    %352 = vmatpush1.msra.mxu0 %v98
    %353 = vmatprep.subr.mxu0 0.0
    %354 = vmatpush1.msra.mxu0 %v99
    %355 = vmatprep.subr.mxu0 0.0
    %356 = vmatpush1.msra.mxu0 0.0
    %357 = vmatprep.subr.mxu0 0.0
    %358 = vmatpush1.msra.mxu0 0.0
    %359 = vmatprep.subr.mxu0 0.0
    %360 = vmatpush1.msra.mxu0 0.0
    %361 = vmatprep.subr.mxu0 0.0
    %362 = vmatpush1.msra.mxu0 0.0
    %363 = vmatprep.subr.mxu0 0.0
    %364 = vmatpush1.msra.mxu0 0.0
    %365 = vmatprep.subr.mxu0 0.0
    %366 = vmatpush1.msra.mxu0 0.0
    %367 = vmatprep.subr.mxu0 0.0
    %368 = vmatpush1.msra.mxu0 0.0
    %369 = vmatprep.subr.mxu0 0.0
    %370 = vmatpush1.msra.mxu0 0.0
    %371 = vmatprep.subr.mxu0 0.0
    %372 = vmatpush1.msra.mxu0 0.0
    %373 = vmatprep.subr.mxu0 0.0
    %374 = vmatpush1.msra.mxu0 0.0
    %375 = vmatprep.subr.mxu0 0.0
    %376 = vmatpush1.msra.mxu0 0.0
    %377 = vmatprep.subr.mxu0 0.0
    %378 = vmatpush1.msra.mxu0 0.0
    %379 = vmatprep.subr.mxu0 0.0
    %380 = vmatpush1.msra.mxu0 0.0
    %381 = vmatprep.subr.mxu0 0.0
    %382 = vmatpush1.msra.mxu0 0.0
    %383 = vmatprep.subr.mxu0 0.0
    %384 = vmatpush1.msra.mxu0 0.0
    %385 = vmatprep.subr.mxu0 0.0
    %386 = vmatpush1.msra.mxu0 0.0
    %387 = vmatprep.subr.mxu0 0.0
    %388 = vmatpush1.msra.mxu0 0.0
    %389 = vmatprep.subr.mxu0 0.0
    %390 = vmatpush1.msra.mxu0 0.0
    %391 = vmatprep.subr.mxu0 0.0
    %392 = vmatpush1.msra.mxu0 0.0
    %393 = vmatprep.subr.mxu0 0.0
    %394 = vmatpush1.msra.mxu0 0.0
    %395 = vmatprep.subr.mxu0 0.0
    %396 = vmatpush1.msra.mxu0 0.0
    %397 = vmatprep.subr.mxu0 0.0
    %398 = vmatpush1.msra.mxu0 0.0
    %399 = vmatprep.subr.mxu0 0.0
    %400 = vmatpush1.msra.mxu0 0.0
    %401 = vmatprep.subr.mxu0 0.0
    %402 = vmatpush1.msra.mxu0 0.0
    %403 = vmatprep.subr.mxu0 0.0
    %404 = vmatpush1.msra.mxu0 0.0
    %405 = vmatprep.subr.mxu0 0.0
    %406 = vmatpush1.msra.mxu0 0.0
    %407 = vmatprep.subr.mxu0 0.0
    %408 = vmatpush1.msra.mxu0 0.0
    %409 = vmatprep.subr.mxu0 0.0
    %410 = vmatpush1.msra.mxu0 0.0
    %411 = vmatprep.mubr.f32.mxu0 0.0
    %412 = vmatmul.mubr.f32.gmra.mrb[0].mxu0 %v189
    %v413 = vpop.f32.mrb[0].mxu0
    %v414 = vadd.f32 %v345, %v413
    %v415 = vpop.f32.mrb[0].mxu0
    %416 = vdwg.mxu0
    %v417 = vmul.f32 %v335, %v414
    %v418 = vadd.f32 %v186, %v417
    %v419 = vtanh.pop %v418
    %v420 = vsub.f32 0.0, %v419
    %v421 = vmul.f32 %v340, %v420
    %v422 = vadd.f32 %v419, %v421
    %v424 = vlaneseq
    %v425 = vshrl.u32 %v424, 7
    %v426 = vsub.s32 0, %v425
    %v427 = vrot.slane %v134, %v426
    %v430 = vsel %vm187, %v422, 0
    %432 = vmatprep.subr.mxu0 0.0
    %433 = vmatpush1.msra.mxu0 %v106
    %434 = vmatprep.subr.mxu0 0.0
    %435 = vmatpush1.msra.mxu0 %v107
    %436 = vmatprep.subr.mxu0 0.0
    %437 = vmatpush1.msra.mxu0 %v108
    %438 = vmatprep.subr.mxu0 0.0
    %439 = vmatpush1.msra.mxu0 %v109
    %440 = vmatprep.subr.mxu0 0.0
    %441 = vmatpush1.msra.mxu0 0.0
    %442 = vmatprep.subr.mxu0 0.0
    %443 = vmatpush1.msra.mxu0 0.0
    %444 = vmatprep.subr.mxu0 0.0
    %445 = vmatpush1.msra.mxu0 0.0
    %446 = vmatprep.subr.mxu0 0.0
    %447 = vmatpush1.msra.mxu0 0.0
    %448 = vmatprep.subr.mxu0 0.0
    %449 = vmatpush1.msra.mxu0 0.0
    %450 = vmatprep.subr.mxu0 0.0
    %451 = vmatpush1.msra.mxu0 0.0
    %452 = vmatprep.subr.mxu0 0.0
    %453 = vmatpush1.msra.mxu0 0.0
    %454 = vmatprep.subr.mxu0 0.0
    %455 = vmatpush1.msra.mxu0 0.0
    %456 = vmatprep.subr.mxu0 0.0
    %457 = vmatpush1.msra.mxu0 0.0
    %458 = vmatprep.subr.mxu0 0.0
    %459 = vmatpush1.msra.mxu0 0.0
    %460 = vmatprep.subr.mxu0 0.0
    %461 = vmatpush1.msra.mxu0 0.0
    %462 = vmatprep.subr.mxu0 0.0
    %463 = vmatpush1.msra.mxu0 0.0
    %464 = vmatprep.subr.mxu0 0.0
    %465 = vmatpush1.msra.mxu0 0.0
    %466 = vmatprep.subr.mxu0 0.0
    %467 = vmatpush1.msra.mxu0 0.0
    %468 = vmatprep.subr.mxu0 0.0
    %469 = vmatpush1.msra.mxu0 0.0
    %470 = vmatprep.subr.mxu0 0.0
    %471 = vmatpush1.msra.mxu0 0.0
    %472 = vmatprep.subr.mxu0 0.0
    %473 = vmatpush1.msra.mxu0 0.0
    %474 = vmatprep.subr.mxu0 0.0
    %475 = vmatpush1.msra.mxu0 0.0
    %476 = vmatprep.subr.mxu0 0.0
    %477 = vmatpush1.msra.mxu0 0.0
    %478 = vmatprep.subr.mxu0 0.0
    %479 = vmatpush1.msra.mxu0 0.0
    %480 = vmatprep.subr.mxu0 0.0
    %481 = vmatpush1.msra.mxu0 0.0
    %482 = vmatprep.subr.mxu0 0.0
    %483 = vmatpush1.msra.mxu0 0.0
    %484 = vmatprep.subr.mxu0 0.0
    %485 = vmatpush1.msra.mxu0 0.0
    %486 = vmatprep.subr.mxu0 0.0
    %487 = vmatpush1.msra.mxu0 0.0
    %488 = vmatprep.subr.mxu0 0.0
    %489 = vmatpush1.msra.mxu0 0.0
    %490 = vmatprep.subr.mxu0 0.0
    %491 = vmatpush1.msra.mxu0 0.0
    %492 = vmatprep.subr.mxu0 0.0
    %493 = vmatpush1.msra.mxu0 0.0
    %494 = vmatprep.subr.mxu0 0.0
    %495 = vmatpush1.msra.mxu0 0.0
    %496 = vmatprep.mubr.f32.mxu0 0.0
    %497 = vmatmul.mubr.f32.gmra.mrb[0].mxu0 %v430
    %v498 = vpop.f32.mrb[0].mxu0
    %v499 = vadd.f32 %v427, %v498
    %v500 = vpop.f32.mrb[0].mxu0
    %501 = vdwg.mxu0
    %v503 = vlaneseq
    %v504 = vshrl.u32 %v503, 7
    %v505 = vsub.s32 0, %v504
    %v506 = vrot.slane %v136, %v505
    %508 = vmatprep.subr.mxu0 0.0
    %509 = vmatpush1.msra.mxu0 %v111
    %510 = vmatprep.subr.mxu0 0.0
    %511 = vmatpush1.msra.mxu0 %v112
    %512 = vmatprep.subr.mxu0 0.0
    %513 = vmatpush1.msra.mxu0 %v113
    %514 = vmatprep.subr.mxu0 0.0
    %515 = vmatpush1.msra.mxu0 %v114
    %516 = vmatprep.subr.mxu0 0.0
    %517 = vmatpush1.msra.mxu0 0.0
    %518 = vmatprep.subr.mxu0 0.0
    %519 = vmatpush1.msra.mxu0 0.0
    %520 = vmatprep.subr.mxu0 0.0
    %521 = vmatpush1.msra.mxu0 0.0
    %522 = vmatprep.subr.mxu0 0.0
    %523 = vmatpush1.msra.mxu0 0.0
    %524 = vmatprep.subr.mxu0 0.0
    %525 = vmatpush1.msra.mxu0 0.0
    %526 = vmatprep.subr.mxu0 0.0
    %527 = vmatpush1.msra.mxu0 0.0
    %528 = vmatprep.subr.mxu0 0.0
    %529 = vmatpush1.msra.mxu0 0.0
    %530 = vmatprep.subr.mxu0 0.0
    %531 = vmatpush1.msra.mxu0 0.0
    %532 = vmatprep.subr.mxu0 0.0
    %533 = vmatpush1.msra.mxu0 0.0
    %534 = vmatprep.subr.mxu0 0.0
    %535 = vmatpush1.msra.mxu0 0.0
    %536 = vmatprep.subr.mxu0 0.0
    %537 = vmatpush1.msra.mxu0 0.0
    %538 = vmatprep.subr.mxu0 0.0
    %539 = vmatpush1.msra.mxu0 0.0
    %540 = vmatprep.subr.mxu0 0.0
    %541 = vmatpush1.msra.mxu0 0.0
    %542 = vmatprep.subr.mxu0 0.0
    %543 = vmatpush1.msra.mxu0 0.0
    %544 = vmatprep.subr.mxu0 0.0
    %545 = vmatpush1.msra.mxu0 0.0
    %546 = vmatprep.subr.mxu0 0.0
    %547 = vmatpush1.msra.mxu0 0.0
    %548 = vmatprep.subr.mxu0 0.0
    %549 = vmatpush1.msra.mxu0 0.0
    %550 = vmatprep.subr.mxu0 0.0
    %551 = vmatpush1.msra.mxu0 0.0
    %552 = vmatprep.subr.mxu0 0.0
    %553 = vmatpush1.msra.mxu0 0.0
    %554 = vmatprep.subr.mxu0 0.0
    %555 = vmatpush1.msra.mxu0 0.0
    %556 = vmatprep.subr.mxu0 0.0
    %557 = vmatpush1.msra.mxu0 0.0
    %558 = vmatprep.subr.mxu0 0.0
    %559 = vmatpush1.msra.mxu0 0.0
    %560 = vmatprep.subr.mxu0 0.0
    %561 = vmatpush1.msra.mxu0 0.0
    %562 = vmatprep.subr.mxu0 0.0
    %563 = vmatpush1.msra.mxu0 0.0
    %564 = vmatprep.subr.mxu0 0.0
    %565 = vmatpush1.msra.mxu0 0.0
    %566 = vmatprep.subr.mxu0 0.0
    %567 = vmatpush1.msra.mxu0 0.0
    %568 = vmatprep.subr.mxu0 0.0
    %569 = vmatpush1.msra.mxu0 0.0
    %570 = vmatprep.subr.mxu0 0.0
    %571 = vmatpush1.msra.mxu0 0.0
    %572 = vmatprep.mubr.f32.mxu0 0.0
    %573 = vmatmul.mubr.f32.gmra.mrb[0].mxu0 %v430
    %v574 = vpop.f32.mrb[0].mxu0
    %v575 = vadd.f32 %v506, %v574
    %v576 = vpop.f32.mrb[0].mxu0
    %577 = vdwg.mxu0
    %v579 = vlaneseq
    %v580 = vshrl.u32 %v579, 7
    %v581 = vsub.s32 0, %v580
    %v582 = vrot.slane %v138, %v581
    %584 = vmatprep.subr.mxu0 0.0
    %585 = vmatpush1.msra.mxu0 %v116
    %586 = vmatprep.subr.mxu0 0.0
    %587 = vmatpush1.msra.mxu0 %v117
    %588 = vmatprep.subr.mxu0 0.0
    %589 = vmatpush1.msra.mxu0 %v118
    %590 = vmatprep.subr.mxu0 0.0
    %591 = vmatpush1.msra.mxu0 %v119
    %592 = vmatprep.subr.mxu0 0.0
    %593 = vmatpush1.msra.mxu0 0.0
    %594 = vmatprep.subr.mxu0 0.0
    %595 = vmatpush1.msra.mxu0 0.0
    %596 = vmatprep.subr.mxu0 0.0
    %597 = vmatpush1.msra.mxu0 0.0
    %598 = vmatprep.subr.mxu0 0.0
    %599 = vmatpush1.msra.mxu0 0.0
    %600 = vmatprep.subr.mxu0 0.0
    %601 = vmatpush1.msra.mxu0 0.0
    %602 = vmatprep.subr.mxu0 0.0
    %603 = vmatpush1.msra.mxu0 0.0
    %604 = vmatprep.subr.mxu0 0.0
    %605 = vmatpush1.msra.mxu0 0.0
    %606 = vmatprep.subr.mxu0 0.0
    %607 = vmatpush1.msra.mxu0 0.0
    %608 = vmatprep.subr.mxu0 0.0
    %609 = vmatpush1.msra.mxu0 0.0
    %610 = vmatprep.subr.mxu0 0.0
    %611 = vmatpush1.msra.mxu0 0.0
    %612 = vmatprep.subr.mxu0 0.0
    %613 = vmatpush1.msra.mxu0 0.0
    %614 = vmatprep.subr.mxu0 0.0
    %615 = vmatpush1.msra.mxu0 0.0
    %616 = vmatprep.subr.mxu0 0.0
    %617 = vmatpush1.msra.mxu0 0.0
    %618 = vmatprep.subr.mxu0 0.0
    %619 = vmatpush1.msra.mxu0 0.0
    %620 = vmatprep.subr.mxu0 0.0
    %621 = vmatpush1.msra.mxu0 0.0
    %622 = vmatprep.subr.mxu0 0.0
    %623 = vmatpush1.msra.mxu0 0.0
    %624 = vmatprep.subr.mxu0 0.0
    %625 = vmatpush1.msra.mxu0 0.0
    %626 = vmatprep.subr.mxu0 0.0
    %627 = vmatpush1.msra.mxu0 0.0
    %628 = vmatprep.subr.mxu0 0.0
    %629 = vmatpush1.msra.mxu0 0.0
    %630 = vmatprep.subr.mxu0 0.0
    %631 = vmatpush1.msra.mxu0 0.0
    %632 = vmatprep.subr.mxu0 0.0
    %633 = vmatpush1.msra.mxu0 0.0
    %634 = vmatprep.subr.mxu0 0.0
    %635 = vmatpush1.msra.mxu0 0.0
    %636 = vmatprep.subr.mxu0 0.0
    %637 = vmatpush1.msra.mxu0 0.0
    %638 = vmatprep.subr.mxu0 0.0
    %639 = vmatpush1.msra.mxu0 0.0
    %640 = vmatprep.subr.mxu0 0.0
    %641 = vmatpush1.msra.mxu0 0.0
    %642 = vmatprep.subr.mxu0 0.0
    %643 = vmatpush1.msra.mxu0 0.0
    %644 = vmatprep.subr.mxu0 0.0
    %645 = vmatpush1.msra.mxu0 0.0
    %646 = vmatprep.subr.mxu0 0.0
    %647 = vmatpush1.msra.mxu0 0.0
    %648 = vmatprep.mubr.f32.mxu0 0.0
    %649 = vmatmul.mubr.f32.gmra.mrb[0].mxu0 %v430
    %v650 = vpop.f32.mrb[0].mxu0
    %v651 = vadd.f32 %v582, %v650
    %v652 = vpop.f32.mrb[0].mxu0
    %653 = vdwg.mxu0
    %654 = vmatprep.subr.mxu0 0.0
    %655 = vmatpush1.msra.mxu0 %v120
    %656 = vmatprep.subr.mxu0 0.0
    %657 = vmatpush1.msra.mxu0 %v121
    %658 = vmatprep.subr.mxu0 0.0
    %659 = vmatpush1.msra.mxu0 %v122
    %660 = vmatprep.subr.mxu0 0.0
    %661 = vmatpush1.msra.mxu0 %v123
    %662 = vmatprep.subr.mxu0 0.0
    %663 = vmatpush1.msra.mxu0 0.0
    %664 = vmatprep.subr.mxu0 0.0
    %665 = vmatpush1.msra.mxu0 0.0
    %666 = vmatprep.subr.mxu0 0.0
    %667 = vmatpush1.msra.mxu0 0.0
    %668 = vmatprep.subr.mxu0 0.0
    %669 = vmatpush1.msra.mxu0 0.0
    %670 = vmatprep.subr.mxu0 0.0
    %671 = vmatpush1.msra.mxu0 0.0
    %672 = vmatprep.subr.mxu0 0.0
    %673 = vmatpush1.msra.mxu0 0.0
    %674 = vmatprep.subr.mxu0 0.0
    %675 = vmatpush1.msra.mxu0 0.0
    %676 = vmatprep.subr.mxu0 0.0
    %677 = vmatpush1.msra.mxu0 0.0
    %678 = vmatprep.subr.mxu0 0.0
    %679 = vmatpush1.msra.mxu0 0.0
    %680 = vmatprep.subr.mxu0 0.0
    %681 = vmatpush1.msra.mxu0 0.0
    %682 = vmatprep.subr.mxu0 0.0
    %683 = vmatpush1.msra.mxu0 0.0
    %684 = vmatprep.subr.mxu0 0.0
    %685 = vmatpush1.msra.mxu0 0.0
    %686 = vmatprep.subr.mxu0 0.0
    %687 = vmatpush1.msra.mxu0 0.0
    %688 = vmatprep.subr.mxu0 0.0
    %689 = vmatpush1.msra.mxu0 0.0
    %690 = vmatprep.subr.mxu0 0.0
    %691 = vmatpush1.msra.mxu0 0.0
    %692 = vmatprep.subr.mxu0 0.0
    %693 = vmatpush1.msra.mxu0 0.0
    %694 = vmatprep.subr.mxu0 0.0
    %695 = vmatpush1.msra.mxu0 0.0
    %696 = vmatprep.subr.mxu0 0.0
    %697 = vmatpush1.msra.mxu0 0.0
    %698 = vmatprep.subr.mxu0 0.0
    %699 = vmatpush1.msra.mxu0 0.0
    %700 = vmatprep.subr.mxu0 0.0
    %701 = vmatpush1.msra.mxu0 0.0
    %702 = vmatprep.subr.mxu0 0.0
    %703 = vmatpush1.msra.mxu0 0.0
    %704 = vmatprep.subr.mxu0 0.0
    %705 = vmatpush1.msra.mxu0 0.0
    %706 = vmatprep.subr.mxu0 0.0
    %707 = vmatpush1.msra.mxu0 0.0
    %708 = vmatprep.subr.mxu0 0.0
    %709 = vmatpush1.msra.mxu0 0.0
    %710 = vmatprep.subr.mxu0 0.0
    %711 = vmatpush1.msra.mxu0 0.0
    %712 = vmatprep.subr.mxu0 0.0
    %713 = vmatpush1.msra.mxu0 0.0
    %714 = vmatprep.subr.mxu0 0.0
    %715 = vmatpush1.msra.mxu0 0.0
    %716 = vmatprep.subr.mxu0 0.0
    %717 = vmatpush1.msra.mxu0 0.0
    %718 = vmatprep.mubr.f32.mxu0 0.0
    %719 = vmatmul.mubr.f32.gmra.mrb[0].mxu0 %v189
    %v720 = vpop.f32.mrb[0].mxu0
    %v721 = vadd.f32 0.0, %v720
    %v722 = vpop.f32.mrb[0].mxu0
    %723 = vdwg.mxu0
    %724 = vmatprep.subr.mxu0 0.0
    %725 = vmatpush1.msra.mxu0 %v125
    %726 = vmatprep.subr.mxu0 0.0
    %727 = vmatpush1.msra.mxu0 %v126
    %728 = vmatprep.subr.mxu0 0.0
    %729 = vmatpush1.msra.mxu0 %v127
    %730 = vmatprep.subr.mxu0 0.0
    %731 = vmatpush1.msra.mxu0 %v128
    %732 = vmatprep.subr.mxu0 0.0
    %733 = vmatpush1.msra.mxu0 0.0
    %734 = vmatprep.subr.mxu0 0.0
    %735 = vmatpush1.msra.mxu0 0.0
    %736 = vmatprep.subr.mxu0 0.0
    %737 = vmatpush1.msra.mxu0 0.0
    %738 = vmatprep.subr.mxu0 0.0
    %739 = vmatpush1.msra.mxu0 0.0
    %740 = vmatprep.subr.mxu0 0.0
    %741 = vmatpush1.msra.mxu0 0.0
    %742 = vmatprep.subr.mxu0 0.0
    %743 = vmatpush1.msra.mxu0 0.0
    %744 = vmatprep.subr.mxu0 0.0
    %745 = vmatpush1.msra.mxu0 0.0
    %746 = vmatprep.subr.mxu0 0.0
    %747 = vmatpush1.msra.mxu0 0.0
    %748 = vmatprep.subr.mxu0 0.0
    %749 = vmatpush1.msra.mxu0 0.0
    %750 = vmatprep.subr.mxu0 0.0
    %751 = vmatpush1.msra.mxu0 0.0
    %752 = vmatprep.subr.mxu0 0.0
    %753 = vmatpush1.msra.mxu0 0.0
    %754 = vmatprep.subr.mxu0 0.0
    %755 = vmatpush1.msra.mxu0 0.0
    %756 = vmatprep.subr.mxu0 0.0
    %757 = vmatpush1.msra.mxu0 0.0
    %758 = vmatprep.subr.mxu0 0.0
    %759 = vmatpush1.msra.mxu0 0.0
    %760 = vmatprep.subr.mxu0 0.0
    %761 = vmatpush1.msra.mxu0 0.0
    %762 = vmatprep.subr.mxu0 0.0
    %763 = vmatpush1.msra.mxu0 0.0
    %764 = vmatprep.subr.mxu0 0.0
    %765 = vmatpush1.msra.mxu0 0.0
    %766 = vmatprep.subr.mxu0 0.0
    %767 = vmatpush1.msra.mxu0 0.0
    %768 = vmatprep.subr.mxu0 0.0
    %769 = vmatpush1.msra.mxu0 0.0
    %770 = vmatprep.subr.mxu0 0.0
    %771 = vmatpush1.msra.mxu0 0.0
    %772 = vmatprep.subr.mxu0 0.0
    %773 = vmatpush1.msra.mxu0 0.0
    %774 = vmatprep.subr.mxu0 0.0
    %775 = vmatpush1.msra.mxu0 0.0
    %776 = vmatprep.subr.mxu0 0.0
    %777 = vmatpush1.msra.mxu0 0.0
    %778 = vmatprep.subr.mxu0 0.0
    %779 = vmatpush1.msra.mxu0 0.0
    %780 = vmatprep.subr.mxu0 0.0
    %781 = vmatpush1.msra.mxu0 0.0
    %782 = vmatprep.subr.mxu0 0.0
    %783 = vmatpush1.msra.mxu0 0.0
    %784 = vmatprep.subr.mxu0 0.0
    %785 = vmatpush1.msra.mxu0 0.0
    %786 = vmatprep.subr.mxu0 0.0
    %787 = vmatpush1.msra.mxu0 0.0
    %788 = vmatprep.mubr.f32.mxu0 0.0
    %789 = vmatmul.mubr.f32.gmra.mrb[0].mxu0 %v189
    %v790 = vpop.f32.mrb[0].mxu0
    %v791 = vadd.f32 0.0, %v790
    %v792 = vpop.f32.mrb[0].mxu0
    %793 = vdwg.mxu0
    %v794 = vadd.f32 %v499, %v721
    %v795 = vmul.f32 %v794, 0.5
    %v796 = vtanh.pop %v795
    %v797 = vmul.f32 %v796, 0.5
    %v798 = vadd.f32 %v797, 0.5
    %v799 = vadd.f32 %v575, %v791
    %v800 = vmul.f32 %v799, 0.5
    %v801 = vtanh.pop %v800
    %v802 = vmul.f32 %v801, 0.5
    %v803 = vadd.f32 %v802, 0.5
    %v805 = vlaneseq
    %v806 = vshrl.u32 %v805, 7
    %v807 = vsub.s32 0, %v806
    %v808 = vrot.slane %v139, %v807
    %810 = vmatprep.subr.mxu0 0.0
    %811 = vmatpush1.msra.mxu0 %v130
    %812 = vmatprep.subr.mxu0 0.0
    %813 = vmatpush1.msra.mxu0 %v131
    %814 = vmatprep.subr.mxu0 0.0
    %815 = vmatpush1.msra.mxu0 %v132
    %816 = vmatprep.subr.mxu0 0.0
    %817 = vmatpush1.msra.mxu0 %v133
    %818 = vmatprep.subr.mxu0 0.0
    %819 = vmatpush1.msra.mxu0 0.0
    %820 = vmatprep.subr.mxu0 0.0
    %821 = vmatpush1.msra.mxu0 0.0
    %822 = vmatprep.subr.mxu0 0.0
    %823 = vmatpush1.msra.mxu0 0.0
    %824 = vmatprep.subr.mxu0 0.0
    %825 = vmatpush1.msra.mxu0 0.0
    %826 = vmatprep.subr.mxu0 0.0
    %827 = vmatpush1.msra.mxu0 0.0
    %828 = vmatprep.subr.mxu0 0.0
    %829 = vmatpush1.msra.mxu0 0.0
    %830 = vmatprep.subr.mxu0 0.0
    %831 = vmatpush1.msra.mxu0 0.0
    %832 = vmatprep.subr.mxu0 0.0
    %833 = vmatpush1.msra.mxu0 0.0
    %834 = vmatprep.subr.mxu0 0.0
    %835 = vmatpush1.msra.mxu0 0.0
    %836 = vmatprep.subr.mxu0 0.0
    %837 = vmatpush1.msra.mxu0 0.0
    %838 = vmatprep.subr.mxu0 0.0
    %839 = vmatpush1.msra.mxu0 0.0
    %840 = vmatprep.subr.mxu0 0.0
    %841 = vmatpush1.msra.mxu0 0.0
    %842 = vmatprep.subr.mxu0 0.0
    %843 = vmatpush1.msra.mxu0 0.0
    %844 = vmatprep.subr.mxu0 0.0
    %845 = vmatpush1.msra.mxu0 0.0
    %846 = vmatprep.subr.mxu0 0.0
    %847 = vmatpush1.msra.mxu0 0.0
    %848 = vmatprep.subr.mxu0 0.0
    %849 = vmatpush1.msra.mxu0 0.0
    %850 = vmatprep.subr.mxu0 0.0
    %851 = vmatpush1.msra.mxu0 0.0
    %852 = vmatprep.subr.mxu0 0.0
    %853 = vmatpush1.msra.mxu0 0.0
    %854 = vmatprep.subr.mxu0 0.0
    %855 = vmatpush1.msra.mxu0 0.0
    %856 = vmatprep.subr.mxu0 0.0
    %857 = vmatpush1.msra.mxu0 0.0
    %858 = vmatprep.subr.mxu0 0.0
    %859 = vmatpush1.msra.mxu0 0.0
    %860 = vmatprep.subr.mxu0 0.0
    %861 = vmatpush1.msra.mxu0 0.0
    %862 = vmatprep.subr.mxu0 0.0
    %863 = vmatpush1.msra.mxu0 0.0
    %864 = vmatprep.subr.mxu0 0.0
    %865 = vmatpush1.msra.mxu0 0.0
    %866 = vmatprep.subr.mxu0 0.0
    %867 = vmatpush1.msra.mxu0 0.0
    %868 = vmatprep.subr.mxu0 0.0
    %869 = vmatpush1.msra.mxu0 0.0
    %870 = vmatprep.subr.mxu0 0.0
    %871 = vmatpush1.msra.mxu0 0.0
    %872 = vmatprep.subr.mxu0 0.0
    %873 = vmatpush1.msra.mxu0 0.0
    %874 = vmatprep.mubr.f32.mxu0 0.0
    %875 = vmatmul.mubr.f32.gmra.mrb[0].mxu0 %v189
    %v876 = vpop.f32.mrb[0].mxu0
    %v877 = vadd.f32 %v808, %v876
    %v878 = vpop.f32.mrb[0].mxu0
    %879 = vdwg.mxu0
    %v880 = vmul.f32 %v798, %v877
    %v881 = vadd.f32 %v651, %v880
    %v882 = vtanh.pop %v881
    %v883 = vsub.f32 0.0, %v882
    %v884 = vmul.f32 %v803, %v883
    %v885 = vadd.f32 %v882, %v884
    %886 = vset.pattern.permute.xlu0 1
    %887 = vperm.xlu0 %886, %v80
    %v888 = vpop.permute.xlu0 %887
    %v890 = vmul.f32 %v888, %v149
    %v891 = vadd.f32 %v890, %v156
    %v892 = vmul.f32 %v888, %v163
    %v893 = vadd.f32 %v892, %v170
    %v894 = vmul.f32 %v888, %v177
    %v895 = vadd.f32 %v894, %v184
    %896 = vmatprep.subr.mxu0 0.0
    %897 = vmatpush1.msra.mxu0 %v86
    %898 = vmatprep.subr.mxu0 0.0
    %899 = vmatpush1.msra.mxu0 %v87
    %900 = vmatprep.subr.mxu0 0.0
    %901 = vmatpush1.msra.mxu0 %v88
    %902 = vmatprep.subr.mxu0 0.0
    %903 = vmatpush1.msra.mxu0 %v89
    %904 = vmatprep.subr.mxu0 0.0
    %905 = vmatpush1.msra.mxu0 0.0
    %906 = vmatprep.subr.mxu0 0.0
    %907 = vmatpush1.msra.mxu0 0.0
    %908 = vmatprep.subr.mxu0 0.0
    %909 = vmatpush1.msra.mxu0 0.0
    %910 = vmatprep.subr.mxu0 0.0
    %911 = vmatpush1.msra.mxu0 0.0
    %912 = vmatprep.subr.mxu0 0.0
    %913 = vmatpush1.msra.mxu0 0.0
    %914 = vmatprep.subr.mxu0 0.0
    %915 = vmatpush1.msra.mxu0 0.0
    %916 = vmatprep.subr.mxu0 0.0
    %917 = vmatpush1.msra.mxu0 0.0
    %918 = vmatprep.subr.mxu0 0.0
    %919 = vmatpush1.msra.mxu0 0.0
    %920 = vmatprep.subr.mxu0 0.0
    %921 = vmatpush1.msra.mxu0 0.0
    %922 = vmatprep.subr.mxu0 0.0
    %923 = vmatpush1.msra.mxu0 0.0
    %924 = vmatprep.subr.mxu0 0.0
    %925 = vmatpush1.msra.mxu0 0.0
    %926 = vmatprep.subr.mxu0 0.0
    %927 = vmatpush1.msra.mxu0 0.0
    %928 = vmatprep.subr.mxu0 0.0
    %929 = vmatpush1.msra.mxu0 0.0
    %930 = vmatprep.subr.mxu0 0.0
    %931 = vmatpush1.msra.mxu0 0.0
    %932 = vmatprep.subr.mxu0 0.0
    %933 = vmatpush1.msra.mxu0 0.0
    %934 = vmatprep.subr.mxu0 0.0
    %935 = vmatpush1.msra.mxu0 0.0
    %936 = vmatprep.subr.mxu0 0.0
    %937 = vmatpush1.msra.mxu0 0.0
    %938 = vmatprep.subr.mxu0 0.0
    %939 = vmatpush1.msra.mxu0 0.0
    %940 = vmatprep.subr.mxu0 0.0
    %941 = vmatpush1.msra.mxu0 0.0
    %942 = vmatprep.subr.mxu0 0.0
    %943 = vmatpush1.msra.mxu0 0.0
    %944 = vmatprep.subr.mxu0 0.0
    %945 = vmatpush1.msra.mxu0 0.0
    %946 = vmatprep.subr.mxu0 0.0
    %947 = vmatpush1.msra.mxu0 0.0
    %948 = vmatprep.subr.mxu0 0.0
    %949 = vmatpush1.msra.mxu0 0.0
    %950 = vmatprep.subr.mxu0 0.0
    %951 = vmatpush1.msra.mxu0 0.0
    %952 = vmatprep.subr.mxu0 0.0
    %953 = vmatpush1.msra.mxu0 0.0
    %954 = vmatprep.subr.mxu0 0.0
    %955 = vmatpush1.msra.mxu0 0.0
    %956 = vmatprep.subr.mxu0 0.0
    %957 = vmatpush1.msra.mxu0 0.0
    %958 = vmatprep.subr.mxu0 0.0
    %959 = vmatpush1.msra.mxu0 0.0
    %960 = vmatprep.mubr.f32.mxu0 0.0
    %961 = vmatmul.mubr.f32.gmra.mrb[0].mxu0 %v430
    %v962 = vpop.f32.mrb[0].mxu0
    %v963 = vadd.f32 0.0, %v962
    %v964 = vpop.f32.mrb[0].mxu0
    %965 = vdwg.mxu0
    %966 = vmatprep.subr.mxu0 0.0
    %967 = vmatpush1.msra.mxu0 %v91
    %968 = vmatprep.subr.mxu0 0.0
    %969 = vmatpush1.msra.mxu0 %v92
    %970 = vmatprep.subr.mxu0 0.0
    %971 = vmatpush1.msra.mxu0 %v93
    %972 = vmatprep.subr.mxu0 0.0
    %973 = vmatpush1.msra.mxu0 %v94
    %974 = vmatprep.subr.mxu0 0.0
    %975 = vmatpush1.msra.mxu0 0.0
    %976 = vmatprep.subr.mxu0 0.0
    %977 = vmatpush1.msra.mxu0 0.0
    %978 = vmatprep.subr.mxu0 0.0
    %979 = vmatpush1.msra.mxu0 0.0
    %980 = vmatprep.subr.mxu0 0.0
    %981 = vmatpush1.msra.mxu0 0.0
    %982 = vmatprep.subr.mxu0 0.0
    %983 = vmatpush1.msra.mxu0 0.0
    %984 = vmatprep.subr.mxu0 0.0
    %985 = vmatpush1.msra.mxu0 0.0
    %986 = vmatprep.subr.mxu0 0.0
    %987 = vmatpush1.msra.mxu0 0.0
    %988 = vmatprep.subr.mxu0 0.0
    %989 = vmatpush1.msra.mxu0 0.0
    %990 = vmatprep.subr.mxu0 0.0
    %991 = vmatpush1.msra.mxu0 0.0
    %992 = vmatprep.subr.mxu0 0.0
    %993 = vmatpush1.msra.mxu0 0.0
    %994 = vmatprep.subr.mxu0 0.0
    %995 = vmatpush1.msra.mxu0 0.0
    %996 = vmatprep.subr.mxu0 0.0
    %997 = vmatpush1.msra.mxu0 0.0
    %998 = vmatprep.subr.mxu0 0.0
    %999 = vmatpush1.msra.mxu0 0.0
    %1000 = vmatprep.subr.mxu0 0.0
    %1001 = vmatpush1.msra.mxu0 0.0
    %1002 = vmatprep.subr.mxu0 0.0
    %1003 = vmatpush1.msra.mxu0 0.0
    %1004 = vmatprep.subr.mxu0 0.0
    %1005 = vmatpush1.msra.mxu0 0.0
    %1006 = vmatprep.subr.mxu0 0.0
    %1007 = vmatpush1.msra.mxu0 0.0
    %1008 = vmatprep.subr.mxu0 0.0
    %1009 = vmatpush1.msra.mxu0 0.0
    %1010 = vmatprep.subr.mxu0 0.0
    %1011 = vmatpush1.msra.mxu0 0.0
    %1012 = vmatprep.subr.mxu0 0.0
    %1013 = vmatpush1.msra.mxu0 0.0
    %1014 = vmatprep.subr.mxu0 0.0
    %1015 = vmatpush1.msra.mxu0 0.0
    %1016 = vmatprep.subr.mxu0 0.0
    %1017 = vmatpush1.msra.mxu0 0.0
    %1018 = vmatprep.subr.mxu0 0.0
    %1019 = vmatpush1.msra.mxu0 0.0
    %1020 = vmatprep.subr.mxu0 0.0
    %1021 = vmatpush1.msra.mxu0 0.0
    %1022 = vmatprep.subr.mxu0 0.0
    %1023 = vmatpush1.msra.mxu0 0.0
    %1024 = vmatprep.subr.mxu0 0.0
    %1025 = vmatpush1.msra.mxu0 0.0
    %1026 = vmatprep.subr.mxu0 0.0
    %1027 = vmatpush1.msra.mxu0 0.0
    %1028 = vmatprep.subr.mxu0 0.0
    %1029 = vmatpush1.msra.mxu0 0.0
    %1030 = vmatprep.mubr.f32.mxu0 0.0
    %1031 = vmatmul.mubr.f32.gmra.mrb[0].mxu0 %v430
    %v1032 = vpop.f32.mrb[0].mxu0
    %v1033 = vadd.f32 0.0, %v1032
    %v1034 = vpop.f32.mrb[0].mxu0
    %1035 = vdwg.mxu0
    %v1036 = vadd.f32 %v891, %v963
    %v1037 = vmul.f32 %v1036, 0.5
    %v1038 = vtanh.pop %v1037
    %v1039 = vmul.f32 %v1038, 0.5
    %v1040 = vadd.f32 %v1039, 0.5
    %v1041 = vadd.f32 %v893, %v1033
    %v1042 = vmul.f32 %v1041, 0.5
    %v1043 = vtanh.pop %v1042
    %v1044 = vmul.f32 %v1043, 0.5
    %v1045 = vadd.f32 %v1044, 0.5
    %1046 = vmatprep.subr.mxu0 0.0
    %1047 = vmatpush1.msra.mxu0 %v96
    %1048 = vmatprep.subr.mxu0 0.0
    %1049 = vmatpush1.msra.mxu0 %v97
    %1050 = vmatprep.subr.mxu0 0.0
    %1051 = vmatpush1.msra.mxu0 %v98
    %1052 = vmatprep.subr.mxu0 0.0
    %1053 = vmatpush1.msra.mxu0 %v99
    %1054 = vmatprep.subr.mxu0 0.0
    %1055 = vmatpush1.msra.mxu0 0.0
    %1056 = vmatprep.subr.mxu0 0.0
    %1057 = vmatpush1.msra.mxu0 0.0
    %1058 = vmatprep.subr.mxu0 0.0
    %1059 = vmatpush1.msra.mxu0 0.0
    %1060 = vmatprep.subr.mxu0 0.0
    %1061 = vmatpush1.msra.mxu0 0.0
    %1062 = vmatprep.subr.mxu0 0.0
    %1063 = vmatpush1.msra.mxu0 0.0
    %1064 = vmatprep.subr.mxu0 0.0
    %1065 = vmatpush1.msra.mxu0 0.0
    %1066 = vmatprep.subr.mxu0 0.0
    %1067 = vmatpush1.msra.mxu0 0.0
    %1068 = vmatprep.subr.mxu0 0.0
    %1069 = vmatpush1.msra.mxu0 0.0
    %1070 = vmatprep.subr.mxu0 0.0
    %1071 = vmatpush1.msra.mxu0 0.0
    %1072 = vmatprep.subr.mxu0 0.0
    %1073 = vmatpush1.msra.mxu0 0.0
    %1074 = vmatprep.subr.mxu0 0.0
    %1075 = vmatpush1.msra.mxu0 0.0
    %1076 = vmatprep.subr.mxu0 0.0
    %1077 = vmatpush1.msra.mxu0 0.0
    %1078 = vmatprep.subr.mxu0 0.0
    %1079 = vmatpush1.msra.mxu0 0.0
    %1080 = vmatprep.subr.mxu0 0.0
    %1081 = vmatpush1.msra.mxu0 0.0
    %1082 = vmatprep.subr.mxu0 0.0
    %1083 = vmatpush1.msra.mxu0 0.0
    %1084 = vmatprep.subr.mxu0 0.0
    %1085 = vmatpush1.msra.mxu0 0.0
    %1086 = vmatprep.subr.mxu0 0.0
    %1087 = vmatpush1.msra.mxu0 0.0
    %1088 = vmatprep.subr.mxu0 0.0
    %1089 = vmatpush1.msra.mxu0 0.0
    %1090 = vmatprep.subr.mxu0 0.0
    %1091 = vmatpush1.msra.mxu0 0.0
    %1092 = vmatprep.subr.mxu0 0.0
    %1093 = vmatpush1.msra.mxu0 0.0
    %1094 = vmatprep.subr.mxu0 0.0
    %1095 = vmatpush1.msra.mxu0 0.0
    %1096 = vmatprep.subr.mxu0 0.0
    %1097 = vmatpush1.msra.mxu0 0.0
    %1098 = vmatprep.subr.mxu0 0.0
    %1099 = vmatpush1.msra.mxu0 0.0
    %1100 = vmatprep.subr.mxu0 0.0
    %1101 = vmatpush1.msra.mxu0 0.0
    %1102 = vmatprep.subr.mxu0 0.0
    %1103 = vmatpush1.msra.mxu0 0.0
    %1104 = vmatprep.subr.mxu0 0.0
    %1105 = vmatpush1.msra.mxu0 0.0
    %1106 = vmatprep.subr.mxu0 0.0
    %1107 = vmatpush1.msra.mxu0 0.0
    %1108 = vmatprep.subr.mxu0 0.0
    %1109 = vmatpush1.msra.mxu0 0.0
    %1110 = vmatprep.mubr.f32.mxu0 0.0
    %1111 = vmatmul.mubr.f32.gmra.mrb[0].mxu0 %v430
    %v1112 = vpop.f32.mrb[0].mxu0
    %v1113 = vadd.f32 %v345, %v1112
    %v1114 = vpop.f32.mrb[0].mxu0
    %1115 = vdwg.mxu0
    %v1116 = vmul.f32 %v1040, %v1113
    %v1117 = vadd.f32 %v895, %v1116
    %v1118 = vtanh.pop %v1117
    %v1119 = vsub.f32 %v422, %v1118
    %v1120 = vmul.f32 %v1045, %v1119
    %v1121 = vadd.f32 %v1118, %v1120
    %v1123 = vsel %vm187, %v1121, 0
    %1125 = vmatprep.subr.mxu0 0.0
    %1126 = vmatpush1.msra.mxu0 %v106
    %1127 = vmatprep.subr.mxu0 0.0
    %1128 = vmatpush1.msra.mxu0 %v107
    %1129 = vmatprep.subr.mxu0 0.0
    %1130 = vmatpush1.msra.mxu0 %v108
    %1131 = vmatprep.subr.mxu0 0.0
    %1132 = vmatpush1.msra.mxu0 %v109
    %1133 = vmatprep.subr.mxu0 0.0
    %1134 = vmatpush1.msra.mxu0 0.0
    %1135 = vmatprep.subr.mxu0 0.0
    %1136 = vmatpush1.msra.mxu0 0.0
    %1137 = vmatprep.subr.mxu0 0.0
    %1138 = vmatpush1.msra.mxu0 0.0
    %1139 = vmatprep.subr.mxu0 0.0
    %1140 = vmatpush1.msra.mxu0 0.0
    %1141 = vmatprep.subr.mxu0 0.0
    %1142 = vmatpush1.msra.mxu0 0.0
    %1143 = vmatprep.subr.mxu0 0.0
    %1144 = vmatpush1.msra.mxu0 0.0
    %1145 = vmatprep.subr.mxu0 0.0
    %1146 = vmatpush1.msra.mxu0 0.0
    %1147 = vmatprep.subr.mxu0 0.0
    %1148 = vmatpush1.msra.mxu0 0.0
    %1149 = vmatprep.subr.mxu0 0.0
    %1150 = vmatpush1.msra.mxu0 0.0
    %1151 = vmatprep.subr.mxu0 0.0
    %1152 = vmatpush1.msra.mxu0 0.0
    %1153 = vmatprep.subr.mxu0 0.0
    %1154 = vmatpush1.msra.mxu0 0.0
    %1155 = vmatprep.subr.mxu0 0.0
    %1156 = vmatpush1.msra.mxu0 0.0
    %1157 = vmatprep.subr.mxu0 0.0
    %1158 = vmatpush1.msra.mxu0 0.0
    %1159 = vmatprep.subr.mxu0 0.0
    %1160 = vmatpush1.msra.mxu0 0.0
    %1161 = vmatprep.subr.mxu0 0.0
    %1162 = vmatpush1.msra.mxu0 0.0
    %1163 = vmatprep.subr.mxu0 0.0
    %1164 = vmatpush1.msra.mxu0 0.0
    %1165 = vmatprep.subr.mxu0 0.0
    %1166 = vmatpush1.msra.mxu0 0.0
    %1167 = vmatprep.subr.mxu0 0.0
    %1168 = vmatpush1.msra.mxu0 0.0
    %1169 = vmatprep.subr.mxu0 0.0
    %1170 = vmatpush1.msra.mxu0 0.0
    %1171 = vmatprep.subr.mxu0 0.0
    %1172 = vmatpush1.msra.mxu0 0.0
    %1173 = vmatprep.subr.mxu0 0.0
    %1174 = vmatpush1.msra.mxu0 0.0
    %1175 = vmatprep.subr.mxu0 0.0
    %1176 = vmatpush1.msra.mxu0 0.0
    %1177 = vmatprep.subr.mxu0 0.0
    %1178 = vmatpush1.msra.mxu0 0.0
    %1179 = vmatprep.subr.mxu0 0.0
    %1180 = vmatpush1.msra.mxu0 0.0
    %1181 = vmatprep.subr.mxu0 0.0
    %1182 = vmatpush1.msra.mxu0 0.0
    %1183 = vmatprep.subr.mxu0 0.0
    %1184 = vmatpush1.msra.mxu0 0.0
    %1185 = vmatprep.subr.mxu0 0.0
    %1186 = vmatpush1.msra.mxu0 0.0
    %1187 = vmatprep.subr.mxu0 0.0
    %1188 = vmatpush1.msra.mxu0 0.0
    %1189 = vmatprep.mubr.f32.mxu0 0.0
    %1190 = vmatmul.mubr.f32.gmra.mrb[0].mxu0 %v1123
    %v1191 = vpop.f32.mrb[0].mxu0
    %v1192 = vadd.f32 %v427, %v1191
    %v1193 = vpop.f32.mrb[0].mxu0
    %1194 = vdwg.mxu0
    %1195 = vmatprep.subr.mxu0 0.0
    %1196 = vmatpush1.msra.mxu0 %v111
    %1197 = vmatprep.subr.mxu0 0.0
    %1198 = vmatpush1.msra.mxu0 %v112
    %1199 = vmatprep.subr.mxu0 0.0
    %1200 = vmatpush1.msra.mxu0 %v113
    %1201 = vmatprep.subr.mxu0 0.0
    %1202 = vmatpush1.msra.mxu0 %v114
    %1203 = vmatprep.subr.mxu0 0.0
    %1204 = vmatpush1.msra.mxu0 0.0
    %1205 = vmatprep.subr.mxu0 0.0
    %1206 = vmatpush1.msra.mxu0 0.0
    %1207 = vmatprep.subr.mxu0 0.0
    %1208 = vmatpush1.msra.mxu0 0.0
    %1209 = vmatprep.subr.mxu0 0.0
    %1210 = vmatpush1.msra.mxu0 0.0
    %1211 = vmatprep.subr.mxu0 0.0
    %1212 = vmatpush1.msra.mxu0 0.0
    %1213 = vmatprep.subr.mxu0 0.0
    %1214 = vmatpush1.msra.mxu0 0.0
    %1215 = vmatprep.subr.mxu0 0.0
    %1216 = vmatpush1.msra.mxu0 0.0
    %1217 = vmatprep.subr.mxu0 0.0
    %1218 = vmatpush1.msra.mxu0 0.0
    %1219 = vmatprep.subr.mxu0 0.0
    %1220 = vmatpush1.msra.mxu0 0.0
    %1221 = vmatprep.subr.mxu0 0.0
    %1222 = vmatpush1.msra.mxu0 0.0
    %1223 = vmatprep.subr.mxu0 0.0
    %1224 = vmatpush1.msra.mxu0 0.0
    %1225 = vmatprep.subr.mxu0 0.0
    %1226 = vmatpush1.msra.mxu0 0.0
    %1227 = vmatprep.subr.mxu0 0.0
    %1228 = vmatpush1.msra.mxu0 0.0
    %1229 = vmatprep.subr.mxu0 0.0
    %1230 = vmatpush1.msra.mxu0 0.0
    %1231 = vmatprep.subr.mxu0 0.0
    %1232 = vmatpush1.msra.mxu0 0.0
    %1233 = vmatprep.subr.mxu0 0.0
    %1234 = vmatpush1.msra.mxu0 0.0
    %1235 = vmatprep.subr.mxu0 0.0
    %1236 = vmatpush1.msra.mxu0 0.0
    %1237 = vmatprep.subr.mxu0 0.0
    %1238 = vmatpush1.msra.mxu0 0.0
    %1239 = vmatprep.subr.mxu0 0.0
    %1240 = vmatpush1.msra.mxu0 0.0
    %1241 = vmatprep.subr.mxu0 0.0
    %1242 = vmatpush1.msra.mxu0 0.0
    %1243 = vmatprep.subr.mxu0 0.0
    %1244 = vmatpush1.msra.mxu0 0.0
    %1245 = vmatprep.subr.mxu0 0.0
    %1246 = vmatpush1.msra.mxu0 0.0
    %1247 = vmatprep.subr.mxu0 0.0
    %1248 = vmatpush1.msra.mxu0 0.0
    %1249 = vmatprep.subr.mxu0 0.0
    %1250 = vmatpush1.msra.mxu0 0.0
    %1251 = vmatprep.subr.mxu0 0.0
    %1252 = vmatpush1.msra.mxu0 0.0
    %1253 = vmatprep.subr.mxu0 0.0
    %1254 = vmatpush1.msra.mxu0 0.0
    %1255 = vmatprep.subr.mxu0 0.0
    %1256 = vmatpush1.msra.mxu0 0.0
    %1257 = vmatprep.subr.mxu0 0.0
    %1258 = vmatpush1.msra.mxu0 0.0
    %1259 = vmatprep.mubr.f32.mxu0 0.0
    %1260 = vmatmul.mubr.f32.gmra.mrb[0].mxu0 %v1123
    %v1261 = vpop.f32.mrb[0].mxu0
    %v1262 = vadd.f32 %v506, %v1261
    %v1263 = vpop.f32.mrb[0].mxu0
    %1264 = vdwg.mxu0
    %1265 = vmatprep.subr.mxu0 0.0
    %1266 = vmatpush1.msra.mxu0 %v116
    %1267 = vmatprep.subr.mxu0 0.0
    %1268 = vmatpush1.msra.mxu0 %v117
    %1269 = vmatprep.subr.mxu0 0.0
    %1270 = vmatpush1.msra.mxu0 %v118
    %1271 = vmatprep.subr.mxu0 0.0
    %1272 = vmatpush1.msra.mxu0 %v119
    %1273 = vmatprep.subr.mxu0 0.0
    %1274 = vmatpush1.msra.mxu0 0.0
    %1275 = vmatprep.subr.mxu0 0.0
    %1276 = vmatpush1.msra.mxu0 0.0
    %1277 = vmatprep.subr.mxu0 0.0
    %1278 = vmatpush1.msra.mxu0 0.0
    %1279 = vmatprep.subr.mxu0 0.0
    %1280 = vmatpush1.msra.mxu0 0.0
    %1281 = vmatprep.subr.mxu0 0.0
    %1282 = vmatpush1.msra.mxu0 0.0
    %1283 = vmatprep.subr.mxu0 0.0
    %1284 = vmatpush1.msra.mxu0 0.0
    %1285 = vmatprep.subr.mxu0 0.0
    %1286 = vmatpush1.msra.mxu0 0.0
    %1287 = vmatprep.subr.mxu0 0.0
    %1288 = vmatpush1.msra.mxu0 0.0
    %1289 = vmatprep.subr.mxu0 0.0
    %1290 = vmatpush1.msra.mxu0 0.0
    %1291 = vmatprep.subr.mxu0 0.0
    %1292 = vmatpush1.msra.mxu0 0.0
    %1293 = vmatprep.subr.mxu0 0.0
    %1294 = vmatpush1.msra.mxu0 0.0
    %1295 = vmatprep.subr.mxu0 0.0
    %1296 = vmatpush1.msra.mxu0 0.0
    %1297 = vmatprep.subr.mxu0 0.0
    %1298 = vmatpush1.msra.mxu0 0.0
    %1299 = vmatprep.subr.mxu0 0.0
    %1300 = vmatpush1.msra.mxu0 0.0
    %1301 = vmatprep.subr.mxu0 0.0
    %1302 = vmatpush1.msra.mxu0 0.0
    %1303 = vmatprep.subr.mxu0 0.0
    %1304 = vmatpush1.msra.mxu0 0.0
    %1305 = vmatprep.subr.mxu0 0.0
    %1306 = vmatpush1.msra.mxu0 0.0
    %1307 = vmatprep.subr.mxu0 0.0
    %1308 = vmatpush1.msra.mxu0 0.0
    %1309 = vmatprep.subr.mxu0 0.0
    %1310 = vmatpush1.msra.mxu0 0.0
    %1311 = vmatprep.subr.mxu0 0.0
    %1312 = vmatpush1.msra.mxu0 0.0
    %1313 = vmatprep.subr.mxu0 0.0
    %1314 = vmatpush1.msra.mxu0 0.0
    %1315 = vmatprep.subr.mxu0 0.0
    %1316 = vmatpush1.msra.mxu0 0.0
    %1317 = vmatprep.subr.mxu0 0.0
    %1318 = vmatpush1.msra.mxu0 0.0
    %1319 = vmatprep.subr.mxu0 0.0
    %1320 = vmatpush1.msra.mxu0 0.0
    %1321 = vmatprep.subr.mxu0 0.0
    %1322 = vmatpush1.msra.mxu0 0.0
    %1323 = vmatprep.subr.mxu0 0.0
    %1324 = vmatpush1.msra.mxu0 0.0
    %1325 = vmatprep.subr.mxu0 0.0
    %1326 = vmatpush1.msra.mxu0 0.0
    %1327 = vmatprep.subr.mxu0 0.0
    %1328 = vmatpush1.msra.mxu0 0.0
    %1329 = vmatprep.mubr.f32.mxu0 0.0
    %1330 = vmatmul.mubr.f32.gmra.mrb[0].mxu0 %v1123
    %v1331 = vpop.f32.mrb[0].mxu0
    %v1332 = vadd.f32 %v582, %v1331
    %v1333 = vpop.f32.mrb[0].mxu0
    %1334 = vdwg.mxu0
    %v1336 = vsel %vm187, %v885, 0
    %1338 = vmatprep.subr.mxu0 0.0
    %1339 = vmatpush1.msra.mxu0 %v120
    %1340 = vmatprep.subr.mxu0 0.0
    %1341 = vmatpush1.msra.mxu0 %v121
    %1342 = vmatprep.subr.mxu0 0.0
    %1343 = vmatpush1.msra.mxu0 %v122
    %1344 = vmatprep.subr.mxu0 0.0
    %1345 = vmatpush1.msra.mxu0 %v123
    %1346 = vmatprep.subr.mxu0 0.0
    %1347 = vmatpush1.msra.mxu0 0.0
    %1348 = vmatprep.subr.mxu0 0.0
    %1349 = vmatpush1.msra.mxu0 0.0
    %1350 = vmatprep.subr.mxu0 0.0
    %1351 = vmatpush1.msra.mxu0 0.0
    %1352 = vmatprep.subr.mxu0 0.0
    %1353 = vmatpush1.msra.mxu0 0.0
    %1354 = vmatprep.subr.mxu0 0.0
    %1355 = vmatpush1.msra.mxu0 0.0
    %1356 = vmatprep.subr.mxu0 0.0
    %1357 = vmatpush1.msra.mxu0 0.0
    %1358 = vmatprep.subr.mxu0 0.0
    %1359 = vmatpush1.msra.mxu0 0.0
    %1360 = vmatprep.subr.mxu0 0.0
    %1361 = vmatpush1.msra.mxu0 0.0
    %1362 = vmatprep.subr.mxu0 0.0
    %1363 = vmatpush1.msra.mxu0 0.0
    %1364 = vmatprep.subr.mxu0 0.0
    %1365 = vmatpush1.msra.mxu0 0.0
    %1366 = vmatprep.subr.mxu0 0.0
    %1367 = vmatpush1.msra.mxu0 0.0
    %1368 = vmatprep.subr.mxu0 0.0
    %1369 = vmatpush1.msra.mxu0 0.0
    %1370 = vmatprep.subr.mxu0 0.0
    %1371 = vmatpush1.msra.mxu0 0.0
    %1372 = vmatprep.subr.mxu0 0.0
    %1373 = vmatpush1.msra.mxu0 0.0
    %1374 = vmatprep.subr.mxu0 0.0
    %1375 = vmatpush1.msra.mxu0 0.0
    %1376 = vmatprep.subr.mxu0 0.0
    %1377 = vmatpush1.msra.mxu0 0.0
    %1378 = vmatprep.subr.mxu0 0.0
    %1379 = vmatpush1.msra.mxu0 0.0
    %1380 = vmatprep.subr.mxu0 0.0
    %1381 = vmatpush1.msra.mxu0 0.0
    %1382 = vmatprep.subr.mxu0 0.0
    %1383 = vmatpush1.msra.mxu0 0.0
    %1384 = vmatprep.subr.mxu0 0.0
    %1385 = vmatpush1.msra.mxu0 0.0
    %1386 = vmatprep.subr.mxu0 0.0
    %1387 = vmatpush1.msra.mxu0 0.0
    %1388 = vmatprep.subr.mxu0 0.0
    %1389 = vmatpush1.msra.mxu0 0.0
    %1390 = vmatprep.subr.mxu0 0.0
    %1391 = vmatpush1.msra.mxu0 0.0
    %1392 = vmatprep.subr.mxu0 0.0
    %1393 = vmatpush1.msra.mxu0 0.0
    %1394 = vmatprep.subr.mxu0 0.0
    %1395 = vmatpush1.msra.mxu0 0.0
    %1396 = vmatprep.subr.mxu0 0.0
    %1397 = vmatpush1.msra.mxu0 0.0
    %1398 = vmatprep.subr.mxu0 0.0
    %1399 = vmatpush1.msra.mxu0 0.0
    %1400 = vmatprep.subr.mxu0 0.0
    %1401 = vmatpush1.msra.mxu0 0.0
    %1402 = vmatprep.mubr.f32.mxu0 0.0
    %1403 = vmatmul.mubr.f32.gmra.mrb[0].mxu0 %v1336
    %v1404 = vpop.f32.mrb[0].mxu0
    %v1405 = vadd.f32 0.0, %v1404
    %v1406 = vpop.f32.mrb[0].mxu0
    %1407 = vdwg.mxu0
    %1408 = vmatprep.subr.mxu0 0.0
    %1409 = vmatpush1.msra.mxu0 %v125
    %1410 = vmatprep.subr.mxu0 0.0
    %1411 = vmatpush1.msra.mxu0 %v126
    %1412 = vmatprep.subr.mxu0 0.0
    %1413 = vmatpush1.msra.mxu0 %v127
    %1414 = vmatprep.subr.mxu0 0.0
    %1415 = vmatpush1.msra.mxu0 %v128
    %1416 = vmatprep.subr.mxu0 0.0
    %1417 = vmatpush1.msra.mxu0 0.0
    %1418 = vmatprep.subr.mxu0 0.0
    %1419 = vmatpush1.msra.mxu0 0.0
    %1420 = vmatprep.subr.mxu0 0.0
    %1421 = vmatpush1.msra.mxu0 0.0
    %1422 = vmatprep.subr.mxu0 0.0
    %1423 = vmatpush1.msra.mxu0 0.0
    %1424 = vmatprep.subr.mxu0 0.0
    %1425 = vmatpush1.msra.mxu0 0.0
    %1426 = vmatprep.subr.mxu0 0.0
    %1427 = vmatpush1.msra.mxu0 0.0
    %1428 = vmatprep.subr.mxu0 0.0
    %1429 = vmatpush1.msra.mxu0 0.0
    %1430 = vmatprep.subr.mxu0 0.0
    %1431 = vmatpush1.msra.mxu0 0.0
    %1432 = vmatprep.subr.mxu0 0.0
    %1433 = vmatpush1.msra.mxu0 0.0
    %1434 = vmatprep.subr.mxu0 0.0
    %1435 = vmatpush1.msra.mxu0 0.0
    %1436 = vmatprep.subr.mxu0 0.0
    %1437 = vmatpush1.msra.mxu0 0.0
    %1438 = vmatprep.subr.mxu0 0.0
    %1439 = vmatpush1.msra.mxu0 0.0
    %1440 = vmatprep.subr.mxu0 0.0
    %1441 = vmatpush1.msra.mxu0 0.0
    %1442 = vmatprep.subr.mxu0 0.0
    %1443 = vmatpush1.msra.mxu0 0.0
    %1444 = vmatprep.subr.mxu0 0.0
    %1445 = vmatpush1.msra.mxu0 0.0
    %1446 = vmatprep.subr.mxu0 0.0
    %1447 = vmatpush1.msra.mxu0 0.0
    %1448 = vmatprep.subr.mxu0 0.0
    %1449 = vmatpush1.msra.mxu0 0.0
    %1450 = vmatprep.subr.mxu0 0.0
    %1451 = vmatpush1.msra.mxu0 0.0
    %1452 = vmatprep.subr.mxu0 0.0
    %1453 = vmatpush1.msra.mxu0 0.0
    %1454 = vmatprep.subr.mxu0 0.0
    %1455 = vmatpush1.msra.mxu0 0.0
    %1456 = vmatprep.subr.mxu0 0.0
    %1457 = vmatpush1.msra.mxu0 0.0
    %1458 = vmatprep.subr.mxu0 0.0
    %1459 = vmatpush1.msra.mxu0 0.0
    %1460 = vmatprep.subr.mxu0 0.0
    %1461 = vmatpush1.msra.mxu0 0.0
    %1462 = vmatprep.subr.mxu0 0.0
    %1463 = vmatpush1.msra.mxu0 0.0
    %1464 = vmatprep.subr.mxu0 0.0
    %1465 = vmatpush1.msra.mxu0 0.0
    %1466 = vmatprep.subr.mxu0 0.0
    %1467 = vmatpush1.msra.mxu0 0.0
    %1468 = vmatprep.subr.mxu0 0.0
    %1469 = vmatpush1.msra.mxu0 0.0
    %1470 = vmatprep.subr.mxu0 0.0
    %1471 = vmatpush1.msra.mxu0 0.0
    %1472 = vmatprep.mubr.f32.mxu0 0.0
    %1473 = vmatmul.mubr.f32.gmra.mrb[0].mxu0 %v1336
    %v1474 = vpop.f32.mrb[0].mxu0
    %v1475 = vadd.f32 0.0, %v1474
    %v1476 = vpop.f32.mrb[0].mxu0
    %1477 = vdwg.mxu0
    %v1478 = vadd.f32 %v1192, %v1405
    %v1479 = vmul.f32 %v1478, 0.5
    %v1480 = vtanh.pop %v1479
    %v1481 = vmul.f32 %v1480, 0.5
    %v1482 = vadd.f32 %v1481, 0.5
    %v1483 = vadd.f32 %v1262, %v1475
    %v1484 = vmul.f32 %v1483, 0.5
    %v1485 = vtanh.pop %v1484
    %v1486 = vmul.f32 %v1485, 0.5
    %v1487 = vadd.f32 %v1486, 0.5
    %1488 = vmatprep.subr.mxu0 0.0
    %1489 = vmatpush1.msra.mxu0 %v130
    %1490 = vmatprep.subr.mxu0 0.0
    %1491 = vmatpush1.msra.mxu0 %v131
    %1492 = vmatprep.subr.mxu0 0.0
    %1493 = vmatpush1.msra.mxu0 %v132
    %1494 = vmatprep.subr.mxu0 0.0
    %1495 = vmatpush1.msra.mxu0 %v133
    %1496 = vmatprep.subr.mxu0 0.0
    %1497 = vmatpush1.msra.mxu0 0.0
    %1498 = vmatprep.subr.mxu0 0.0
    %1499 = vmatpush1.msra.mxu0 0.0
    %1500 = vmatprep.subr.mxu0 0.0
    %1501 = vmatpush1.msra.mxu0 0.0
    %1502 = vmatprep.subr.mxu0 0.0
    %1503 = vmatpush1.msra.mxu0 0.0
    %1504 = vmatprep.subr.mxu0 0.0
    %1505 = vmatpush1.msra.mxu0 0.0
    %1506 = vmatprep.subr.mxu0 0.0
    %1507 = vmatpush1.msra.mxu0 0.0
    %1508 = vmatprep.subr.mxu0 0.0
    %1509 = vmatpush1.msra.mxu0 0.0
    %1510 = vmatprep.subr.mxu0 0.0
    %1511 = vmatpush1.msra.mxu0 0.0
    %1512 = vmatprep.subr.mxu0 0.0
    %1513 = vmatpush1.msra.mxu0 0.0
    %1514 = vmatprep.subr.mxu0 0.0
    %1515 = vmatpush1.msra.mxu0 0.0
    %1516 = vmatprep.subr.mxu0 0.0
    %1517 = vmatpush1.msra.mxu0 0.0
    %1518 = vmatprep.subr.mxu0 0.0
    %1519 = vmatpush1.msra.mxu0 0.0
    %1520 = vmatprep.subr.mxu0 0.0
    %1521 = vmatpush1.msra.mxu0 0.0
    %1522 = vmatprep.subr.mxu0 0.0
    %1523 = vmatpush1.msra.mxu0 0.0
    %1524 = vmatprep.subr.mxu0 0.0
    %1525 = vmatpush1.msra.mxu0 0.0
    %1526 = vmatprep.subr.mxu0 0.0
    %1527 = vmatpush1.msra.mxu0 0.0
    %1528 = vmatprep.subr.mxu0 0.0
    %1529 = vmatpush1.msra.mxu0 0.0
    %1530 = vmatprep.subr.mxu0 0.0
    %1531 = vmatpush1.msra.mxu0 0.0
    %1532 = vmatprep.subr.mxu0 0.0
    %1533 = vmatpush1.msra.mxu0 0.0
    %1534 = vmatprep.subr.mxu0 0.0
    %1535 = vmatpush1.msra.mxu0 0.0
    %1536 = vmatprep.subr.mxu0 0.0
    %1537 = vmatpush1.msra.mxu0 0.0
    %1538 = vmatprep.subr.mxu0 0.0
    %1539 = vmatpush1.msra.mxu0 0.0
    %1540 = vmatprep.subr.mxu0 0.0
    %1541 = vmatpush1.msra.mxu0 0.0
    %1542 = vmatprep.subr.mxu0 0.0
    %1543 = vmatpush1.msra.mxu0 0.0
    %1544 = vmatprep.subr.mxu0 0.0
    %1545 = vmatpush1.msra.mxu0 0.0
    %1546 = vmatprep.subr.mxu0 0.0
    %1547 = vmatpush1.msra.mxu0 0.0
    %1548 = vmatprep.subr.mxu0 0.0
    %1549 = vmatpush1.msra.mxu0 0.0
    %1550 = vmatprep.subr.mxu0 0.0
    %1551 = vmatpush1.msra.mxu0 0.0
    %1552 = vmatprep.mubr.f32.mxu0 0.0
    %1553 = vmatmul.mubr.f32.gmra.mrb[0].mxu0 %v1336
    %v1554 = vpop.f32.mrb[0].mxu0
    %v1555 = vadd.f32 %v808, %v1554
    %v1556 = vpop.f32.mrb[0].mxu0
    %1557 = vdwg.mxu0
    %v1558 = vmul.f32 %v1482, %v1555
    %v1559 = vadd.f32 %v1332, %v1558
    %v1560 = vtanh.pop %v1559
    %v1561 = vsub.f32 %v885, %v1560
    %v1562 = vmul.f32 %v1487, %v1561
    %v1563 = vadd.f32 %v1560, %v1562
    %1564 = vset.pattern.permute.xlu0 2
    %1565 = vperm.xlu0 %1564, %v80
    %v1566 = vpop.permute.xlu0 %1565
    %v1568 = vmul.f32 %v1566, %v149
    %v1569 = vadd.f32 %v1568, %v156
    %v1570 = vmul.f32 %v1566, %v163
    %v1571 = vadd.f32 %v1570, %v170
    %v1572 = vmul.f32 %v1566, %v177
    %v1573 = vadd.f32 %v1572, %v184
    %1574 = vmatprep.subr.mxu0 0.0
    %1575 = vmatpush1.msra.mxu0 %v86
    %1576 = vmatprep.subr.mxu0 0.0
    %1577 = vmatpush1.msra.mxu0 %v87
    %1578 = vmatprep.subr.mxu0 0.0
    %1579 = vmatpush1.msra.mxu0 %v88
    %1580 = vmatprep.subr.mxu0 0.0
    %1581 = vmatpush1.msra.mxu0 %v89
    %1582 = vmatprep.subr.mxu0 0.0
    %1583 = vmatpush1.msra.mxu0 0.0
    %1584 = vmatprep.subr.mxu0 0.0
    %1585 = vmatpush1.msra.mxu0 0.0
    %1586 = vmatprep.subr.mxu0 0.0
    %1587 = vmatpush1.msra.mxu0 0.0
    %1588 = vmatprep.subr.mxu0 0.0
    %1589 = vmatpush1.msra.mxu0 0.0
    %1590 = vmatprep.subr.mxu0 0.0
    %1591 = vmatpush1.msra.mxu0 0.0
    %1592 = vmatprep.subr.mxu0 0.0
    %1593 = vmatpush1.msra.mxu0 0.0
    %1594 = vmatprep.subr.mxu0 0.0
    %1595 = vmatpush1.msra.mxu0 0.0
    %1596 = vmatprep.subr.mxu0 0.0
    %1597 = vmatpush1.msra.mxu0 0.0
    %1598 = vmatprep.subr.mxu0 0.0
    %1599 = vmatpush1.msra.mxu0 0.0
    %1600 = vmatprep.subr.mxu0 0.0
    %1601 = vmatpush1.msra.mxu0 0.0
    %1602 = vmatprep.subr.mxu0 0.0
    %1603 = vmatpush1.msra.mxu0 0.0
    %1604 = vmatprep.subr.mxu0 0.0
    %1605 = vmatpush1.msra.mxu0 0.0
    %1606 = vmatprep.subr.mxu0 0.0
    %1607 = vmatpush1.msra.mxu0 0.0
    %1608 = vmatprep.subr.mxu0 0.0
    %1609 = vmatpush1.msra.mxu0 0.0
    %1610 = vmatprep.subr.mxu0 0.0
    %1611 = vmatpush1.msra.mxu0 0.0
    %1612 = vmatprep.subr.mxu0 0.0
    %1613 = vmatpush1.msra.mxu0 0.0
    %1614 = vmatprep.subr.mxu0 0.0
    %1615 = vmatpush1.msra.mxu0 0.0
    %1616 = vmatprep.subr.mxu0 0.0
    %1617 = vmatpush1.msra.mxu0 0.0
    %1618 = vmatprep.subr.mxu0 0.0
    %1619 = vmatpush1.msra.mxu0 0.0
    %1620 = vmatprep.subr.mxu0 0.0
    %1621 = vmatpush1.msra.mxu0 0.0
    %1622 = vmatprep.subr.mxu0 0.0
    %1623 = vmatpush1.msra.mxu0 0.0
    %1624 = vmatprep.subr.mxu0 0.0
    %1625 = vmatpush1.msra.mxu0 0.0
    %1626 = vmatprep.subr.mxu0 0.0
    %1627 = vmatpush1.msra.mxu0 0.0
    %1628 = vmatprep.subr.mxu0 0.0
    %1629 = vmatpush1.msra.mxu0 0.0
    %1630 = vmatprep.subr.mxu0 0.0
    %1631 = vmatpush1.msra.mxu0 0.0
    %1632 = vmatprep.subr.mxu0 0.0
    %1633 = vmatpush1.msra.mxu0 0.0
    %1634 = vmatprep.subr.mxu0 0.0
    %1635 = vmatpush1.msra.mxu0 0.0
    %1636 = vmatprep.subr.mxu0 0.0
    %1637 = vmatpush1.msra.mxu0 0.0
    %1638 = vmatprep.mubr.f32.mxu0 0.0
    %1639 = vmatmul.mubr.f32.gmra.mrb[0].mxu0 %v1123
    %v1640 = vpop.f32.mrb[0].mxu0
    %v1641 = vadd.f32 0.0, %v1640
    %v1642 = vpop.f32.mrb[0].mxu0
    %1643 = vdwg.mxu0
    %1644 = vmatprep.subr.mxu0 0.0
    %1645 = vmatpush1.msra.mxu0 %v91
    %1646 = vmatprep.subr.mxu0 0.0
    %1647 = vmatpush1.msra.mxu0 %v92
    %1648 = vmatprep.subr.mxu0 0.0
    %1649 = vmatpush1.msra.mxu0 %v93
    %1650 = vmatprep.subr.mxu0 0.0
    %1651 = vmatpush1.msra.mxu0 %v94
    %1652 = vmatprep.subr.mxu0 0.0
    %1653 = vmatpush1.msra.mxu0 0.0
    %1654 = vmatprep.subr.mxu0 0.0
    %1655 = vmatpush1.msra.mxu0 0.0
    %1656 = vmatprep.subr.mxu0 0.0
    %1657 = vmatpush1.msra.mxu0 0.0
    %1658 = vmatprep.subr.mxu0 0.0
    %1659 = vmatpush1.msra.mxu0 0.0
    %1660 = vmatprep.subr.mxu0 0.0
    %1661 = vmatpush1.msra.mxu0 0.0
    %1662 = vmatprep.subr.mxu0 0.0
    %1663 = vmatpush1.msra.mxu0 0.0
    %1664 = vmatprep.subr.mxu0 0.0
    %1665 = vmatpush1.msra.mxu0 0.0
    %1666 = vmatprep.subr.mxu0 0.0
    %1667 = vmatpush1.msra.mxu0 0.0
    %1668 = vmatprep.subr.mxu0 0.0
    %1669 = vmatpush1.msra.mxu0 0.0
    %1670 = vmatprep.subr.mxu0 0.0
    %1671 = vmatpush1.msra.mxu0 0.0
    %1672 = vmatprep.subr.mxu0 0.0
    %1673 = vmatpush1.msra.mxu0 0.0
    %1674 = vmatprep.subr.mxu0 0.0
    %1675 = vmatpush1.msra.mxu0 0.0
    %1676 = vmatprep.subr.mxu0 0.0
    %1677 = vmatpush1.msra.mxu0 0.0
    %1678 = vmatprep.subr.mxu0 0.0
    %1679 = vmatpush1.msra.mxu0 0.0
    %1680 = vmatprep.subr.mxu0 0.0
    %1681 = vmatpush1.msra.mxu0 0.0
    %1682 = vmatprep.subr.mxu0 0.0
    %1683 = vmatpush1.msra.mxu0 0.0
    %1684 = vmatprep.subr.mxu0 0.0
    %1685 = vmatpush1.msra.mxu0 0.0
    %1686 = vmatprep.subr.mxu0 0.0
    %1687 = vmatpush1.msra.mxu0 0.0
    %1688 = vmatprep.subr.mxu0 0.0
    %1689 = vmatpush1.msra.mxu0 0.0
    %1690 = vmatprep.subr.mxu0 0.0
    %1691 = vmatpush1.msra.mxu0 0.0
    %1692 = vmatprep.subr.mxu0 0.0
    %1693 = vmatpush1.msra.mxu0 0.0
    %1694 = vmatprep.subr.mxu0 0.0
    %1695 = vmatpush1.msra.mxu0 0.0
    %1696 = vmatprep.subr.mxu0 0.0
    %1697 = vmatpush1.msra.mxu0 0.0
    %1698 = vmatprep.subr.mxu0 0.0
    %1699 = vmatpush1.msra.mxu0 0.0
    %1700 = vmatprep.subr.mxu0 0.0
    %1701 = vmatpush1.msra.mxu0 0.0
    %1702 = vmatprep.subr.mxu0 0.0
    %1703 = vmatpush1.msra.mxu0 0.0
    %1704 = vmatprep.subr.mxu0 0.0
    %1705 = vmatpush1.msra.mxu0 0.0
    %1706 = vmatprep.subr.mxu0 0.0
    %1707 = vmatpush1.msra.mxu0 0.0
    %1708 = vmatprep.mubr.f32.mxu0 0.0
    %1709 = vmatmul.mubr.f32.gmra.mrb[0].mxu0 %v1123
    %v1710 = vpop.f32.mrb[0].mxu0
    %v1711 = vadd.f32 0.0, %v1710
    %v1712 = vpop.f32.mrb[0].mxu0
    %1713 = vdwg.mxu0
    %v1714 = vadd.f32 %v1569, %v1641
    %v1715 = vmul.f32 %v1714, 0.5
    %v1716 = vtanh.pop %v1715
    %v1717 = vmul.f32 %v1716, 0.5
    %v1718 = vadd.f32 %v1717, 0.5
    %v1719 = vadd.f32 %v1571, %v1711
    %v1720 = vmul.f32 %v1719, 0.5
    %v1721 = vtanh.pop %v1720
    %v1722 = vmul.f32 %v1721, 0.5
    %v1723 = vadd.f32 %v1722, 0.5
    %1724 = vmatprep.subr.mxu0 0.0
    %1725 = vmatpush1.msra.mxu0 %v96
    %1726 = vmatprep.subr.mxu0 0.0
    %1727 = vmatpush1.msra.mxu0 %v97
    %1728 = vmatprep.subr.mxu0 0.0
    %1729 = vmatpush1.msra.mxu0 %v98
    %1730 = vmatprep.subr.mxu0 0.0
    %1731 = vmatpush1.msra.mxu0 %v99
    %1732 = vmatprep.subr.mxu0 0.0
    %1733 = vmatpush1.msra.mxu0 0.0
    %1734 = vmatprep.subr.mxu0 0.0
    %1735 = vmatpush1.msra.mxu0 0.0
    %1736 = vmatprep.subr.mxu0 0.0
    %1737 = vmatpush1.msra.mxu0 0.0
    %1738 = vmatprep.subr.mxu0 0.0
    %1739 = vmatpush1.msra.mxu0 0.0
    %1740 = vmatprep.subr.mxu0 0.0
    %1741 = vmatpush1.msra.mxu0 0.0
    %1742 = vmatprep.subr.mxu0 0.0
    %1743 = vmatpush1.msra.mxu0 0.0
    %1744 = vmatprep.subr.mxu0 0.0
    %1745 = vmatpush1.msra.mxu0 0.0
    %1746 = vmatprep.subr.mxu0 0.0
    %1747 = vmatpush1.msra.mxu0 0.0
    %1748 = vmatprep.subr.mxu0 0.0
    %1749 = vmatpush1.msra.mxu0 0.0
    %1750 = vmatprep.subr.mxu0 0.0
    %1751 = vmatpush1.msra.mxu0 0.0
    %1752 = vmatprep.subr.mxu0 0.0
    %1753 = vmatpush1.msra.mxu0 0.0
    %1754 = vmatprep.subr.mxu0 0.0
    %1755 = vmatpush1.msra.mxu0 0.0
    %1756 = vmatprep.subr.mxu0 0.0
    %1757 = vmatpush1.msra.mxu0 0.0
    %1758 = vmatprep.subr.mxu0 0.0
    %1759 = vmatpush1.msra.mxu0 0.0
    %1760 = vmatprep.subr.mxu0 0.0
    %1761 = vmatpush1.msra.mxu0 0.0
    %1762 = vmatprep.subr.mxu0 0.0
    %1763 = vmatpush1.msra.mxu0 0.0
    %1764 = vmatprep.subr.mxu0 0.0
    %1765 = vmatpush1.msra.mxu0 0.0
    %1766 = vmatprep.subr.mxu0 0.0
    %1767 = vmatpush1.msra.mxu0 0.0
    %1768 = vmatprep.subr.mxu0 0.0
    %1769 = vmatpush1.msra.mxu0 0.0
    %1770 = vmatprep.subr.mxu0 0.0
    %1771 = vmatpush1.msra.mxu0 0.0
    %1772 = vmatprep.subr.mxu0 0.0
    %1773 = vmatpush1.msra.mxu0 0.0
    %1774 = vmatprep.subr.mxu0 0.0
    %1775 = vmatpush1.msra.mxu0 0.0
    %1776 = vmatprep.subr.mxu0 0.0
    %1777 = vmatpush1.msra.mxu0 0.0
    %1778 = vmatprep.subr.mxu0 0.0
    %1779 = vmatpush1.msra.mxu0 0.0
    %1780 = vmatprep.subr.mxu0 0.0
    %1781 = vmatpush1.msra.mxu0 0.0
    %1782 = vmatprep.subr.mxu0 0.0
    %1783 = vmatpush1.msra.mxu0 0.0
    %1784 = vmatprep.subr.mxu0 0.0
    %1785 = vmatpush1.msra.mxu0 0.0
    %1786 = vmatprep.subr.mxu0 0.0
    %1787 = vmatpush1.msra.mxu0 0.0
    %1788 = vmatprep.mubr.f32.mxu0 0.0
    %1789 = vmatmul.mubr.f32.gmra.mrb[0].mxu0 %v1123
    %v1790 = vpop.f32.mrb[0].mxu0
    %v1791 = vadd.f32 %v345, %v1790
    %v1792 = vpop.f32.mrb[0].mxu0
    %1793 = vdwg.mxu0
    %v1794 = vmul.f32 %v1718, %v1791
    %v1795 = vadd.f32 %v1573, %v1794
    %v1796 = vtanh.pop %v1795
    %v1797 = vsub.f32 %v1121, %v1796
    %v1798 = vmul.f32 %v1723, %v1797
    %v1799 = vadd.f32 %v1796, %v1798
    %v1801 = vsel %vm187, %v1799, 0
    %1803 = vmatprep.subr.mxu0 0.0
    %1804 = vmatpush1.msra.mxu0 %v106
    %1805 = vmatprep.subr.mxu0 0.0
    %1806 = vmatpush1.msra.mxu0 %v107
    %1807 = vmatprep.subr.mxu0 0.0
    %1808 = vmatpush1.msra.mxu0 %v108
    %1809 = vmatprep.subr.mxu0 0.0
    %1810 = vmatpush1.msra.mxu0 %v109
    %1811 = vmatprep.subr.mxu0 0.0
    %1812 = vmatpush1.msra.mxu0 0.0
    %1813 = vmatprep.subr.mxu0 0.0
    %1814 = vmatpush1.msra.mxu0 0.0
    %1815 = vmatprep.subr.mxu0 0.0
    %1816 = vmatpush1.msra.mxu0 0.0
    %1817 = vmatprep.subr.mxu0 0.0
    %1818 = vmatpush1.msra.mxu0 0.0
    %1819 = vmatprep.subr.mxu0 0.0
    %1820 = vmatpush1.msra.mxu0 0.0
    %1821 = vmatprep.subr.mxu0 0.0
    %1822 = vmatpush1.msra.mxu0 0.0
    %1823 = vmatprep.subr.mxu0 0.0
    %1824 = vmatpush1.msra.mxu0 0.0
    %1825 = vmatprep.subr.mxu0 0.0
    %1826 = vmatpush1.msra.mxu0 0.0
    %1827 = vmatprep.subr.mxu0 0.0
    %1828 = vmatpush1.msra.mxu0 0.0
    %1829 = vmatprep.subr.mxu0 0.0
    %1830 = vmatpush1.msra.mxu0 0.0
    %1831 = vmatprep.subr.mxu0 0.0
    %1832 = vmatpush1.msra.mxu0 0.0
    %1833 = vmatprep.subr.mxu0 0.0
    %1834 = vmatpush1.msra.mxu0 0.0
    %1835 = vmatprep.subr.mxu0 0.0
    %1836 = vmatpush1.msra.mxu0 0.0
    %1837 = vmatprep.subr.mxu0 0.0
    %1838 = vmatpush1.msra.mxu0 0.0
    %1839 = vmatprep.subr.mxu0 0.0
    %1840 = vmatpush1.msra.mxu0 0.0
    %1841 = vmatprep.subr.mxu0 0.0
    %1842 = vmatpush1.msra.mxu0 0.0
    %1843 = vmatprep.subr.mxu0 0.0
    %1844 = vmatpush1.msra.mxu0 0.0
    %1845 = vmatprep.subr.mxu0 0.0
    %1846 = vmatpush1.msra.mxu0 0.0
    %1847 = vmatprep.subr.mxu0 0.0
    %1848 = vmatpush1.msra.mxu0 0.0
    %1849 = vmatprep.subr.mxu0 0.0
    %1850 = vmatpush1.msra.mxu0 0.0
    %1851 = vmatprep.subr.mxu0 0.0
    %1852 = vmatpush1.msra.mxu0 0.0
    %1853 = vmatprep.subr.mxu0 0.0
    %1854 = vmatpush1.msra.mxu0 0.0
    %1855 = vmatprep.subr.mxu0 0.0
    %1856 = vmatpush1.msra.mxu0 0.0
    %1857 = vmatprep.subr.mxu0 0.0
    %1858 = vmatpush1.msra.mxu0 0.0
    %1859 = vmatprep.subr.mxu0 0.0
    %1860 = vmatpush1.msra.mxu0 0.0
    %1861 = vmatprep.subr.mxu0 0.0
    %1862 = vmatpush1.msra.mxu0 0.0
    %1863 = vmatprep.subr.mxu0 0.0
    %1864 = vmatpush1.msra.mxu0 0.0
    %1865 = vmatprep.subr.mxu0 0.0
    %1866 = vmatpush1.msra.mxu0 0.0
    %1867 = vmatprep.mubr.f32.mxu0 0.0
    %1868 = vmatmul.mubr.f32.gmra.mrb[0].mxu0 %v1801
    %v1869 = vpop.f32.mrb[0].mxu0
    %v1870 = vadd.f32 %v427, %v1869
    %v1871 = vpop.f32.mrb[0].mxu0
    %1872 = vdwg.mxu0
    %1873 = vmatprep.subr.mxu0 0.0
    %1874 = vmatpush1.msra.mxu0 %v111
    %1875 = vmatprep.subr.mxu0 0.0
    %1876 = vmatpush1.msra.mxu0 %v112
    %1877 = vmatprep.subr.mxu0 0.0
    %1878 = vmatpush1.msra.mxu0 %v113
    %1879 = vmatprep.subr.mxu0 0.0
    %1880 = vmatpush1.msra.mxu0 %v114
    %1881 = vmatprep.subr.mxu0 0.0
    %1882 = vmatpush1.msra.mxu0 0.0
    %1883 = vmatprep.subr.mxu0 0.0
    %1884 = vmatpush1.msra.mxu0 0.0
    %1885 = vmatprep.subr.mxu0 0.0
    %1886 = vmatpush1.msra.mxu0 0.0
    %1887 = vmatprep.subr.mxu0 0.0
    %1888 = vmatpush1.msra.mxu0 0.0
    %1889 = vmatprep.subr.mxu0 0.0
    %1890 = vmatpush1.msra.mxu0 0.0
    %1891 = vmatprep.subr.mxu0 0.0
    %1892 = vmatpush1.msra.mxu0 0.0
    %1893 = vmatprep.subr.mxu0 0.0
    %1894 = vmatpush1.msra.mxu0 0.0
    %1895 = vmatprep.subr.mxu0 0.0
    %1896 = vmatpush1.msra.mxu0 0.0
    %1897 = vmatprep.subr.mxu0 0.0
    %1898 = vmatpush1.msra.mxu0 0.0
    %1899 = vmatprep.subr.mxu0 0.0
    %1900 = vmatpush1.msra.mxu0 0.0
    %1901 = vmatprep.subr.mxu0 0.0
    %1902 = vmatpush1.msra.mxu0 0.0
    %1903 = vmatprep.subr.mxu0 0.0
    %1904 = vmatpush1.msra.mxu0 0.0
    %1905 = vmatprep.subr.mxu0 0.0
    %1906 = vmatpush1.msra.mxu0 0.0
    %1907 = vmatprep.subr.mxu0 0.0
    %1908 = vmatpush1.msra.mxu0 0.0
    %1909 = vmatprep.subr.mxu0 0.0
    %1910 = vmatpush1.msra.mxu0 0.0
    %1911 = vmatprep.subr.mxu0 0.0
    %1912 = vmatpush1.msra.mxu0 0.0
    %1913 = vmatprep.subr.mxu0 0.0
    %1914 = vmatpush1.msra.mxu0 0.0
    %1915 = vmatprep.subr.mxu0 0.0
    %1916 = vmatpush1.msra.mxu0 0.0
    %1917 = vmatprep.subr.mxu0 0.0
    %1918 = vmatpush1.msra.mxu0 0.0
    %1919 = vmatprep.subr.mxu0 0.0
    %1920 = vmatpush1.msra.mxu0 0.0
    %1921 = vmatprep.subr.mxu0 0.0
    %1922 = vmatpush1.msra.mxu0 0.0
    %1923 = vmatprep.subr.mxu0 0.0
    %1924 = vmatpush1.msra.mxu0 0.0
    %1925 = vmatprep.subr.mxu0 0.0
    %1926 = vmatpush1.msra.mxu0 0.0
    %1927 = vmatprep.subr.mxu0 0.0
    %1928 = vmatpush1.msra.mxu0 0.0
    %1929 = vmatprep.subr.mxu0 0.0
    %1930 = vmatpush1.msra.mxu0 0.0
    %1931 = vmatprep.subr.mxu0 0.0
    %1932 = vmatpush1.msra.mxu0 0.0
    %1933 = vmatprep.subr.mxu0 0.0
    %1934 = vmatpush1.msra.mxu0 0.0
    %1935 = vmatprep.subr.mxu0 0.0
    %1936 = vmatpush1.msra.mxu0 0.0
    %1937 = vmatprep.mubr.f32.mxu0 0.0
    %1938 = vmatmul.mubr.f32.gmra.mrb[0].mxu0 %v1801
    %v1939 = vpop.f32.mrb[0].mxu0
    %v1940 = vadd.f32 %v506, %v1939
    %v1941 = vpop.f32.mrb[0].mxu0
    %1942 = vdwg.mxu0
    %1943 = vmatprep.subr.mxu0 0.0
    %1944 = vmatpush1.msra.mxu0 %v116
    %1945 = vmatprep.subr.mxu0 0.0
    %1946 = vmatpush1.msra.mxu0 %v117
    %1947 = vmatprep.subr.mxu0 0.0
    %1948 = vmatpush1.msra.mxu0 %v118
    %1949 = vmatprep.subr.mxu0 0.0
    %1950 = vmatpush1.msra.mxu0 %v119
    %1951 = vmatprep.subr.mxu0 0.0
    %1952 = vmatpush1.msra.mxu0 0.0
    %1953 = vmatprep.subr.mxu0 0.0
    %1954 = vmatpush1.msra.mxu0 0.0
    %1955 = vmatprep.subr.mxu0 0.0
    %1956 = vmatpush1.msra.mxu0 0.0
    %1957 = vmatprep.subr.mxu0 0.0
    %1958 = vmatpush1.msra.mxu0 0.0
    %1959 = vmatprep.subr.mxu0 0.0
    %1960 = vmatpush1.msra.mxu0 0.0
    %1961 = vmatprep.subr.mxu0 0.0
    %1962 = vmatpush1.msra.mxu0 0.0
    %1963 = vmatprep.subr.mxu0 0.0
    %1964 = vmatpush1.msra.mxu0 0.0
    %1965 = vmatprep.subr.mxu0 0.0
    %1966 = vmatpush1.msra.mxu0 0.0
    %1967 = vmatprep.subr.mxu0 0.0
    %1968 = vmatpush1.msra.mxu0 0.0
    %1969 = vmatprep.subr.mxu0 0.0
    %1970 = vmatpush1.msra.mxu0 0.0
    %1971 = vmatprep.subr.mxu0 0.0
    %1972 = vmatpush1.msra.mxu0 0.0
    %1973 = vmatprep.subr.mxu0 0.0
    %1974 = vmatpush1.msra.mxu0 0.0
    %1975 = vmatprep.subr.mxu0 0.0
    %1976 = vmatpush1.msra.mxu0 0.0
    %1977 = vmatprep.subr.mxu0 0.0
    %1978 = vmatpush1.msra.mxu0 0.0
    %1979 = vmatprep.subr.mxu0 0.0
    %1980 = vmatpush1.msra.mxu0 0.0
    %1981 = vmatprep.subr.mxu0 0.0
    %1982 = vmatpush1.msra.mxu0 0.0
    %1983 = vmatprep.subr.mxu0 0.0
    %1984 = vmatpush1.msra.mxu0 0.0
    %1985 = vmatprep.subr.mxu0 0.0
    %1986 = vmatpush1.msra.mxu0 0.0
    %1987 = vmatprep.subr.mxu0 0.0
    %1988 = vmatpush1.msra.mxu0 0.0
    %1989 = vmatprep.subr.mxu0 0.0
    %1990 = vmatpush1.msra.mxu0 0.0
    %1991 = vmatprep.subr.mxu0 0.0
    %1992 = vmatpush1.msra.mxu0 0.0
    %1993 = vmatprep.subr.mxu0 0.0
    %1994 = vmatpush1.msra.mxu0 0.0
    %1995 = vmatprep.subr.mxu0 0.0
    %1996 = vmatpush1.msra.mxu0 0.0
    %1997 = vmatprep.subr.mxu0 0.0
    %1998 = vmatpush1.msra.mxu0 0.0
    %1999 = vmatprep.subr.mxu0 0.0
    %2000 = vmatpush1.msra.mxu0 0.0
    %2001 = vmatprep.subr.mxu0 0.0
    %2002 = vmatpush1.msra.mxu0 0.0
    %2003 = vmatprep.subr.mxu0 0.0
    %2004 = vmatpush1.msra.mxu0 0.0
    %2005 = vmatprep.subr.mxu0 0.0
    %2006 = vmatpush1.msra.mxu0 0.0
    %2007 = vmatprep.mubr.f32.mxu0 0.0
    %2008 = vmatmul.mubr.f32.gmra.mrb[0].mxu0 %v1801
    %v2009 = vpop.f32.mrb[0].mxu0
    %v2010 = vadd.f32 %v582, %v2009
    %v2011 = vpop.f32.mrb[0].mxu0
    %2012 = vdwg.mxu0
    %v2014 = vsel %vm187, %v1563, 0
    %2016 = vmatprep.subr.mxu0 0.0
    %2017 = vmatpush1.msra.mxu0 %v120
    %2018 = vmatprep.subr.mxu0 0.0
    %2019 = vmatpush1.msra.mxu0 %v121
    %2020 = vmatprep.subr.mxu0 0.0
    %2021 = vmatpush1.msra.mxu0 %v122
    %2022 = vmatprep.subr.mxu0 0.0
    %2023 = vmatpush1.msra.mxu0 %v123
    %2024 = vmatprep.subr.mxu0 0.0
    %2025 = vmatpush1.msra.mxu0 0.0
    %2026 = vmatprep.subr.mxu0 0.0
    %2027 = vmatpush1.msra.mxu0 0.0
    %2028 = vmatprep.subr.mxu0 0.0
    %2029 = vmatpush1.msra.mxu0 0.0
    %2030 = vmatprep.subr.mxu0 0.0
    %2031 = vmatpush1.msra.mxu0 0.0
    %2032 = vmatprep.subr.mxu0 0.0
    %2033 = vmatpush1.msra.mxu0 0.0
    %2034 = vmatprep.subr.mxu0 0.0
    %2035 = vmatpush1.msra.mxu0 0.0
    %2036 = vmatprep.subr.mxu0 0.0
    %2037 = vmatpush1.msra.mxu0 0.0
    %2038 = vmatprep.subr.mxu0 0.0
    %2039 = vmatpush1.msra.mxu0 0.0
    %2040 = vmatprep.subr.mxu0 0.0
    %2041 = vmatpush1.msra.mxu0 0.0
    %2042 = vmatprep.subr.mxu0 0.0
    %2043 = vmatpush1.msra.mxu0 0.0
    %2044 = vmatprep.subr.mxu0 0.0
    %2045 = vmatpush1.msra.mxu0 0.0
    %2046 = vmatprep.subr.mxu0 0.0
    %2047 = vmatpush1.msra.mxu0 0.0
    %2048 = vmatprep.subr.mxu0 0.0
    %2049 = vmatpush1.msra.mxu0 0.0
    %2050 = vmatprep.subr.mxu0 0.0
    %2051 = vmatpush1.msra.mxu0 0.0
    %2052 = vmatprep.subr.mxu0 0.0
    %2053 = vmatpush1.msra.mxu0 0.0
    %2054 = vmatprep.subr.mxu0 0.0
    %2055 = vmatpush1.msra.mxu0 0.0
    %2056 = vmatprep.subr.mxu0 0.0
    %2057 = vmatpush1.msra.mxu0 0.0
    %2058 = vmatprep.subr.mxu0 0.0
    %2059 = vmatpush1.msra.mxu0 0.0
    %2060 = vmatprep.subr.mxu0 0.0
    %2061 = vmatpush1.msra.mxu0 0.0
    %2062 = vmatprep.subr.mxu0 0.0
    %2063 = vmatpush1.msra.mxu0 0.0
    %2064 = vmatprep.subr.mxu0 0.0
    %2065 = vmatpush1.msra.mxu0 0.0
    %2066 = vmatprep.subr.mxu0 0.0
    %2067 = vmatpush1.msra.mxu0 0.0
    %2068 = vmatprep.subr.mxu0 0.0
    %2069 = vmatpush1.msra.mxu0 0.0
    %2070 = vmatprep.subr.mxu0 0.0
    %2071 = vmatpush1.msra.mxu0 0.0
    %2072 = vmatprep.subr.mxu0 0.0
    %2073 = vmatpush1.msra.mxu0 0.0
    %2074 = vmatprep.subr.mxu0 0.0
    %2075 = vmatpush1.msra.mxu0 0.0
    %2076 = vmatprep.subr.mxu0 0.0
    %2077 = vmatpush1.msra.mxu0 0.0
    %2078 = vmatprep.subr.mxu0 0.0
    %2079 = vmatpush1.msra.mxu0 0.0
    %2080 = vmatprep.mubr.f32.mxu0 0.0
    %2081 = vmatmul.mubr.f32.gmra.mrb[0].mxu0 %v2014
    %v2082 = vpop.f32.mrb[0].mxu0
    %v2083 = vadd.f32 0.0, %v2082
    %v2084 = vpop.f32.mrb[0].mxu0
    %2085 = vdwg.mxu0
    %2086 = vmatprep.subr.mxu0 0.0
    %2087 = vmatpush1.msra.mxu0 %v125
    %2088 = vmatprep.subr.mxu0 0.0
    %2089 = vmatpush1.msra.mxu0 %v126
    %2090 = vmatprep.subr.mxu0 0.0
    %2091 = vmatpush1.msra.mxu0 %v127
    %2092 = vmatprep.subr.mxu0 0.0
    %2093 = vmatpush1.msra.mxu0 %v128
    %2094 = vmatprep.subr.mxu0 0.0
    %2095 = vmatpush1.msra.mxu0 0.0
    %2096 = vmatprep.subr.mxu0 0.0
    %2097 = vmatpush1.msra.mxu0 0.0
    %2098 = vmatprep.subr.mxu0 0.0
    %2099 = vmatpush1.msra.mxu0 0.0
    %2100 = vmatprep.subr.mxu0 0.0
    %2101 = vmatpush1.msra.mxu0 0.0
    %2102 = vmatprep.subr.mxu0 0.0
    %2103 = vmatpush1.msra.mxu0 0.0
    %2104 = vmatprep.subr.mxu0 0.0
    %2105 = vmatpush1.msra.mxu0 0.0
    %2106 = vmatprep.subr.mxu0 0.0
    %2107 = vmatpush1.msra.mxu0 0.0
    %2108 = vmatprep.subr.mxu0 0.0
    %2109 = vmatpush1.msra.mxu0 0.0
    %2110 = vmatprep.subr.mxu0 0.0
    %2111 = vmatpush1.msra.mxu0 0.0
    %2112 = vmatprep.subr.mxu0 0.0
    %2113 = vmatpush1.msra.mxu0 0.0
    %2114 = vmatprep.subr.mxu0 0.0
    %2115 = vmatpush1.msra.mxu0 0.0
    %2116 = vmatprep.subr.mxu0 0.0
    %2117 = vmatpush1.msra.mxu0 0.0
    %2118 = vmatprep.subr.mxu0 0.0
    %2119 = vmatpush1.msra.mxu0 0.0
    %2120 = vmatprep.subr.mxu0 0.0
    %2121 = vmatpush1.msra.mxu0 0.0
    %2122 = vmatprep.subr.mxu0 0.0
    %2123 = vmatpush1.msra.mxu0 0.0
    %2124 = vmatprep.subr.mxu0 0.0
    %2125 = vmatpush1.msra.mxu0 0.0
    %2126 = vmatprep.subr.mxu0 0.0
    %2127 = vmatpush1.msra.mxu0 0.0
    %2128 = vmatprep.subr.mxu0 0.0
    %2129 = vmatpush1.msra.mxu0 0.0
    %2130 = vmatprep.subr.mxu0 0.0
    %2131 = vmatpush1.msra.mxu0 0.0
    %2132 = vmatprep.subr.mxu0 0.0
    %2133 = vmatpush1.msra.mxu0 0.0
    %2134 = vmatprep.subr.mxu0 0.0
    %2135 = vmatpush1.msra.mxu0 0.0
    %2136 = vmatprep.subr.mxu0 0.0
    %2137 = vmatpush1.msra.mxu0 0.0
    %2138 = vmatprep.subr.mxu0 0.0
    %2139 = vmatpush1.msra.mxu0 0.0
    %2140 = vmatprep.subr.mxu0 0.0
    %2141 = vmatpush1.msra.mxu0 0.0
    %2142 = vmatprep.subr.mxu0 0.0
    %2143 = vmatpush1.msra.mxu0 0.0
    %2144 = vmatprep.subr.mxu0 0.0
    %2145 = vmatpush1.msra.mxu0 0.0
    %2146 = vmatprep.subr.mxu0 0.0
    %2147 = vmatpush1.msra.mxu0 0.0
    %2148 = vmatprep.subr.mxu0 0.0
    %2149 = vmatpush1.msra.mxu0 0.0
    %2150 = vmatprep.mubr.f32.mxu0 0.0
    %2151 = vmatmul.mubr.f32.gmra.mrb[0].mxu0 %v2014
    %v2152 = vpop.f32.mrb[0].mxu0
    %v2153 = vadd.f32 0.0, %v2152
    %v2154 = vpop.f32.mrb[0].mxu0
    %2155 = vdwg.mxu0
    %v2156 = vadd.f32 %v1870, %v2083
    %v2157 = vmul.f32 %v2156, 0.5
    %v2158 = vtanh.pop %v2157
    %v2159 = vmul.f32 %v2158, 0.5
    %v2160 = vadd.f32 %v2159, 0.5
    %v2161 = vadd.f32 %v1940, %v2153
    %v2162 = vmul.f32 %v2161, 0.5
    %v2163 = vtanh.pop %v2162
    %v2164 = vmul.f32 %v2163, 0.5
    %v2165 = vadd.f32 %v2164, 0.5
    %2166 = vmatprep.subr.mxu0 0.0
    %2167 = vmatpush1.msra.mxu0 %v130
    %2168 = vmatprep.subr.mxu0 0.0
    %2169 = vmatpush1.msra.mxu0 %v131
    %2170 = vmatprep.subr.mxu0 0.0
    %2171 = vmatpush1.msra.mxu0 %v132
    %2172 = vmatprep.subr.mxu0 0.0
    %2173 = vmatpush1.msra.mxu0 %v133
    %2174 = vmatprep.subr.mxu0 0.0
    %2175 = vmatpush1.msra.mxu0 0.0
    %2176 = vmatprep.subr.mxu0 0.0
    %2177 = vmatpush1.msra.mxu0 0.0
    %2178 = vmatprep.subr.mxu0 0.0
    %2179 = vmatpush1.msra.mxu0 0.0
    %2180 = vmatprep.subr.mxu0 0.0
    %2181 = vmatpush1.msra.mxu0 0.0
    %2182 = vmatprep.subr.mxu0 0.0
    %2183 = vmatpush1.msra.mxu0 0.0
    %2184 = vmatprep.subr.mxu0 0.0
    %2185 = vmatpush1.msra.mxu0 0.0
    %2186 = vmatprep.subr.mxu0 0.0
    %2187 = vmatpush1.msra.mxu0 0.0
    %2188 = vmatprep.subr.mxu0 0.0
    %2189 = vmatpush1.msra.mxu0 0.0
    %2190 = vmatprep.subr.mxu0 0.0
    %2191 = vmatpush1.msra.mxu0 0.0
    %2192 = vmatprep.subr.mxu0 0.0
    %2193 = vmatpush1.msra.mxu0 0.0
    %2194 = vmatprep.subr.mxu0 0.0
    %2195 = vmatpush1.msra.mxu0 0.0
    %2196 = vmatprep.subr.mxu0 0.0
    %2197 = vmatpush1.msra.mxu0 0.0
    %2198 = vmatprep.subr.mxu0 0.0
    %2199 = vmatpush1.msra.mxu0 0.0
    %2200 = vmatprep.subr.mxu0 0.0
    %2201 = vmatpush1.msra.mxu0 0.0
    %2202 = vmatprep.subr.mxu0 0.0
    %2203 = vmatpush1.msra.mxu0 0.0
    %2204 = vmatprep.subr.mxu0 0.0
    %2205 = vmatpush1.msra.mxu0 0.0
    %2206 = vmatprep.subr.mxu0 0.0
    %2207 = vmatpush1.msra.mxu0 0.0
    %2208 = vmatprep.subr.mxu0 0.0
    %2209 = vmatpush1.msra.mxu0 0.0
    %2210 = vmatprep.subr.mxu0 0.0
    %2211 = vmatpush1.msra.mxu0 0.0
    %2212 = vmatprep.subr.mxu0 0.0
    %2213 = vmatpush1.msra.mxu0 0.0
    %2214 = vmatprep.subr.mxu0 0.0
    %2215 = vmatpush1.msra.mxu0 0.0
    %2216 = vmatprep.subr.mxu0 0.0
    %2217 = vmatpush1.msra.mxu0 0.0
    %2218 = vmatprep.subr.mxu0 0.0
    %2219 = vmatpush1.msra.mxu0 0.0
    %2220 = vmatprep.subr.mxu0 0.0
    %2221 = vmatpush1.msra.mxu0 0.0
    %2222 = vmatprep.subr.mxu0 0.0
    %2223 = vmatpush1.msra.mxu0 0.0
    %2224 = vmatprep.subr.mxu0 0.0
    %2225 = vmatpush1.msra.mxu0 0.0
    %2226 = vmatprep.subr.mxu0 0.0
    %2227 = vmatpush1.msra.mxu0 0.0
    %2228 = vmatprep.subr.mxu0 0.0
    %2229 = vmatpush1.msra.mxu0 0.0
    %2230 = vmatprep.mubr.f32.mxu0 0.0
    %2231 = vmatmul.mubr.f32.gmra.mrb[0].mxu0 %v2014
    %v2232 = vpop.f32.mrb[0].mxu0
    %v2233 = vadd.f32 %v808, %v2232
    %v2234 = vpop.f32.mrb[0].mxu0
    %2235 = vdwg.mxu0
    %v2236 = vmul.f32 %v2160, %v2233
    %v2237 = vadd.f32 %v2010, %v2236
    %v2238 = vtanh.pop %v2237
    %v2239 = vsub.f32 %v1563, %v2238
    %v2240 = vmul.f32 %v2165, %v2239
    %v2241 = vadd.f32 %v2238, %v2240
    %2242 = vset.pattern.permute.xlu0 3
    %2243 = vperm.xlu0 %2242, %v80
    %v2244 = vpop.permute.xlu0 %2243
    %v2246 = vmul.f32 %v2244, %v149
    %v2247 = vadd.f32 %v2246, %v156
    %v2248 = vmul.f32 %v2244, %v163
    %v2249 = vadd.f32 %v2248, %v170
    %v2250 = vmul.f32 %v2244, %v177
    %v2251 = vadd.f32 %v2250, %v184
    %2252 = vmatprep.subr.mxu0 0.0
    %2253 = vmatpush1.msra.mxu0 %v86
    %2254 = vmatprep.subr.mxu0 0.0
    %2255 = vmatpush1.msra.mxu0 %v87
    %2256 = vmatprep.subr.mxu0 0.0
    %2257 = vmatpush1.msra.mxu0 %v88
    %2258 = vmatprep.subr.mxu0 0.0
    %2259 = vmatpush1.msra.mxu0 %v89
    %2260 = vmatprep.subr.mxu0 0.0
    %2261 = vmatpush1.msra.mxu0 0.0
    %2262 = vmatprep.subr.mxu0 0.0
    %2263 = vmatpush1.msra.mxu0 0.0
    %2264 = vmatprep.subr.mxu0 0.0
    %2265 = vmatpush1.msra.mxu0 0.0
    %2266 = vmatprep.subr.mxu0 0.0
    %2267 = vmatpush1.msra.mxu0 0.0
    %2268 = vmatprep.subr.mxu0 0.0
    %2269 = vmatpush1.msra.mxu0 0.0
    %2270 = vmatprep.subr.mxu0 0.0
    %2271 = vmatpush1.msra.mxu0 0.0
    %2272 = vmatprep.subr.mxu0 0.0
    %2273 = vmatpush1.msra.mxu0 0.0
    %2274 = vmatprep.subr.mxu0 0.0
    %2275 = vmatpush1.msra.mxu0 0.0
    %2276 = vmatprep.subr.mxu0 0.0
    %2277 = vmatpush1.msra.mxu0 0.0
    %2278 = vmatprep.subr.mxu0 0.0
    %2279 = vmatpush1.msra.mxu0 0.0
    %2280 = vmatprep.subr.mxu0 0.0
    %2281 = vmatpush1.msra.mxu0 0.0
    %2282 = vmatprep.subr.mxu0 0.0
    %2283 = vmatpush1.msra.mxu0 0.0
    %2284 = vmatprep.subr.mxu0 0.0
    %2285 = vmatpush1.msra.mxu0 0.0
    %2286 = vmatprep.subr.mxu0 0.0
    %2287 = vmatpush1.msra.mxu0 0.0
    %2288 = vmatprep.subr.mxu0 0.0
    %2289 = vmatpush1.msra.mxu0 0.0
    %2290 = vmatprep.subr.mxu0 0.0
    %2291 = vmatpush1.msra.mxu0 0.0
    %2292 = vmatprep.subr.mxu0 0.0
    %2293 = vmatpush1.msra.mxu0 0.0
    %2294 = vmatprep.subr.mxu0 0.0
    %2295 = vmatpush1.msra.mxu0 0.0
    %2296 = vmatprep.subr.mxu0 0.0
    %2297 = vmatpush1.msra.mxu0 0.0
    %2298 = vmatprep.subr.mxu0 0.0
    %2299 = vmatpush1.msra.mxu0 0.0
    %2300 = vmatprep.subr.mxu0 0.0
    %2301 = vmatpush1.msra.mxu0 0.0
    %2302 = vmatprep.subr.mxu0 0.0
    %2303 = vmatpush1.msra.mxu0 0.0
    %2304 = vmatprep.subr.mxu0 0.0
    %2305 = vmatpush1.msra.mxu0 0.0
    %2306 = vmatprep.subr.mxu0 0.0
    %2307 = vmatpush1.msra.mxu0 0.0
    %2308 = vmatprep.subr.mxu0 0.0
    %2309 = vmatpush1.msra.mxu0 0.0
    %2310 = vmatprep.subr.mxu0 0.0
    %2311 = vmatpush1.msra.mxu0 0.0
    %2312 = vmatprep.subr.mxu0 0.0
    %2313 = vmatpush1.msra.mxu0 0.0
    %2314 = vmatprep.subr.mxu0 0.0
    %2315 = vmatpush1.msra.mxu0 0.0
    %2316 = vmatprep.mubr.f32.mxu0 0.0
    %2317 = vmatmul.mubr.f32.gmra.mrb[0].mxu0 %v1801
    %v2318 = vpop.f32.mrb[0].mxu0
    %v2319 = vadd.f32 0.0, %v2318
    %v2320 = vpop.f32.mrb[0].mxu0
    %2321 = vdwg.mxu0
    %2322 = vmatprep.subr.mxu0 0.0
    %2323 = vmatpush1.msra.mxu0 %v91
    %2324 = vmatprep.subr.mxu0 0.0
    %2325 = vmatpush1.msra.mxu0 %v92
    %2326 = vmatprep.subr.mxu0 0.0
    %2327 = vmatpush1.msra.mxu0 %v93
    %2328 = vmatprep.subr.mxu0 0.0
    %2329 = vmatpush1.msra.mxu0 %v94
    %2330 = vmatprep.subr.mxu0 0.0
    %2331 = vmatpush1.msra.mxu0 0.0
    %2332 = vmatprep.subr.mxu0 0.0
    %2333 = vmatpush1.msra.mxu0 0.0
    %2334 = vmatprep.subr.mxu0 0.0
    %2335 = vmatpush1.msra.mxu0 0.0
    %2336 = vmatprep.subr.mxu0 0.0
    %2337 = vmatpush1.msra.mxu0 0.0
    %2338 = vmatprep.subr.mxu0 0.0
    %2339 = vmatpush1.msra.mxu0 0.0
    %2340 = vmatprep.subr.mxu0 0.0
    %2341 = vmatpush1.msra.mxu0 0.0
    %2342 = vmatprep.subr.mxu0 0.0
    %2343 = vmatpush1.msra.mxu0 0.0
    %2344 = vmatprep.subr.mxu0 0.0
    %2345 = vmatpush1.msra.mxu0 0.0
    %2346 = vmatprep.subr.mxu0 0.0
    %2347 = vmatpush1.msra.mxu0 0.0
    %2348 = vmatprep.subr.mxu0 0.0
    %2349 = vmatpush1.msra.mxu0 0.0
    %2350 = vmatprep.subr.mxu0 0.0
    %2351 = vmatpush1.msra.mxu0 0.0
    %2352 = vmatprep.subr.mxu0 0.0
    %2353 = vmatpush1.msra.mxu0 0.0
    %2354 = vmatprep.subr.mxu0 0.0
    %2355 = vmatpush1.msra.mxu0 0.0
    %2356 = vmatprep.subr.mxu0 0.0
    %2357 = vmatpush1.msra.mxu0 0.0
    %2358 = vmatprep.subr.mxu0 0.0
    %2359 = vmatpush1.msra.mxu0 0.0
    %2360 = vmatprep.subr.mxu0 0.0
    %2361 = vmatpush1.msra.mxu0 0.0
    %2362 = vmatprep.subr.mxu0 0.0
    %2363 = vmatpush1.msra.mxu0 0.0
    %2364 = vmatprep.subr.mxu0 0.0
    %2365 = vmatpush1.msra.mxu0 0.0
    %2366 = vmatprep.subr.mxu0 0.0
    %2367 = vmatpush1.msra.mxu0 0.0
    %2368 = vmatprep.subr.mxu0 0.0
    %2369 = vmatpush1.msra.mxu0 0.0
    %2370 = vmatprep.subr.mxu0 0.0
    %2371 = vmatpush1.msra.mxu0 0.0
    %2372 = vmatprep.subr.mxu0 0.0
    %2373 = vmatpush1.msra.mxu0 0.0
    %2374 = vmatprep.subr.mxu0 0.0
    %2375 = vmatpush1.msra.mxu0 0.0
    %2376 = vmatprep.subr.mxu0 0.0
    %2377 = vmatpush1.msra.mxu0 0.0
    %2378 = vmatprep.subr.mxu0 0.0
    %2379 = vmatpush1.msra.mxu0 0.0
    %2380 = vmatprep.subr.mxu0 0.0
    %2381 = vmatpush1.msra.mxu0 0.0
    %2382 = vmatprep.subr.mxu0 0.0
    %2383 = vmatpush1.msra.mxu0 0.0
    %2384 = vmatprep.subr.mxu0 0.0
    %2385 = vmatpush1.msra.mxu0 0.0
    %2386 = vmatprep.mubr.f32.mxu0 0.0
    %2387 = vmatmul.mubr.f32.gmra.mrb[0].mxu0 %v1801
    %v2388 = vpop.f32.mrb[0].mxu0
    %v2389 = vadd.f32 0.0, %v2388
    %v2390 = vpop.f32.mrb[0].mxu0
    %2391 = vdwg.mxu0
    %v2392 = vadd.f32 %v2247, %v2319
    %v2393 = vmul.f32 %v2392, 0.5
    %v2394 = vtanh.pop %v2393
    %v2395 = vmul.f32 %v2394, 0.5
    %v2396 = vadd.f32 %v2395, 0.5
    %v2397 = vadd.f32 %v2249, %v2389
    %v2398 = vmul.f32 %v2397, 0.5
    %v2399 = vtanh.pop %v2398
    %v2400 = vmul.f32 %v2399, 0.5
    %v2401 = vadd.f32 %v2400, 0.5
    %2402 = vmatprep.subr.mxu0 0.0
    %2403 = vmatpush1.msra.mxu0 %v96
    %2404 = vmatprep.subr.mxu0 0.0
    %2405 = vmatpush1.msra.mxu0 %v97
    %2406 = vmatprep.subr.mxu0 0.0
    %2407 = vmatpush1.msra.mxu0 %v98
    %2408 = vmatprep.subr.mxu0 0.0
    %2409 = vmatpush1.msra.mxu0 %v99
    %2410 = vmatprep.subr.mxu0 0.0
    %2411 = vmatpush1.msra.mxu0 0.0
    %2412 = vmatprep.subr.mxu0 0.0
    %2413 = vmatpush1.msra.mxu0 0.0
    %2414 = vmatprep.subr.mxu0 0.0
    %2415 = vmatpush1.msra.mxu0 0.0
    %2416 = vmatprep.subr.mxu0 0.0
    %2417 = vmatpush1.msra.mxu0 0.0
    %2418 = vmatprep.subr.mxu0 0.0
    %2419 = vmatpush1.msra.mxu0 0.0
    %2420 = vmatprep.subr.mxu0 0.0
    %2421 = vmatpush1.msra.mxu0 0.0
    %2422 = vmatprep.subr.mxu0 0.0
    %2423 = vmatpush1.msra.mxu0 0.0
    %2424 = vmatprep.subr.mxu0 0.0
    %2425 = vmatpush1.msra.mxu0 0.0
    %2426 = vmatprep.subr.mxu0 0.0
    %2427 = vmatpush1.msra.mxu0 0.0
    %2428 = vmatprep.subr.mxu0 0.0
    %2429 = vmatpush1.msra.mxu0 0.0
    %2430 = vmatprep.subr.mxu0 0.0
    %2431 = vmatpush1.msra.mxu0 0.0
    %2432 = vmatprep.subr.mxu0 0.0
    %2433 = vmatpush1.msra.mxu0 0.0
    %2434 = vmatprep.subr.mxu0 0.0
    %2435 = vmatpush1.msra.mxu0 0.0
    %2436 = vmatprep.subr.mxu0 0.0
    %2437 = vmatpush1.msra.mxu0 0.0
    %2438 = vmatprep.subr.mxu0 0.0
    %2439 = vmatpush1.msra.mxu0 0.0
    %2440 = vmatprep.subr.mxu0 0.0
    %2441 = vmatpush1.msra.mxu0 0.0
    %2442 = vmatprep.subr.mxu0 0.0
    %2443 = vmatpush1.msra.mxu0 0.0
    %2444 = vmatprep.subr.mxu0 0.0
    %2445 = vmatpush1.msra.mxu0 0.0
    %2446 = vmatprep.subr.mxu0 0.0
    %2447 = vmatpush1.msra.mxu0 0.0
    %2448 = vmatprep.subr.mxu0 0.0
    %2449 = vmatpush1.msra.mxu0 0.0
    %2450 = vmatprep.subr.mxu0 0.0
    %2451 = vmatpush1.msra.mxu0 0.0
    %2452 = vmatprep.subr.mxu0 0.0
    %2453 = vmatpush1.msra.mxu0 0.0
    %2454 = vmatprep.subr.mxu0 0.0
    %2455 = vmatpush1.msra.mxu0 0.0
    %2456 = vmatprep.subr.mxu0 0.0
    %2457 = vmatpush1.msra.mxu0 0.0
    %2458 = vmatprep.subr.mxu0 0.0
    %2459 = vmatpush1.msra.mxu0 0.0
    %2460 = vmatprep.subr.mxu0 0.0
    %2461 = vmatpush1.msra.mxu0 0.0
    %2462 = vmatprep.subr.mxu0 0.0
    %2463 = vmatpush1.msra.mxu0 0.0
    %2464 = vmatprep.subr.mxu0 0.0
    %2465 = vmatpush1.msra.mxu0 0.0
    %2466 = vmatprep.mubr.f32.mxu0 0.0
    %2467 = vmatmul.mubr.f32.gmra.mrb[0].mxu0 %v1801
    %v2468 = vpop.f32.mrb[0].mxu0
    %v2469 = vadd.f32 %v345, %v2468
    %v2470 = vpop.f32.mrb[0].mxu0
    %2471 = vdwg.mxu0
    %v2472 = vmul.f32 %v2396, %v2469
    %v2473 = vadd.f32 %v2251, %v2472
    %v2474 = vtanh.pop %v2473
    %v2475 = vsub.f32 %v1799, %v2474
    %v2476 = vmul.f32 %v2401, %v2475
    %v2477 = vadd.f32 %v2474, %v2476
    %v2479 = vsel %vm187, %v2477, 0
    %2481 = vmatprep.subr.mxu0 0.0
    %2482 = vmatpush1.msra.mxu0 %v106
    %2483 = vmatprep.subr.mxu0 0.0
    %2484 = vmatpush1.msra.mxu0 %v107
    %2485 = vmatprep.subr.mxu0 0.0
    %2486 = vmatpush1.msra.mxu0 %v108
    %2487 = vmatprep.subr.mxu0 0.0
    %2488 = vmatpush1.msra.mxu0 %v109
    %2489 = vmatprep.subr.mxu0 0.0
    %2490 = vmatpush1.msra.mxu0 0.0
    %2491 = vmatprep.subr.mxu0 0.0
    %2492 = vmatpush1.msra.mxu0 0.0
    %2493 = vmatprep.subr.mxu0 0.0
    %2494 = vmatpush1.msra.mxu0 0.0
    %2495 = vmatprep.subr.mxu0 0.0
    %2496 = vmatpush1.msra.mxu0 0.0
    %2497 = vmatprep.subr.mxu0 0.0
    %2498 = vmatpush1.msra.mxu0 0.0
    %2499 = vmatprep.subr.mxu0 0.0
    %2500 = vmatpush1.msra.mxu0 0.0
    %2501 = vmatprep.subr.mxu0 0.0
    %2502 = vmatpush1.msra.mxu0 0.0
    %2503 = vmatprep.subr.mxu0 0.0
    %2504 = vmatpush1.msra.mxu0 0.0
    %2505 = vmatprep.subr.mxu0 0.0
    %2506 = vmatpush1.msra.mxu0 0.0
    %2507 = vmatprep.subr.mxu0 0.0
    %2508 = vmatpush1.msra.mxu0 0.0
    %2509 = vmatprep.subr.mxu0 0.0
    %2510 = vmatpush1.msra.mxu0 0.0
    %2511 = vmatprep.subr.mxu0 0.0
    %2512 = vmatpush1.msra.mxu0 0.0
    %2513 = vmatprep.subr.mxu0 0.0
    %2514 = vmatpush1.msra.mxu0 0.0
    %2515 = vmatprep.subr.mxu0 0.0
    %2516 = vmatpush1.msra.mxu0 0.0
    %2517 = vmatprep.subr.mxu0 0.0
    %2518 = vmatpush1.msra.mxu0 0.0
    %2519 = vmatprep.subr.mxu0 0.0
    %2520 = vmatpush1.msra.mxu0 0.0
    %2521 = vmatprep.subr.mxu0 0.0
    %2522 = vmatpush1.msra.mxu0 0.0
    %2523 = vmatprep.subr.mxu0 0.0
    %2524 = vmatpush1.msra.mxu0 0.0
    %2525 = vmatprep.subr.mxu0 0.0
    %2526 = vmatpush1.msra.mxu0 0.0
    %2527 = vmatprep.subr.mxu0 0.0
    %2528 = vmatpush1.msra.mxu0 0.0
    %2529 = vmatprep.subr.mxu0 0.0
    %2530 = vmatpush1.msra.mxu0 0.0
    %2531 = vmatprep.subr.mxu0 0.0
    %2532 = vmatpush1.msra.mxu0 0.0
    %2533 = vmatprep.subr.mxu0 0.0
    %2534 = vmatpush1.msra.mxu0 0.0
    %2535 = vmatprep.subr.mxu0 0.0
    %2536 = vmatpush1.msra.mxu0 0.0
    %2537 = vmatprep.subr.mxu0 0.0
    %2538 = vmatpush1.msra.mxu0 0.0
    %2539 = vmatprep.subr.mxu0 0.0
    %2540 = vmatpush1.msra.mxu0 0.0
    %2541 = vmatprep.subr.mxu0 0.0
    %2542 = vmatpush1.msra.mxu0 0.0
    %2543 = vmatprep.subr.mxu0 0.0
    %2544 = vmatpush1.msra.mxu0 0.0
    %2545 = vmatprep.mubr.f32.mxu0 0.0
    %2546 = vmatmul.mubr.f32.gmra.mrb[0].mxu0 %v2479
    %v2547 = vpop.f32.mrb[0].mxu0
    %v2548 = vadd.f32 %v427, %v2547
    %v2549 = vpop.f32.mrb[0].mxu0
    %2550 = vdwg.mxu0
    %2551 = vmatprep.subr.mxu0 0.0
    %2552 = vmatpush1.msra.mxu0 %v111
    %2553 = vmatprep.subr.mxu0 0.0
    %2554 = vmatpush1.msra.mxu0 %v112
    %2555 = vmatprep.subr.mxu0 0.0
    %2556 = vmatpush1.msra.mxu0 %v113
    %2557 = vmatprep.subr.mxu0 0.0
    %2558 = vmatpush1.msra.mxu0 %v114
    %2559 = vmatprep.subr.mxu0 0.0
    %2560 = vmatpush1.msra.mxu0 0.0
    %2561 = vmatprep.subr.mxu0 0.0
    %2562 = vmatpush1.msra.mxu0 0.0
    %2563 = vmatprep.subr.mxu0 0.0
    %2564 = vmatpush1.msra.mxu0 0.0
    %2565 = vmatprep.subr.mxu0 0.0
    %2566 = vmatpush1.msra.mxu0 0.0
    %2567 = vmatprep.subr.mxu0 0.0
    %2568 = vmatpush1.msra.mxu0 0.0
    %2569 = vmatprep.subr.mxu0 0.0
    %2570 = vmatpush1.msra.mxu0 0.0
    %2571 = vmatprep.subr.mxu0 0.0
    %2572 = vmatpush1.msra.mxu0 0.0
    %2573 = vmatprep.subr.mxu0 0.0
    %2574 = vmatpush1.msra.mxu0 0.0
    %2575 = vmatprep.subr.mxu0 0.0
    %2576 = vmatpush1.msra.mxu0 0.0
    %2577 = vmatprep.subr.mxu0 0.0
    %2578 = vmatpush1.msra.mxu0 0.0
    %2579 = vmatprep.subr.mxu0 0.0
    %2580 = vmatpush1.msra.mxu0 0.0
    %2581 = vmatprep.subr.mxu0 0.0
    %2582 = vmatpush1.msra.mxu0 0.0
    %2583 = vmatprep.subr.mxu0 0.0
    %2584 = vmatpush1.msra.mxu0 0.0
    %2585 = vmatprep.subr.mxu0 0.0
    %2586 = vmatpush1.msra.mxu0 0.0
    %2587 = vmatprep.subr.mxu0 0.0
    %2588 = vmatpush1.msra.mxu0 0.0
    %2589 = vmatprep.subr.mxu0 0.0
    %2590 = vmatpush1.msra.mxu0 0.0
    %2591 = vmatprep.subr.mxu0 0.0
    %2592 = vmatpush1.msra.mxu0 0.0
    %2593 = vmatprep.subr.mxu0 0.0
    %2594 = vmatpush1.msra.mxu0 0.0
    %2595 = vmatprep.subr.mxu0 0.0
    %2596 = vmatpush1.msra.mxu0 0.0
    %2597 = vmatprep.subr.mxu0 0.0
    %2598 = vmatpush1.msra.mxu0 0.0
    %2599 = vmatprep.subr.mxu0 0.0
    %2600 = vmatpush1.msra.mxu0 0.0
    %2601 = vmatprep.subr.mxu0 0.0
    %2602 = vmatpush1.msra.mxu0 0.0
    %2603 = vmatprep.subr.mxu0 0.0
    %2604 = vmatpush1.msra.mxu0 0.0
    %2605 = vmatprep.subr.mxu0 0.0
    %2606 = vmatpush1.msra.mxu0 0.0
    %2607 = vmatprep.subr.mxu0 0.0
    %2608 = vmatpush1.msra.mxu0 0.0
    %2609 = vmatprep.subr.mxu0 0.0
    %2610 = vmatpush1.msra.mxu0 0.0
    %2611 = vmatprep.subr.mxu0 0.0
    %2612 = vmatpush1.msra.mxu0 0.0
    %2613 = vmatprep.subr.mxu0 0.0
    %2614 = vmatpush1.msra.mxu0 0.0
    %2615 = vmatprep.mubr.f32.mxu0 0.0
    %2616 = vmatmul.mubr.f32.gmra.mrb[0].mxu0 %v2479
    %v2617 = vpop.f32.mrb[0].mxu0
    %v2618 = vadd.f32 %v506, %v2617
    %v2619 = vpop.f32.mrb[0].mxu0
    %2620 = vdwg.mxu0
    %2621 = vmatprep.subr.mxu0 0.0
    %2622 = vmatpush1.msra.mxu0 %v116
    %2623 = vmatprep.subr.mxu0 0.0
    %2624 = vmatpush1.msra.mxu0 %v117
    %2625 = vmatprep.subr.mxu0 0.0
    %2626 = vmatpush1.msra.mxu0 %v118
    %2627 = vmatprep.subr.mxu0 0.0
    %2628 = vmatpush1.msra.mxu0 %v119
    %2629 = vmatprep.subr.mxu0 0.0
    %2630 = vmatpush1.msra.mxu0 0.0
    %2631 = vmatprep.subr.mxu0 0.0
    %2632 = vmatpush1.msra.mxu0 0.0
    %2633 = vmatprep.subr.mxu0 0.0
    %2634 = vmatpush1.msra.mxu0 0.0
    %2635 = vmatprep.subr.mxu0 0.0
    %2636 = vmatpush1.msra.mxu0 0.0
    %2637 = vmatprep.subr.mxu0 0.0
    %2638 = vmatpush1.msra.mxu0 0.0
    %2639 = vmatprep.subr.mxu0 0.0
    %2640 = vmatpush1.msra.mxu0 0.0
    %2641 = vmatprep.subr.mxu0 0.0
    %2642 = vmatpush1.msra.mxu0 0.0
    %2643 = vmatprep.subr.mxu0 0.0
    %2644 = vmatpush1.msra.mxu0 0.0
    %2645 = vmatprep.subr.mxu0 0.0
    %2646 = vmatpush1.msra.mxu0 0.0
    %2647 = vmatprep.subr.mxu0 0.0
    %2648 = vmatpush1.msra.mxu0 0.0
    %2649 = vmatprep.subr.mxu0 0.0
    %2650 = vmatpush1.msra.mxu0 0.0
    %2651 = vmatprep.subr.mxu0 0.0
    %2652 = vmatpush1.msra.mxu0 0.0
    %2653 = vmatprep.subr.mxu0 0.0
    %2654 = vmatpush1.msra.mxu0 0.0
    %2655 = vmatprep.subr.mxu0 0.0
    %2656 = vmatpush1.msra.mxu0 0.0
    %2657 = vmatprep.subr.mxu0 0.0
    %2658 = vmatpush1.msra.mxu0 0.0
    %2659 = vmatprep.subr.mxu0 0.0
    %2660 = vmatpush1.msra.mxu0 0.0
    %2661 = vmatprep.subr.mxu0 0.0
    %2662 = vmatpush1.msra.mxu0 0.0
    %2663 = vmatprep.subr.mxu0 0.0
    %2664 = vmatpush1.msra.mxu0 0.0
    %2665 = vmatprep.subr.mxu0 0.0
    %2666 = vmatpush1.msra.mxu0 0.0
    %2667 = vmatprep.subr.mxu0 0.0
    %2668 = vmatpush1.msra.mxu0 0.0
    %2669 = vmatprep.subr.mxu0 0.0
    %2670 = vmatpush1.msra.mxu0 0.0
    %2671 = vmatprep.subr.mxu0 0.0
    %2672 = vmatpush1.msra.mxu0 0.0
    %2673 = vmatprep.subr.mxu0 0.0
    %2674 = vmatpush1.msra.mxu0 0.0
    %2675 = vmatprep.subr.mxu0 0.0
    %2676 = vmatpush1.msra.mxu0 0.0
    %2677 = vmatprep.subr.mxu0 0.0
    %2678 = vmatpush1.msra.mxu0 0.0
    %2679 = vmatprep.subr.mxu0 0.0
    %2680 = vmatpush1.msra.mxu0 0.0
    %2681 = vmatprep.subr.mxu0 0.0
    %2682 = vmatpush1.msra.mxu0 0.0
    %2683 = vmatprep.subr.mxu0 0.0
    %2684 = vmatpush1.msra.mxu0 0.0
    %2685 = vmatprep.mubr.f32.mxu0 0.0
    %2686 = vmatmul.mubr.f32.gmra.mrb[0].mxu0 %v2479
    %v2687 = vpop.f32.mrb[0].mxu0
    %v2688 = vadd.f32 %v582, %v2687
    %v2689 = vpop.f32.mrb[0].mxu0
    %2690 = vdwg.mxu0
    %v2692 = vsel %vm187, %v2241, 0
    %2694 = vmatprep.subr.mxu0 0.0
    %2695 = vmatpush1.msra.mxu0 %v120
    %2696 = vmatprep.subr.mxu0 0.0
    %2697 = vmatpush1.msra.mxu0 %v121
    %2698 = vmatprep.subr.mxu0 0.0
    %2699 = vmatpush1.msra.mxu0 %v122
    %2700 = vmatprep.subr.mxu0 0.0
    %2701 = vmatpush1.msra.mxu0 %v123
    %2702 = vmatprep.subr.mxu0 0.0
    %2703 = vmatpush1.msra.mxu0 0.0
    %2704 = vmatprep.subr.mxu0 0.0
    %2705 = vmatpush1.msra.mxu0 0.0
    %2706 = vmatprep.subr.mxu0 0.0
    %2707 = vmatpush1.msra.mxu0 0.0
    %2708 = vmatprep.subr.mxu0 0.0
    %2709 = vmatpush1.msra.mxu0 0.0
    %2710 = vmatprep.subr.mxu0 0.0
    %2711 = vmatpush1.msra.mxu0 0.0
    %2712 = vmatprep.subr.mxu0 0.0
    %2713 = vmatpush1.msra.mxu0 0.0
    %2714 = vmatprep.subr.mxu0 0.0
    %2715 = vmatpush1.msra.mxu0 0.0
    %2716 = vmatprep.subr.mxu0 0.0
    %2717 = vmatpush1.msra.mxu0 0.0
    %2718 = vmatprep.subr.mxu0 0.0
    %2719 = vmatpush1.msra.mxu0 0.0
    %2720 = vmatprep.subr.mxu0 0.0
    %2721 = vmatpush1.msra.mxu0 0.0
    %2722 = vmatprep.subr.mxu0 0.0
    %2723 = vmatpush1.msra.mxu0 0.0
    %2724 = vmatprep.subr.mxu0 0.0
    %2725 = vmatpush1.msra.mxu0 0.0
    %2726 = vmatprep.subr.mxu0 0.0
    %2727 = vmatpush1.msra.mxu0 0.0
    %2728 = vmatprep.subr.mxu0 0.0
    %2729 = vmatpush1.msra.mxu0 0.0
    %2730 = vmatprep.subr.mxu0 0.0
    %2731 = vmatpush1.msra.mxu0 0.0
    %2732 = vmatprep.subr.mxu0 0.0
    %2733 = vmatpush1.msra.mxu0 0.0
    %2734 = vmatprep.subr.mxu0 0.0
    %2735 = vmatpush1.msra.mxu0 0.0
    %2736 = vmatprep.subr.mxu0 0.0
    %2737 = vmatpush1.msra.mxu0 0.0
    %2738 = vmatprep.subr.mxu0 0.0
    %2739 = vmatpush1.msra.mxu0 0.0
    %2740 = vmatprep.subr.mxu0 0.0
    %2741 = vmatpush1.msra.mxu0 0.0
    %2742 = vmatprep.subr.mxu0 0.0
    %2743 = vmatpush1.msra.mxu0 0.0
    %2744 = vmatprep.subr.mxu0 0.0
    %2745 = vmatpush1.msra.mxu0 0.0
    %2746 = vmatprep.subr.mxu0 0.0
    %2747 = vmatpush1.msra.mxu0 0.0
    %2748 = vmatprep.subr.mxu0 0.0
    %2749 = vmatpush1.msra.mxu0 0.0
    %2750 = vmatprep.subr.mxu0 0.0
    %2751 = vmatpush1.msra.mxu0 0.0
    %2752 = vmatprep.subr.mxu0 0.0
    %2753 = vmatpush1.msra.mxu0 0.0
    %2754 = vmatprep.subr.mxu0 0.0
    %2755 = vmatpush1.msra.mxu0 0.0
    %2756 = vmatprep.subr.mxu0 0.0
    %2757 = vmatpush1.msra.mxu0 0.0
    %2758 = vmatprep.mubr.f32.mxu0 0.0
    %2759 = vmatmul.mubr.f32.gmra.mrb[0].mxu0 %v2692
    %v2760 = vpop.f32.mrb[0].mxu0
    %v2761 = vadd.f32 0.0, %v2760
    %v2762 = vpop.f32.mrb[0].mxu0
    %2763 = vdwg.mxu0
    %2764 = vmatprep.subr.mxu0 0.0
    %2765 = vmatpush1.msra.mxu0 %v125
    %2766 = vmatprep.subr.mxu0 0.0
    %2767 = vmatpush1.msra.mxu0 %v126
    %2768 = vmatprep.subr.mxu0 0.0
    %2769 = vmatpush1.msra.mxu0 %v127
    %2770 = vmatprep.subr.mxu0 0.0
    %2771 = vmatpush1.msra.mxu0 %v128
    %2772 = vmatprep.subr.mxu0 0.0
    %2773 = vmatpush1.msra.mxu0 0.0
    %2774 = vmatprep.subr.mxu0 0.0
    %2775 = vmatpush1.msra.mxu0 0.0
    %2776 = vmatprep.subr.mxu0 0.0
    %2777 = vmatpush1.msra.mxu0 0.0
    %2778 = vmatprep.subr.mxu0 0.0
    %2779 = vmatpush1.msra.mxu0 0.0
    %2780 = vmatprep.subr.mxu0 0.0
    %2781 = vmatpush1.msra.mxu0 0.0
    %2782 = vmatprep.subr.mxu0 0.0
    %2783 = vmatpush1.msra.mxu0 0.0
    %2784 = vmatprep.subr.mxu0 0.0
    %2785 = vmatpush1.msra.mxu0 0.0
    %2786 = vmatprep.subr.mxu0 0.0
    %2787 = vmatpush1.msra.mxu0 0.0
    %2788 = vmatprep.subr.mxu0 0.0
    %2789 = vmatpush1.msra.mxu0 0.0
    %2790 = vmatprep.subr.mxu0 0.0
    %2791 = vmatpush1.msra.mxu0 0.0
    %2792 = vmatprep.subr.mxu0 0.0
    %2793 = vmatpush1.msra.mxu0 0.0
    %2794 = vmatprep.subr.mxu0 0.0
    %2795 = vmatpush1.msra.mxu0 0.0
    %2796 = vmatprep.subr.mxu0 0.0
    %2797 = vmatpush1.msra.mxu0 0.0
    %2798 = vmatprep.subr.mxu0 0.0
    %2799 = vmatpush1.msra.mxu0 0.0
    %2800 = vmatprep.subr.mxu0 0.0
    %2801 = vmatpush1.msra.mxu0 0.0
    %2802 = vmatprep.subr.mxu0 0.0
    %2803 = vmatpush1.msra.mxu0 0.0
    %2804 = vmatprep.subr.mxu0 0.0
    %2805 = vmatpush1.msra.mxu0 0.0
    %2806 = vmatprep.subr.mxu0 0.0
    %2807 = vmatpush1.msra.mxu0 0.0
    %2808 = vmatprep.subr.mxu0 0.0
    %2809 = vmatpush1.msra.mxu0 0.0
    %2810 = vmatprep.subr.mxu0 0.0
    %2811 = vmatpush1.msra.mxu0 0.0
    %2812 = vmatprep.subr.mxu0 0.0
    %2813 = vmatpush1.msra.mxu0 0.0
    %2814 = vmatprep.subr.mxu0 0.0
    %2815 = vmatpush1.msra.mxu0 0.0
    %2816 = vmatprep.subr.mxu0 0.0
    %2817 = vmatpush1.msra.mxu0 0.0
    %2818 = vmatprep.subr.mxu0 0.0
    %2819 = vmatpush1.msra.mxu0 0.0
    %2820 = vmatprep.subr.mxu0 0.0
    %2821 = vmatpush1.msra.mxu0 0.0
    %2822 = vmatprep.subr.mxu0 0.0
    %2823 = vmatpush1.msra.mxu0 0.0
    %2824 = vmatprep.subr.mxu0 0.0
    %2825 = vmatpush1.msra.mxu0 0.0
    %2826 = vmatprep.subr.mxu0 0.0
    %2827 = vmatpush1.msra.mxu0 0.0
    %2828 = vmatprep.mubr.f32.mxu0 0.0
    %2829 = vmatmul.mubr.f32.gmra.mrb[0].mxu0 %v2692
    %v2830 = vpop.f32.mrb[0].mxu0
    %v2831 = vadd.f32 0.0, %v2830
    %v2832 = vpop.f32.mrb[0].mxu0
    %2833 = vdwg.mxu0
    %v2834 = vadd.f32 %v2548, %v2761
    %v2835 = vmul.f32 %v2834, 0.5
    %v2836 = vtanh.pop %v2835
    %v2837 = vmul.f32 %v2836, 0.5
    %v2838 = vadd.f32 %v2837, 0.5
    %v2839 = vadd.f32 %v2618, %v2831
    %v2840 = vmul.f32 %v2839, 0.5
    %v2841 = vtanh.pop %v2840
    %v2842 = vmul.f32 %v2841, 0.5
    %v2843 = vadd.f32 %v2842, 0.5
    %2844 = vmatprep.subr.mxu0 0.0
    %2845 = vmatpush1.msra.mxu0 %v130
    %2846 = vmatprep.subr.mxu0 0.0
    %2847 = vmatpush1.msra.mxu0 %v131
    %2848 = vmatprep.subr.mxu0 0.0
    %2849 = vmatpush1.msra.mxu0 %v132
    %2850 = vmatprep.subr.mxu0 0.0
    %2851 = vmatpush1.msra.mxu0 %v133
    %2852 = vmatprep.subr.mxu0 0.0
    %2853 = vmatpush1.msra.mxu0 0.0
    %2854 = vmatprep.subr.mxu0 0.0
    %2855 = vmatpush1.msra.mxu0 0.0
    %2856 = vmatprep.subr.mxu0 0.0
    %2857 = vmatpush1.msra.mxu0 0.0
    %2858 = vmatprep.subr.mxu0 0.0
    %2859 = vmatpush1.msra.mxu0 0.0
    %2860 = vmatprep.subr.mxu0 0.0
    %2861 = vmatpush1.msra.mxu0 0.0
    %2862 = vmatprep.subr.mxu0 0.0
    %2863 = vmatpush1.msra.mxu0 0.0
    %2864 = vmatprep.subr.mxu0 0.0
    %2865 = vmatpush1.msra.mxu0 0.0
    %2866 = vmatprep.subr.mxu0 0.0
    %2867 = vmatpush1.msra.mxu0 0.0
    %2868 = vmatprep.subr.mxu0 0.0
    %2869 = vmatpush1.msra.mxu0 0.0
    %2870 = vmatprep.subr.mxu0 0.0
    %2871 = vmatpush1.msra.mxu0 0.0
    %2872 = vmatprep.subr.mxu0 0.0
    %2873 = vmatpush1.msra.mxu0 0.0
    %2874 = vmatprep.subr.mxu0 0.0
    %2875 = vmatpush1.msra.mxu0 0.0
    %2876 = vmatprep.subr.mxu0 0.0
    %2877 = vmatpush1.msra.mxu0 0.0
    %2878 = vmatprep.subr.mxu0 0.0
    %2879 = vmatpush1.msra.mxu0 0.0
    %2880 = vmatprep.subr.mxu0 0.0
    %2881 = vmatpush1.msra.mxu0 0.0
    %2882 = vmatprep.subr.mxu0 0.0
    %2883 = vmatpush1.msra.mxu0 0.0
    %2884 = vmatprep.subr.mxu0 0.0
    %2885 = vmatpush1.msra.mxu0 0.0
    %2886 = vmatprep.subr.mxu0 0.0
    %2887 = vmatpush1.msra.mxu0 0.0
    %2888 = vmatprep.subr.mxu0 0.0
    %2889 = vmatpush1.msra.mxu0 0.0
    %2890 = vmatprep.subr.mxu0 0.0
    %2891 = vmatpush1.msra.mxu0 0.0
    %2892 = vmatprep.subr.mxu0 0.0
    %2893 = vmatpush1.msra.mxu0 0.0
    %2894 = vmatprep.subr.mxu0 0.0
    %2895 = vmatpush1.msra.mxu0 0.0
    %2896 = vmatprep.subr.mxu0 0.0
    %2897 = vmatpush1.msra.mxu0 0.0
    %2898 = vmatprep.subr.mxu0 0.0
    %2899 = vmatpush1.msra.mxu0 0.0
    %2900 = vmatprep.subr.mxu0 0.0
    %2901 = vmatpush1.msra.mxu0 0.0
    %2902 = vmatprep.subr.mxu0 0.0
    %2903 = vmatpush1.msra.mxu0 0.0
    %2904 = vmatprep.subr.mxu0 0.0
    %2905 = vmatpush1.msra.mxu0 0.0
    %2906 = vmatprep.subr.mxu0 0.0
    %2907 = vmatpush1.msra.mxu0 0.0
    %2908 = vmatprep.mubr.f32.mxu0 0.0
    %2909 = vmatmul.mubr.f32.gmra.mrb[0].mxu0 %v2692
    %v2910 = vpop.f32.mrb[0].mxu0
    %v2911 = vadd.f32 %v808, %v2910
    %v2912 = vpop.f32.mrb[0].mxu0
    %2913 = vdwg.mxu0
    %v2914 = vmul.f32 %v2838, %v2911
    %v2915 = vadd.f32 %v2688, %v2914
    %v2916 = vtanh.pop %v2915
    %v2917 = vsub.f32 %v2241, %v2916
    %v2918 = vmul.f32 %v2843, %v2917
    %v2919 = vadd.f32 %v2916, %v2918
    %2920 = vset.pattern.permute.xlu0 4
    %2921 = vperm.xlu0 %2920, %v80
    %v2922 = vpop.permute.xlu0 %2921
    %v2924 = vmul.f32 %v2922, %v149
    %v2925 = vadd.f32 %v2924, %v156
    %v2926 = vmul.f32 %v2922, %v163
    %v2927 = vadd.f32 %v2926, %v170
    %v2928 = vmul.f32 %v2922, %v177
    %v2929 = vadd.f32 %v2928, %v184
    %2930 = vmatprep.subr.mxu0 0.0
    %2931 = vmatpush1.msra.mxu0 %v86
    %2932 = vmatprep.subr.mxu0 0.0
    %2933 = vmatpush1.msra.mxu0 %v87
    %2934 = vmatprep.subr.mxu0 0.0
    %2935 = vmatpush1.msra.mxu0 %v88
    %2936 = vmatprep.subr.mxu0 0.0
    %2937 = vmatpush1.msra.mxu0 %v89
    %2938 = vmatprep.subr.mxu0 0.0
    %2939 = vmatpush1.msra.mxu0 0.0
    %2940 = vmatprep.subr.mxu0 0.0
    %2941 = vmatpush1.msra.mxu0 0.0
    %2942 = vmatprep.subr.mxu0 0.0
    %2943 = vmatpush1.msra.mxu0 0.0
    %2944 = vmatprep.subr.mxu0 0.0
    %2945 = vmatpush1.msra.mxu0 0.0
    %2946 = vmatprep.subr.mxu0 0.0
    %2947 = vmatpush1.msra.mxu0 0.0
    %2948 = vmatprep.subr.mxu0 0.0
    %2949 = vmatpush1.msra.mxu0 0.0
    %2950 = vmatprep.subr.mxu0 0.0
    %2951 = vmatpush1.msra.mxu0 0.0
    %2952 = vmatprep.subr.mxu0 0.0
    %2953 = vmatpush1.msra.mxu0 0.0
    %2954 = vmatprep.subr.mxu0 0.0
    %2955 = vmatpush1.msra.mxu0 0.0
    %2956 = vmatprep.subr.mxu0 0.0
    %2957 = vmatpush1.msra.mxu0 0.0
    %2958 = vmatprep.subr.mxu0 0.0
    %2959 = vmatpush1.msra.mxu0 0.0
    %2960 = vmatprep.subr.mxu0 0.0
    %2961 = vmatpush1.msra.mxu0 0.0
    %2962 = vmatprep.subr.mxu0 0.0
    %2963 = vmatpush1.msra.mxu0 0.0
    %2964 = vmatprep.subr.mxu0 0.0
    %2965 = vmatpush1.msra.mxu0 0.0
    %2966 = vmatprep.subr.mxu0 0.0
    %2967 = vmatpush1.msra.mxu0 0.0
    %2968 = vmatprep.subr.mxu0 0.0
    %2969 = vmatpush1.msra.mxu0 0.0
    %2970 = vmatprep.subr.mxu0 0.0
    %2971 = vmatpush1.msra.mxu0 0.0
    %2972 = vmatprep.subr.mxu0 0.0
    %2973 = vmatpush1.msra.mxu0 0.0
    %2974 = vmatprep.subr.mxu0 0.0
    %2975 = vmatpush1.msra.mxu0 0.0
    %2976 = vmatprep.subr.mxu0 0.0
    %2977 = vmatpush1.msra.mxu0 0.0
    %2978 = vmatprep.subr.mxu0 0.0
    %2979 = vmatpush1.msra.mxu0 0.0
    %2980 = vmatprep.subr.mxu0 0.0
    %2981 = vmatpush1.msra.mxu0 0.0
    %2982 = vmatprep.subr.mxu0 0.0
    %2983 = vmatpush1.msra.mxu0 0.0
    %2984 = vmatprep.subr.mxu0 0.0
    %2985 = vmatpush1.msra.mxu0 0.0
    %2986 = vmatprep.subr.mxu0 0.0
    %2987 = vmatpush1.msra.mxu0 0.0
    %2988 = vmatprep.subr.mxu0 0.0
    %2989 = vmatpush1.msra.mxu0 0.0
    %2990 = vmatprep.subr.mxu0 0.0
    %2991 = vmatpush1.msra.mxu0 0.0
    %2992 = vmatprep.subr.mxu0 0.0
    %2993 = vmatpush1.msra.mxu0 0.0
    %2994 = vmatprep.mubr.f32.mxu0 0.0
    %2995 = vmatmul.mubr.f32.gmra.mrb[0].mxu0 %v2479
    %v2996 = vpop.f32.mrb[0].mxu0
    %v2997 = vadd.f32 0.0, %v2996
    %v2998 = vpop.f32.mrb[0].mxu0
    %2999 = vdwg.mxu0
    %3000 = vmatprep.subr.mxu0 0.0
    %3001 = vmatpush1.msra.mxu0 %v91
    %3002 = vmatprep.subr.mxu0 0.0
    %3003 = vmatpush1.msra.mxu0 %v92
    %3004 = vmatprep.subr.mxu0 0.0
    %3005 = vmatpush1.msra.mxu0 %v93
    %3006 = vmatprep.subr.mxu0 0.0
    %3007 = vmatpush1.msra.mxu0 %v94
    %3008 = vmatprep.subr.mxu0 0.0
    %3009 = vmatpush1.msra.mxu0 0.0
    %3010 = vmatprep.subr.mxu0 0.0
    %3011 = vmatpush1.msra.mxu0 0.0
    %3012 = vmatprep.subr.mxu0 0.0
    %3013 = vmatpush1.msra.mxu0 0.0
    %3014 = vmatprep.subr.mxu0 0.0
    %3015 = vmatpush1.msra.mxu0 0.0
    %3016 = vmatprep.subr.mxu0 0.0
    %3017 = vmatpush1.msra.mxu0 0.0
    %3018 = vmatprep.subr.mxu0 0.0
    %3019 = vmatpush1.msra.mxu0 0.0
    %3020 = vmatprep.subr.mxu0 0.0
    %3021 = vmatpush1.msra.mxu0 0.0
    %3022 = vmatprep.subr.mxu0 0.0
    %3023 = vmatpush1.msra.mxu0 0.0
    %3024 = vmatprep.subr.mxu0 0.0
    %3025 = vmatpush1.msra.mxu0 0.0
    %3026 = vmatprep.subr.mxu0 0.0
    %3027 = vmatpush1.msra.mxu0 0.0
    %3028 = vmatprep.subr.mxu0 0.0
    %3029 = vmatpush1.msra.mxu0 0.0
    %3030 = vmatprep.subr.mxu0 0.0
    %3031 = vmatpush1.msra.mxu0 0.0
    %3032 = vmatprep.subr.mxu0 0.0
    %3033 = vmatpush1.msra.mxu0 0.0
    %3034 = vmatprep.subr.mxu0 0.0
    %3035 = vmatpush1.msra.mxu0 0.0
    %3036 = vmatprep.subr.mxu0 0.0
    %3037 = vmatpush1.msra.mxu0 0.0
    %3038 = vmatprep.subr.mxu0 0.0
    %3039 = vmatpush1.msra.mxu0 0.0
    %3040 = vmatprep.subr.mxu0 0.0
    %3041 = vmatpush1.msra.mxu0 0.0
    %3042 = vmatprep.subr.mxu0 0.0
    %3043 = vmatpush1.msra.mxu0 0.0
    %3044 = vmatprep.subr.mxu0 0.0
    %3045 = vmatpush1.msra.mxu0 0.0
    %3046 = vmatprep.subr.mxu0 0.0
    %3047 = vmatpush1.msra.mxu0 0.0
    %3048 = vmatprep.subr.mxu0 0.0
    %3049 = vmatpush1.msra.mxu0 0.0
    %3050 = vmatprep.subr.mxu0 0.0
    %3051 = vmatpush1.msra.mxu0 0.0
    %3052 = vmatprep.subr.mxu0 0.0
    %3053 = vmatpush1.msra.mxu0 0.0
    %3054 = vmatprep.subr.mxu0 0.0
    %3055 = vmatpush1.msra.mxu0 0.0
    %3056 = vmatprep.subr.mxu0 0.0
    %3057 = vmatpush1.msra.mxu0 0.0
    %3058 = vmatprep.subr.mxu0 0.0
    %3059 = vmatpush1.msra.mxu0 0.0
    %3060 = vmatprep.subr.mxu0 0.0
    %3061 = vmatpush1.msra.mxu0 0.0
    %3062 = vmatprep.subr.mxu0 0.0
    %3063 = vmatpush1.msra.mxu0 0.0
    %3064 = vmatprep.mubr.f32.mxu0 0.0
    %3065 = vmatmul.mubr.f32.gmra.mrb[0].mxu0 %v2479
    %v3066 = vpop.f32.mrb[0].mxu0
    %v3067 = vadd.f32 0.0, %v3066
    %v3068 = vpop.f32.mrb[0].mxu0
    %3069 = vdwg.mxu0
    %v3070 = vadd.f32 %v2925, %v2997
    %v3071 = vmul.f32 %v3070, 0.5
    %v3072 = vtanh.pop %v3071
    %v3073 = vmul.f32 %v3072, 0.5
    %v3074 = vadd.f32 %v3073, 0.5
    %v3075 = vadd.f32 %v2927, %v3067
    %v3076 = vmul.f32 %v3075, 0.5
    %v3077 = vtanh.pop %v3076
    %v3078 = vmul.f32 %v3077, 0.5
    %v3079 = vadd.f32 %v3078, 0.5
    %3080 = vmatprep.subr.mxu0 0.0
    %3081 = vmatpush1.msra.mxu0 %v96
    %3082 = vmatprep.subr.mxu0 0.0
    %3083 = vmatpush1.msra.mxu0 %v97
    %3084 = vmatprep.subr.mxu0 0.0
    %3085 = vmatpush1.msra.mxu0 %v98
    %3086 = vmatprep.subr.mxu0 0.0
    %3087 = vmatpush1.msra.mxu0 %v99
    %3088 = vmatprep.subr.mxu0 0.0
    %3089 = vmatpush1.msra.mxu0 0.0
    %3090 = vmatprep.subr.mxu0 0.0
    %3091 = vmatpush1.msra.mxu0 0.0
    %3092 = vmatprep.subr.mxu0 0.0
    %3093 = vmatpush1.msra.mxu0 0.0
    %3094 = vmatprep.subr.mxu0 0.0
    %3095 = vmatpush1.msra.mxu0 0.0
    %3096 = vmatprep.subr.mxu0 0.0
    %3097 = vmatpush1.msra.mxu0 0.0
    %3098 = vmatprep.subr.mxu0 0.0
    %3099 = vmatpush1.msra.mxu0 0.0
    %3100 = vmatprep.subr.mxu0 0.0
    %3101 = vmatpush1.msra.mxu0 0.0
    %3102 = vmatprep.subr.mxu0 0.0
    %3103 = vmatpush1.msra.mxu0 0.0
    %3104 = vmatprep.subr.mxu0 0.0
    %3105 = vmatpush1.msra.mxu0 0.0
    %3106 = vmatprep.subr.mxu0 0.0
    %3107 = vmatpush1.msra.mxu0 0.0
    %3108 = vmatprep.subr.mxu0 0.0
    %3109 = vmatpush1.msra.mxu0 0.0
    %3110 = vmatprep.subr.mxu0 0.0
    %3111 = vmatpush1.msra.mxu0 0.0
    %3112 = vmatprep.subr.mxu0 0.0
    %3113 = vmatpush1.msra.mxu0 0.0
    %3114 = vmatprep.subr.mxu0 0.0
    %3115 = vmatpush1.msra.mxu0 0.0
    %3116 = vmatprep.subr.mxu0 0.0
    %3117 = vmatpush1.msra.mxu0 0.0
    %3118 = vmatprep.subr.mxu0 0.0
    %3119 = vmatpush1.msra.mxu0 0.0
    %3120 = vmatprep.subr.mxu0 0.0
    %3121 = vmatpush1.msra.mxu0 0.0
    %3122 = vmatprep.subr.mxu0 0.0
    %3123 = vmatpush1.msra.mxu0 0.0
    %3124 = vmatprep.subr.mxu0 0.0
    %3125 = vmatpush1.msra.mxu0 0.0
    %3126 = vmatprep.subr.mxu0 0.0
    %3127 = vmatpush1.msra.mxu0 0.0
    %3128 = vmatprep.subr.mxu0 0.0
    %3129 = vmatpush1.msra.mxu0 0.0
    %3130 = vmatprep.subr.mxu0 0.0
    %3131 = vmatpush1.msra.mxu0 0.0
    %3132 = vmatprep.subr.mxu0 0.0
    %3133 = vmatpush1.msra.mxu0 0.0
    %3134 = vmatprep.subr.mxu0 0.0
    %3135 = vmatpush1.msra.mxu0 0.0
    %3136 = vmatprep.subr.mxu0 0.0
    %3137 = vmatpush1.msra.mxu0 0.0
    %3138 = vmatprep.subr.mxu0 0.0
    %3139 = vmatpush1.msra.mxu0 0.0
    %3140 = vmatprep.subr.mxu0 0.0
    %3141 = vmatpush1.msra.mxu0 0.0
    %3142 = vmatprep.subr.mxu0 0.0
    %3143 = vmatpush1.msra.mxu0 0.0
    %3144 = vmatprep.mubr.f32.mxu0 0.0
    %3145 = vmatmul.mubr.f32.gmra.mrb[0].mxu0 %v2479
    %v3146 = vpop.f32.mrb[0].mxu0
    %v3147 = vadd.f32 %v345, %v3146
    %v3148 = vpop.f32.mrb[0].mxu0
    %3149 = vdwg.mxu0
    %v3150 = vmul.f32 %v3074, %v3147
    %v3151 = vadd.f32 %v2929, %v3150
    %v3152 = vtanh.pop %v3151
    %v3153 = vsub.f32 %v2477, %v3152
    %v3154 = vmul.f32 %v3079, %v3153
    %v3155 = vadd.f32 %v3152, %v3154
    %v3157 = vsel %vm187, %v3155, 0
    %3159 = vmatprep.subr.mxu0 0.0
    %3160 = vmatpush1.msra.mxu0 %v106
    %3161 = vmatprep.subr.mxu0 0.0
    %3162 = vmatpush1.msra.mxu0 %v107
    %3163 = vmatprep.subr.mxu0 0.0
    %3164 = vmatpush1.msra.mxu0 %v108
    %3165 = vmatprep.subr.mxu0 0.0
    %3166 = vmatpush1.msra.mxu0 %v109
    %3167 = vmatprep.subr.mxu0 0.0
    %3168 = vmatpush1.msra.mxu0 0.0
    %3169 = vmatprep.subr.mxu0 0.0
    %3170 = vmatpush1.msra.mxu0 0.0
    %3171 = vmatprep.subr.mxu0 0.0
    %3172 = vmatpush1.msra.mxu0 0.0
    %3173 = vmatprep.subr.mxu0 0.0
    %3174 = vmatpush1.msra.mxu0 0.0
    %3175 = vmatprep.subr.mxu0 0.0
    %3176 = vmatpush1.msra.mxu0 0.0
    %3177 = vmatprep.subr.mxu0 0.0
    %3178 = vmatpush1.msra.mxu0 0.0
    %3179 = vmatprep.subr.mxu0 0.0
    %3180 = vmatpush1.msra.mxu0 0.0
    %3181 = vmatprep.subr.mxu0 0.0
    %3182 = vmatpush1.msra.mxu0 0.0
    %3183 = vmatprep.subr.mxu0 0.0
    %3184 = vmatpush1.msra.mxu0 0.0
    %3185 = vmatprep.subr.mxu0 0.0
    %3186 = vmatpush1.msra.mxu0 0.0
    %3187 = vmatprep.subr.mxu0 0.0
    %3188 = vmatpush1.msra.mxu0 0.0
    %3189 = vmatprep.subr.mxu0 0.0
    %3190 = vmatpush1.msra.mxu0 0.0
    %3191 = vmatprep.subr.mxu0 0.0
    %3192 = vmatpush1.msra.mxu0 0.0
    %3193 = vmatprep.subr.mxu0 0.0
    %3194 = vmatpush1.msra.mxu0 0.0
    %3195 = vmatprep.subr.mxu0 0.0
    %3196 = vmatpush1.msra.mxu0 0.0
    %3197 = vmatprep.subr.mxu0 0.0
    %3198 = vmatpush1.msra.mxu0 0.0
    %3199 = vmatprep.subr.mxu0 0.0
    %3200 = vmatpush1.msra.mxu0 0.0
    %3201 = vmatprep.subr.mxu0 0.0
    %3202 = vmatpush1.msra.mxu0 0.0
    %3203 = vmatprep.subr.mxu0 0.0
    %3204 = vmatpush1.msra.mxu0 0.0
    %3205 = vmatprep.subr.mxu0 0.0
    %3206 = vmatpush1.msra.mxu0 0.0
    %3207 = vmatprep.subr.mxu0 0.0
    %3208 = vmatpush1.msra.mxu0 0.0
    %3209 = vmatprep.subr.mxu0 0.0
    %3210 = vmatpush1.msra.mxu0 0.0
    %3211 = vmatprep.subr.mxu0 0.0
    %3212 = vmatpush1.msra.mxu0 0.0
    %3213 = vmatprep.subr.mxu0 0.0
    %3214 = vmatpush1.msra.mxu0 0.0
    %3215 = vmatprep.subr.mxu0 0.0
    %3216 = vmatpush1.msra.mxu0 0.0
    %3217 = vmatprep.subr.mxu0 0.0
    %3218 = vmatpush1.msra.mxu0 0.0
    %3219 = vmatprep.subr.mxu0 0.0
    %3220 = vmatpush1.msra.mxu0 0.0
    %3221 = vmatprep.subr.mxu0 0.0
    %3222 = vmatpush1.msra.mxu0 0.0
    %3223 = vmatprep.mubr.f32.mxu0 0.0
    %3224 = vmatmul.mubr.f32.gmra.mrb[0].mxu0 %v3157
    %v3225 = vpop.f32.mrb[0].mxu0
    %v3226 = vadd.f32 %v427, %v3225
    %v3227 = vpop.f32.mrb[0].mxu0
    %3228 = vdwg.mxu0
    %3229 = vmatprep.subr.mxu0 0.0
    %3230 = vmatpush1.msra.mxu0 %v111
    %3231 = vmatprep.subr.mxu0 0.0
    %3232 = vmatpush1.msra.mxu0 %v112
    %3233 = vmatprep.subr.mxu0 0.0
    %3234 = vmatpush1.msra.mxu0 %v113
    %3235 = vmatprep.subr.mxu0 0.0
    %3236 = vmatpush1.msra.mxu0 %v114
    %3237 = vmatprep.subr.mxu0 0.0
    %3238 = vmatpush1.msra.mxu0 0.0
    %3239 = vmatprep.subr.mxu0 0.0
    %3240 = vmatpush1.msra.mxu0 0.0
    %3241 = vmatprep.subr.mxu0 0.0
    %3242 = vmatpush1.msra.mxu0 0.0
    %3243 = vmatprep.subr.mxu0 0.0
    %3244 = vmatpush1.msra.mxu0 0.0
    %3245 = vmatprep.subr.mxu0 0.0
    %3246 = vmatpush1.msra.mxu0 0.0
    %3247 = vmatprep.subr.mxu0 0.0
    %3248 = vmatpush1.msra.mxu0 0.0
    %3249 = vmatprep.subr.mxu0 0.0
    %3250 = vmatpush1.msra.mxu0 0.0
    %3251 = vmatprep.subr.mxu0 0.0
    %3252 = vmatpush1.msra.mxu0 0.0
    %3253 = vmatprep.subr.mxu0 0.0
    %3254 = vmatpush1.msra.mxu0 0.0
    %3255 = vmatprep.subr.mxu0 0.0
    %3256 = vmatpush1.msra.mxu0 0.0
    %3257 = vmatprep.subr.mxu0 0.0
    %3258 = vmatpush1.msra.mxu0 0.0
    %3259 = vmatprep.subr.mxu0 0.0
    %3260 = vmatpush1.msra.mxu0 0.0
    %3261 = vmatprep.subr.mxu0 0.0
    %3262 = vmatpush1.msra.mxu0 0.0
    %3263 = vmatprep.subr.mxu0 0.0
    %3264 = vmatpush1.msra.mxu0 0.0
    %3265 = vmatprep.subr.mxu0 0.0
    %3266 = vmatpush1.msra.mxu0 0.0
    %3267 = vmatprep.subr.mxu0 0.0
    %3268 = vmatpush1.msra.mxu0 0.0
    %3269 = vmatprep.subr.mxu0 0.0
    %3270 = vmatpush1.msra.mxu0 0.0
    %3271 = vmatprep.subr.mxu0 0.0
    %3272 = vmatpush1.msra.mxu0 0.0
    %3273 = vmatprep.subr.mxu0 0.0
    %3274 = vmatpush1.msra.mxu0 0.0
    %3275 = vmatprep.subr.mxu0 0.0
    %3276 = vmatpush1.msra.mxu0 0.0
    %3277 = vmatprep.subr.mxu0 0.0
    %3278 = vmatpush1.msra.mxu0 0.0
    %3279 = vmatprep.subr.mxu0 0.0
    %3280 = vmatpush1.msra.mxu0 0.0
    %3281 = vmatprep.subr.mxu0 0.0
    %3282 = vmatpush1.msra.mxu0 0.0
    %3283 = vmatprep.subr.mxu0 0.0
    %3284 = vmatpush1.msra.mxu0 0.0
    %3285 = vmatprep.subr.mxu0 0.0
    %3286 = vmatpush1.msra.mxu0 0.0
    %3287 = vmatprep.subr.mxu0 0.0
    %3288 = vmatpush1.msra.mxu0 0.0
    %3289 = vmatprep.subr.mxu0 0.0
    %3290 = vmatpush1.msra.mxu0 0.0
    %3291 = vmatprep.subr.mxu0 0.0
    %3292 = vmatpush1.msra.mxu0 0.0
    %3293 = vmatprep.mubr.f32.mxu0 0.0
    %3294 = vmatmul.mubr.f32.gmra.mrb[0].mxu0 %v3157
    %v3295 = vpop.f32.mrb[0].mxu0
    %v3296 = vadd.f32 %v506, %v3295
    %v3297 = vpop.f32.mrb[0].mxu0
    %3298 = vdwg.mxu0
    %3299 = vmatprep.subr.mxu0 0.0
    %3300 = vmatpush1.msra.mxu0 %v116
    %3301 = vmatprep.subr.mxu0 0.0
    %3302 = vmatpush1.msra.mxu0 %v117
    %3303 = vmatprep.subr.mxu0 0.0
    %3304 = vmatpush1.msra.mxu0 %v118
    %3305 = vmatprep.subr.mxu0 0.0
    %3306 = vmatpush1.msra.mxu0 %v119
    %3307 = vmatprep.subr.mxu0 0.0
    %3308 = vmatpush1.msra.mxu0 0.0
    %3309 = vmatprep.subr.mxu0 0.0
    %3310 = vmatpush1.msra.mxu0 0.0
    %3311 = vmatprep.subr.mxu0 0.0
    %3312 = vmatpush1.msra.mxu0 0.0
    %3313 = vmatprep.subr.mxu0 0.0
    %3314 = vmatpush1.msra.mxu0 0.0
    %3315 = vmatprep.subr.mxu0 0.0
    %3316 = vmatpush1.msra.mxu0 0.0
    %3317 = vmatprep.subr.mxu0 0.0
    %3318 = vmatpush1.msra.mxu0 0.0
    %3319 = vmatprep.subr.mxu0 0.0
    %3320 = vmatpush1.msra.mxu0 0.0
    %3321 = vmatprep.subr.mxu0 0.0
    %3322 = vmatpush1.msra.mxu0 0.0
    %3323 = vmatprep.subr.mxu0 0.0
    %3324 = vmatpush1.msra.mxu0 0.0
    %3325 = vmatprep.subr.mxu0 0.0
    %3326 = vmatpush1.msra.mxu0 0.0
    %3327 = vmatprep.subr.mxu0 0.0
    %3328 = vmatpush1.msra.mxu0 0.0
    %3329 = vmatprep.subr.mxu0 0.0
    %3330 = vmatpush1.msra.mxu0 0.0
    %3331 = vmatprep.subr.mxu0 0.0
    %3332 = vmatpush1.msra.mxu0 0.0
    %3333 = vmatprep.subr.mxu0 0.0
    %3334 = vmatpush1.msra.mxu0 0.0
    %3335 = vmatprep.subr.mxu0 0.0
    %3336 = vmatpush1.msra.mxu0 0.0
    %3337 = vmatprep.subr.mxu0 0.0
    %3338 = vmatpush1.msra.mxu0 0.0
    %3339 = vmatprep.subr.mxu0 0.0
    %3340 = vmatpush1.msra.mxu0 0.0
    %3341 = vmatprep.subr.mxu0 0.0
    %3342 = vmatpush1.msra.mxu0 0.0
    %3343 = vmatprep.subr.mxu0 0.0
    %3344 = vmatpush1.msra.mxu0 0.0
    %3345 = vmatprep.subr.mxu0 0.0
    %3346 = vmatpush1.msra.mxu0 0.0
    %3347 = vmatprep.subr.mxu0 0.0
    %3348 = vmatpush1.msra.mxu0 0.0
    %3349 = vmatprep.subr.mxu0 0.0
    %3350 = vmatpush1.msra.mxu0 0.0
    %3351 = vmatprep.subr.mxu0 0.0
    %3352 = vmatpush1.msra.mxu0 0.0
    %3353 = vmatprep.subr.mxu0 0.0
    %3354 = vmatpush1.msra.mxu0 0.0
    %3355 = vmatprep.subr.mxu0 0.0
    %3356 = vmatpush1.msra.mxu0 0.0
    %3357 = vmatprep.subr.mxu0 0.0
    %3358 = vmatpush1.msra.mxu0 0.0
    %3359 = vmatprep.subr.mxu0 0.0
    %3360 = vmatpush1.msra.mxu0 0.0
    %3361 = vmatprep.subr.mxu0 0.0
    %3362 = vmatpush1.msra.mxu0 0.0
    %3363 = vmatprep.mubr.f32.mxu0 0.0
    %3364 = vmatmul.mubr.f32.gmra.mrb[0].mxu0 %v3157
    %v3365 = vpop.f32.mrb[0].mxu0
    %v3366 = vadd.f32 %v582, %v3365
    %v3367 = vpop.f32.mrb[0].mxu0
    %3368 = vdwg.mxu0
    %v3370 = vsel %vm187, %v2919, 0
    %3372 = vmatprep.subr.mxu0 0.0
    %3373 = vmatpush1.msra.mxu0 %v120
    %3374 = vmatprep.subr.mxu0 0.0
    %3375 = vmatpush1.msra.mxu0 %v121
    %3376 = vmatprep.subr.mxu0 0.0
    %3377 = vmatpush1.msra.mxu0 %v122
    %3378 = vmatprep.subr.mxu0 0.0
    %3379 = vmatpush1.msra.mxu0 %v123
    %3380 = vmatprep.subr.mxu0 0.0
    %3381 = vmatpush1.msra.mxu0 0.0
    %3382 = vmatprep.subr.mxu0 0.0
    %3383 = vmatpush1.msra.mxu0 0.0
    %3384 = vmatprep.subr.mxu0 0.0
    %3385 = vmatpush1.msra.mxu0 0.0
    %3386 = vmatprep.subr.mxu0 0.0
    %3387 = vmatpush1.msra.mxu0 0.0
    %3388 = vmatprep.subr.mxu0 0.0
    %3389 = vmatpush1.msra.mxu0 0.0
    %3390 = vmatprep.subr.mxu0 0.0
    %3391 = vmatpush1.msra.mxu0 0.0
    %3392 = vmatprep.subr.mxu0 0.0
    %3393 = vmatpush1.msra.mxu0 0.0
    %3394 = vmatprep.subr.mxu0 0.0
    %3395 = vmatpush1.msra.mxu0 0.0
    %3396 = vmatprep.subr.mxu0 0.0
    %3397 = vmatpush1.msra.mxu0 0.0
    %3398 = vmatprep.subr.mxu0 0.0
    %3399 = vmatpush1.msra.mxu0 0.0
    %3400 = vmatprep.subr.mxu0 0.0
    %3401 = vmatpush1.msra.mxu0 0.0
    %3402 = vmatprep.subr.mxu0 0.0
    %3403 = vmatpush1.msra.mxu0 0.0
    %3404 = vmatprep.subr.mxu0 0.0
    %3405 = vmatpush1.msra.mxu0 0.0
    %3406 = vmatprep.subr.mxu0 0.0
    %3407 = vmatpush1.msra.mxu0 0.0
    %3408 = vmatprep.subr.mxu0 0.0
    %3409 = vmatpush1.msra.mxu0 0.0
    %3410 = vmatprep.subr.mxu0 0.0
    %3411 = vmatpush1.msra.mxu0 0.0
    %3412 = vmatprep.subr.mxu0 0.0
    %3413 = vmatpush1.msra.mxu0 0.0
    %3414 = vmatprep.subr.mxu0 0.0
    %3415 = vmatpush1.msra.mxu0 0.0
    %3416 = vmatprep.subr.mxu0 0.0
    %3417 = vmatpush1.msra.mxu0 0.0
    %3418 = vmatprep.subr.mxu0 0.0
    %3419 = vmatpush1.msra.mxu0 0.0
    %3420 = vmatprep.subr.mxu0 0.0
    %3421 = vmatpush1.msra.mxu0 0.0
    %3422 = vmatprep.subr.mxu0 0.0
    %3423 = vmatpush1.msra.mxu0 0.0
    %3424 = vmatprep.subr.mxu0 0.0
    %3425 = vmatpush1.msra.mxu0 0.0
    %3426 = vmatprep.subr.mxu0 0.0
    %3427 = vmatpush1.msra.mxu0 0.0
    %3428 = vmatprep.subr.mxu0 0.0
    %3429 = vmatpush1.msra.mxu0 0.0
    %3430 = vmatprep.subr.mxu0 0.0
    %3431 = vmatpush1.msra.mxu0 0.0
    %3432 = vmatprep.subr.mxu0 0.0
    %3433 = vmatpush1.msra.mxu0 0.0
    %3434 = vmatprep.subr.mxu0 0.0
    %3435 = vmatpush1.msra.mxu0 0.0
    %3436 = vmatprep.mubr.f32.mxu0 0.0
    %3437 = vmatmul.mubr.f32.gmra.mrb[0].mxu0 %v3370
    %v3438 = vpop.f32.mrb[0].mxu0
    %v3439 = vadd.f32 0.0, %v3438
    %v3440 = vpop.f32.mrb[0].mxu0
    %3441 = vdwg.mxu0
    %3442 = vmatprep.subr.mxu0 0.0
    %3443 = vmatpush1.msra.mxu0 %v125
    %3444 = vmatprep.subr.mxu0 0.0
    %3445 = vmatpush1.msra.mxu0 %v126
    %3446 = vmatprep.subr.mxu0 0.0
    %3447 = vmatpush1.msra.mxu0 %v127
    %3448 = vmatprep.subr.mxu0 0.0
    %3449 = vmatpush1.msra.mxu0 %v128
    %3450 = vmatprep.subr.mxu0 0.0
    %3451 = vmatpush1.msra.mxu0 0.0
    %3452 = vmatprep.subr.mxu0 0.0
    %3453 = vmatpush1.msra.mxu0 0.0
    %3454 = vmatprep.subr.mxu0 0.0
    %3455 = vmatpush1.msra.mxu0 0.0
    %3456 = vmatprep.subr.mxu0 0.0
    %3457 = vmatpush1.msra.mxu0 0.0
    %3458 = vmatprep.subr.mxu0 0.0
    %3459 = vmatpush1.msra.mxu0 0.0
    %3460 = vmatprep.subr.mxu0 0.0
    %3461 = vmatpush1.msra.mxu0 0.0
    %3462 = vmatprep.subr.mxu0 0.0
    %3463 = vmatpush1.msra.mxu0 0.0
    %3464 = vmatprep.subr.mxu0 0.0
    %3465 = vmatpush1.msra.mxu0 0.0
    %3466 = vmatprep.subr.mxu0 0.0
    %3467 = vmatpush1.msra.mxu0 0.0
    %3468 = vmatprep.subr.mxu0 0.0
    %3469 = vmatpush1.msra.mxu0 0.0
    %3470 = vmatprep.subr.mxu0 0.0
    %3471 = vmatpush1.msra.mxu0 0.0
    %3472 = vmatprep.subr.mxu0 0.0
    %3473 = vmatpush1.msra.mxu0 0.0
    %3474 = vmatprep.subr.mxu0 0.0
    %3475 = vmatpush1.msra.mxu0 0.0
    %3476 = vmatprep.subr.mxu0 0.0
    %3477 = vmatpush1.msra.mxu0 0.0
    %3478 = vmatprep.subr.mxu0 0.0
    %3479 = vmatpush1.msra.mxu0 0.0
    %3480 = vmatprep.subr.mxu0 0.0
    %3481 = vmatpush1.msra.mxu0 0.0
    %3482 = vmatprep.subr.mxu0 0.0
    %3483 = vmatpush1.msra.mxu0 0.0
    %3484 = vmatprep.subr.mxu0 0.0
    %3485 = vmatpush1.msra.mxu0 0.0
    %3486 = vmatprep.subr.mxu0 0.0
    %3487 = vmatpush1.msra.mxu0 0.0
    %3488 = vmatprep.subr.mxu0 0.0
    %3489 = vmatpush1.msra.mxu0 0.0
    %3490 = vmatprep.subr.mxu0 0.0
    %3491 = vmatpush1.msra.mxu0 0.0
    %3492 = vmatprep.subr.mxu0 0.0
    %3493 = vmatpush1.msra.mxu0 0.0
    %3494 = vmatprep.subr.mxu0 0.0
    %3495 = vmatpush1.msra.mxu0 0.0
    %3496 = vmatprep.subr.mxu0 0.0
    %3497 = vmatpush1.msra.mxu0 0.0
    %3498 = vmatprep.subr.mxu0 0.0
    %3499 = vmatpush1.msra.mxu0 0.0
    %3500 = vmatprep.subr.mxu0 0.0
    %3501 = vmatpush1.msra.mxu0 0.0
    %3502 = vmatprep.subr.mxu0 0.0
    %3503 = vmatpush1.msra.mxu0 0.0
    %3504 = vmatprep.subr.mxu0 0.0
    %3505 = vmatpush1.msra.mxu0 0.0
    %3506 = vmatprep.mubr.f32.mxu0 0.0
    %3507 = vmatmul.mubr.f32.gmra.mrb[0].mxu0 %v3370
    %v3508 = vpop.f32.mrb[0].mxu0
    %v3509 = vadd.f32 0.0, %v3508
    %v3510 = vpop.f32.mrb[0].mxu0
    %3511 = vdwg.mxu0
    %v3512 = vadd.f32 %v3226, %v3439
    %v3513 = vmul.f32 %v3512, 0.5
    %v3514 = vtanh.pop %v3513
    %v3515 = vmul.f32 %v3514, 0.5
    %v3516 = vadd.f32 %v3515, 0.5
    %v3517 = vadd.f32 %v3296, %v3509
    %v3518 = vmul.f32 %v3517, 0.5
    %v3519 = vtanh.pop %v3518
    %v3520 = vmul.f32 %v3519, 0.5
    %v3521 = vadd.f32 %v3520, 0.5
    %3522 = vmatprep.subr.mxu0 0.0
    %3523 = vmatpush1.msra.mxu0 %v130
    %3524 = vmatprep.subr.mxu0 0.0
    %3525 = vmatpush1.msra.mxu0 %v131
    %3526 = vmatprep.subr.mxu0 0.0
    %3527 = vmatpush1.msra.mxu0 %v132
    %3528 = vmatprep.subr.mxu0 0.0
    %3529 = vmatpush1.msra.mxu0 %v133
    %3530 = vmatprep.subr.mxu0 0.0
    %3531 = vmatpush1.msra.mxu0 0.0
    %3532 = vmatprep.subr.mxu0 0.0
    %3533 = vmatpush1.msra.mxu0 0.0
    %3534 = vmatprep.subr.mxu0 0.0
    %3535 = vmatpush1.msra.mxu0 0.0
    %3536 = vmatprep.subr.mxu0 0.0
    %3537 = vmatpush1.msra.mxu0 0.0
    %3538 = vmatprep.subr.mxu0 0.0
    %3539 = vmatpush1.msra.mxu0 0.0
    %3540 = vmatprep.subr.mxu0 0.0
    %3541 = vmatpush1.msra.mxu0 0.0
    %3542 = vmatprep.subr.mxu0 0.0
    %3543 = vmatpush1.msra.mxu0 0.0
    %3544 = vmatprep.subr.mxu0 0.0
    %3545 = vmatpush1.msra.mxu0 0.0
    %3546 = vmatprep.subr.mxu0 0.0
    %3547 = vmatpush1.msra.mxu0 0.0
    %3548 = vmatprep.subr.mxu0 0.0
    %3549 = vmatpush1.msra.mxu0 0.0
    %3550 = vmatprep.subr.mxu0 0.0
    %3551 = vmatpush1.msra.mxu0 0.0
    %3552 = vmatprep.subr.mxu0 0.0
    %3553 = vmatpush1.msra.mxu0 0.0
    %3554 = vmatprep.subr.mxu0 0.0
    %3555 = vmatpush1.msra.mxu0 0.0
    %3556 = vmatprep.subr.mxu0 0.0
    %3557 = vmatpush1.msra.mxu0 0.0
    %3558 = vmatprep.subr.mxu0 0.0
    %3559 = vmatpush1.msra.mxu0 0.0
    %3560 = vmatprep.subr.mxu0 0.0
    %3561 = vmatpush1.msra.mxu0 0.0
    %3562 = vmatprep.subr.mxu0 0.0
    %3563 = vmatpush1.msra.mxu0 0.0
    %3564 = vmatprep.subr.mxu0 0.0
    %3565 = vmatpush1.msra.mxu0 0.0
    %3566 = vmatprep.subr.mxu0 0.0
    %3567 = vmatpush1.msra.mxu0 0.0
    %3568 = vmatprep.subr.mxu0 0.0
    %3569 = vmatpush1.msra.mxu0 0.0
    %3570 = vmatprep.subr.mxu0 0.0
    %3571 = vmatpush1.msra.mxu0 0.0
    %3572 = vmatprep.subr.mxu0 0.0
    %3573 = vmatpush1.msra.mxu0 0.0
    %3574 = vmatprep.subr.mxu0 0.0
    %3575 = vmatpush1.msra.mxu0 0.0
    %3576 = vmatprep.subr.mxu0 0.0
    %3577 = vmatpush1.msra.mxu0 0.0
    %3578 = vmatprep.subr.mxu0 0.0
    %3579 = vmatpush1.msra.mxu0 0.0
    %3580 = vmatprep.subr.mxu0 0.0
    %3581 = vmatpush1.msra.mxu0 0.0
    %3582 = vmatprep.subr.mxu0 0.0
    %3583 = vmatpush1.msra.mxu0 0.0
    %3584 = vmatprep.subr.mxu0 0.0
    %3585 = vmatpush1.msra.mxu0 0.0
    %3586 = vmatprep.mubr.f32.mxu0 0.0
    %3587 = vmatmul.mubr.f32.gmra.mrb[0].mxu0 %v3370
    %v3588 = vpop.f32.mrb[0].mxu0
    %v3589 = vadd.f32 %v808, %v3588
    %v3590 = vpop.f32.mrb[0].mxu0
    %3591 = vdwg.mxu0
    %v3592 = vmul.f32 %v3516, %v3589
    %v3593 = vadd.f32 %v3366, %v3592
    %v3594 = vtanh.pop %v3593
    %v3595 = vsub.f32 %v2919, %v3594
    %v3596 = vmul.f32 %v3521, %v3595
    %v3597 = vadd.f32 %v3594, %v3596
    %3598 = vset.pattern.permute.xlu0 5
    %3599 = vperm.xlu0 %3598, %v80
    %v3600 = vpop.permute.xlu0 %3599
    %v3602 = vmul.f32 %v3600, %v149
    %v3603 = vadd.f32 %v3602, %v156
    %v3604 = vmul.f32 %v3600, %v163
    %v3605 = vadd.f32 %v3604, %v170
    %v3606 = vmul.f32 %v3600, %v177
    %v3607 = vadd.f32 %v3606, %v184
    %3608 = vmatprep.subr.mxu0 0.0
    %3609 = vmatpush1.msra.mxu0 %v86
    %3610 = vmatprep.subr.mxu0 0.0
    %3611 = vmatpush1.msra.mxu0 %v87
    %3612 = vmatprep.subr.mxu0 0.0
    %3613 = vmatpush1.msra.mxu0 %v88
    %3614 = vmatprep.subr.mxu0 0.0
    %3615 = vmatpush1.msra.mxu0 %v89
    %3616 = vmatprep.subr.mxu0 0.0
    %3617 = vmatpush1.msra.mxu0 0.0
    %3618 = vmatprep.subr.mxu0 0.0
    %3619 = vmatpush1.msra.mxu0 0.0
    %3620 = vmatprep.subr.mxu0 0.0
    %3621 = vmatpush1.msra.mxu0 0.0
    %3622 = vmatprep.subr.mxu0 0.0
    %3623 = vmatpush1.msra.mxu0 0.0
    %3624 = vmatprep.subr.mxu0 0.0
    %3625 = vmatpush1.msra.mxu0 0.0
    %3626 = vmatprep.subr.mxu0 0.0
    %3627 = vmatpush1.msra.mxu0 0.0
    %3628 = vmatprep.subr.mxu0 0.0
    %3629 = vmatpush1.msra.mxu0 0.0
    %3630 = vmatprep.subr.mxu0 0.0
    %3631 = vmatpush1.msra.mxu0 0.0
    %3632 = vmatprep.subr.mxu0 0.0
    %3633 = vmatpush1.msra.mxu0 0.0
    %3634 = vmatprep.subr.mxu0 0.0
    %3635 = vmatpush1.msra.mxu0 0.0
    %3636 = vmatprep.subr.mxu0 0.0
    %3637 = vmatpush1.msra.mxu0 0.0
    %3638 = vmatprep.subr.mxu0 0.0
    %3639 = vmatpush1.msra.mxu0 0.0
    %3640 = vmatprep.subr.mxu0 0.0
    %3641 = vmatpush1.msra.mxu0 0.0
    %3642 = vmatprep.subr.mxu0 0.0
    %3643 = vmatpush1.msra.mxu0 0.0
    %3644 = vmatprep.subr.mxu0 0.0
    %3645 = vmatpush1.msra.mxu0 0.0
    %3646 = vmatprep.subr.mxu0 0.0
    %3647 = vmatpush1.msra.mxu0 0.0
    %3648 = vmatprep.subr.mxu0 0.0
    %3649 = vmatpush1.msra.mxu0 0.0
    %3650 = vmatprep.subr.mxu0 0.0
    %3651 = vmatpush1.msra.mxu0 0.0
    %3652 = vmatprep.subr.mxu0 0.0
    %3653 = vmatpush1.msra.mxu0 0.0
    %3654 = vmatprep.subr.mxu0 0.0
    %3655 = vmatpush1.msra.mxu0 0.0
    %3656 = vmatprep.subr.mxu0 0.0
    %3657 = vmatpush1.msra.mxu0 0.0
    %3658 = vmatprep.subr.mxu0 0.0
    %3659 = vmatpush1.msra.mxu0 0.0
    %3660 = vmatprep.subr.mxu0 0.0
    %3661 = vmatpush1.msra.mxu0 0.0
    %3662 = vmatprep.subr.mxu0 0.0
    %3663 = vmatpush1.msra.mxu0 0.0
    %3664 = vmatprep.subr.mxu0 0.0
    %3665 = vmatpush1.msra.mxu0 0.0
    %3666 = vmatprep.subr.mxu0 0.0
    %3667 = vmatpush1.msra.mxu0 0.0
    %3668 = vmatprep.subr.mxu0 0.0
    %3669 = vmatpush1.msra.mxu0 0.0
    %3670 = vmatprep.subr.mxu0 0.0
    %3671 = vmatpush1.msra.mxu0 0.0
    %3672 = vmatprep.mubr.f32.mxu0 0.0
    %3673 = vmatmul.mubr.f32.gmra.mrb[0].mxu0 %v3157
    %v3674 = vpop.f32.mrb[0].mxu0
    %v3675 = vadd.f32 0.0, %v3674
    %v3676 = vpop.f32.mrb[0].mxu0
    %3677 = vdwg.mxu0
    %3678 = vmatprep.subr.mxu0 0.0
    %3679 = vmatpush1.msra.mxu0 %v91
    %3680 = vmatprep.subr.mxu0 0.0
    %3681 = vmatpush1.msra.mxu0 %v92
    %3682 = vmatprep.subr.mxu0 0.0
    %3683 = vmatpush1.msra.mxu0 %v93
    %3684 = vmatprep.subr.mxu0 0.0
    %3685 = vmatpush1.msra.mxu0 %v94
    %3686 = vmatprep.subr.mxu0 0.0
    %3687 = vmatpush1.msra.mxu0 0.0
    %3688 = vmatprep.subr.mxu0 0.0
    %3689 = vmatpush1.msra.mxu0 0.0
    %3690 = vmatprep.subr.mxu0 0.0
    %3691 = vmatpush1.msra.mxu0 0.0
    %3692 = vmatprep.subr.mxu0 0.0
    %3693 = vmatpush1.msra.mxu0 0.0
    %3694 = vmatprep.subr.mxu0 0.0
    %3695 = vmatpush1.msra.mxu0 0.0
    %3696 = vmatprep.subr.mxu0 0.0
    %3697 = vmatpush1.msra.mxu0 0.0
    %3698 = vmatprep.subr.mxu0 0.0
    %3699 = vmatpush1.msra.mxu0 0.0
    %3700 = vmatprep.subr.mxu0 0.0
    %3701 = vmatpush1.msra.mxu0 0.0
    %3702 = vmatprep.subr.mxu0 0.0
    %3703 = vmatpush1.msra.mxu0 0.0
    %3704 = vmatprep.subr.mxu0 0.0
    %3705 = vmatpush1.msra.mxu0 0.0
    %3706 = vmatprep.subr.mxu0 0.0
    %3707 = vmatpush1.msra.mxu0 0.0
    %3708 = vmatprep.subr.mxu0 0.0
    %3709 = vmatpush1.msra.mxu0 0.0
    %3710 = vmatprep.subr.mxu0 0.0
    %3711 = vmatpush1.msra.mxu0 0.0
    %3712 = vmatprep.subr.mxu0 0.0
    %3713 = vmatpush1.msra.mxu0 0.0
    %3714 = vmatprep.subr.mxu0 0.0
    %3715 = vmatpush1.msra.mxu0 0.0
    %3716 = vmatprep.subr.mxu0 0.0
    %3717 = vmatpush1.msra.mxu0 0.0
    %3718 = vmatprep.subr.mxu0 0.0
    %3719 = vmatpush1.msra.mxu0 0.0
    %3720 = vmatprep.subr.mxu0 0.0
    %3721 = vmatpush1.msra.mxu0 0.0
    %3722 = vmatprep.subr.mxu0 0.0
    %3723 = vmatpush1.msra.mxu0 0.0
    %3724 = vmatprep.subr.mxu0 0.0
    %3725 = vmatpush1.msra.mxu0 0.0
    %3726 = vmatprep.subr.mxu0 0.0
    %3727 = vmatpush1.msra.mxu0 0.0
    %3728 = vmatprep.subr.mxu0 0.0
    %3729 = vmatpush1.msra.mxu0 0.0
    %3730 = vmatprep.subr.mxu0 0.0
    %3731 = vmatpush1.msra.mxu0 0.0
    %3732 = vmatprep.subr.mxu0 0.0
    %3733 = vmatpush1.msra.mxu0 0.0
    %3734 = vmatprep.subr.mxu0 0.0
    %3735 = vmatpush1.msra.mxu0 0.0
    %3736 = vmatprep.subr.mxu0 0.0
    %3737 = vmatpush1.msra.mxu0 0.0
    %3738 = vmatprep.subr.mxu0 0.0
    %3739 = vmatpush1.msra.mxu0 0.0
    %3740 = vmatprep.subr.mxu0 0.0
    %3741 = vmatpush1.msra.mxu0 0.0
    %3742 = vmatprep.mubr.f32.mxu0 0.0
    %3743 = vmatmul.mubr.f32.gmra.mrb[0].mxu0 %v3157
    %v3744 = vpop.f32.mrb[0].mxu0
    %v3745 = vadd.f32 0.0, %v3744
    %v3746 = vpop.f32.mrb[0].mxu0
    %3747 = vdwg.mxu0
    %v3748 = vadd.f32 %v3603, %v3675
    %v3749 = vmul.f32 %v3748, 0.5
    %v3750 = vtanh.pop %v3749
    %v3751 = vmul.f32 %v3750, 0.5
    %v3752 = vadd.f32 %v3751, 0.5
    %v3753 = vadd.f32 %v3605, %v3745
    %v3754 = vmul.f32 %v3753, 0.5
    %v3755 = vtanh.pop %v3754
    %v3756 = vmul.f32 %v3755, 0.5
    %v3757 = vadd.f32 %v3756, 0.5
    %3758 = vmatprep.subr.mxu0 0.0
    %3759 = vmatpush1.msra.mxu0 %v96
    %3760 = vmatprep.subr.mxu0 0.0
    %3761 = vmatpush1.msra.mxu0 %v97
    %3762 = vmatprep.subr.mxu0 0.0
    %3763 = vmatpush1.msra.mxu0 %v98
    %3764 = vmatprep.subr.mxu0 0.0
    %3765 = vmatpush1.msra.mxu0 %v99
    %3766 = vmatprep.subr.mxu0 0.0
    %3767 = vmatpush1.msra.mxu0 0.0
    %3768 = vmatprep.subr.mxu0 0.0
    %3769 = vmatpush1.msra.mxu0 0.0
    %3770 = vmatprep.subr.mxu0 0.0
    %3771 = vmatpush1.msra.mxu0 0.0
    %3772 = vmatprep.subr.mxu0 0.0
    %3773 = vmatpush1.msra.mxu0 0.0
    %3774 = vmatprep.subr.mxu0 0.0
    %3775 = vmatpush1.msra.mxu0 0.0
    %3776 = vmatprep.subr.mxu0 0.0
    %3777 = vmatpush1.msra.mxu0 0.0
    %3778 = vmatprep.subr.mxu0 0.0
    %3779 = vmatpush1.msra.mxu0 0.0
    %3780 = vmatprep.subr.mxu0 0.0
    %3781 = vmatpush1.msra.mxu0 0.0
    %3782 = vmatprep.subr.mxu0 0.0
    %3783 = vmatpush1.msra.mxu0 0.0
    %3784 = vmatprep.subr.mxu0 0.0
    %3785 = vmatpush1.msra.mxu0 0.0
    %3786 = vmatprep.subr.mxu0 0.0
    %3787 = vmatpush1.msra.mxu0 0.0
    %3788 = vmatprep.subr.mxu0 0.0
    %3789 = vmatpush1.msra.mxu0 0.0
    %3790 = vmatprep.subr.mxu0 0.0
    %3791 = vmatpush1.msra.mxu0 0.0
    %3792 = vmatprep.subr.mxu0 0.0
    %3793 = vmatpush1.msra.mxu0 0.0
    %3794 = vmatprep.subr.mxu0 0.0
    %3795 = vmatpush1.msra.mxu0 0.0
    %3796 = vmatprep.subr.mxu0 0.0
    %3797 = vmatpush1.msra.mxu0 0.0
    %3798 = vmatprep.subr.mxu0 0.0
    %3799 = vmatpush1.msra.mxu0 0.0
    %3800 = vmatprep.subr.mxu0 0.0
    %3801 = vmatpush1.msra.mxu0 0.0
    %3802 = vmatprep.subr.mxu0 0.0
    %3803 = vmatpush1.msra.mxu0 0.0
    %3804 = vmatprep.subr.mxu0 0.0
    %3805 = vmatpush1.msra.mxu0 0.0
    %3806 = vmatprep.subr.mxu0 0.0
    %3807 = vmatpush1.msra.mxu0 0.0
    %3808 = vmatprep.subr.mxu0 0.0
    %3809 = vmatpush1.msra.mxu0 0.0
    %3810 = vmatprep.subr.mxu0 0.0
    %3811 = vmatpush1.msra.mxu0 0.0
    %3812 = vmatprep.subr.mxu0 0.0
    %3813 = vmatpush1.msra.mxu0 0.0
    %3814 = vmatprep.subr.mxu0 0.0
    %3815 = vmatpush1.msra.mxu0 0.0
    %3816 = vmatprep.subr.mxu0 0.0
    %3817 = vmatpush1.msra.mxu0 0.0
    %3818 = vmatprep.subr.mxu0 0.0
    %3819 = vmatpush1.msra.mxu0 0.0
    %3820 = vmatprep.subr.mxu0 0.0
    %3821 = vmatpush1.msra.mxu0 0.0
    %3822 = vmatprep.mubr.f32.mxu0 0.0
    %3823 = vmatmul.mubr.f32.gmra.mrb[0].mxu0 %v3157
    %v3824 = vpop.f32.mrb[0].mxu0
    %v3825 = vadd.f32 %v345, %v3824
    %v3826 = vpop.f32.mrb[0].mxu0
    %3827 = vdwg.mxu0
    %v3828 = vmul.f32 %v3752, %v3825
    %v3829 = vadd.f32 %v3607, %v3828
    %v3830 = vtanh.pop %v3829
    %v3831 = vsub.f32 %v3155, %v3830
    %v3832 = vmul.f32 %v3757, %v3831
    %v3833 = vadd.f32 %v3830, %v3832
    %v3835 = vsel %vm187, %v3833, 0
    %3837 = vmatprep.subr.mxu0 0.0
    %3838 = vmatpush1.msra.mxu0 %v106
    %3839 = vmatprep.subr.mxu0 0.0
    %3840 = vmatpush1.msra.mxu0 %v107
    %3841 = vmatprep.subr.mxu0 0.0
    %3842 = vmatpush1.msra.mxu0 %v108
    %3843 = vmatprep.subr.mxu0 0.0
    %3844 = vmatpush1.msra.mxu0 %v109
    %3845 = vmatprep.subr.mxu0 0.0
    %3846 = vmatpush1.msra.mxu0 0.0
    %3847 = vmatprep.subr.mxu0 0.0
    %3848 = vmatpush1.msra.mxu0 0.0
    %3849 = vmatprep.subr.mxu0 0.0
    %3850 = vmatpush1.msra.mxu0 0.0
    %3851 = vmatprep.subr.mxu0 0.0
    %3852 = vmatpush1.msra.mxu0 0.0
    %3853 = vmatprep.subr.mxu0 0.0
    %3854 = vmatpush1.msra.mxu0 0.0
    %3855 = vmatprep.subr.mxu0 0.0
    %3856 = vmatpush1.msra.mxu0 0.0
    %3857 = vmatprep.subr.mxu0 0.0
    %3858 = vmatpush1.msra.mxu0 0.0
    %3859 = vmatprep.subr.mxu0 0.0
    %3860 = vmatpush1.msra.mxu0 0.0
    %3861 = vmatprep.subr.mxu0 0.0
    %3862 = vmatpush1.msra.mxu0 0.0
    %3863 = vmatprep.subr.mxu0 0.0
    %3864 = vmatpush1.msra.mxu0 0.0
    %3865 = vmatprep.subr.mxu0 0.0
    %3866 = vmatpush1.msra.mxu0 0.0
    %3867 = vmatprep.subr.mxu0 0.0
    %3868 = vmatpush1.msra.mxu0 0.0
    %3869 = vmatprep.subr.mxu0 0.0
    %3870 = vmatpush1.msra.mxu0 0.0
    %3871 = vmatprep.subr.mxu0 0.0
    %3872 = vmatpush1.msra.mxu0 0.0
    %3873 = vmatprep.subr.mxu0 0.0
    %3874 = vmatpush1.msra.mxu0 0.0
    %3875 = vmatprep.subr.mxu0 0.0
    %3876 = vmatpush1.msra.mxu0 0.0
    %3877 = vmatprep.subr.mxu0 0.0
    %3878 = vmatpush1.msra.mxu0 0.0
    %3879 = vmatprep.subr.mxu0 0.0
    %3880 = vmatpush1.msra.mxu0 0.0
    %3881 = vmatprep.subr.mxu0 0.0
    %3882 = vmatpush1.msra.mxu0 0.0
    %3883 = vmatprep.subr.mxu0 0.0
    %3884 = vmatpush1.msra.mxu0 0.0
    %3885 = vmatprep.subr.mxu0 0.0
    %3886 = vmatpush1.msra.mxu0 0.0
    %3887 = vmatprep.subr.mxu0 0.0
    %3888 = vmatpush1.msra.mxu0 0.0
    %3889 = vmatprep.subr.mxu0 0.0
    %3890 = vmatpush1.msra.mxu0 0.0
    %3891 = vmatprep.subr.mxu0 0.0
    %3892 = vmatpush1.msra.mxu0 0.0
    %3893 = vmatprep.subr.mxu0 0.0
    %3894 = vmatpush1.msra.mxu0 0.0
    %3895 = vmatprep.subr.mxu0 0.0
    %3896 = vmatpush1.msra.mxu0 0.0
    %3897 = vmatprep.subr.mxu0 0.0
    %3898 = vmatpush1.msra.mxu0 0.0
    %3899 = vmatprep.subr.mxu0 0.0
    %3900 = vmatpush1.msra.mxu0 0.0
    %3901 = vmatprep.mubr.f32.mxu0 0.0
    %3902 = vmatmul.mubr.f32.gmra.mrb[0].mxu0 %v3835
    %v3903 = vpop.f32.mrb[0].mxu0
    %v3904 = vadd.f32 %v427, %v3903
    %v3905 = vpop.f32.mrb[0].mxu0
    %3906 = vdwg.mxu0
    %3907 = vmatprep.subr.mxu0 0.0
    %3908 = vmatpush1.msra.mxu0 %v111
    %3909 = vmatprep.subr.mxu0 0.0
    %3910 = vmatpush1.msra.mxu0 %v112
    %3911 = vmatprep.subr.mxu0 0.0
    %3912 = vmatpush1.msra.mxu0 %v113
    %3913 = vmatprep.subr.mxu0 0.0
    %3914 = vmatpush1.msra.mxu0 %v114
    %3915 = vmatprep.subr.mxu0 0.0
    %3916 = vmatpush1.msra.mxu0 0.0
    %3917 = vmatprep.subr.mxu0 0.0
    %3918 = vmatpush1.msra.mxu0 0.0
    %3919 = vmatprep.subr.mxu0 0.0
    %3920 = vmatpush1.msra.mxu0 0.0
    %3921 = vmatprep.subr.mxu0 0.0
    %3922 = vmatpush1.msra.mxu0 0.0
    %3923 = vmatprep.subr.mxu0 0.0
    %3924 = vmatpush1.msra.mxu0 0.0
    %3925 = vmatprep.subr.mxu0 0.0
    %3926 = vmatpush1.msra.mxu0 0.0
    %3927 = vmatprep.subr.mxu0 0.0
    %3928 = vmatpush1.msra.mxu0 0.0
    %3929 = vmatprep.subr.mxu0 0.0
    %3930 = vmatpush1.msra.mxu0 0.0
    %3931 = vmatprep.subr.mxu0 0.0
    %3932 = vmatpush1.msra.mxu0 0.0
    %3933 = vmatprep.subr.mxu0 0.0
    %3934 = vmatpush1.msra.mxu0 0.0
    %3935 = vmatprep.subr.mxu0 0.0
    %3936 = vmatpush1.msra.mxu0 0.0
    %3937 = vmatprep.subr.mxu0 0.0
    %3938 = vmatpush1.msra.mxu0 0.0
    %3939 = vmatprep.subr.mxu0 0.0
    %3940 = vmatpush1.msra.mxu0 0.0
    %3941 = vmatprep.subr.mxu0 0.0
    %3942 = vmatpush1.msra.mxu0 0.0
    %3943 = vmatprep.subr.mxu0 0.0
    %3944 = vmatpush1.msra.mxu0 0.0
    %3945 = vmatprep.subr.mxu0 0.0
    %3946 = vmatpush1.msra.mxu0 0.0
    %3947 = vmatprep.subr.mxu0 0.0
    %3948 = vmatpush1.msra.mxu0 0.0
    %3949 = vmatprep.subr.mxu0 0.0
    %3950 = vmatpush1.msra.mxu0 0.0
    %3951 = vmatprep.subr.mxu0 0.0
    %3952 = vmatpush1.msra.mxu0 0.0
    %3953 = vmatprep.subr.mxu0 0.0
    %3954 = vmatpush1.msra.mxu0 0.0
    %3955 = vmatprep.subr.mxu0 0.0
    %3956 = vmatpush1.msra.mxu0 0.0
    %3957 = vmatprep.subr.mxu0 0.0
    %3958 = vmatpush1.msra.mxu0 0.0
    %3959 = vmatprep.subr.mxu0 0.0
    %3960 = vmatpush1.msra.mxu0 0.0
    %3961 = vmatprep.subr.mxu0 0.0
    %3962 = vmatpush1.msra.mxu0 0.0
    %3963 = vmatprep.subr.mxu0 0.0
    %3964 = vmatpush1.msra.mxu0 0.0
    %3965 = vmatprep.subr.mxu0 0.0
    %3966 = vmatpush1.msra.mxu0 0.0
    %3967 = vmatprep.subr.mxu0 0.0
    %3968 = vmatpush1.msra.mxu0 0.0
    %3969 = vmatprep.subr.mxu0 0.0
    %3970 = vmatpush1.msra.mxu0 0.0
    %3971 = vmatprep.mubr.f32.mxu0 0.0
    %3972 = vmatmul.mubr.f32.gmra.mrb[0].mxu0 %v3835
    %v3973 = vpop.f32.mrb[0].mxu0
    %v3974 = vadd.f32 %v506, %v3973
    %v3975 = vpop.f32.mrb[0].mxu0
    %3976 = vdwg.mxu0
    %3977 = vmatprep.subr.mxu0 0.0
    %3978 = vmatpush1.msra.mxu0 %v116
    %3979 = vmatprep.subr.mxu0 0.0
    %3980 = vmatpush1.msra.mxu0 %v117
    %3981 = vmatprep.subr.mxu0 0.0
    %3982 = vmatpush1.msra.mxu0 %v118
    %3983 = vmatprep.subr.mxu0 0.0
    %3984 = vmatpush1.msra.mxu0 %v119
    %3985 = vmatprep.subr.mxu0 0.0
    %3986 = vmatpush1.msra.mxu0 0.0
    %3987 = vmatprep.subr.mxu0 0.0
    %3988 = vmatpush1.msra.mxu0 0.0
    %3989 = vmatprep.subr.mxu0 0.0
    %3990 = vmatpush1.msra.mxu0 0.0
    %3991 = vmatprep.subr.mxu0 0.0
    %3992 = vmatpush1.msra.mxu0 0.0
    %3993 = vmatprep.subr.mxu0 0.0
    %3994 = vmatpush1.msra.mxu0 0.0
    %3995 = vmatprep.subr.mxu0 0.0
    %3996 = vmatpush1.msra.mxu0 0.0
    %3997 = vmatprep.subr.mxu0 0.0
    %3998 = vmatpush1.msra.mxu0 0.0
    %3999 = vmatprep.subr.mxu0 0.0
    %4000 = vmatpush1.msra.mxu0 0.0
    %4001 = vmatprep.subr.mxu0 0.0
    %4002 = vmatpush1.msra.mxu0 0.0
    %4003 = vmatprep.subr.mxu0 0.0
    %4004 = vmatpush1.msra.mxu0 0.0
    %4005 = vmatprep.subr.mxu0 0.0
    %4006 = vmatpush1.msra.mxu0 0.0
    %4007 = vmatprep.subr.mxu0 0.0
    %4008 = vmatpush1.msra.mxu0 0.0
    %4009 = vmatprep.subr.mxu0 0.0
    %4010 = vmatpush1.msra.mxu0 0.0
    %4011 = vmatprep.subr.mxu0 0.0
    %4012 = vmatpush1.msra.mxu0 0.0
    %4013 = vmatprep.subr.mxu0 0.0
    %4014 = vmatpush1.msra.mxu0 0.0
    %4015 = vmatprep.subr.mxu0 0.0
    %4016 = vmatpush1.msra.mxu0 0.0
    %4017 = vmatprep.subr.mxu0 0.0
    %4018 = vmatpush1.msra.mxu0 0.0
    %4019 = vmatprep.subr.mxu0 0.0
    %4020 = vmatpush1.msra.mxu0 0.0
    %4021 = vmatprep.subr.mxu0 0.0
    %4022 = vmatpush1.msra.mxu0 0.0
    %4023 = vmatprep.subr.mxu0 0.0
    %4024 = vmatpush1.msra.mxu0 0.0
    %4025 = vmatprep.subr.mxu0 0.0
    %4026 = vmatpush1.msra.mxu0 0.0
    %4027 = vmatprep.subr.mxu0 0.0
    %4028 = vmatpush1.msra.mxu0 0.0
    %4029 = vmatprep.subr.mxu0 0.0
    %4030 = vmatpush1.msra.mxu0 0.0
    %4031 = vmatprep.subr.mxu0 0.0
    %4032 = vmatpush1.msra.mxu0 0.0
    %4033 = vmatprep.subr.mxu0 0.0
    %4034 = vmatpush1.msra.mxu0 0.0
    %4035 = vmatprep.subr.mxu0 0.0
    %4036 = vmatpush1.msra.mxu0 0.0
    %4037 = vmatprep.subr.mxu0 0.0
    %4038 = vmatpush1.msra.mxu0 0.0
    %4039 = vmatprep.subr.mxu0 0.0
    %4040 = vmatpush1.msra.mxu0 0.0
    %4041 = vmatprep.mubr.f32.mxu0 0.0
    %4042 = vmatmul.mubr.f32.gmra.mrb[0].mxu0 %v3835
    %v4043 = vpop.f32.mrb[0].mxu0
    %v4044 = vadd.f32 %v582, %v4043
    %v4045 = vpop.f32.mrb[0].mxu0
    %4046 = vdwg.mxu0
    %v4048 = vsel %vm187, %v3597, 0
    %4050 = vmatprep.subr.mxu0 0.0
    %4051 = vmatpush1.msra.mxu0 %v120
    %4052 = vmatprep.subr.mxu0 0.0
    %4053 = vmatpush1.msra.mxu0 %v121
    %4054 = vmatprep.subr.mxu0 0.0
    %4055 = vmatpush1.msra.mxu0 %v122
    %4056 = vmatprep.subr.mxu0 0.0
    %4057 = vmatpush1.msra.mxu0 %v123
    %4058 = vmatprep.subr.mxu0 0.0
    %4059 = vmatpush1.msra.mxu0 0.0
    %4060 = vmatprep.subr.mxu0 0.0
    %4061 = vmatpush1.msra.mxu0 0.0
    %4062 = vmatprep.subr.mxu0 0.0
    %4063 = vmatpush1.msra.mxu0 0.0
    %4064 = vmatprep.subr.mxu0 0.0
    %4065 = vmatpush1.msra.mxu0 0.0
    %4066 = vmatprep.subr.mxu0 0.0
    %4067 = vmatpush1.msra.mxu0 0.0
    %4068 = vmatprep.subr.mxu0 0.0
    %4069 = vmatpush1.msra.mxu0 0.0
    %4070 = vmatprep.subr.mxu0 0.0
    %4071 = vmatpush1.msra.mxu0 0.0
    %4072 = vmatprep.subr.mxu0 0.0
    %4073 = vmatpush1.msra.mxu0 0.0
    %4074 = vmatprep.subr.mxu0 0.0
    %4075 = vmatpush1.msra.mxu0 0.0
    %4076 = vmatprep.subr.mxu0 0.0
    %4077 = vmatpush1.msra.mxu0 0.0
    %4078 = vmatprep.subr.mxu0 0.0
    %4079 = vmatpush1.msra.mxu0 0.0
    %4080 = vmatprep.subr.mxu0 0.0
    %4081 = vmatpush1.msra.mxu0 0.0
    %4082 = vmatprep.subr.mxu0 0.0
    %4083 = vmatpush1.msra.mxu0 0.0
    %4084 = vmatprep.subr.mxu0 0.0
    %4085 = vmatpush1.msra.mxu0 0.0
    %4086 = vmatprep.subr.mxu0 0.0
    %4087 = vmatpush1.msra.mxu0 0.0
    %4088 = vmatprep.subr.mxu0 0.0
    %4089 = vmatpush1.msra.mxu0 0.0
    %4090 = vmatprep.subr.mxu0 0.0
    %4091 = vmatpush1.msra.mxu0 0.0
    %4092 = vmatprep.subr.mxu0 0.0
    %4093 = vmatpush1.msra.mxu0 0.0
    %4094 = vmatprep.subr.mxu0 0.0
    %4095 = vmatpush1.msra.mxu0 0.0
    %4096 = vmatprep.subr.mxu0 0.0
    %4097 = vmatpush1.msra.mxu0 0.0
    %4098 = vmatprep.subr.mxu0 0.0
    %4099 = vmatpush1.msra.mxu0 0.0
    %4100 = vmatprep.subr.mxu0 0.0
    %4101 = vmatpush1.msra.mxu0 0.0
    %4102 = vmatprep.subr.mxu0 0.0
    %4103 = vmatpush1.msra.mxu0 0.0
    %4104 = vmatprep.subr.mxu0 0.0
    %4105 = vmatpush1.msra.mxu0 0.0
    %4106 = vmatprep.subr.mxu0 0.0
    %4107 = vmatpush1.msra.mxu0 0.0
    %4108 = vmatprep.subr.mxu0 0.0
    %4109 = vmatpush1.msra.mxu0 0.0
    %4110 = vmatprep.subr.mxu0 0.0
    %4111 = vmatpush1.msra.mxu0 0.0
    %4112 = vmatprep.subr.mxu0 0.0
    %4113 = vmatpush1.msra.mxu0 0.0
    %4114 = vmatprep.mubr.f32.mxu0 0.0
    %4115 = vmatmul.mubr.f32.gmra.mrb[0].mxu0 %v4048
    %v4116 = vpop.f32.mrb[0].mxu0
    %v4117 = vadd.f32 0.0, %v4116
    %v4118 = vpop.f32.mrb[0].mxu0
    %4119 = vdwg.mxu0
    %4120 = vmatprep.subr.mxu0 0.0
    %4121 = vmatpush1.msra.mxu0 %v125
    %4122 = vmatprep.subr.mxu0 0.0
    %4123 = vmatpush1.msra.mxu0 %v126
    %4124 = vmatprep.subr.mxu0 0.0
    %4125 = vmatpush1.msra.mxu0 %v127
    %4126 = vmatprep.subr.mxu0 0.0
    %4127 = vmatpush1.msra.mxu0 %v128
    %4128 = vmatprep.subr.mxu0 0.0
    %4129 = vmatpush1.msra.mxu0 0.0
    %4130 = vmatprep.subr.mxu0 0.0
    %4131 = vmatpush1.msra.mxu0 0.0
    %4132 = vmatprep.subr.mxu0 0.0
    %4133 = vmatpush1.msra.mxu0 0.0
    %4134 = vmatprep.subr.mxu0 0.0
    %4135 = vmatpush1.msra.mxu0 0.0
    %4136 = vmatprep.subr.mxu0 0.0
    %4137 = vmatpush1.msra.mxu0 0.0
    %4138 = vmatprep.subr.mxu0 0.0
    %4139 = vmatpush1.msra.mxu0 0.0
    %4140 = vmatprep.subr.mxu0 0.0
    %4141 = vmatpush1.msra.mxu0 0.0
    %4142 = vmatprep.subr.mxu0 0.0
    %4143 = vmatpush1.msra.mxu0 0.0
    %4144 = vmatprep.subr.mxu0 0.0
    %4145 = vmatpush1.msra.mxu0 0.0
    %4146 = vmatprep.subr.mxu0 0.0
    %4147 = vmatpush1.msra.mxu0 0.0
    %4148 = vmatprep.subr.mxu0 0.0
    %4149 = vmatpush1.msra.mxu0 0.0
    %4150 = vmatprep.subr.mxu0 0.0
    %4151 = vmatpush1.msra.mxu0 0.0
    %4152 = vmatprep.subr.mxu0 0.0
    %4153 = vmatpush1.msra.mxu0 0.0
    %4154 = vmatprep.subr.mxu0 0.0
    %4155 = vmatpush1.msra.mxu0 0.0
    %4156 = vmatprep.subr.mxu0 0.0
    %4157 = vmatpush1.msra.mxu0 0.0
    %4158 = vmatprep.subr.mxu0 0.0
    %4159 = vmatpush1.msra.mxu0 0.0
    %4160 = vmatprep.subr.mxu0 0.0
    %4161 = vmatpush1.msra.mxu0 0.0
    %4162 = vmatprep.subr.mxu0 0.0
    %4163 = vmatpush1.msra.mxu0 0.0
    %4164 = vmatprep.subr.mxu0 0.0
    %4165 = vmatpush1.msra.mxu0 0.0
    %4166 = vmatprep.subr.mxu0 0.0
    %4167 = vmatpush1.msra.mxu0 0.0
    %4168 = vmatprep.subr.mxu0 0.0
    %4169 = vmatpush1.msra.mxu0 0.0
    %4170 = vmatprep.subr.mxu0 0.0
    %4171 = vmatpush1.msra.mxu0 0.0
    %4172 = vmatprep.subr.mxu0 0.0
    %4173 = vmatpush1.msra.mxu0 0.0
    %4174 = vmatprep.subr.mxu0 0.0
    %4175 = vmatpush1.msra.mxu0 0.0
    %4176 = vmatprep.subr.mxu0 0.0
    %4177 = vmatpush1.msra.mxu0 0.0
    %4178 = vmatprep.subr.mxu0 0.0
    %4179 = vmatpush1.msra.mxu0 0.0
    %4180 = vmatprep.subr.mxu0 0.0
    %4181 = vmatpush1.msra.mxu0 0.0
    %4182 = vmatprep.subr.mxu0 0.0
    %4183 = vmatpush1.msra.mxu0 0.0
    %4184 = vmatprep.mubr.f32.mxu0 0.0
    %4185 = vmatmul.mubr.f32.gmra.mrb[0].mxu0 %v4048
    %v4186 = vpop.f32.mrb[0].mxu0
    %v4187 = vadd.f32 0.0, %v4186
    %v4188 = vpop.f32.mrb[0].mxu0
    %4189 = vdwg.mxu0
    %v4190 = vadd.f32 %v3904, %v4117
    %v4191 = vmul.f32 %v4190, 0.5
    %v4192 = vtanh.pop %v4191
    %v4193 = vmul.f32 %v4192, 0.5
    %v4194 = vadd.f32 %v4193, 0.5
    %v4195 = vadd.f32 %v3974, %v4187
    %v4196 = vmul.f32 %v4195, 0.5
    %v4197 = vtanh.pop %v4196
    %v4198 = vmul.f32 %v4197, 0.5
    %v4199 = vadd.f32 %v4198, 0.5
    %4200 = vmatprep.subr.mxu0 0.0
    %4201 = vmatpush1.msra.mxu0 %v130
    %4202 = vmatprep.subr.mxu0 0.0
    %4203 = vmatpush1.msra.mxu0 %v131
    %4204 = vmatprep.subr.mxu0 0.0
    %4205 = vmatpush1.msra.mxu0 %v132
    %4206 = vmatprep.subr.mxu0 0.0
    %4207 = vmatpush1.msra.mxu0 %v133
    %4208 = vmatprep.subr.mxu0 0.0
    %4209 = vmatpush1.msra.mxu0 0.0
    %4210 = vmatprep.subr.mxu0 0.0
    %4211 = vmatpush1.msra.mxu0 0.0
    %4212 = vmatprep.subr.mxu0 0.0
    %4213 = vmatpush1.msra.mxu0 0.0
    %4214 = vmatprep.subr.mxu0 0.0
    %4215 = vmatpush1.msra.mxu0 0.0
    %4216 = vmatprep.subr.mxu0 0.0
    %4217 = vmatpush1.msra.mxu0 0.0
    %4218 = vmatprep.subr.mxu0 0.0
    %4219 = vmatpush1.msra.mxu0 0.0
    %4220 = vmatprep.subr.mxu0 0.0
    %4221 = vmatpush1.msra.mxu0 0.0
    %4222 = vmatprep.subr.mxu0 0.0
    %4223 = vmatpush1.msra.mxu0 0.0
    %4224 = vmatprep.subr.mxu0 0.0
    %4225 = vmatpush1.msra.mxu0 0.0
    %4226 = vmatprep.subr.mxu0 0.0
    %4227 = vmatpush1.msra.mxu0 0.0
    %4228 = vmatprep.subr.mxu0 0.0
    %4229 = vmatpush1.msra.mxu0 0.0
    %4230 = vmatprep.subr.mxu0 0.0
    %4231 = vmatpush1.msra.mxu0 0.0
    %4232 = vmatprep.subr.mxu0 0.0
    %4233 = vmatpush1.msra.mxu0 0.0
    %4234 = vmatprep.subr.mxu0 0.0
    %4235 = vmatpush1.msra.mxu0 0.0
    %4236 = vmatprep.subr.mxu0 0.0
    %4237 = vmatpush1.msra.mxu0 0.0
    %4238 = vmatprep.subr.mxu0 0.0
    %4239 = vmatpush1.msra.mxu0 0.0
    %4240 = vmatprep.subr.mxu0 0.0
    %4241 = vmatpush1.msra.mxu0 0.0
    %4242 = vmatprep.subr.mxu0 0.0
    %4243 = vmatpush1.msra.mxu0 0.0
    %4244 = vmatprep.subr.mxu0 0.0
    %4245 = vmatpush1.msra.mxu0 0.0
    %4246 = vmatprep.subr.mxu0 0.0
    %4247 = vmatpush1.msra.mxu0 0.0
    %4248 = vmatprep.subr.mxu0 0.0
    %4249 = vmatpush1.msra.mxu0 0.0
    %4250 = vmatprep.subr.mxu0 0.0
    %4251 = vmatpush1.msra.mxu0 0.0
    %4252 = vmatprep.subr.mxu0 0.0
    %4253 = vmatpush1.msra.mxu0 0.0
    %4254 = vmatprep.subr.mxu0 0.0
    %4255 = vmatpush1.msra.mxu0 0.0
    %4256 = vmatprep.subr.mxu0 0.0
    %4257 = vmatpush1.msra.mxu0 0.0
    %4258 = vmatprep.subr.mxu0 0.0
    %4259 = vmatpush1.msra.mxu0 0.0
    %4260 = vmatprep.subr.mxu0 0.0
    %4261 = vmatpush1.msra.mxu0 0.0
    %4262 = vmatprep.subr.mxu0 0.0
    %4263 = vmatpush1.msra.mxu0 0.0
    %4264 = vmatprep.mubr.f32.mxu0 0.0
    %4265 = vmatmul.mubr.f32.gmra.mrb[0].mxu0 %v4048
    %v4266 = vpop.f32.mrb[0].mxu0
    %v4267 = vadd.f32 %v808, %v4266
    %v4268 = vpop.f32.mrb[0].mxu0
    %4269 = vdwg.mxu0
    %v4270 = vmul.f32 %v4194, %v4267
    %v4271 = vadd.f32 %v4044, %v4270
    %v4272 = vtanh.pop %v4271
    %v4273 = vsub.f32 %v3597, %v4272
    %v4274 = vmul.f32 %v4199, %v4273
    %v4275 = vadd.f32 %v4272, %v4274
    %4276 = vset.pattern.permute.xlu0 6
    %4277 = vperm.xlu0 %4276, %v80
    %v4278 = vpop.permute.xlu0 %4277
    %v4280 = vmul.f32 %v4278, %v149
    %v4281 = vadd.f32 %v4280, %v156
    %v4282 = vmul.f32 %v4278, %v163
    %v4283 = vadd.f32 %v4282, %v170
    %v4284 = vmul.f32 %v4278, %v177
    %v4285 = vadd.f32 %v4284, %v184
    %4286 = vmatprep.subr.mxu0 0.0
    %4287 = vmatpush1.msra.mxu0 %v86
    %4288 = vmatprep.subr.mxu0 0.0
    %4289 = vmatpush1.msra.mxu0 %v87
    %4290 = vmatprep.subr.mxu0 0.0
    %4291 = vmatpush1.msra.mxu0 %v88
    %4292 = vmatprep.subr.mxu0 0.0
    %4293 = vmatpush1.msra.mxu0 %v89
    %4294 = vmatprep.subr.mxu0 0.0
    %4295 = vmatpush1.msra.mxu0 0.0
    %4296 = vmatprep.subr.mxu0 0.0
    %4297 = vmatpush1.msra.mxu0 0.0
    %4298 = vmatprep.subr.mxu0 0.0
    %4299 = vmatpush1.msra.mxu0 0.0
    %4300 = vmatprep.subr.mxu0 0.0
    %4301 = vmatpush1.msra.mxu0 0.0
    %4302 = vmatprep.subr.mxu0 0.0
    %4303 = vmatpush1.msra.mxu0 0.0
    %4304 = vmatprep.subr.mxu0 0.0
    %4305 = vmatpush1.msra.mxu0 0.0
    %4306 = vmatprep.subr.mxu0 0.0
    %4307 = vmatpush1.msra.mxu0 0.0
    %4308 = vmatprep.subr.mxu0 0.0
    %4309 = vmatpush1.msra.mxu0 0.0
    %4310 = vmatprep.subr.mxu0 0.0
    %4311 = vmatpush1.msra.mxu0 0.0
    %4312 = vmatprep.subr.mxu0 0.0
    %4313 = vmatpush1.msra.mxu0 0.0
    %4314 = vmatprep.subr.mxu0 0.0
    %4315 = vmatpush1.msra.mxu0 0.0
    %4316 = vmatprep.subr.mxu0 0.0
    %4317 = vmatpush1.msra.mxu0 0.0
    %4318 = vmatprep.subr.mxu0 0.0
    %4319 = vmatpush1.msra.mxu0 0.0
    %4320 = vmatprep.subr.mxu0 0.0
    %4321 = vmatpush1.msra.mxu0 0.0
    %4322 = vmatprep.subr.mxu0 0.0
    %4323 = vmatpush1.msra.mxu0 0.0
    %4324 = vmatprep.subr.mxu0 0.0
    %4325 = vmatpush1.msra.mxu0 0.0
    %4326 = vmatprep.subr.mxu0 0.0
    %4327 = vmatpush1.msra.mxu0 0.0
    %4328 = vmatprep.subr.mxu0 0.0
    %4329 = vmatpush1.msra.mxu0 0.0
    %4330 = vmatprep.subr.mxu0 0.0
    %4331 = vmatpush1.msra.mxu0 0.0
    %4332 = vmatprep.subr.mxu0 0.0
    %4333 = vmatpush1.msra.mxu0 0.0
    %4334 = vmatprep.subr.mxu0 0.0
    %4335 = vmatpush1.msra.mxu0 0.0
    %4336 = vmatprep.subr.mxu0 0.0
    %4337 = vmatpush1.msra.mxu0 0.0
    %4338 = vmatprep.subr.mxu0 0.0
    %4339 = vmatpush1.msra.mxu0 0.0
    %4340 = vmatprep.subr.mxu0 0.0
    %4341 = vmatpush1.msra.mxu0 0.0
    %4342 = vmatprep.subr.mxu0 0.0
    %4343 = vmatpush1.msra.mxu0 0.0
    %4344 = vmatprep.subr.mxu0 0.0
    %4345 = vmatpush1.msra.mxu0 0.0
    %4346 = vmatprep.subr.mxu0 0.0
    %4347 = vmatpush1.msra.mxu0 0.0
    %4348 = vmatprep.subr.mxu0 0.0
    %4349 = vmatpush1.msra.mxu0 0.0
    %4350 = vmatprep.mubr.f32.mxu0 0.0
    %4351 = vmatmul.mubr.f32.gmra.mrb[0].mxu0 %v3835
    %v4352 = vpop.f32.mrb[0].mxu0
    %v4353 = vadd.f32 0.0, %v4352
    %v4354 = vpop.f32.mrb[0].mxu0
    %4355 = vdwg.mxu0
    %4356 = vmatprep.subr.mxu0 0.0
    %4357 = vmatpush1.msra.mxu0 %v91
    %4358 = vmatprep.subr.mxu0 0.0
    %4359 = vmatpush1.msra.mxu0 %v92
    %4360 = vmatprep.subr.mxu0 0.0
    %4361 = vmatpush1.msra.mxu0 %v93
    %4362 = vmatprep.subr.mxu0 0.0
    %4363 = vmatpush1.msra.mxu0 %v94
    %4364 = vmatprep.subr.mxu0 0.0
    %4365 = vmatpush1.msra.mxu0 0.0
    %4366 = vmatprep.subr.mxu0 0.0
    %4367 = vmatpush1.msra.mxu0 0.0
    %4368 = vmatprep.subr.mxu0 0.0
    %4369 = vmatpush1.msra.mxu0 0.0
    %4370 = vmatprep.subr.mxu0 0.0
    %4371 = vmatpush1.msra.mxu0 0.0
    %4372 = vmatprep.subr.mxu0 0.0
    %4373 = vmatpush1.msra.mxu0 0.0
    %4374 = vmatprep.subr.mxu0 0.0
    %4375 = vmatpush1.msra.mxu0 0.0
    %4376 = vmatprep.subr.mxu0 0.0
    %4377 = vmatpush1.msra.mxu0 0.0
    %4378 = vmatprep.subr.mxu0 0.0
    %4379 = vmatpush1.msra.mxu0 0.0
    %4380 = vmatprep.subr.mxu0 0.0
    %4381 = vmatpush1.msra.mxu0 0.0
    %4382 = vmatprep.subr.mxu0 0.0
    %4383 = vmatpush1.msra.mxu0 0.0
    %4384 = vmatprep.subr.mxu0 0.0
    %4385 = vmatpush1.msra.mxu0 0.0
    %4386 = vmatprep.subr.mxu0 0.0
    %4387 = vmatpush1.msra.mxu0 0.0
    %4388 = vmatprep.subr.mxu0 0.0
    %4389 = vmatpush1.msra.mxu0 0.0
    %4390 = vmatprep.subr.mxu0 0.0
    %4391 = vmatpush1.msra.mxu0 0.0
    %4392 = vmatprep.subr.mxu0 0.0
    %4393 = vmatpush1.msra.mxu0 0.0
    %4394 = vmatprep.subr.mxu0 0.0
    %4395 = vmatpush1.msra.mxu0 0.0
    %4396 = vmatprep.subr.mxu0 0.0
    %4397 = vmatpush1.msra.mxu0 0.0
    %4398 = vmatprep.subr.mxu0 0.0
    %4399 = vmatpush1.msra.mxu0 0.0
    %4400 = vmatprep.subr.mxu0 0.0
    %4401 = vmatpush1.msra.mxu0 0.0
    %4402 = vmatprep.subr.mxu0 0.0
    %4403 = vmatpush1.msra.mxu0 0.0
    %4404 = vmatprep.subr.mxu0 0.0
    %4405 = vmatpush1.msra.mxu0 0.0
    %4406 = vmatprep.subr.mxu0 0.0
    %4407 = vmatpush1.msra.mxu0 0.0
    %4408 = vmatprep.subr.mxu0 0.0
    %4409 = vmatpush1.msra.mxu0 0.0
    %4410 = vmatprep.subr.mxu0 0.0
    %4411 = vmatpush1.msra.mxu0 0.0
    %4412 = vmatprep.subr.mxu0 0.0
    %4413 = vmatpush1.msra.mxu0 0.0
    %4414 = vmatprep.subr.mxu0 0.0
    %4415 = vmatpush1.msra.mxu0 0.0
    %4416 = vmatprep.subr.mxu0 0.0
    %4417 = vmatpush1.msra.mxu0 0.0
    %4418 = vmatprep.subr.mxu0 0.0
    %4419 = vmatpush1.msra.mxu0 0.0
    %4420 = vmatprep.mubr.f32.mxu0 0.0
    %4421 = vmatmul.mubr.f32.gmra.mrb[0].mxu0 %v3835
    %v4422 = vpop.f32.mrb[0].mxu0
    %v4423 = vadd.f32 0.0, %v4422
    %v4424 = vpop.f32.mrb[0].mxu0
    %4425 = vdwg.mxu0
    %v4426 = vadd.f32 %v4281, %v4353
    %v4427 = vmul.f32 %v4426, 0.5
    %v4428 = vtanh.pop %v4427
    %v4429 = vmul.f32 %v4428, 0.5
    %v4430 = vadd.f32 %v4429, 0.5
    %v4431 = vadd.f32 %v4283, %v4423
    %v4432 = vmul.f32 %v4431, 0.5
    %v4433 = vtanh.pop %v4432
    %v4434 = vmul.f32 %v4433, 0.5
    %v4435 = vadd.f32 %v4434, 0.5
    %4436 = vmatprep.subr.mxu0 0.0
    %4437 = vmatpush1.msra.mxu0 %v96
    %4438 = vmatprep.subr.mxu0 0.0
    %4439 = vmatpush1.msra.mxu0 %v97
    %4440 = vmatprep.subr.mxu0 0.0
    %4441 = vmatpush1.msra.mxu0 %v98
    %4442 = vmatprep.subr.mxu0 0.0
    %4443 = vmatpush1.msra.mxu0 %v99
    %4444 = vmatprep.subr.mxu0 0.0
    %4445 = vmatpush1.msra.mxu0 0.0
    %4446 = vmatprep.subr.mxu0 0.0
    %4447 = vmatpush1.msra.mxu0 0.0
    %4448 = vmatprep.subr.mxu0 0.0
    %4449 = vmatpush1.msra.mxu0 0.0
    %4450 = vmatprep.subr.mxu0 0.0
    %4451 = vmatpush1.msra.mxu0 0.0
    %4452 = vmatprep.subr.mxu0 0.0
    %4453 = vmatpush1.msra.mxu0 0.0
    %4454 = vmatprep.subr.mxu0 0.0
    %4455 = vmatpush1.msra.mxu0 0.0
    %4456 = vmatprep.subr.mxu0 0.0
    %4457 = vmatpush1.msra.mxu0 0.0
    %4458 = vmatprep.subr.mxu0 0.0
    %4459 = vmatpush1.msra.mxu0 0.0
    %4460 = vmatprep.subr.mxu0 0.0
    %4461 = vmatpush1.msra.mxu0 0.0
    %4462 = vmatprep.subr.mxu0 0.0
    %4463 = vmatpush1.msra.mxu0 0.0
    %4464 = vmatprep.subr.mxu0 0.0
    %4465 = vmatpush1.msra.mxu0 0.0
    %4466 = vmatprep.subr.mxu0 0.0
    %4467 = vmatpush1.msra.mxu0 0.0
    %4468 = vmatprep.subr.mxu0 0.0
    %4469 = vmatpush1.msra.mxu0 0.0
    %4470 = vmatprep.subr.mxu0 0.0
    %4471 = vmatpush1.msra.mxu0 0.0
    %4472 = vmatprep.subr.mxu0 0.0
    %4473 = vmatpush1.msra.mxu0 0.0
    %4474 = vmatprep.subr.mxu0 0.0
    %4475 = vmatpush1.msra.mxu0 0.0
    %4476 = vmatprep.subr.mxu0 0.0
    %4477 = vmatpush1.msra.mxu0 0.0
    %4478 = vmatprep.subr.mxu0 0.0
    %4479 = vmatpush1.msra.mxu0 0.0
    %4480 = vmatprep.subr.mxu0 0.0
    %4481 = vmatpush1.msra.mxu0 0.0
    %4482 = vmatprep.subr.mxu0 0.0
    %4483 = vmatpush1.msra.mxu0 0.0
    %4484 = vmatprep.subr.mxu0 0.0
    %4485 = vmatpush1.msra.mxu0 0.0
    %4486 = vmatprep.subr.mxu0 0.0
    %4487 = vmatpush1.msra.mxu0 0.0
    %4488 = vmatprep.subr.mxu0 0.0
    %4489 = vmatpush1.msra.mxu0 0.0
    %4490 = vmatprep.subr.mxu0 0.0
    %4491 = vmatpush1.msra.mxu0 0.0
    %4492 = vmatprep.subr.mxu0 0.0
    %4493 = vmatpush1.msra.mxu0 0.0
    %4494 = vmatprep.subr.mxu0 0.0
    %4495 = vmatpush1.msra.mxu0 0.0
    %4496 = vmatprep.subr.mxu0 0.0
    %4497 = vmatpush1.msra.mxu0 0.0
    %4498 = vmatprep.subr.mxu0 0.0
    %4499 = vmatpush1.msra.mxu0 0.0
    %4500 = vmatprep.mubr.f32.mxu0 0.0
    %4501 = vmatmul.mubr.f32.gmra.mrb[0].mxu0 %v3835
    %v4502 = vpop.f32.mrb[0].mxu0
    %v4503 = vadd.f32 %v345, %v4502
    %v4504 = vpop.f32.mrb[0].mxu0
    %4505 = vdwg.mxu0
    %v4506 = vmul.f32 %v4430, %v4503
    %v4507 = vadd.f32 %v4285, %v4506
    %v4508 = vtanh.pop %v4507
    %v4509 = vsub.f32 %v3833, %v4508
    %v4510 = vmul.f32 %v4435, %v4509
    %v4511 = vadd.f32 %v4508, %v4510
    %v4513 = vsel %vm187, %v4511, 0
    %4515 = vmatprep.subr.mxu0 0.0
    %4516 = vmatpush1.msra.mxu0 %v106
    %4517 = vmatprep.subr.mxu0 0.0
    %4518 = vmatpush1.msra.mxu0 %v107
    %4519 = vmatprep.subr.mxu0 0.0
    %4520 = vmatpush1.msra.mxu0 %v108
    %4521 = vmatprep.subr.mxu0 0.0
    %4522 = vmatpush1.msra.mxu0 %v109
    %4523 = vmatprep.subr.mxu0 0.0
    %4524 = vmatpush1.msra.mxu0 0.0
    %4525 = vmatprep.subr.mxu0 0.0
    %4526 = vmatpush1.msra.mxu0 0.0
    %4527 = vmatprep.subr.mxu0 0.0
    %4528 = vmatpush1.msra.mxu0 0.0
    %4529 = vmatprep.subr.mxu0 0.0
    %4530 = vmatpush1.msra.mxu0 0.0
    %4531 = vmatprep.subr.mxu0 0.0
    %4532 = vmatpush1.msra.mxu0 0.0
    %4533 = vmatprep.subr.mxu0 0.0
    %4534 = vmatpush1.msra.mxu0 0.0
    %4535 = vmatprep.subr.mxu0 0.0
    %4536 = vmatpush1.msra.mxu0 0.0
    %4537 = vmatprep.subr.mxu0 0.0
    %4538 = vmatpush1.msra.mxu0 0.0
    %4539 = vmatprep.subr.mxu0 0.0
    %4540 = vmatpush1.msra.mxu0 0.0
    %4541 = vmatprep.subr.mxu0 0.0
    %4542 = vmatpush1.msra.mxu0 0.0
    %4543 = vmatprep.subr.mxu0 0.0
    %4544 = vmatpush1.msra.mxu0 0.0
    %4545 = vmatprep.subr.mxu0 0.0
    %4546 = vmatpush1.msra.mxu0 0.0
    %4547 = vmatprep.subr.mxu0 0.0
    %4548 = vmatpush1.msra.mxu0 0.0
    %4549 = vmatprep.subr.mxu0 0.0
    %4550 = vmatpush1.msra.mxu0 0.0
    %4551 = vmatprep.subr.mxu0 0.0
    %4552 = vmatpush1.msra.mxu0 0.0
    %4553 = vmatprep.subr.mxu0 0.0
    %4554 = vmatpush1.msra.mxu0 0.0
    %4555 = vmatprep.subr.mxu0 0.0
    %4556 = vmatpush1.msra.mxu0 0.0
    %4557 = vmatprep.subr.mxu0 0.0
    %4558 = vmatpush1.msra.mxu0 0.0
    %4559 = vmatprep.subr.mxu0 0.0
    %4560 = vmatpush1.msra.mxu0 0.0
    %4561 = vmatprep.subr.mxu0 0.0
    %4562 = vmatpush1.msra.mxu0 0.0
    %4563 = vmatprep.subr.mxu0 0.0
    %4564 = vmatpush1.msra.mxu0 0.0
    %4565 = vmatprep.subr.mxu0 0.0
    %4566 = vmatpush1.msra.mxu0 0.0
    %4567 = vmatprep.subr.mxu0 0.0
    %4568 = vmatpush1.msra.mxu0 0.0
    %4569 = vmatprep.subr.mxu0 0.0
    %4570 = vmatpush1.msra.mxu0 0.0
    %4571 = vmatprep.subr.mxu0 0.0
    %4572 = vmatpush1.msra.mxu0 0.0
    %4573 = vmatprep.subr.mxu0 0.0
    %4574 = vmatpush1.msra.mxu0 0.0
    %4575 = vmatprep.subr.mxu0 0.0
    %4576 = vmatpush1.msra.mxu0 0.0
    %4577 = vmatprep.subr.mxu0 0.0
    %4578 = vmatpush1.msra.mxu0 0.0
    %4579 = vmatprep.mubr.f32.mxu0 0.0
    %4580 = vmatmul.mubr.f32.gmra.mrb[0].mxu0 %v4513
    %v4581 = vpop.f32.mrb[0].mxu0
    %v4582 = vadd.f32 %v427, %v4581
    %v4583 = vpop.f32.mrb[0].mxu0
    %4584 = vdwg.mxu0
    %4585 = vmatprep.subr.mxu0 0.0
    %4586 = vmatpush1.msra.mxu0 %v111
    %4587 = vmatprep.subr.mxu0 0.0
    %4588 = vmatpush1.msra.mxu0 %v112
    %4589 = vmatprep.subr.mxu0 0.0
    %4590 = vmatpush1.msra.mxu0 %v113
    %4591 = vmatprep.subr.mxu0 0.0
    %4592 = vmatpush1.msra.mxu0 %v114
    %4593 = vmatprep.subr.mxu0 0.0
    %4594 = vmatpush1.msra.mxu0 0.0
    %4595 = vmatprep.subr.mxu0 0.0
    %4596 = vmatpush1.msra.mxu0 0.0
    %4597 = vmatprep.subr.mxu0 0.0
    %4598 = vmatpush1.msra.mxu0 0.0
    %4599 = vmatprep.subr.mxu0 0.0
    %4600 = vmatpush1.msra.mxu0 0.0
    %4601 = vmatprep.subr.mxu0 0.0
    %4602 = vmatpush1.msra.mxu0 0.0
    %4603 = vmatprep.subr.mxu0 0.0
    %4604 = vmatpush1.msra.mxu0 0.0
    %4605 = vmatprep.subr.mxu0 0.0
    %4606 = vmatpush1.msra.mxu0 0.0
    %4607 = vmatprep.subr.mxu0 0.0
    %4608 = vmatpush1.msra.mxu0 0.0
    %4609 = vmatprep.subr.mxu0 0.0
    %4610 = vmatpush1.msra.mxu0 0.0
    %4611 = vmatprep.subr.mxu0 0.0
    %4612 = vmatpush1.msra.mxu0 0.0
    %4613 = vmatprep.subr.mxu0 0.0
    %4614 = vmatpush1.msra.mxu0 0.0
    %4615 = vmatprep.subr.mxu0 0.0
    %4616 = vmatpush1.msra.mxu0 0.0
    %4617 = vmatprep.subr.mxu0 0.0
    %4618 = vmatpush1.msra.mxu0 0.0
    %4619 = vmatprep.subr.mxu0 0.0
    %4620 = vmatpush1.msra.mxu0 0.0
    %4621 = vmatprep.subr.mxu0 0.0
    %4622 = vmatpush1.msra.mxu0 0.0
    %4623 = vmatprep.subr.mxu0 0.0
    %4624 = vmatpush1.msra.mxu0 0.0
    %4625 = vmatprep.subr.mxu0 0.0
    %4626 = vmatpush1.msra.mxu0 0.0
    %4627 = vmatprep.subr.mxu0 0.0
    %4628 = vmatpush1.msra.mxu0 0.0
    %4629 = vmatprep.subr.mxu0 0.0
    %4630 = vmatpush1.msra.mxu0 0.0
    %4631 = vmatprep.subr.mxu0 0.0
    %4632 = vmatpush1.msra.mxu0 0.0
    %4633 = vmatprep.subr.mxu0 0.0
    %4634 = vmatpush1.msra.mxu0 0.0
    %4635 = vmatprep.subr.mxu0 0.0
    %4636 = vmatpush1.msra.mxu0 0.0
    %4637 = vmatprep.subr.mxu0 0.0
    %4638 = vmatpush1.msra.mxu0 0.0
    %4639 = vmatprep.subr.mxu0 0.0
    %4640 = vmatpush1.msra.mxu0 0.0
    %4641 = vmatprep.subr.mxu0 0.0
    %4642 = vmatpush1.msra.mxu0 0.0
    %4643 = vmatprep.subr.mxu0 0.0
    %4644 = vmatpush1.msra.mxu0 0.0
    %4645 = vmatprep.subr.mxu0 0.0
    %4646 = vmatpush1.msra.mxu0 0.0
    %4647 = vmatprep.subr.mxu0 0.0
    %4648 = vmatpush1.msra.mxu0 0.0
    %4649 = vmatprep.mubr.f32.mxu0 0.0
    %4650 = vmatmul.mubr.f32.gmra.mrb[0].mxu0 %v4513
    %v4651 = vpop.f32.mrb[0].mxu0
    %v4652 = vadd.f32 %v506, %v4651
    %v4653 = vpop.f32.mrb[0].mxu0
    %4654 = vdwg.mxu0
    %4655 = vmatprep.subr.mxu0 0.0
    %4656 = vmatpush1.msra.mxu0 %v116
    %4657 = vmatprep.subr.mxu0 0.0
    %4658 = vmatpush1.msra.mxu0 %v117
    %4659 = vmatprep.subr.mxu0 0.0
    %4660 = vmatpush1.msra.mxu0 %v118
    %4661 = vmatprep.subr.mxu0 0.0
    %4662 = vmatpush1.msra.mxu0 %v119
    %4663 = vmatprep.subr.mxu0 0.0
    %4664 = vmatpush1.msra.mxu0 0.0
    %4665 = vmatprep.subr.mxu0 0.0
    %4666 = vmatpush1.msra.mxu0 0.0
    %4667 = vmatprep.subr.mxu0 0.0
    %4668 = vmatpush1.msra.mxu0 0.0
    %4669 = vmatprep.subr.mxu0 0.0
    %4670 = vmatpush1.msra.mxu0 0.0
    %4671 = vmatprep.subr.mxu0 0.0
    %4672 = vmatpush1.msra.mxu0 0.0
    %4673 = vmatprep.subr.mxu0 0.0
    %4674 = vmatpush1.msra.mxu0 0.0
    %4675 = vmatprep.subr.mxu0 0.0
    %4676 = vmatpush1.msra.mxu0 0.0
    %4677 = vmatprep.subr.mxu0 0.0
    %4678 = vmatpush1.msra.mxu0 0.0
    %4679 = vmatprep.subr.mxu0 0.0
    %4680 = vmatpush1.msra.mxu0 0.0
    %4681 = vmatprep.subr.mxu0 0.0
    %4682 = vmatpush1.msra.mxu0 0.0
    %4683 = vmatprep.subr.mxu0 0.0
    %4684 = vmatpush1.msra.mxu0 0.0
    %4685 = vmatprep.subr.mxu0 0.0
    %4686 = vmatpush1.msra.mxu0 0.0
    %4687 = vmatprep.subr.mxu0 0.0
    %4688 = vmatpush1.msra.mxu0 0.0
    %4689 = vmatprep.subr.mxu0 0.0
    %4690 = vmatpush1.msra.mxu0 0.0
    %4691 = vmatprep.subr.mxu0 0.0
    %4692 = vmatpush1.msra.mxu0 0.0
    %4693 = vmatprep.subr.mxu0 0.0
    %4694 = vmatpush1.msra.mxu0 0.0
    %4695 = vmatprep.subr.mxu0 0.0
    %4696 = vmatpush1.msra.mxu0 0.0
    %4697 = vmatprep.subr.mxu0 0.0
    %4698 = vmatpush1.msra.mxu0 0.0
    %4699 = vmatprep.subr.mxu0 0.0
    %4700 = vmatpush1.msra.mxu0 0.0
    %4701 = vmatprep.subr.mxu0 0.0
    %4702 = vmatpush1.msra.mxu0 0.0
    %4703 = vmatprep.subr.mxu0 0.0
    %4704 = vmatpush1.msra.mxu0 0.0
    %4705 = vmatprep.subr.mxu0 0.0
    %4706 = vmatpush1.msra.mxu0 0.0
    %4707 = vmatprep.subr.mxu0 0.0
    %4708 = vmatpush1.msra.mxu0 0.0
    %4709 = vmatprep.subr.mxu0 0.0
    %4710 = vmatpush1.msra.mxu0 0.0
    %4711 = vmatprep.subr.mxu0 0.0
    %4712 = vmatpush1.msra.mxu0 0.0
    %4713 = vmatprep.subr.mxu0 0.0
    %4714 = vmatpush1.msra.mxu0 0.0
    %4715 = vmatprep.subr.mxu0 0.0
    %4716 = vmatpush1.msra.mxu0 0.0
    %4717 = vmatprep.subr.mxu0 0.0
    %4718 = vmatpush1.msra.mxu0 0.0
    %4719 = vmatprep.mubr.f32.mxu0 0.0
    %4720 = vmatmul.mubr.f32.gmra.mrb[0].mxu0 %v4513
    %v4721 = vpop.f32.mrb[0].mxu0
    %v4722 = vadd.f32 %v582, %v4721
    %v4723 = vpop.f32.mrb[0].mxu0
    %4724 = vdwg.mxu0
    %v4726 = vsel %vm187, %v4275, 0
    %4728 = vmatprep.subr.mxu0 0.0
    %4729 = vmatpush1.msra.mxu0 %v120
    %4730 = vmatprep.subr.mxu0 0.0
    %4731 = vmatpush1.msra.mxu0 %v121
    %4732 = vmatprep.subr.mxu0 0.0
    %4733 = vmatpush1.msra.mxu0 %v122
    %4734 = vmatprep.subr.mxu0 0.0
    %4735 = vmatpush1.msra.mxu0 %v123
    %4736 = vmatprep.subr.mxu0 0.0
    %4737 = vmatpush1.msra.mxu0 0.0
    %4738 = vmatprep.subr.mxu0 0.0
    %4739 = vmatpush1.msra.mxu0 0.0
    %4740 = vmatprep.subr.mxu0 0.0
    %4741 = vmatpush1.msra.mxu0 0.0
    %4742 = vmatprep.subr.mxu0 0.0
    %4743 = vmatpush1.msra.mxu0 0.0
    %4744 = vmatprep.subr.mxu0 0.0
    %4745 = vmatpush1.msra.mxu0 0.0
    %4746 = vmatprep.subr.mxu0 0.0
    %4747 = vmatpush1.msra.mxu0 0.0
    %4748 = vmatprep.subr.mxu0 0.0
    %4749 = vmatpush1.msra.mxu0 0.0
    %4750 = vmatprep.subr.mxu0 0.0
    %4751 = vmatpush1.msra.mxu0 0.0
    %4752 = vmatprep.subr.mxu0 0.0
    %4753 = vmatpush1.msra.mxu0 0.0
    %4754 = vmatprep.subr.mxu0 0.0
    %4755 = vmatpush1.msra.mxu0 0.0
    %4756 = vmatprep.subr.mxu0 0.0
    %4757 = vmatpush1.msra.mxu0 0.0
    %4758 = vmatprep.subr.mxu0 0.0
    %4759 = vmatpush1.msra.mxu0 0.0
    %4760 = vmatprep.subr.mxu0 0.0
    %4761 = vmatpush1.msra.mxu0 0.0
    %4762 = vmatprep.subr.mxu0 0.0
    %4763 = vmatpush1.msra.mxu0 0.0
    %4764 = vmatprep.subr.mxu0 0.0
    %4765 = vmatpush1.msra.mxu0 0.0
    %4766 = vmatprep.subr.mxu0 0.0
    %4767 = vmatpush1.msra.mxu0 0.0
    %4768 = vmatprep.subr.mxu0 0.0
    %4769 = vmatpush1.msra.mxu0 0.0
    %4770 = vmatprep.subr.mxu0 0.0
    %4771 = vmatpush1.msra.mxu0 0.0
    %4772 = vmatprep.subr.mxu0 0.0
    %4773 = vmatpush1.msra.mxu0 0.0
    %4774 = vmatprep.subr.mxu0 0.0
    %4775 = vmatpush1.msra.mxu0 0.0
    %4776 = vmatprep.subr.mxu0 0.0
    %4777 = vmatpush1.msra.mxu0 0.0
    %4778 = vmatprep.subr.mxu0 0.0
    %4779 = vmatpush1.msra.mxu0 0.0
    %4780 = vmatprep.subr.mxu0 0.0
    %4781 = vmatpush1.msra.mxu0 0.0
    %4782 = vmatprep.subr.mxu0 0.0
    %4783 = vmatpush1.msra.mxu0 0.0
    %4784 = vmatprep.subr.mxu0 0.0
    %4785 = vmatpush1.msra.mxu0 0.0
    %4786 = vmatprep.subr.mxu0 0.0
    %4787 = vmatpush1.msra.mxu0 0.0
    %4788 = vmatprep.subr.mxu0 0.0
    %4789 = vmatpush1.msra.mxu0 0.0
    %4790 = vmatprep.subr.mxu0 0.0
    %4791 = vmatpush1.msra.mxu0 0.0
    %4792 = vmatprep.mubr.f32.mxu0 0.0
    %4793 = vmatmul.mubr.f32.gmra.mrb[0].mxu0 %v4726
    %v4794 = vpop.f32.mrb[0].mxu0
    %v4795 = vadd.f32 0.0, %v4794
    %v4796 = vpop.f32.mrb[0].mxu0
    %4797 = vdwg.mxu0
    %4798 = vmatprep.subr.mxu0 0.0
    %4799 = vmatpush1.msra.mxu0 %v125
    %4800 = vmatprep.subr.mxu0 0.0
    %4801 = vmatpush1.msra.mxu0 %v126
    %4802 = vmatprep.subr.mxu0 0.0
    %4803 = vmatpush1.msra.mxu0 %v127
    %4804 = vmatprep.subr.mxu0 0.0
    %4805 = vmatpush1.msra.mxu0 %v128
    %4806 = vmatprep.subr.mxu0 0.0
    %4807 = vmatpush1.msra.mxu0 0.0
    %4808 = vmatprep.subr.mxu0 0.0
    %4809 = vmatpush1.msra.mxu0 0.0
    %4810 = vmatprep.subr.mxu0 0.0
    %4811 = vmatpush1.msra.mxu0 0.0
    %4812 = vmatprep.subr.mxu0 0.0
    %4813 = vmatpush1.msra.mxu0 0.0
    %4814 = vmatprep.subr.mxu0 0.0
    %4815 = vmatpush1.msra.mxu0 0.0
    %4816 = vmatprep.subr.mxu0 0.0
    %4817 = vmatpush1.msra.mxu0 0.0
    %4818 = vmatprep.subr.mxu0 0.0
    %4819 = vmatpush1.msra.mxu0 0.0
    %4820 = vmatprep.subr.mxu0 0.0
    %4821 = vmatpush1.msra.mxu0 0.0
    %4822 = vmatprep.subr.mxu0 0.0
    %4823 = vmatpush1.msra.mxu0 0.0
    %4824 = vmatprep.subr.mxu0 0.0
    %4825 = vmatpush1.msra.mxu0 0.0
    %4826 = vmatprep.subr.mxu0 0.0
    %4827 = vmatpush1.msra.mxu0 0.0
    %4828 = vmatprep.subr.mxu0 0.0
    %4829 = vmatpush1.msra.mxu0 0.0
    %4830 = vmatprep.subr.mxu0 0.0
    %4831 = vmatpush1.msra.mxu0 0.0
    %4832 = vmatprep.subr.mxu0 0.0
    %4833 = vmatpush1.msra.mxu0 0.0
    %4834 = vmatprep.subr.mxu0 0.0
    %4835 = vmatpush1.msra.mxu0 0.0
    %4836 = vmatprep.subr.mxu0 0.0
    %4837 = vmatpush1.msra.mxu0 0.0
    %4838 = vmatprep.subr.mxu0 0.0
    %4839 = vmatpush1.msra.mxu0 0.0
    %4840 = vmatprep.subr.mxu0 0.0
    %4841 = vmatpush1.msra.mxu0 0.0
    %4842 = vmatprep.subr.mxu0 0.0
    %4843 = vmatpush1.msra.mxu0 0.0
    %4844 = vmatprep.subr.mxu0 0.0
    %4845 = vmatpush1.msra.mxu0 0.0
    %4846 = vmatprep.subr.mxu0 0.0
    %4847 = vmatpush1.msra.mxu0 0.0
    %4848 = vmatprep.subr.mxu0 0.0
    %4849 = vmatpush1.msra.mxu0 0.0
    %4850 = vmatprep.subr.mxu0 0.0
    %4851 = vmatpush1.msra.mxu0 0.0
    %4852 = vmatprep.subr.mxu0 0.0
    %4853 = vmatpush1.msra.mxu0 0.0
    %4854 = vmatprep.subr.mxu0 0.0
    %4855 = vmatpush1.msra.mxu0 0.0
    %4856 = vmatprep.subr.mxu0 0.0
    %4857 = vmatpush1.msra.mxu0 0.0
    %4858 = vmatprep.subr.mxu0 0.0
    %4859 = vmatpush1.msra.mxu0 0.0
    %4860 = vmatprep.subr.mxu0 0.0
    %4861 = vmatpush1.msra.mxu0 0.0
    %4862 = vmatprep.mubr.f32.mxu0 0.0
    %4863 = vmatmul.mubr.f32.gmra.mrb[0].mxu0 %v4726
    %v4864 = vpop.f32.mrb[0].mxu0
    %v4865 = vadd.f32 0.0, %v4864
    %v4866 = vpop.f32.mrb[0].mxu0
    %4867 = vdwg.mxu0
    %v4868 = vadd.f32 %v4582, %v4795
    %v4869 = vmul.f32 %v4868, 0.5
    %v4870 = vtanh.pop %v4869
    %v4871 = vmul.f32 %v4870, 0.5
    %v4872 = vadd.f32 %v4871, 0.5
    %v4873 = vadd.f32 %v4652, %v4865
    %v4874 = vmul.f32 %v4873, 0.5
    %v4875 = vtanh.pop %v4874
    %v4876 = vmul.f32 %v4875, 0.5
    %v4877 = vadd.f32 %v4876, 0.5
    %4878 = vmatprep.subr.mxu0 0.0
    %4879 = vmatpush1.msra.mxu0 %v130
    %4880 = vmatprep.subr.mxu0 0.0
    %4881 = vmatpush1.msra.mxu0 %v131
    %4882 = vmatprep.subr.mxu0 0.0
    %4883 = vmatpush1.msra.mxu0 %v132
    %4884 = vmatprep.subr.mxu0 0.0
    %4885 = vmatpush1.msra.mxu0 %v133
    %4886 = vmatprep.subr.mxu0 0.0
    %4887 = vmatpush1.msra.mxu0 0.0
    %4888 = vmatprep.subr.mxu0 0.0
    %4889 = vmatpush1.msra.mxu0 0.0
    %4890 = vmatprep.subr.mxu0 0.0
    %4891 = vmatpush1.msra.mxu0 0.0
    %4892 = vmatprep.subr.mxu0 0.0
    %4893 = vmatpush1.msra.mxu0 0.0
    %4894 = vmatprep.subr.mxu0 0.0
    %4895 = vmatpush1.msra.mxu0 0.0
    %4896 = vmatprep.subr.mxu0 0.0
    %4897 = vmatpush1.msra.mxu0 0.0
    %4898 = vmatprep.subr.mxu0 0.0
    %4899 = vmatpush1.msra.mxu0 0.0
    %4900 = vmatprep.subr.mxu0 0.0
    %4901 = vmatpush1.msra.mxu0 0.0
    %4902 = vmatprep.subr.mxu0 0.0
    %4903 = vmatpush1.msra.mxu0 0.0
    %4904 = vmatprep.subr.mxu0 0.0
    %4905 = vmatpush1.msra.mxu0 0.0
    %4906 = vmatprep.subr.mxu0 0.0
    %4907 = vmatpush1.msra.mxu0 0.0
    %4908 = vmatprep.subr.mxu0 0.0
    %4909 = vmatpush1.msra.mxu0 0.0
    %4910 = vmatprep.subr.mxu0 0.0
    %4911 = vmatpush1.msra.mxu0 0.0
    %4912 = vmatprep.subr.mxu0 0.0
    %4913 = vmatpush1.msra.mxu0 0.0
    %4914 = vmatprep.subr.mxu0 0.0
    %4915 = vmatpush1.msra.mxu0 0.0
    %4916 = vmatprep.subr.mxu0 0.0
    %4917 = vmatpush1.msra.mxu0 0.0
    %4918 = vmatprep.subr.mxu0 0.0
    %4919 = vmatpush1.msra.mxu0 0.0
    %4920 = vmatprep.subr.mxu0 0.0
    %4921 = vmatpush1.msra.mxu0 0.0
    %4922 = vmatprep.subr.mxu0 0.0
    %4923 = vmatpush1.msra.mxu0 0.0
    %4924 = vmatprep.subr.mxu0 0.0
    %4925 = vmatpush1.msra.mxu0 0.0
    %4926 = vmatprep.subr.mxu0 0.0
    %4927 = vmatpush1.msra.mxu0 0.0
    %4928 = vmatprep.subr.mxu0 0.0
    %4929 = vmatpush1.msra.mxu0 0.0
    %4930 = vmatprep.subr.mxu0 0.0
    %4931 = vmatpush1.msra.mxu0 0.0
    %4932 = vmatprep.subr.mxu0 0.0
    %4933 = vmatpush1.msra.mxu0 0.0
    %4934 = vmatprep.subr.mxu0 0.0
    %4935 = vmatpush1.msra.mxu0 0.0
    %4936 = vmatprep.subr.mxu0 0.0
    %4937 = vmatpush1.msra.mxu0 0.0
    %4938 = vmatprep.subr.mxu0 0.0
    %4939 = vmatpush1.msra.mxu0 0.0
    %4940 = vmatprep.subr.mxu0 0.0
    %4941 = vmatpush1.msra.mxu0 0.0
    %4942 = vmatprep.mubr.f32.mxu0 0.0
    %4943 = vmatmul.mubr.f32.gmra.mrb[0].mxu0 %v4726
    %v4944 = vpop.f32.mrb[0].mxu0
    %v4945 = vadd.f32 %v808, %v4944
    %v4946 = vpop.f32.mrb[0].mxu0
    %4947 = vdwg.mxu0
    %v4948 = vmul.f32 %v4872, %v4945
    %v4949 = vadd.f32 %v4722, %v4948
    %v4950 = vtanh.pop %v4949
    %v4951 = vsub.f32 %v4275, %v4950
    %v4952 = vmul.f32 %v4877, %v4951
    %v4953 = vadd.f32 %v4950, %v4952
    %4954 = vset.pattern.permute.xlu0 7
    %4955 = vperm.xlu0 %4954, %v80
    %v4956 = vpop.permute.xlu0 %4955
    %v4958 = vmul.f32 %v4956, %v149
    %v4959 = vadd.f32 %v4958, %v156
    %v4960 = vmul.f32 %v4956, %v163
    %v4961 = vadd.f32 %v4960, %v170
    %v4962 = vmul.f32 %v4956, %v177
    %v4963 = vadd.f32 %v4962, %v184
    %4964 = vmatprep.subr.mxu0 0.0
    %4965 = vmatpush1.msra.mxu0 %v86
    %4966 = vmatprep.subr.mxu0 0.0
    %4967 = vmatpush1.msra.mxu0 %v87
    %4968 = vmatprep.subr.mxu0 0.0
    %4969 = vmatpush1.msra.mxu0 %v88
    %4970 = vmatprep.subr.mxu0 0.0
    %4971 = vmatpush1.msra.mxu0 %v89
    %4972 = vmatprep.subr.mxu0 0.0
    %4973 = vmatpush1.msra.mxu0 0.0
    %4974 = vmatprep.subr.mxu0 0.0
    %4975 = vmatpush1.msra.mxu0 0.0
    %4976 = vmatprep.subr.mxu0 0.0
    %4977 = vmatpush1.msra.mxu0 0.0
    %4978 = vmatprep.subr.mxu0 0.0
    %4979 = vmatpush1.msra.mxu0 0.0
    %4980 = vmatprep.subr.mxu0 0.0
    %4981 = vmatpush1.msra.mxu0 0.0
    %4982 = vmatprep.subr.mxu0 0.0
    %4983 = vmatpush1.msra.mxu0 0.0
    %4984 = vmatprep.subr.mxu0 0.0
    %4985 = vmatpush1.msra.mxu0 0.0
    %4986 = vmatprep.subr.mxu0 0.0
    %4987 = vmatpush1.msra.mxu0 0.0
    %4988 = vmatprep.subr.mxu0 0.0
    %4989 = vmatpush1.msra.mxu0 0.0
    %4990 = vmatprep.subr.mxu0 0.0
    %4991 = vmatpush1.msra.mxu0 0.0
    %4992 = vmatprep.subr.mxu0 0.0
    %4993 = vmatpush1.msra.mxu0 0.0
    %4994 = vmatprep.subr.mxu0 0.0
    %4995 = vmatpush1.msra.mxu0 0.0
    %4996 = vmatprep.subr.mxu0 0.0
    %4997 = vmatpush1.msra.mxu0 0.0
    %4998 = vmatprep.subr.mxu0 0.0
    %4999 = vmatpush1.msra.mxu0 0.0
    %5000 = vmatprep.subr.mxu0 0.0
    %5001 = vmatpush1.msra.mxu0 0.0
    %5002 = vmatprep.subr.mxu0 0.0
    %5003 = vmatpush1.msra.mxu0 0.0
    %5004 = vmatprep.subr.mxu0 0.0
    %5005 = vmatpush1.msra.mxu0 0.0
    %5006 = vmatprep.subr.mxu0 0.0
    %5007 = vmatpush1.msra.mxu0 0.0
    %5008 = vmatprep.subr.mxu0 0.0
    %5009 = vmatpush1.msra.mxu0 0.0
    %5010 = vmatprep.subr.mxu0 0.0
    %5011 = vmatpush1.msra.mxu0 0.0
    %5012 = vmatprep.subr.mxu0 0.0
    %5013 = vmatpush1.msra.mxu0 0.0
    %5014 = vmatprep.subr.mxu0 0.0
    %5015 = vmatpush1.msra.mxu0 0.0
    %5016 = vmatprep.subr.mxu0 0.0
    %5017 = vmatpush1.msra.mxu0 0.0
    %5018 = vmatprep.subr.mxu0 0.0
    %5019 = vmatpush1.msra.mxu0 0.0
    %5020 = vmatprep.subr.mxu0 0.0
    %5021 = vmatpush1.msra.mxu0 0.0
    %5022 = vmatprep.subr.mxu0 0.0
    %5023 = vmatpush1.msra.mxu0 0.0
    %5024 = vmatprep.subr.mxu0 0.0
    %5025 = vmatpush1.msra.mxu0 0.0
    %5026 = vmatprep.subr.mxu0 0.0
    %5027 = vmatpush1.msra.mxu0 0.0
    %5028 = vmatprep.mubr.f32.mxu0 0.0
    %5029 = vmatmul.mubr.f32.gmra.mrb[0].mxu0 %v4513
    %v5030 = vpop.f32.mrb[0].mxu0
    %v5031 = vadd.f32 0.0, %v5030
    %v5032 = vpop.f32.mrb[0].mxu0
    %5033 = vdwg.mxu0
    %5034 = vmatprep.subr.mxu0 0.0
    %5035 = vmatpush1.msra.mxu0 %v91
    %5036 = vmatprep.subr.mxu0 0.0
    %5037 = vmatpush1.msra.mxu0 %v92
    %5038 = vmatprep.subr.mxu0 0.0
    %5039 = vmatpush1.msra.mxu0 %v93
    %5040 = vmatprep.subr.mxu0 0.0
    %5041 = vmatpush1.msra.mxu0 %v94
    %5042 = vmatprep.subr.mxu0 0.0
    %5043 = vmatpush1.msra.mxu0 0.0
    %5044 = vmatprep.subr.mxu0 0.0
    %5045 = vmatpush1.msra.mxu0 0.0
    %5046 = vmatprep.subr.mxu0 0.0
    %5047 = vmatpush1.msra.mxu0 0.0
    %5048 = vmatprep.subr.mxu0 0.0
    %5049 = vmatpush1.msra.mxu0 0.0
    %5050 = vmatprep.subr.mxu0 0.0
    %5051 = vmatpush1.msra.mxu0 0.0
    %5052 = vmatprep.subr.mxu0 0.0
    %5053 = vmatpush1.msra.mxu0 0.0
    %5054 = vmatprep.subr.mxu0 0.0
    %5055 = vmatpush1.msra.mxu0 0.0
    %5056 = vmatprep.subr.mxu0 0.0
    %5057 = vmatpush1.msra.mxu0 0.0
    %5058 = vmatprep.subr.mxu0 0.0
    %5059 = vmatpush1.msra.mxu0 0.0
    %5060 = vmatprep.subr.mxu0 0.0
    %5061 = vmatpush1.msra.mxu0 0.0
    %5062 = vmatprep.subr.mxu0 0.0
    %5063 = vmatpush1.msra.mxu0 0.0
    %5064 = vmatprep.subr.mxu0 0.0
    %5065 = vmatpush1.msra.mxu0 0.0
    %5066 = vmatprep.subr.mxu0 0.0
    %5067 = vmatpush1.msra.mxu0 0.0
    %5068 = vmatprep.subr.mxu0 0.0
    %5069 = vmatpush1.msra.mxu0 0.0
    %5070 = vmatprep.subr.mxu0 0.0
    %5071 = vmatpush1.msra.mxu0 0.0
    %5072 = vmatprep.subr.mxu0 0.0
    %5073 = vmatpush1.msra.mxu0 0.0
    %5074 = vmatprep.subr.mxu0 0.0
    %5075 = vmatpush1.msra.mxu0 0.0
    %5076 = vmatprep.subr.mxu0 0.0
    %5077 = vmatpush1.msra.mxu0 0.0
    %5078 = vmatprep.subr.mxu0 0.0
    %5079 = vmatpush1.msra.mxu0 0.0
    %5080 = vmatprep.subr.mxu0 0.0
    %5081 = vmatpush1.msra.mxu0 0.0
    %5082 = vmatprep.subr.mxu0 0.0
    %5083 = vmatpush1.msra.mxu0 0.0
    %5084 = vmatprep.subr.mxu0 0.0
    %5085 = vmatpush1.msra.mxu0 0.0
    %5086 = vmatprep.subr.mxu0 0.0
    %5087 = vmatpush1.msra.mxu0 0.0
    %5088 = vmatprep.subr.mxu0 0.0
    %5089 = vmatpush1.msra.mxu0 0.0
    %5090 = vmatprep.subr.mxu0 0.0
    %5091 = vmatpush1.msra.mxu0 0.0
    %5092 = vmatprep.subr.mxu0 0.0
    %5093 = vmatpush1.msra.mxu0 0.0
    %5094 = vmatprep.subr.mxu0 0.0
    %5095 = vmatpush1.msra.mxu0 0.0
    %5096 = vmatprep.subr.mxu0 0.0
    %5097 = vmatpush1.msra.mxu0 0.0
    %5098 = vmatprep.mubr.f32.mxu0 0.0
    %5099 = vmatmul.mubr.f32.gmra.mrb[0].mxu0 %v4513
    %v5100 = vpop.f32.mrb[0].mxu0
    %v5101 = vadd.f32 0.0, %v5100
    %v5102 = vpop.f32.mrb[0].mxu0
    %5103 = vdwg.mxu0
    %v5104 = vadd.f32 %v4959, %v5031
    %v5105 = vmul.f32 %v5104, 0.5
    %v5106 = vtanh.pop %v5105
    %v5107 = vmul.f32 %v5106, 0.5
    %v5108 = vadd.f32 %v5107, 0.5
    %v5109 = vadd.f32 %v4961, %v5101
    %v5110 = vmul.f32 %v5109, 0.5
    %v5111 = vtanh.pop %v5110
    %v5112 = vmul.f32 %v5111, 0.5
    %v5113 = vadd.f32 %v5112, 0.5
    %5114 = vmatprep.subr.mxu0 0.0
    %5115 = vmatpush1.msra.mxu0 %v96
    %5116 = vmatprep.subr.mxu0 0.0
    %5117 = vmatpush1.msra.mxu0 %v97
    %5118 = vmatprep.subr.mxu0 0.0
    %5119 = vmatpush1.msra.mxu0 %v98
    %5120 = vmatprep.subr.mxu0 0.0
    %5121 = vmatpush1.msra.mxu0 %v99
    %5122 = vmatprep.subr.mxu0 0.0
    %5123 = vmatpush1.msra.mxu0 0.0
    %5124 = vmatprep.subr.mxu0 0.0
    %5125 = vmatpush1.msra.mxu0 0.0
    %5126 = vmatprep.subr.mxu0 0.0
    %5127 = vmatpush1.msra.mxu0 0.0
    %5128 = vmatprep.subr.mxu0 0.0
    %5129 = vmatpush1.msra.mxu0 0.0
    %5130 = vmatprep.subr.mxu0 0.0
    %5131 = vmatpush1.msra.mxu0 0.0
    %5132 = vmatprep.subr.mxu0 0.0
    %5133 = vmatpush1.msra.mxu0 0.0
    %5134 = vmatprep.subr.mxu0 0.0
    %5135 = vmatpush1.msra.mxu0 0.0
    %5136 = vmatprep.subr.mxu0 0.0
    %5137 = vmatpush1.msra.mxu0 0.0
    %5138 = vmatprep.subr.mxu0 0.0
    %5139 = vmatpush1.msra.mxu0 0.0
    %5140 = vmatprep.subr.mxu0 0.0
    %5141 = vmatpush1.msra.mxu0 0.0
    %5142 = vmatprep.subr.mxu0 0.0
    %5143 = vmatpush1.msra.mxu0 0.0
    %5144 = vmatprep.subr.mxu0 0.0
    %5145 = vmatpush1.msra.mxu0 0.0
    %5146 = vmatprep.subr.mxu0 0.0
    %5147 = vmatpush1.msra.mxu0 0.0
    %5148 = vmatprep.subr.mxu0 0.0
    %5149 = vmatpush1.msra.mxu0 0.0
    %5150 = vmatprep.subr.mxu0 0.0
    %5151 = vmatpush1.msra.mxu0 0.0
    %5152 = vmatprep.subr.mxu0 0.0
    %5153 = vmatpush1.msra.mxu0 0.0
    %5154 = vmatprep.subr.mxu0 0.0
    %5155 = vmatpush1.msra.mxu0 0.0
    %5156 = vmatprep.subr.mxu0 0.0
    %5157 = vmatpush1.msra.mxu0 0.0
    %5158 = vmatprep.subr.mxu0 0.0
    %5159 = vmatpush1.msra.mxu0 0.0
    %5160 = vmatprep.subr.mxu0 0.0
    %5161 = vmatpush1.msra.mxu0 0.0
    %5162 = vmatprep.subr.mxu0 0.0
    %5163 = vmatpush1.msra.mxu0 0.0
    %5164 = vmatprep.subr.mxu0 0.0
    %5165 = vmatpush1.msra.mxu0 0.0
    %5166 = vmatprep.subr.mxu0 0.0
    %5167 = vmatpush1.msra.mxu0 0.0
    %5168 = vmatprep.subr.mxu0 0.0
    %5169 = vmatpush1.msra.mxu0 0.0
    %5170 = vmatprep.subr.mxu0 0.0
    %5171 = vmatpush1.msra.mxu0 0.0
    %5172 = vmatprep.subr.mxu0 0.0
    %5173 = vmatpush1.msra.mxu0 0.0
    %5174 = vmatprep.subr.mxu0 0.0
    %5175 = vmatpush1.msra.mxu0 0.0
    %5176 = vmatprep.subr.mxu0 0.0
    %5177 = vmatpush1.msra.mxu0 0.0
    %5178 = vmatprep.mubr.f32.mxu0 0.0
    %5179 = vmatmul.mubr.f32.gmra.mrb[0].mxu0 %v4513
    %v5180 = vpop.f32.mrb[0].mxu0
    %v5181 = vadd.f32 %v345, %v5180
    %v5182 = vpop.f32.mrb[0].mxu0
    %5183 = vdwg.mxu0
    %v5184 = vmul.f32 %v5108, %v5181
    %v5185 = vadd.f32 %v4963, %v5184
    %v5186 = vtanh.pop %v5185
    %v5187 = vsub.f32 %v4511, %v5186
    %v5188 = vmul.f32 %v5113, %v5187
    %v5189 = vadd.f32 %v5186, %v5188
    %v5191 = vsel %vm187, %v5189, 0
    %5193 = vmatprep.subr.mxu0 0.0
    %5194 = vmatpush1.msra.mxu0 %v106
    %5195 = vmatprep.subr.mxu0 0.0
    %5196 = vmatpush1.msra.mxu0 %v107
    %5197 = vmatprep.subr.mxu0 0.0
    %5198 = vmatpush1.msra.mxu0 %v108
    %5199 = vmatprep.subr.mxu0 0.0
    %5200 = vmatpush1.msra.mxu0 %v109
    %5201 = vmatprep.subr.mxu0 0.0
    %5202 = vmatpush1.msra.mxu0 0.0
    %5203 = vmatprep.subr.mxu0 0.0
    %5204 = vmatpush1.msra.mxu0 0.0
    %5205 = vmatprep.subr.mxu0 0.0
    %5206 = vmatpush1.msra.mxu0 0.0
    %5207 = vmatprep.subr.mxu0 0.0
    %5208 = vmatpush1.msra.mxu0 0.0
    %5209 = vmatprep.subr.mxu0 0.0
    %5210 = vmatpush1.msra.mxu0 0.0
    %5211 = vmatprep.subr.mxu0 0.0
    %5212 = vmatpush1.msra.mxu0 0.0
    %5213 = vmatprep.subr.mxu0 0.0
    %5214 = vmatpush1.msra.mxu0 0.0
    %5215 = vmatprep.subr.mxu0 0.0
    %5216 = vmatpush1.msra.mxu0 0.0
    %5217 = vmatprep.subr.mxu0 0.0
    %5218 = vmatpush1.msra.mxu0 0.0
    %5219 = vmatprep.subr.mxu0 0.0
    %5220 = vmatpush1.msra.mxu0 0.0
    %5221 = vmatprep.subr.mxu0 0.0
    %5222 = vmatpush1.msra.mxu0 0.0
    %5223 = vmatprep.subr.mxu0 0.0
    %5224 = vmatpush1.msra.mxu0 0.0
    %5225 = vmatprep.subr.mxu0 0.0
    %5226 = vmatpush1.msra.mxu0 0.0
    %5227 = vmatprep.subr.mxu0 0.0
    %5228 = vmatpush1.msra.mxu0 0.0
    %5229 = vmatprep.subr.mxu0 0.0
    %5230 = vmatpush1.msra.mxu0 0.0
    %5231 = vmatprep.subr.mxu0 0.0
    %5232 = vmatpush1.msra.mxu0 0.0
    %5233 = vmatprep.subr.mxu0 0.0
    %5234 = vmatpush1.msra.mxu0 0.0
    %5235 = vmatprep.subr.mxu0 0.0
    %5236 = vmatpush1.msra.mxu0 0.0
    %5237 = vmatprep.subr.mxu0 0.0
    %5238 = vmatpush1.msra.mxu0 0.0
    %5239 = vmatprep.subr.mxu0 0.0
    %5240 = vmatpush1.msra.mxu0 0.0
    %5241 = vmatprep.subr.mxu0 0.0
    %5242 = vmatpush1.msra.mxu0 0.0
    %5243 = vmatprep.subr.mxu0 0.0
    %5244 = vmatpush1.msra.mxu0 0.0
    %5245 = vmatprep.subr.mxu0 0.0
    %5246 = vmatpush1.msra.mxu0 0.0
    %5247 = vmatprep.subr.mxu0 0.0
    %5248 = vmatpush1.msra.mxu0 0.0
    %5249 = vmatprep.subr.mxu0 0.0
    %5250 = vmatpush1.msra.mxu0 0.0
    %5251 = vmatprep.subr.mxu0 0.0
    %5252 = vmatpush1.msra.mxu0 0.0
    %5253 = vmatprep.subr.mxu0 0.0
    %5254 = vmatpush1.msra.mxu0 0.0
    %5255 = vmatprep.subr.mxu0 0.0
    %5256 = vmatpush1.msra.mxu0 0.0
    %5257 = vmatprep.mubr.f32.mxu0 0.0
    %5258 = vmatmul.mubr.f32.gmra.mrb[0].mxu0 %v5191
    %v5259 = vpop.f32.mrb[0].mxu0
    %v5260 = vadd.f32 %v427, %v5259
    %v5261 = vpop.f32.mrb[0].mxu0
    %5262 = vdwg.mxu0
    %5263 = vmatprep.subr.mxu0 0.0
    %5264 = vmatpush1.msra.mxu0 %v111
    %5265 = vmatprep.subr.mxu0 0.0
    %5266 = vmatpush1.msra.mxu0 %v112
    %5267 = vmatprep.subr.mxu0 0.0
    %5268 = vmatpush1.msra.mxu0 %v113
    %5269 = vmatprep.subr.mxu0 0.0
    %5270 = vmatpush1.msra.mxu0 %v114
    %5271 = vmatprep.subr.mxu0 0.0
    %5272 = vmatpush1.msra.mxu0 0.0
    %5273 = vmatprep.subr.mxu0 0.0
    %5274 = vmatpush1.msra.mxu0 0.0
    %5275 = vmatprep.subr.mxu0 0.0
    %5276 = vmatpush1.msra.mxu0 0.0
    %5277 = vmatprep.subr.mxu0 0.0
    %5278 = vmatpush1.msra.mxu0 0.0
    %5279 = vmatprep.subr.mxu0 0.0
    %5280 = vmatpush1.msra.mxu0 0.0
    %5281 = vmatprep.subr.mxu0 0.0
    %5282 = vmatpush1.msra.mxu0 0.0
    %5283 = vmatprep.subr.mxu0 0.0
    %5284 = vmatpush1.msra.mxu0 0.0
    %5285 = vmatprep.subr.mxu0 0.0
    %5286 = vmatpush1.msra.mxu0 0.0
    %5287 = vmatprep.subr.mxu0 0.0
    %5288 = vmatpush1.msra.mxu0 0.0
    %5289 = vmatprep.subr.mxu0 0.0
    %5290 = vmatpush1.msra.mxu0 0.0
    %5291 = vmatprep.subr.mxu0 0.0
    %5292 = vmatpush1.msra.mxu0 0.0
    %5293 = vmatprep.subr.mxu0 0.0
    %5294 = vmatpush1.msra.mxu0 0.0
    %5295 = vmatprep.subr.mxu0 0.0
    %5296 = vmatpush1.msra.mxu0 0.0
    %5297 = vmatprep.subr.mxu0 0.0
    %5298 = vmatpush1.msra.mxu0 0.0
    %5299 = vmatprep.subr.mxu0 0.0
    %5300 = vmatpush1.msra.mxu0 0.0
    %5301 = vmatprep.subr.mxu0 0.0
    %5302 = vmatpush1.msra.mxu0 0.0
    %5303 = vmatprep.subr.mxu0 0.0
    %5304 = vmatpush1.msra.mxu0 0.0
    %5305 = vmatprep.subr.mxu0 0.0
    %5306 = vmatpush1.msra.mxu0 0.0
    %5307 = vmatprep.subr.mxu0 0.0
    %5308 = vmatpush1.msra.mxu0 0.0
    %5309 = vmatprep.subr.mxu0 0.0
    %5310 = vmatpush1.msra.mxu0 0.0
    %5311 = vmatprep.subr.mxu0 0.0
    %5312 = vmatpush1.msra.mxu0 0.0
    %5313 = vmatprep.subr.mxu0 0.0
    %5314 = vmatpush1.msra.mxu0 0.0
    %5315 = vmatprep.subr.mxu0 0.0
    %5316 = vmatpush1.msra.mxu0 0.0
    %5317 = vmatprep.subr.mxu0 0.0
    %5318 = vmatpush1.msra.mxu0 0.0
    %5319 = vmatprep.subr.mxu0 0.0
    %5320 = vmatpush1.msra.mxu0 0.0
    %5321 = vmatprep.subr.mxu0 0.0
    %5322 = vmatpush1.msra.mxu0 0.0
    %5323 = vmatprep.subr.mxu0 0.0
    %5324 = vmatpush1.msra.mxu0 0.0
    %5325 = vmatprep.subr.mxu0 0.0
    %5326 = vmatpush1.msra.mxu0 0.0
    %5327 = vmatprep.mubr.f32.mxu0 0.0
    %5328 = vmatmul.mubr.f32.gmra.mrb[0].mxu0 %v5191
    %v5329 = vpop.f32.mrb[0].mxu0
    %v5330 = vadd.f32 %v506, %v5329
    %v5331 = vpop.f32.mrb[0].mxu0
    %5332 = vdwg.mxu0
    %5333 = vmatprep.subr.mxu0 0.0
    %5334 = vmatpush1.msra.mxu0 %v116
    %5335 = vmatprep.subr.mxu0 0.0
    %5336 = vmatpush1.msra.mxu0 %v117
    %5337 = vmatprep.subr.mxu0 0.0
    %5338 = vmatpush1.msra.mxu0 %v118
    %5339 = vmatprep.subr.mxu0 0.0
    %5340 = vmatpush1.msra.mxu0 %v119
    %5341 = vmatprep.subr.mxu0 0.0
    %5342 = vmatpush1.msra.mxu0 0.0
    %5343 = vmatprep.subr.mxu0 0.0
    %5344 = vmatpush1.msra.mxu0 0.0
    %5345 = vmatprep.subr.mxu0 0.0
    %5346 = vmatpush1.msra.mxu0 0.0
    %5347 = vmatprep.subr.mxu0 0.0
    %5348 = vmatpush1.msra.mxu0 0.0
    %5349 = vmatprep.subr.mxu0 0.0
    %5350 = vmatpush1.msra.mxu0 0.0
    %5351 = vmatprep.subr.mxu0 0.0
    %5352 = vmatpush1.msra.mxu0 0.0
    %5353 = vmatprep.subr.mxu0 0.0
    %5354 = vmatpush1.msra.mxu0 0.0
    %5355 = vmatprep.subr.mxu0 0.0
    %5356 = vmatpush1.msra.mxu0 0.0
    %5357 = vmatprep.subr.mxu0 0.0
    %5358 = vmatpush1.msra.mxu0 0.0
    %5359 = vmatprep.subr.mxu0 0.0
    %5360 = vmatpush1.msra.mxu0 0.0
    %5361 = vmatprep.subr.mxu0 0.0
    %5362 = vmatpush1.msra.mxu0 0.0
    %5363 = vmatprep.subr.mxu0 0.0
    %5364 = vmatpush1.msra.mxu0 0.0
    %5365 = vmatprep.subr.mxu0 0.0
    %5366 = vmatpush1.msra.mxu0 0.0
    %5367 = vmatprep.subr.mxu0 0.0
    %5368 = vmatpush1.msra.mxu0 0.0
    %5369 = vmatprep.subr.mxu0 0.0
    %5370 = vmatpush1.msra.mxu0 0.0
    %5371 = vmatprep.subr.mxu0 0.0
    %5372 = vmatpush1.msra.mxu0 0.0
    %5373 = vmatprep.subr.mxu0 0.0
    %5374 = vmatpush1.msra.mxu0 0.0
    %5375 = vmatprep.subr.mxu0 0.0
    %5376 = vmatpush1.msra.mxu0 0.0
    %5377 = vmatprep.subr.mxu0 0.0
    %5378 = vmatpush1.msra.mxu0 0.0
    %5379 = vmatprep.subr.mxu0 0.0
    %5380 = vmatpush1.msra.mxu0 0.0
    %5381 = vmatprep.subr.mxu0 0.0
    %5382 = vmatpush1.msra.mxu0 0.0
    %5383 = vmatprep.subr.mxu0 0.0
    %5384 = vmatpush1.msra.mxu0 0.0
    %5385 = vmatprep.subr.mxu0 0.0
    %5386 = vmatpush1.msra.mxu0 0.0
    %5387 = vmatprep.subr.mxu0 0.0
    %5388 = vmatpush1.msra.mxu0 0.0
    %5389 = vmatprep.subr.mxu0 0.0
    %5390 = vmatpush1.msra.mxu0 0.0
    %5391 = vmatprep.subr.mxu0 0.0
    %5392 = vmatpush1.msra.mxu0 0.0
    %5393 = vmatprep.subr.mxu0 0.0
    %5394 = vmatpush1.msra.mxu0 0.0
    %5395 = vmatprep.subr.mxu0 0.0
    %5396 = vmatpush1.msra.mxu0 0.0
    %5397 = vmatprep.mubr.f32.mxu0 0.0
    %5398 = vmatmul.mubr.f32.gmra.mrb[0].mxu0 %v5191
    %v5399 = vpop.f32.mrb[0].mxu0
    %v5400 = vadd.f32 %v582, %v5399
    %v5401 = vpop.f32.mrb[0].mxu0
    %5402 = vdwg.mxu0
    %v5404 = vsel %vm187, %v4953, 0
    %5406 = vmatprep.subr.mxu0 0.0
    %5407 = vmatpush1.msra.mxu0 %v120
    %5408 = vmatprep.subr.mxu0 0.0
    %5409 = vmatpush1.msra.mxu0 %v121
    %5410 = vmatprep.subr.mxu0 0.0
    %5411 = vmatpush1.msra.mxu0 %v122
    %5412 = vmatprep.subr.mxu0 0.0
    %5413 = vmatpush1.msra.mxu0 %v123
    %5414 = vmatprep.subr.mxu0 0.0
    %5415 = vmatpush1.msra.mxu0 0.0
    %5416 = vmatprep.subr.mxu0 0.0
    %5417 = vmatpush1.msra.mxu0 0.0
    %5418 = vmatprep.subr.mxu0 0.0
    %5419 = vmatpush1.msra.mxu0 0.0
    %5420 = vmatprep.subr.mxu0 0.0
    %5421 = vmatpush1.msra.mxu0 0.0
    %5422 = vmatprep.subr.mxu0 0.0
    %5423 = vmatpush1.msra.mxu0 0.0
    %5424 = vmatprep.subr.mxu0 0.0
    %5425 = vmatpush1.msra.mxu0 0.0
    %5426 = vmatprep.subr.mxu0 0.0
    %5427 = vmatpush1.msra.mxu0 0.0
    %5428 = vmatprep.subr.mxu0 0.0
    %5429 = vmatpush1.msra.mxu0 0.0
    %5430 = vmatprep.subr.mxu0 0.0
    %5431 = vmatpush1.msra.mxu0 0.0
    %5432 = vmatprep.subr.mxu0 0.0
    %5433 = vmatpush1.msra.mxu0 0.0
    %5434 = vmatprep.subr.mxu0 0.0
    %5435 = vmatpush1.msra.mxu0 0.0
    %5436 = vmatprep.subr.mxu0 0.0
    %5437 = vmatpush1.msra.mxu0 0.0
    %5438 = vmatprep.subr.mxu0 0.0
    %5439 = vmatpush1.msra.mxu0 0.0
    %5440 = vmatprep.subr.mxu0 0.0
    %5441 = vmatpush1.msra.mxu0 0.0
    %5442 = vmatprep.subr.mxu0 0.0
    %5443 = vmatpush1.msra.mxu0 0.0
    %5444 = vmatprep.subr.mxu0 0.0
    %5445 = vmatpush1.msra.mxu0 0.0
    %5446 = vmatprep.subr.mxu0 0.0
    %5447 = vmatpush1.msra.mxu0 0.0
    %5448 = vmatprep.subr.mxu0 0.0
    %5449 = vmatpush1.msra.mxu0 0.0
    %5450 = vmatprep.subr.mxu0 0.0
    %5451 = vmatpush1.msra.mxu0 0.0
    %5452 = vmatprep.subr.mxu0 0.0
    %5453 = vmatpush1.msra.mxu0 0.0
    %5454 = vmatprep.subr.mxu0 0.0
    %5455 = vmatpush1.msra.mxu0 0.0
    %5456 = vmatprep.subr.mxu0 0.0
    %5457 = vmatpush1.msra.mxu0 0.0
    %5458 = vmatprep.subr.mxu0 0.0
    %5459 = vmatpush1.msra.mxu0 0.0
    %5460 = vmatprep.subr.mxu0 0.0
    %5461 = vmatpush1.msra.mxu0 0.0
    %5462 = vmatprep.subr.mxu0 0.0
    %5463 = vmatpush1.msra.mxu0 0.0
    %5464 = vmatprep.subr.mxu0 0.0
    %5465 = vmatpush1.msra.mxu0 0.0
    %5466 = vmatprep.subr.mxu0 0.0
    %5467 = vmatpush1.msra.mxu0 0.0
    %5468 = vmatprep.subr.mxu0 0.0
    %5469 = vmatpush1.msra.mxu0 0.0
    %5470 = vmatprep.mubr.f32.mxu0 0.0
    %5471 = vmatmul.mubr.f32.gmra.mrb[0].mxu0 %v5404
    %v5472 = vpop.f32.mrb[0].mxu0
    %v5473 = vadd.f32 0.0, %v5472
    %v5474 = vpop.f32.mrb[0].mxu0
    %5475 = vdwg.mxu0
    %5476 = vmatprep.subr.mxu0 0.0
    %5477 = vmatpush1.msra.mxu0 %v125
    %5478 = vmatprep.subr.mxu0 0.0
    %5479 = vmatpush1.msra.mxu0 %v126
    %5480 = vmatprep.subr.mxu0 0.0
    %5481 = vmatpush1.msra.mxu0 %v127
    %5482 = vmatprep.subr.mxu0 0.0
    %5483 = vmatpush1.msra.mxu0 %v128
    %5484 = vmatprep.subr.mxu0 0.0
    %5485 = vmatpush1.msra.mxu0 0.0
    %5486 = vmatprep.subr.mxu0 0.0
    %5487 = vmatpush1.msra.mxu0 0.0
    %5488 = vmatprep.subr.mxu0 0.0
    %5489 = vmatpush1.msra.mxu0 0.0
    %5490 = vmatprep.subr.mxu0 0.0
    %5491 = vmatpush1.msra.mxu0 0.0
    %5492 = vmatprep.subr.mxu0 0.0
    %5493 = vmatpush1.msra.mxu0 0.0
    %5494 = vmatprep.subr.mxu0 0.0
    %5495 = vmatpush1.msra.mxu0 0.0
    %5496 = vmatprep.subr.mxu0 0.0
    %5497 = vmatpush1.msra.mxu0 0.0
    %5498 = vmatprep.subr.mxu0 0.0
    %5499 = vmatpush1.msra.mxu0 0.0
    %5500 = vmatprep.subr.mxu0 0.0
    %5501 = vmatpush1.msra.mxu0 0.0
    %5502 = vmatprep.subr.mxu0 0.0
    %5503 = vmatpush1.msra.mxu0 0.0
    %5504 = vmatprep.subr.mxu0 0.0
    %5505 = vmatpush1.msra.mxu0 0.0
    %5506 = vmatprep.subr.mxu0 0.0
    %5507 = vmatpush1.msra.mxu0 0.0
    %5508 = vmatprep.subr.mxu0 0.0
    %5509 = vmatpush1.msra.mxu0 0.0
    %5510 = vmatprep.subr.mxu0 0.0
    %5511 = vmatpush1.msra.mxu0 0.0
    %5512 = vmatprep.subr.mxu0 0.0
    %5513 = vmatpush1.msra.mxu0 0.0
    %5514 = vmatprep.subr.mxu0 0.0
    %5515 = vmatpush1.msra.mxu0 0.0
    %5516 = vmatprep.subr.mxu0 0.0
    %5517 = vmatpush1.msra.mxu0 0.0
    %5518 = vmatprep.subr.mxu0 0.0
    %5519 = vmatpush1.msra.mxu0 0.0
    %5520 = vmatprep.subr.mxu0 0.0
    %5521 = vmatpush1.msra.mxu0 0.0
    %5522 = vmatprep.subr.mxu0 0.0
    %5523 = vmatpush1.msra.mxu0 0.0
    %5524 = vmatprep.subr.mxu0 0.0
    %5525 = vmatpush1.msra.mxu0 0.0
    %5526 = vmatprep.subr.mxu0 0.0
    %5527 = vmatpush1.msra.mxu0 0.0
    %5528 = vmatprep.subr.mxu0 0.0
    %5529 = vmatpush1.msra.mxu0 0.0
    %5530 = vmatprep.subr.mxu0 0.0
    %5531 = vmatpush1.msra.mxu0 0.0
    %5532 = vmatprep.subr.mxu0 0.0
    %5533 = vmatpush1.msra.mxu0 0.0
    %5534 = vmatprep.subr.mxu0 0.0
    %5535 = vmatpush1.msra.mxu0 0.0
    %5536 = vmatprep.subr.mxu0 0.0
    %5537 = vmatpush1.msra.mxu0 0.0
    %5538 = vmatprep.subr.mxu0 0.0
    %5539 = vmatpush1.msra.mxu0 0.0
    %5540 = vmatprep.mubr.f32.mxu0 0.0
    %5541 = vmatmul.mubr.f32.gmra.mrb[0].mxu0 %v5404
    %v5542 = vpop.f32.mrb[0].mxu0
    %v5543 = vadd.f32 0.0, %v5542
    %v5544 = vpop.f32.mrb[0].mxu0
    %5545 = vdwg.mxu0
    %v5546 = vadd.f32 %v5260, %v5473
    %v5547 = vmul.f32 %v5546, 0.5
    %v5548 = vtanh.pop %v5547
    %v5549 = vmul.f32 %v5548, 0.5
    %v5550 = vadd.f32 %v5549, 0.5
    %v5551 = vadd.f32 %v5330, %v5543
    %v5552 = vmul.f32 %v5551, 0.5
    %v5553 = vtanh.pop %v5552
    %v5554 = vmul.f32 %v5553, 0.5
    %v5555 = vadd.f32 %v5554, 0.5
    %5556 = vmatprep.subr.mxu0 0.0
    %5557 = vmatpush1.msra.mxu0 %v130
    %5558 = vmatprep.subr.mxu0 0.0
    %5559 = vmatpush1.msra.mxu0 %v131
    %5560 = vmatprep.subr.mxu0 0.0
    %5561 = vmatpush1.msra.mxu0 %v132
    %5562 = vmatprep.subr.mxu0 0.0
    %5563 = vmatpush1.msra.mxu0 %v133
    %5564 = vmatprep.subr.mxu0 0.0
    %5565 = vmatpush1.msra.mxu0 0.0
    %5566 = vmatprep.subr.mxu0 0.0
    %5567 = vmatpush1.msra.mxu0 0.0
    %5568 = vmatprep.subr.mxu0 0.0
    %5569 = vmatpush1.msra.mxu0 0.0
    %5570 = vmatprep.subr.mxu0 0.0
    %5571 = vmatpush1.msra.mxu0 0.0
    %5572 = vmatprep.subr.mxu0 0.0
    %5573 = vmatpush1.msra.mxu0 0.0
    %5574 = vmatprep.subr.mxu0 0.0
    %5575 = vmatpush1.msra.mxu0 0.0
    %5576 = vmatprep.subr.mxu0 0.0
    %5577 = vmatpush1.msra.mxu0 0.0
    %5578 = vmatprep.subr.mxu0 0.0
    %5579 = vmatpush1.msra.mxu0 0.0
    %5580 = vmatprep.subr.mxu0 0.0
    %5581 = vmatpush1.msra.mxu0 0.0
    %5582 = vmatprep.subr.mxu0 0.0
    %5583 = vmatpush1.msra.mxu0 0.0
    %5584 = vmatprep.subr.mxu0 0.0
    %5585 = vmatpush1.msra.mxu0 0.0
    %5586 = vmatprep.subr.mxu0 0.0
    %5587 = vmatpush1.msra.mxu0 0.0
    %5588 = vmatprep.subr.mxu0 0.0
    %5589 = vmatpush1.msra.mxu0 0.0
    %5590 = vmatprep.subr.mxu0 0.0
    %5591 = vmatpush1.msra.mxu0 0.0
    %5592 = vmatprep.subr.mxu0 0.0
    %5593 = vmatpush1.msra.mxu0 0.0
    %5594 = vmatprep.subr.mxu0 0.0
    %5595 = vmatpush1.msra.mxu0 0.0
    %5596 = vmatprep.subr.mxu0 0.0
    %5597 = vmatpush1.msra.mxu0 0.0
    %5598 = vmatprep.subr.mxu0 0.0
    %5599 = vmatpush1.msra.mxu0 0.0
    %5600 = vmatprep.subr.mxu0 0.0
    %5601 = vmatpush1.msra.mxu0 0.0
    %5602 = vmatprep.subr.mxu0 0.0
    %5603 = vmatpush1.msra.mxu0 0.0
    %5604 = vmatprep.subr.mxu0 0.0
    %5605 = vmatpush1.msra.mxu0 0.0
    %5606 = vmatprep.subr.mxu0 0.0
    %5607 = vmatpush1.msra.mxu0 0.0
    %5608 = vmatprep.subr.mxu0 0.0
    %5609 = vmatpush1.msra.mxu0 0.0
    %5610 = vmatprep.subr.mxu0 0.0
    %5611 = vmatpush1.msra.mxu0 0.0
    %5612 = vmatprep.subr.mxu0 0.0
    %5613 = vmatpush1.msra.mxu0 0.0
    %5614 = vmatprep.subr.mxu0 0.0
    %5615 = vmatpush1.msra.mxu0 0.0
    %5616 = vmatprep.subr.mxu0 0.0
    %5617 = vmatpush1.msra.mxu0 0.0
    %5618 = vmatprep.subr.mxu0 0.0
    %5619 = vmatpush1.msra.mxu0 0.0
    %5620 = vmatprep.mubr.f32.mxu0 0.0
    %5621 = vmatmul.mubr.f32.gmra.mrb[0].mxu0 %v5404
    %v5622 = vpop.f32.mrb[0].mxu0
    %v5623 = vadd.f32 %v808, %v5622
    %v5624 = vpop.f32.mrb[0].mxu0
    %5625 = vdwg.mxu0
    %v5626 = vmul.f32 %v5550, %v5623
    %v5627 = vadd.f32 %v5400, %v5626
    %v5628 = vtanh.pop %v5627
    %v5629 = vsub.f32 %v4953, %v5628
    %v5630 = vmul.f32 %v5555, %v5629
    %v5631 = vadd.f32 %v5628, %v5630
    %v5632 = vld [vmem:[%s9] sm:$0xff]
    %v5633 = vld [vmem:[%s9 + $0x8] sm:$0xff]
    %v5634 = vld [vmem:[%s9 + $0x10] sm:$0xff]
    %v5635 = vld [vmem:[%s9 + $0x18] sm:$0xff]
    %v5636 = vld [vmem:[%s10] sm:$0x1]
    %v5638 = vlaneseq
    %v5639 = vshrl.u32 %v5638, 7
    %v5640 = vsub.s32 0, %v5639
    %v5641 = vrot.slane %v5636, %v5640
    %v5644 = vsel %vm187, %v5631, 0
    %5646 = vmatprep.subr.mxu0 0.0
    %5647 = vmatpush1.msra.mxu0 %v5632
    %5648 = vmatprep.subr.mxu0 0.0
    %5649 = vmatpush1.msra.mxu0 %v5633
    %5650 = vmatprep.subr.mxu0 0.0
    %5651 = vmatpush1.msra.mxu0 %v5634
    %5652 = vmatprep.subr.mxu0 0.0
    %5653 = vmatpush1.msra.mxu0 %v5635
    %5654 = vmatprep.subr.mxu0 0.0
    %5655 = vmatpush1.msra.mxu0 0.0
    %5656 = vmatprep.subr.mxu0 0.0
    %5657 = vmatpush1.msra.mxu0 0.0
    %5658 = vmatprep.subr.mxu0 0.0
    %5659 = vmatpush1.msra.mxu0 0.0
    %5660 = vmatprep.subr.mxu0 0.0
    %5661 = vmatpush1.msra.mxu0 0.0
    %5662 = vmatprep.subr.mxu0 0.0
    %5663 = vmatpush1.msra.mxu0 0.0
    %5664 = vmatprep.subr.mxu0 0.0
    %5665 = vmatpush1.msra.mxu0 0.0
    %5666 = vmatprep.subr.mxu0 0.0
    %5667 = vmatpush1.msra.mxu0 0.0
    %5668 = vmatprep.subr.mxu0 0.0
    %5669 = vmatpush1.msra.mxu0 0.0
    %5670 = vmatprep.subr.mxu0 0.0
    %5671 = vmatpush1.msra.mxu0 0.0
    %5672 = vmatprep.subr.mxu0 0.0
    %5673 = vmatpush1.msra.mxu0 0.0
    %5674 = vmatprep.subr.mxu0 0.0
    %5675 = vmatpush1.msra.mxu0 0.0
    %5676 = vmatprep.subr.mxu0 0.0
    %5677 = vmatpush1.msra.mxu0 0.0
    %5678 = vmatprep.subr.mxu0 0.0
    %5679 = vmatpush1.msra.mxu0 0.0
    %5680 = vmatprep.subr.mxu0 0.0
    %5681 = vmatpush1.msra.mxu0 0.0
    %5682 = vmatprep.subr.mxu0 0.0
    %5683 = vmatpush1.msra.mxu0 0.0
    %5684 = vmatprep.subr.mxu0 0.0
    %5685 = vmatpush1.msra.mxu0 0.0
    %5686 = vmatprep.subr.mxu0 0.0
    %5687 = vmatpush1.msra.mxu0 0.0
    %5688 = vmatprep.subr.mxu0 0.0
    %5689 = vmatpush1.msra.mxu0 0.0
    %5690 = vmatprep.subr.mxu0 0.0
    %5691 = vmatpush1.msra.mxu0 0.0
    %5692 = vmatprep.subr.mxu0 0.0
    %5693 = vmatpush1.msra.mxu0 0.0
    %5694 = vmatprep.subr.mxu0 0.0
    %5695 = vmatpush1.msra.mxu0 0.0
    %5696 = vmatprep.subr.mxu0 0.0
    %5697 = vmatpush1.msra.mxu0 0.0
    %5698 = vmatprep.subr.mxu0 0.0
    %5699 = vmatpush1.msra.mxu0 0.0
    %5700 = vmatprep.subr.mxu0 0.0
    %5701 = vmatpush1.msra.mxu0 0.0
    %5702 = vmatprep.subr.mxu0 0.0
    %5703 = vmatpush1.msra.mxu0 0.0
    %5704 = vmatprep.subr.mxu0 0.0
    %5705 = vmatpush1.msra.mxu0 0.0
    %5706 = vmatprep.subr.mxu0 0.0
    %5707 = vmatpush1.msra.mxu0 0.0
    %5708 = vmatprep.subr.mxu0 0.0
    %5709 = vmatpush1.msra.mxu0 0.0
    %5710 = vmatprep.mubr.f32.mxu0 0.0
    %5711 = vmatmul.mubr.f32.gmra.mrb[0].mxu0 %v5644
    %v5712 = vpop.f32.mrb[0].mxu0
    %v5713 = vadd.f32 %v5641, %v5712
    %v5714 = vpop.f32.mrb[0].mxu0
    %5715 = vdwg.mxu0
    %vm5716 = vcmask 17408
    %5717 = vst.msk [vmem:[#allocation8] sm:$0x3] %vm5716, %v5713
    // Predicated region
    $region58: #{gru_model_forward.1} parent=1 // pred_check
      _
    $region59: #{gru_model_forward.1} parent=1 // pred_check_branch
      %5719 = sbr.rel (0) target = $region61
    $region60: #{gru_model_forward.1} parent=1 // pred_region
      %s5721 = ssub.s32 32, 32
      %5722 = vsyncadd [#allocation4], %s5721
      %s5724 = sshll.u32 [#allocation8], 4
      %s5725 = int_to_ptr.vmem [resolvable:$true] %s5724
      %5727 = dma.vmem_to_hbm [thread:$0]  %s5725, 32, %s11, [#allocation4]
    $region61: #{gru_model_forward.1} parent=1 // pred_fallthru
      _
    // Predicated region
    $region62: #{gru_model_forward.1} parent=1 // pred_check
      _
    $region63: #{gru_model_forward.1} parent=1 // pred_check_branch
      %5729 = sbr.rel (0) target = $region65
    $region64: #{gru_model_forward.1} parent=1 // pred_region
      %5730 = dma.done [#allocation4], 32
    $region65: #{gru_model_forward.1} parent=1 // pred_fallthru
      _
    %5731 = vsyncpa [#allocation3], 1
    %5732 = vsyncpa [#allocation6], 1
    %5733 = vsyncpa [#allocation4], 1

</llo_original>
